<compile_context>
chip_gen: v7x
topology: tpu7x:2x2x1
jax: 0.10.0
libtpu: 0.0.40
codegen_flags: <defaults>
</compile_context>

<pallas_src>
import functools
from typing import NamedTuple

import jax
import jax.numpy as jnp
from jax import lax
from jax.experimental import pallas as pl
from jax.experimental.pallas import tpu as pltpu


# ---------------------------------------------------------------------------
# Layout selection (generation-aware tile height + VMEM budget)
# ---------------------------------------------------------------------------
class Layout(NamedTuple):
    h: int
    w: int
    hp: int
    wp: int
    tile_h: int
    vmem_limit_bytes: int


def _vmem_bytes_estimate(th, w, wp, c, max_num_in, itemsize):
    k = max_num_in * 9 * c
    inputs = 2 * 2 * max_num_in * (th + 2) * wp * c * itemsize   # double-buffered
    out = 2 * th * wp * c * itemsize
    wts = 2 * (k * c * itemsize + 4 * c)
    slab = th * w * k * itemsize
    tmp = 4 * th * w * c * 4 + 2 * max_num_in * th * w * c * itemsize
    return inputs + out + wts + slab + tmp


def make_layout(h, w, c, max_num_in=2, itemsize=2):
    """Pick the row-tile height and the scoped-VMEM limit from the chip's VMEM."""
    wp = w + 2
    hp_min = h + 2
    try:
        cap = int(getattr(pltpu.get_tpu_info(), "vmem_capacity_bytes",
                          64 * 1024 * 1024))
    except Exception:
        cap = 64 * 1024 * 1024                       # v7x-safe fallback
    budget = min(int(cap * 0.55), 100 * 1024 * 1024)

    max_fit = 2
    for cand in range(min(hp_min, 512), 1, -1):
        if _vmem_bytes_estimate(cand, w, wp, c, max_num_in, itemsize) <= budget:
            max_fit = cand
            break
    # Prefer an exact divisor of (H + 2) so no extra pad rows are needed.
    divisors = [d for d in range(2, hp_min + 1)
                if hp_min % d == 0 and d <= max_fit]
    if divisors and 2 * divisors[-1] >= max_fit:
        tile_h = divisors[-1]
        hp = hp_min
    else:
        tile_h = max(max_fit, 2)
        hp = tile_h * ((hp_min + tile_h - 1) // tile_h)
    est = _vmem_bytes_estimate(tile_h, w, wp, c, max_num_in, itemsize)
    vmem_limit = int(min(max(2 * est, 32 * 1024 * 1024), budget))
    return Layout(h, w, hp, wp, tile_h, vmem_limit)


# ---------------------------------------------------------------------------
# Pallas kernel: fused 3x3 SAME conv (split GEMM over operands) + bias/cond + ReLU
# ---------------------------------------------------------------------------
def _conv3x3_cond_relu_kernel(*refs, num_in, th, wout, cin, cout, h_valid):
    # refs: [xm_0, xt_0, xb_0, ..., xm_{k-1}, xt_{k-1}, xb_{k-1},
    #        w_ref, bc_ref, o_ref, slab_ref]
    #   xm_i : (1, TH, Wp, Cin)  main rows of operand i (padded layout)
    #   xt_i : (1, 1,  Wp, Cin)  padded row just above the tile (clamped at r==0)
    #   xb_i : (1, 1,  Wp, Cin)  padded row just below the tile (clamped at last r)
    #   w_ref: (num_in*9*Cin, Cout) folded-tap GEMM weights (resident)
    #   bc_ref: (1, Cout) f32     bias + condition (resident)
    #   o_ref: (1, TH, Wp, Cout)  zero-bordered padded output tile
    #   slab_ref: VMEM (TH, W, num_in*9*Cin) im2col slab
    x_refs = refs[:3 * num_in]
    w_ref, bc_ref, o_ref, slab_ref = refs[3 * num_in:]
    k_total = num_in * 9 * cin
    r = pl.program_id(1)

    # im2col slab: slab[h, w, (i*9 + dy*3 + dx)*Cin + c]
    #   = x_i[padded_row r*TH + h + dy - 1, padded_col w + dx, c]
    for i in range(num_in):
        xm, xt, xb = x_refs[3 * i:3 * i + 3]
        for dx in range(3):
            mid = xm[0, :, dx:dx + wout, :]          # (TH, W, Cin)
            top = xt[0, :, dx:dx + wout, :]          # (1,  W, Cin)
            bot = xb[0, :, dx:dx + wout, :]          # (1,  W, Cin)
            a0 = (i * 9 + 0 * 3 + dx) * cin          # dy = 0
            slab_ref[0:1, :, a0:a0 + cin] = top
            slab_ref[1:th, :, a0:a0 + cin] = mid[:th - 1]
            a1 = (i * 9 + 1 * 3 + dx) * cin          # dy = 1
            slab_ref[:, :, a1:a1 + cin] = mid
            a2 = (i * 9 + 2 * 3 + dx) * cin          # dy = 2
            slab_ref[0:th - 1, :, a2:a2 + cin] = mid[1:]
            slab_ref[th - 1:th, :, a2:a2 + cin] = bot

    # Single MXU GEMM over K = 9 * num_in * Cin with f32 accumulation.
    slab = slab_ref[...].reshape(th * wout, k_total)
    acc = jnp.dot(slab, w_ref[...], preferred_element_type=jnp.float32)
    y = jnp.maximum(acc + bc_ref[...], 0.0).reshape(th, wout, cout)

    # Zero the padding rows (padded row 0 and rows > H) so the next level's
    # halo reads see a correct zero border without any host-side jnp.pad.
    prow = r * th + lax.broadcasted_iota(jnp.int32, (th, wout, cout), 0)
    y = jnp.where((prow >= 1) & (prow <= h_valid), y, 0.0)

    # Store interior columns + explicit zero left/right border columns.
    o_ref[0, :, 1:wout + 1, :] = y.astype(o_ref.dtype)
    zcol = jnp.zeros((th, 1, cout), o_ref.dtype)
    o_ref[0, :, 0:1, :] = zcol
    o_ref[0, :, wout + 1:wout + 2, :] = zcol


def conv3x3_cond_relu_pallas(xs, w_hwio, bias, cond, *, layout, compute_dtype):
    """ReLU(conv3x3_same(concat(xs, -1)) + bias + cond) on zero-padded NHWC maps.

    xs: list of (N, Hp, Wp, Cin) arrays in `compute_dtype` with a zero border.
    Returns (N, Hp, Wp, Cout) in `compute_dtype`, zero border included, ready to
    be consumed by the next conv with no host-side padding.  The skip concat is
    a split GEMM over the operands (no 2C feature map is materialized).
    """
    num_in = len(xs)
    n, hp, wp, cin = xs[0].shape
    assert all(x.shape == (n, hp, wp, cin) for x in xs)
    assert hp == layout.hp and wp == layout.wp
    h, w, th = layout.h, layout.w, layout.tile_h
    cout = w_hwio.shape[-1]
    assert w_hwio.shape == (3, 3, num_in * cin, cout)
    k_total = num_in * 9 * cin

    # Per-operand (dy, dx, cin)-ordered GEMM weights, resident in VMEM.
    w_full = jnp.concatenate(
        [w_hwio[:, :, i * cin:(i + 1) * cin, :].reshape(9 * cin, cout)
         for i in range(num_in)], axis=0).astype(compute_dtype)
    # Bias and per-channel condition folded into one f32 epilogue vector.
    bc = (bias + cond).reshape(1, cout).astype(jnp.float32)

    main_spec = pl.BlockSpec((1, th, wp, cin), lambda ni, ri: (ni, ri, 0, 0))
    top_spec = pl.BlockSpec(
        (1, 1, wp, cin),
        lambda ni, ri: (ni, jnp.maximum(ri * th - 1, 0), 0, 0))
    bot_spec = pl.BlockSpec(
        (1, 1, wp, cin),
        lambda ni, ri: (ni, jnp.minimum(ri * th + th, hp - 1), 0, 0))

    in_specs, operands = [], []
    for x in xs:
        in_specs += [main_spec, top_spec, bot_spec]
        operands += [x, x, x]
    in_specs += [pl.BlockSpec((k_total, cout), lambda ni, ri: (0, 0)),   # resident
                 pl.BlockSpec((1, cout), lambda ni, ri: (0, 0))]          # resident
    operands += [w_full, bc]
    out_spec = pl.BlockSpec((1, th, wp, cout), lambda ni, ri: (ni, ri, 0, 0))

    kernel = functools.partial(_conv3x3_cond_relu_kernel, num_in=num_in, th=th,
                               wout=w, cin=cin, cout=cout, h_valid=h)

    isz = jnp.dtype(compute_dtype).itemsize
    cost = pl.CostEstimate(
        flops=int(2 * n * h * w * k_total * cout),
        transcendentals=0,
        bytes_accessed=int(isz * (num_in * n * hp * wp * cin
                                  + k_total * cout + n * hp * wp * cout)
                           + 4 * cout),
    )

    return pl.pallas_call(
        kernel,
        out_shape=jax.ShapeDtypeStruct((n, hp, wp, cout), compute_dtype),
        grid_spec=pltpu.PrefetchScalarGridSpec(
            num_scalar_prefetch=0,
            grid=(n, hp // th),
            in_specs=in_specs,
            out_specs=out_spec,
            scratch_shapes=[pltpu.VMEM((th, w, k_total), compute_dtype)],
        ),
        compiler_params=pltpu.CompilerParams(
            dimension_semantics=("parallel", "parallel"),
            vmem_limit_bytes=layout.vmem_limit_bytes,
        ),
        cost_estimate=cost,
    )(*operands)


# ---------------------------------------------------------------------------
# Recursive UNet forward (mirrors the PyTorch skeleton exactly)
# ---------------------------------------------------------------------------
def unet_forward(block_fn, encoders_decoders, bottleneck_p, x, conditions, depth=0):
    (enc_p, dec_p), *inner_remaining = encoders_decoders
    encoded = block_fn([x], enc_p["w"], enc_p["b"], conditions[depth])
    if inner_remaining:
        bottlenecked = unet_forward(block_fn, inner_remaining, bottleneck_p,
                                    encoded, conditions, depth + 1)
    else:
        # leaf bottleneck receives the full conditions list; it uses the last one
        bottlenecked = block_fn([encoded], bottleneck_p["w"], bottleneck_p["b"],
                                conditions[-1])
    # torch.cat([encoded, bottlenecked], dim=1) + decoder conv, realized as a
    # split GEMM over the two operands in the Pallas path.
    return block_fn([encoded, bottlenecked], dec_p["w"], dec_p["b"],
                    conditions[depth])


def make_unet_pallas(params, compute_dtype=jnp.bfloat16):
    max_num_in = 2  # decoder consumes (encoded, bottlenecked)

    def fwd(x_nchw, conditions):
        n, c, h, w = x_nchw.shape
        layout = make_layout(h, w, c, max_num_in=max_num_in,
                             itemsize=jnp.dtype(compute_dtype).itemsize)
        block = functools.partial(conv3x3_cond_relu_pallas, layout=layout,
                                  compute_dtype=compute_dtype)
        x = jnp.transpose(x_nchw, (0, 2, 3, 1)).astype(compute_dtype)   # NCHW->NHWC
        # Pad ONCE for the whole network; every conv writes a zero-bordered
        # padded output, so no per-level jnp.pad / HBM round trip is needed.
        xp = jnp.pad(x, ((0, 0), (1, layout.hp - h - 1), (1, 1), (0, 0)))
        yp = unet_forward(block, params["encoders_decoders"],
                          params["bottleneck"], xp, conditions)
        y = yp[:, 1:h + 1, 1:w + 1, :]                                   # interior
        return jnp.transpose(y, (0, 3, 1, 2)).astype(jnp.float32)        # -> NCHW
    return fwd


def make_unet_ref(params, compute_dtype=jnp.bfloat16):
    """Pure-JAX reference with the same per-block dtype rounding as the kernel."""
    def block(xs, w_hwio, bias, cond):
        x = xs[0] if len(xs) == 1 else jnp.concatenate(xs, axis=-1)
        wf = w_hwio.astype(compute_dtype).astype(jnp.float32)
        y = lax.conv_general_dilated(x.astype(jnp.float32), wf, (1, 1), "SAME",
                                     dimension_numbers=("NHWC", "HWIO", "NHWC"))
        y = jnp.maximum(y + (bias + cond)[None, None, None, :], 0.0)
        return y.astype(compute_dtype)

    def fwd(x_nchw, conditions):
        x = jnp.transpose(x_nchw, (0, 2, 3, 1)).astype(compute_dtype)
        y = unet_forward(block, params["encoders_decoders"],
                         params["bottleneck"], x, conditions)
        return jnp.transpose(y, (0, 3, 1, 2)).astype(jnp.float32)
    return fwd


# ---------------------------------------------------------------------------
# Deterministic parameter construction
# ---------------------------------------------------------------------------
def init_block(key, cin, cout):
    kw, kb = jax.random.split(key)
    return {
        "w": 0.1 * jax.random.normal(kw, (3, 3, cin, cout), jnp.float32),  # HWIO
        "b": 0.1 * jax.random.normal(kb, (cout,), jnp.float32),
    }


def init_params(key, channels, num_levels):
    keys = jax.random.split(key, 2 * num_levels + 1)
    enc_dec = []
    for d in range(num_levels):
        enc = init_block(keys[2 * d], channels, channels)            # C -> C
        dec = init_block(keys[2 * d + 1], 2 * channels, channels)    # 2C -> C (skip)
        enc_dec.append((enc, dec))
    bottleneck = init_block(keys[-1], channels, channels)            # C -> C
    return {"encoders_decoders": enc_dec, "bottleneck": bottleneck}


# ---------------------------------------------------------------------------
if __name__ == "__main__":
    N, C, H, W = 2, 4, 16, 16
    num_levels = 2      # two nested encoder/decoder pairs + a leaf bottleneck

    root = jax.random.PRNGKey(0)
    k_params, k_x, k_c = jax.random.split(root, 3)
    params = init_params(k_params, C, num_levels)
    x = jax.random.normal(k_x, (N, C, H, W), jnp.float32)            # NCHW input
    ckeys = jax.random.split(k_c, num_levels + 1)
    conditions = tuple(0.1 * jax.random.normal(k, (C,), jnp.float32) for k in ckeys)

    # float32 path: tight check against the pure-JAX reference.
    out32 = jax.jit(make_unet_pallas(params, jnp.float32))(x, conditions)
    jax.block_until_ready(out32)
    ref32 = jax.jit(make_unet_ref(params, jnp.float32))(x, conditions)
    assert out32.shape == (N, C, H, W), out32.shape
    err32 = float(jnp.max(jnp.abs(out32 - ref32)))
    assert jnp.allclose(out32, ref32, atol=1e-4, rtol=1e-4), err32

    # bfloat16 operand path (halves HBM/VMEM traffic on v6e/v7x), f32 accumulation.
    out16 = jax.jit(make_unet_pallas(params, jnp.bfloat16))(x, conditions)
    jax.block_until_ready(out16)
    ref16 = jax.jit(make_unet_ref(params, jnp.bfloat16))(x, conditions)
    err16 = float(jnp.max(jnp.abs(out16 - ref16)))
    assert jnp.allclose(out16, ref16, atol=5e-2, rtol=5e-2), err16

    print("KERNEL_OK")
</pallas_src>

<mosaic_0001>
module attributes {stable_mosaic.version = 11 : i64} {
  func.func @_conv3x3_cond_relu_kernel(%arg0: i32, %arg1: i32, %arg2: memref<1x18x18x4xf32, #tpu.memory_space<vmem>>, %arg3: memref<1x1x18x4xf32, #tpu.memory_space<vmem>>, %arg4: memref<1x1x18x4xf32, #tpu.memory_space<vmem>>, %arg5: memref<36x4xf32, #tpu.memory_space<vmem>>, %arg6: memref<1x4xf32, #tpu.memory_space<vmem>>, %arg7: memref<1x18x18x4xf32, #tpu.memory_space<vmem>>, %arg8: memref<18x16x36xf32, #tpu.memory_space<vmem>>) attributes {dimension_semantics = [#tpu.dimension_semantics<parallel>, #tpu.dimension_semantics<parallel>], iteration_bounds = array<i64: 2, 1>, scalar_prefetch = 0 : i64, scratch_operands = 1 : i64, tpu.core_type = #tpu.core_type<tc>, window_params = [{transform_indices = @transform_0, window_bounds = array<i64: 1, 18, 18, 4>}, {transform_indices = @transform_1, window_bounds = array<i64: 1, 1, 18, 4>}, {transform_indices = @transform_2, window_bounds = array<i64: 1, 1, 18, 4>}, {pipeline_mode = #tpu.pipeline_mode<synchronous>, transform_indices = @transform_3, window_bounds = array<i64: 36, 4>}, {pipeline_mode = #tpu.pipeline_mode<synchronous>, transform_indices = @transform_4, window_bounds = array<i64: 1, 4>}, {transform_indices = @transform_5, window_bounds = array<i64: 1, 18, 18, 4>}]} {
    %c0 = arith.constant 0 : index
    %c0_0 = arith.constant 0 : index
    %c0_1 = arith.constant 0 : index
    %c0_2 = arith.constant 0 : index
    %0 = vector.load %arg2[%c0, %c0_0, %c0_1, %c0_2] : memref<1x18x18x4xf32, #tpu.memory_space<vmem>>, vector<1x18x16x4xf32>
    %1 = vector.shape_cast %0 : vector<1x18x16x4xf32> to vector<18x16x4xf32>
    %c0_3 = arith.constant 0 : index
    %c0_4 = arith.constant 0 : index
    %c0_5 = arith.constant 0 : index
    %c0_6 = arith.constant 0 : index
    %2 = vector.load %arg3[%c0_3, %c0_4, %c0_5, %c0_6] : memref<1x1x18x4xf32, #tpu.memory_space<vmem>>, vector<1x1x16x4xf32>
    %3 = vector.shape_cast %2 : vector<1x1x16x4xf32> to vector<1x16x4xf32>
    %c0_7 = arith.constant 0 : index
    %c0_8 = arith.constant 0 : index
    %c0_9 = arith.constant 0 : index
    %c0_10 = arith.constant 0 : index
    %4 = vector.load %arg4[%c0_7, %c0_8, %c0_9, %c0_10] : memref<1x1x18x4xf32, #tpu.memory_space<vmem>>, vector<1x1x16x4xf32>
    %5 = vector.shape_cast %4 : vector<1x1x16x4xf32> to vector<1x16x4xf32>
    %c0_11 = arith.constant 0 : index
    %c0_12 = arith.constant 0 : index
    %c0_13 = arith.constant 0 : index
    %6 = vector.load %arg8[%c0_11, %c0_12, %c0_13] : memref<18x16x36xf32, #tpu.memory_space<vmem>>, vector<1x16x4xf32>
    tpu.vector_store %arg8[%c0_11, %c0_12, %c0_13], %3 {strides = array<i32>} : memref<18x16x36xf32, #tpu.memory_space<vmem>>, vector<1x16x4xf32>,
    %7 = vector.extract_strided_slice %1 {offsets = [0, 0, 0], sizes = [17, 16, 4], strides = [1, 1, 1]} : vector<18x16x4xf32> to vector<17x16x4xf32>
    %c1 = arith.constant 1 : index
    %c0_14 = arith.constant 0 : index
    %c0_15 = arith.constant 0 : index
    %8 = vector.load %arg8[%c1, %c0_14, %c0_15] : memref<18x16x36xf32, #tpu.memory_space<vmem>>, vector<17x16x4xf32>
    tpu.vector_store %arg8[%c1, %c0_14, %c0_15], %7 {strides = array<i32>} : memref<18x16x36xf32, #tpu.memory_space<vmem>>, vector<17x16x4xf32>,
    %c0_16 = arith.constant 0 : index
    %c0_17 = arith.constant 0 : index
    %c12 = arith.constant 12 : index
    %9 = vector.load %arg8[%c0_16, %c0_17, %c12] : memref<18x16x36xf32, #tpu.memory_space<vmem>>, vector<18x16x4xf32>
    tpu.vector_store %arg8[%c0_16, %c0_17, %c12], %1 {strides = array<i32>} : memref<18x16x36xf32, #tpu.memory_space<vmem>>, vector<18x16x4xf32>,
    %10 = vector.extract_strided_slice %1 {offsets = [1, 0, 0], sizes = [17, 16, 4], strides = [1, 1, 1]} : vector<18x16x4xf32> to vector<17x16x4xf32>
    %c0_18 = arith.constant 0 : index
    %c0_19 = arith.constant 0 : index
    %c24 = arith.constant 24 : index
    %11 = vector.load %arg8[%c0_18, %c0_19, %c24] : memref<18x16x36xf32, #tpu.memory_space<vmem>>, vector<17x16x4xf32>
    tpu.vector_store %arg8[%c0_18, %c0_19, %c24], %10 {strides = array<i32>} : memref<18x16x36xf32, #tpu.memory_space<vmem>>, vector<17x16x4xf32>,
    %c17 = arith.constant 17 : index
    %c0_20 = arith.constant 0 : index
    %c24_21 = arith.constant 24 : index
    %12 = vector.load %arg8[%c17, %c0_20, %c24_21] : memref<18x16x36xf32, #tpu.memory_space<vmem>>, vector<1x16x4xf32>
    tpu.vector_store %arg8[%c17, %c0_20, %c24_21], %5 {strides = array<i32>} : memref<18x16x36xf32, #tpu.memory_space<vmem>>, vector<1x16x4xf32>,
    %c0_22 = arith.constant 0 : index
    %c0_23 = arith.constant 0 : index
    %c1_24 = arith.constant 1 : index
    %c0_25 = arith.constant 0 : index
    %13 = vector.load %arg2[%c0_22, %c0_23, %c1_24, %c0_25] : memref<1x18x18x4xf32, #tpu.memory_space<vmem>>, vector<1x18x16x4xf32>
    %14 = vector.shape_cast %13 : vector<1x18x16x4xf32> to vector<18x16x4xf32>
    %c0_26 = arith.constant 0 : index
    %c0_27 = arith.constant 0 : index
    %c1_28 = arith.constant 1 : index
    %c0_29 = arith.constant 0 : index
    %15 = vector.load %arg3[%c0_26, %c0_27, %c1_28, %c0_29] : memref<1x1x18x4xf32, #tpu.memory_space<vmem>>, vector<1x1x16x4xf32>
    %16 = vector.shape_cast %15 : vector<1x1x16x4xf32> to vector<1x16x4xf32>
    %c0_30 = arith.constant 0 : index
    %c0_31 = arith.constant 0 : index
    %c1_32 = arith.constant 1 : index
    %c0_33 = arith.constant 0 : index
    %17 = vector.load %arg4[%c0_30, %c0_31, %c1_32, %c0_33] : memref<1x1x18x4xf32, #tpu.memory_space<vmem>>, vector<1x1x16x4xf32>
    %18 = vector.shape_cast %17 : vector<1x1x16x4xf32> to vector<1x16x4xf32>
    %c0_34 = arith.constant 0 : index
    %c0_35 = arith.constant 0 : index
    %c4 = arith.constant 4 : index
    %19 = vector.load %arg8[%c0_34, %c0_35, %c4] : memref<18x16x36xf32, #tpu.memory_space<vmem>>, vector<1x16x4xf32>
    tpu.vector_store %arg8[%c0_34, %c0_35, %c4], %16 {strides = array<i32>} : memref<18x16x36xf32, #tpu.memory_space<vmem>>, vector<1x16x4xf32>,
    %20 = vector.extract_strided_slice %14 {offsets = [0, 0, 0], sizes = [17, 16, 4], strides = [1, 1, 1]} : vector<18x16x4xf32> to vector<17x16x4xf32>
    %c1_36 = arith.constant 1 : index
    %c0_37 = arith.constant 0 : index
    %c4_38 = arith.constant 4 : index
    %21 = vector.load %arg8[%c1_36, %c0_37, %c4_38] : memref<18x16x36xf32, #tpu.memory_space<vmem>>, vector<17x16x4xf32>
    tpu.vector_store %arg8[%c1_36, %c0_37, %c4_38], %20 {strides = array<i32>} : memref<18x16x36xf32, #tpu.memory_space<vmem>>, vector<17x16x4xf32>,
    %c0_39 = arith.constant 0 : index
    %c0_40 = arith.constant 0 : index
    %c16 = arith.constant 16 : index
    %22 = vector.load %arg8[%c0_39, %c0_40, %c16] : memref<18x16x36xf32, #tpu.memory_space<vmem>>, vector<18x16x4xf32>
    tpu.vector_store %arg8[%c0_39, %c0_40, %c16], %14 {strides = array<i32>} : memref<18x16x36xf32, #tpu.memory_space<vmem>>, vector<18x16x4xf32>,
    %23 = vector.extract_strided_slice %14 {offsets = [1, 0, 0], sizes = [17, 16, 4], strides = [1, 1, 1]} : vector<18x16x4xf32> to vector<17x16x4xf32>
    %c0_41 = arith.constant 0 : index
    %c0_42 = arith.constant 0 : index
    %c28 = arith.constant 28 : index
    %24 = vector.load %arg8[%c0_41, %c0_42, %c28] : memref<18x16x36xf32, #tpu.memory_space<vmem>>, vector<17x16x4xf32>
    tpu.vector_store %arg8[%c0_41, %c0_42, %c28], %23 {strides = array<i32>} : memref<18x16x36xf32, #tpu.memory_space<vmem>>, vector<17x16x4xf32>,
    %c17_43 = arith.constant 17 : index
    %c0_44 = arith.constant 0 : index
    %c28_45 = arith.constant 28 : index
    %25 = vector.load %arg8[%c17_43, %c0_44, %c28_45] : memref<18x16x36xf32, #tpu.memory_space<vmem>>, vector<1x16x4xf32>
    tpu.vector_store %arg8[%c17_43, %c0_44, %c28_45], %18 {strides = array<i32>} : memref<18x16x36xf32, #tpu.memory_space<vmem>>, vector<1x16x4xf32>,
    %c0_46 = arith.constant 0 : index
    %c0_47 = arith.constant 0 : index
    %c2 = arith.constant 2 : index
    %c0_48 = arith.constant 0 : index
    %26 = vector.load %arg2[%c0_46, %c0_47, %c2, %c0_48] : memref<1x18x18x4xf32, #tpu.memory_space<vmem>>, vector<1x18x16x4xf32>
    %27 = vector.shape_cast %26 : vector<1x18x16x4xf32> to vector<18x16x4xf32>
    %c0_49 = arith.constant 0 : index
    %c0_50 = arith.constant 0 : index
    %c2_51 = arith.constant 2 : index
    %c0_52 = arith.constant 0 : index
    %28 = vector.load %arg3[%c0_49, %c0_50, %c2_51, %c0_52] : memref<1x1x18x4xf32, #tpu.memory_space<vmem>>, vector<1x1x16x4xf32>
    %29 = vector.shape_cast %28 : vector<1x1x16x4xf32> to vector<1x16x4xf32>
    %c0_53 = arith.constant 0 : index
    %c0_54 = arith.constant 0 : index
    %c2_55 = arith.constant 2 : index
    %c0_56 = arith.constant 0 : index
    %30 = vector.load %arg4[%c0_53, %c0_54, %c2_55, %c0_56] : memref<1x1x18x4xf32, #tpu.memory_space<vmem>>, vector<1x1x16x4xf32>
    %31 = vector.shape_cast %30 : vector<1x1x16x4xf32> to vector<1x16x4xf32>
    %c0_57 = arith.constant 0 : index
    %c0_58 = arith.constant 0 : index
    %c8 = arith.constant 8 : index
    %32 = vector.load %arg8[%c0_57, %c0_58, %c8] : memref<18x16x36xf32, #tpu.memory_space<vmem>>, vector<1x16x4xf32>
    tpu.vector_store %arg8[%c0_57, %c0_58, %c8], %29 {strides = array<i32>} : memref<18x16x36xf32, #tpu.memory_space<vmem>>, vector<1x16x4xf32>,
    %33 = vector.extract_strided_slice %27 {offsets = [0, 0, 0], sizes = [17, 16, 4], strides = [1, 1, 1]} : vector<18x16x4xf32> to vector<17x16x4xf32>
    %c1_59 = arith.constant 1 : index
    %c0_60 = arith.constant 0 : index
    %c8_61 = arith.constant 8 : index
    %34 = vector.load %arg8[%c1_59, %c0_60, %c8_61] : memref<18x16x36xf32, #tpu.memory_space<vmem>>, vector<17x16x4xf32>
    tpu.vector_store %arg8[%c1_59, %c0_60, %c8_61], %33 {strides = array<i32>} : memref<18x16x36xf32, #tpu.memory_space<vmem>>, vector<17x16x4xf32>,
    %c0_62 = arith.constant 0 : index
    %c0_63 = arith.constant 0 : index
    %c20 = arith.constant 20 : index
    %35 = vector.load %arg8[%c0_62, %c0_63, %c20] : memref<18x16x36xf32, #tpu.memory_space<vmem>>, vector<18x16x4xf32>
    tpu.vector_store %arg8[%c0_62, %c0_63, %c20], %27 {strides = array<i32>} : memref<18x16x36xf32, #tpu.memory_space<vmem>>, vector<18x16x4xf32>,
    %36 = vector.extract_strided_slice %27 {offsets = [1, 0, 0], sizes = [17, 16, 4], strides = [1, 1, 1]} : vector<18x16x4xf32> to vector<17x16x4xf32>
    %c0_64 = arith.constant 0 : index
    %c0_65 = arith.constant 0 : index
    %c32 = arith.constant 32 : index
    %37 = vector.load %arg8[%c0_64, %c0_65, %c32] : memref<18x16x36xf32, #tpu.memory_space<vmem>>, vector<17x16x4xf32>
    tpu.vector_store %arg8[%c0_64, %c0_65, %c32], %36 {strides = array<i32>} : memref<18x16x36xf32, #tpu.memory_space<vmem>>, vector<17x16x4xf32>,
    %c17_66 = arith.constant 17 : index
    %c0_67 = arith.constant 0 : index
    %c32_68 = arith.constant 32 : index
    %38 = vector.load %arg8[%c17_66, %c0_67, %c32_68] : memref<18x16x36xf32, #tpu.memory_space<vmem>>, vector<1x16x4xf32>
    tpu.vector_store %arg8[%c17_66, %c0_67, %c32_68], %31 {strides = array<i32>} : memref<18x16x36xf32, #tpu.memory_space<vmem>>, vector<1x16x4xf32>,
    %c0_69 = arith.constant 0 : index
    %c0_70 = arith.constant 0 : index
    %c0_71 = arith.constant 0 : index
    %39 = vector.load %arg8[%c0_69, %c0_70, %c0_71] : memref<18x16x36xf32, #tpu.memory_space<vmem>>, vector<18x16x36xf32>
    %40 = vector.shape_cast %39 : vector<18x16x36xf32> to vector<288x36xf32>
    %c0_72 = arith.constant 0 : index
    %c0_73 = arith.constant 0 : index
    %41 = vector.load %arg5[%c0_72, %c0_73] : memref<36x4xf32, #tpu.memory_space<vmem>>, vector<36x4xf32>
    %cst = arith.constant dense<0.000000e+00> : vector<288x4xf32>
    %42 = tpu.matmul %40, %41, %cst {dimension_numbers = #tpu.dot_dimension_numbers<[1], [0], [0], [1], [0, 0, 1, 1], [], []>} : vector<288x36xf32>, vector<36x4xf32>, vector<288x4xf32> -> vector<288x4xf32>
    %c0_74 = arith.constant 0 : index
    %c0_75 = arith.constant 0 : index
    %43 = vector.load %arg6[%c0_74, %c0_75] : memref<1x4xf32, #tpu.memory_space<vmem>>, vector<1x4xf32>
    %44 = vector.broadcast %43 : vector<1x4xf32> to vector<288x4xf32>
    %45 = arith.addf %42, %44 : vector<288x4xf32>
    %cst_76 = arith.constant 0.000000e+00 : f32
    %46 = vector.broadcast %cst_76 : f32 to vector<288x4xf32>
    %47 = arith.maximumf %45, %46 : vector<288x4xf32>
    %48 = vector.shape_cast %47 : vector<288x4xf32> to vector<18x16x4xf32>
    %c18_i32 = arith.constant 18 : i32
    %49 = arith.muli %arg1, %c18_i32 : i32
    %50 = tpu.iota {dimensions = array<i32: 0>} : vector<18x16x4xi32>
    %51 = vector.broadcast %49 : i32 to vector<18x16x4xi32>
    %52 = arith.addi %51, %50 : vector<18x16x4xi32>
    %c1_i32 = arith.constant 1 : i32
    %53 = vector.broadcast %c1_i32 : i32 to vector<18x16x4xi32>
    %54 = arith.cmpi sge, %52, %53 : vector<18x16x4xi32>
    %c16_i32 = arith.constant 16 : i32
    %55 = vector.broadcast %c16_i32 : i32 to vector<18x16x4xi32>
    %56 = arith.cmpi sle, %52, %55 : vector<18x16x4xi32>
    %57 = arith.andi %54, %56 : vector<18x16x4xi1>
    %cst_77 = arith.constant 0.000000e+00 : f32
    %58 = vector.broadcast %cst_77 : f32 to vector<18x16x4xf32>
    %59 = arith.select %57, %48, %58 : vector<18x16x4xi1>, vector<18x16x4xf32>
    %c0_78 = arith.constant 0 : index
    %c0_79 = arith.constant 0 : index
    %c1_80 = arith.constant 1 : index
    %c0_81 = arith.constant 0 : index
    %60 = vector.load %arg7[%c0_78, %c0_79, %c1_80, %c0_81] : memref<1x18x18x4xf32, #tpu.memory_space<vmem>>, vector<1x18x16x4xf32>
    %61 = vector.shape_cast %60 : vector<1x18x16x4xf32> to vector<18x16x4xf32>
    %62 = vector.shape_cast %59 : vector<18x16x4xf32> to vector<1x18x16x4xf32>
    tpu.vector_store %arg7[%c0_78, %c0_79, %c1_80, %c0_81], %62 {strides = array<i32>} : memref<1x18x18x4xf32, #tpu.memory_space<vmem>>, vector<1x18x16x4xf32>,
    %cst_82 = arith.constant 0.000000e+00 : f32
    %63 = vector.broadcast %cst_82 : f32 to vector<18x1x4xf32>
    %c0_83 = arith.constant 0 : index
    %c0_84 = arith.constant 0 : index
    %c0_85 = arith.constant 0 : index
    %c0_86 = arith.constant 0 : index
    %64 = vector.load %arg7[%c0_83, %c0_84, %c0_85, %c0_86] : memref<1x18x18x4xf32, #tpu.memory_space<vmem>>, vector<1x18x1x4xf32>
    %65 = vector.shape_cast %64 : vector<1x18x1x4xf32> to vector<18x1x4xf32>
    %66 = vector.shape_cast %63 : vector<18x1x4xf32> to vector<1x18x1x4xf32>
    tpu.vector_store %arg7[%c0_83, %c0_84, %c0_85, %c0_86], %66 {strides = array<i32>} : memref<1x18x18x4xf32, #tpu.memory_space<vmem>>, vector<1x18x1x4xf32>,
    %c0_87 = arith.constant 0 : index
    %c0_88 = arith.constant 0 : index
    %c17_89 = arith.constant 17 : index
    %c0_90 = arith.constant 0 : index
    %67 = vector.load %arg7[%c0_87, %c0_88, %c17_89, %c0_90] : memref<1x18x18x4xf32, #tpu.memory_space<vmem>>, vector<1x18x1x4xf32>
    %68 = vector.shape_cast %67 : vector<1x18x1x4xf32> to vector<18x1x4xf32>
    %69 = vector.shape_cast %63 : vector<18x1x4xf32> to vector<1x18x1x4xf32>
    tpu.vector_store %arg7[%c0_87, %c0_88, %c17_89, %c0_90], %69 {strides = array<i32>} : memref<1x18x18x4xf32, #tpu.memory_space<vmem>>, vector<1x18x1x4xf32>,
    return
  }
  func.func @transform_0(%arg0: i32, %arg1: i32) -> (i32, i32, i32, i32) {
    %c0_i32 = arith.constant 0 : i32
    %c0_i32_0 = arith.constant 0 : i32
    %c0_i32_1 = arith.constant 0 : i32
    return %arg0, %arg1, %c0_i32, %c0_i32_0 : i32, i32, i32, i32
  }
  func.func @transform_1(%arg0: i32, %arg1: i32) -> (i32, i32, i32, i32) {
    %c18_i32 = arith.constant 18 : i32
    %0 = arith.muli %arg1, %c18_i32 : i32
    %c1_i32 = arith.constant 1 : i32
    %1 = arith.subi %0, %c1_i32 : i32
    %c0_i32 = arith.constant 0 : i32
    %2 = arith.maxsi %1, %c0_i32 : i32
    %c0_i32_0 = arith.constant 0 : i32
    %c0_i32_1 = arith.constant 0 : i32
    %c0_i32_2 = arith.constant 0 : i32
    return %arg0, %2, %c0_i32_0, %c0_i32_1 : i32, i32, i32, i32
  }
  func.func @transform_2(%arg0: i32, %arg1: i32) -> (i32, i32, i32, i32) {
    %c18_i32 = arith.constant 18 : i32
    %0 = arith.muli %arg1, %c18_i32 : i32
    %c18_i32_0 = arith.constant 18 : i32
    %1 = arith.addi %0, %c18_i32_0 : i32
    %c17_i32 = arith.constant 17 : i32
    %2 = arith.minsi %1, %c17_i32 : i32
    %c0_i32 = arith.constant 0 : i32
    %c0_i32_1 = arith.constant 0 : i32
    %c0_i32_2 = arith.constant 0 : i32
    return %arg0, %2, %c0_i32, %c0_i32_1 : i32, i32, i32, i32
  }
  func.func @transform_3(%arg0: i32, %arg1: i32) -> (i32, i32) {
    %c0_i32 = arith.constant 0 : i32
    %c0_i32_0 = arith.constant 0 : i32
    %c0_i32_1 = arith.constant 0 : i32
    return %c0_i32, %c0_i32_0 : i32, i32
  }
  func.func @transform_4(%arg0: i32, %arg1: i32) -> (i32, i32) {
    %c0_i32 = arith.constant 0 : i32
    %c0_i32_0 = arith.constant 0 : i32
    %c0_i32_1 = arith.constant 0 : i32
    return %c0_i32, %c0_i32_0 : i32, i32
  }
  func.func @transform_5(%arg0: i32, %arg1: i32) -> (i32, i32, i32, i32) {
    %c0_i32 = arith.constant 0 : i32
    %c0_i32_0 = arith.constant 0 : i32
    %c0_i32_1 = arith.constant 0 : i32
    return %arg0, %arg1, %c0_i32, %c0_i32_0 : i32, i32, i32, i32
  }
}

module attributes {stable_mosaic.version = 11 : i64} {
  func.func @_conv3x3_cond_relu_kernel(%arg0: i32, %arg1: i32, %arg2: memref<1x18x18x4xf32, #tpu.memory_space<vmem>>, %arg3: memref<1x1x18x4xf32, #tpu.memory_space<vmem>>, %arg4: memref<1x1x18x4xf32, #tpu.memory_space<vmem>>, %arg5: memref<1x18x18x4xf32, #tpu.memory_space<vmem>>, %arg6: memref<1x1x18x4xf32, #tpu.memory_space<vmem>>, %arg7: memref<1x1x18x4xf32, #tpu.memory_space<vmem>>, %arg8: memref<72x4xf32, #tpu.memory_space<vmem>>, %arg9: memref<1x4xf32, #tpu.memory_space<vmem>>, %arg10: memref<1x18x18x4xf32, #tpu.memory_space<vmem>>, %arg11: memref<18x16x72xf32, #tpu.memory_space<vmem>>) attributes {dimension_semantics = [#tpu.dimension_semantics<parallel>, #tpu.dimension_semantics<parallel>], iteration_bounds = array<i64: 2, 1>, scalar_prefetch = 0 : i64, scratch_operands = 1 : i64, tpu.core_type = #tpu.core_type<tc>, window_params = [{transform_indices = @transform_0, window_bounds = array<i64: 1, 18, 18, 4>}, {transform_indices = @transform_1, window_bounds = array<i64: 1, 1, 18, 4>}, {transform_indices = @transform_2, window_bounds = array<i64: 1, 1, 18, 4>}, {transform_indices = @transform_3, window_bounds = array<i64: 1, 18, 18, 4>}, {transform_indices = @transform_4, window_bounds = array<i64: 1, 1, 18, 4>}, {transform_indices = @transform_5, window_bounds = array<i64: 1, 1, 18, 4>}, {pipeline_mode = #tpu.pipeline_mode<synchronous>, transform_indices = @transform_6, window_bounds = array<i64: 72, 4>}, {pipeline_mode = #tpu.pipeline_mode<synchronous>, transform_indices = @transform_7, window_bounds = array<i64: 1, 4>}, {transform_indices = @transform_8, window_bounds = array<i64: 1, 18, 18, 4>}]} {
    %c0 = arith.constant 0 : index
    %c0_0 = arith.constant 0 : index
    %c0_1 = arith.constant 0 : index
    %c0_2 = arith.constant 0 : index
    %0 = vector.load %arg2[%c0, %c0_0, %c0_1, %c0_2] : memref<1x18x18x4xf32, #tpu.memory_space<vmem>>, vector<1x18x16x4xf32>
    %1 = vector.shape_cast %0 : vector<1x18x16x4xf32> to vector<18x16x4xf32>
    %c0_3 = arith.constant 0 : index
    %c0_4 = arith.constant 0 : index
    %c0_5 = arith.constant 0 : index
    %c0_6 = arith.constant 0 : index
    %2 = vector.load %arg3[%c0_3, %c0_4, %c0_5, %c0_6] : memref<1x1x18x4xf32, #tpu.memory_space<vmem>>, vector<1x1x16x4xf32>
    %3 = vector.shape_cast %2 : vector<1x1x16x4xf32> to vector<1x16x4xf32>
    %c0_7 = arith.constant 0 : index
    %c0_8 = arith.constant 0 : index
    %c0_9 = arith.constant 0 : index
    %c0_10 = arith.constant 0 : index
    %4 = vector.load %arg4[%c0_7, %c0_8, %c0_9, %c0_10] : memref<1x1x18x4xf32, #tpu.memory_space<vmem>>, vector<1x1x16x4xf32>
    %5 = vector.shape_cast %4 : vector<1x1x16x4xf32> to vector<1x16x4xf32>
    %c0_11 = arith.constant 0 : index
    %c0_12 = arith.constant 0 : index
    %c0_13 = arith.constant 0 : index
    %6 = vector.load %arg11[%c0_11, %c0_12, %c0_13] : memref<18x16x72xf32, #tpu.memory_space<vmem>>, vector<1x16x4xf32>
    tpu.vector_store %arg11[%c0_11, %c0_12, %c0_13], %3 {strides = array<i32>} : memref<18x16x72xf32, #tpu.memory_space<vmem>>, vector<1x16x4xf32>,
    %7 = vector.extract_strided_slice %1 {offsets = [0, 0, 0], sizes = [17, 16, 4], strides = [1, 1, 1]} : vector<18x16x4xf32> to vector<17x16x4xf32>
    %c1 = arith.constant 1 : index
    %c0_14 = arith.constant 0 : index
    %c0_15 = arith.constant 0 : index
    %8 = vector.load %arg11[%c1, %c0_14, %c0_15] : memref<18x16x72xf32, #tpu.memory_space<vmem>>, vector<17x16x4xf32>
    tpu.vector_store %arg11[%c1, %c0_14, %c0_15], %7 {strides = array<i32>} : memref<18x16x72xf32, #tpu.memory_space<vmem>>, vector<17x16x4xf32>,
    %c0_16 = arith.constant 0 : index
    %c0_17 = arith.constant 0 : index
    %c12 = arith.constant 12 : index
    %9 = vector.load %arg11[%c0_16, %c0_17, %c12] : memref<18x16x72xf32, #tpu.memory_space<vmem>>, vector<18x16x4xf32>
    tpu.vector_store %arg11[%c0_16, %c0_17, %c12], %1 {strides = array<i32>} : memref<18x16x72xf32, #tpu.memory_space<vmem>>, vector<18x16x4xf32>,
    %10 = vector.extract_strided_slice %1 {offsets = [1, 0, 0], sizes = [17, 16, 4], strides = [1, 1, 1]} : vector<18x16x4xf32> to vector<17x16x4xf32>
    %c0_18 = arith.constant 0 : index
    %c0_19 = arith.constant 0 : index
    %c24 = arith.constant 24 : index
    %11 = vector.load %arg11[%c0_18, %c0_19, %c24] : memref<18x16x72xf32, #tpu.memory_space<vmem>>, vector<17x16x4xf32>
    tpu.vector_store %arg11[%c0_18, %c0_19, %c24], %10 {strides = array<i32>} : memref<18x16x72xf32, #tpu.memory_space<vmem>>, vector<17x16x4xf32>,
    %c17 = arith.constant 17 : index
    %c0_20 = arith.constant 0 : index
    %c24_21 = arith.constant 24 : index
    %12 = vector.load %arg11[%c17, %c0_20, %c24_21] : memref<18x16x72xf32, #tpu.memory_space<vmem>>, vector<1x16x4xf32>
    tpu.vector_store %arg11[%c17, %c0_20, %c24_21], %5 {strides = array<i32>} : memref<18x16x72xf32, #tpu.memory_space<vmem>>, vector<1x16x4xf32>,
    %c0_22 = arith.constant 0 : index
    %c0_23 = arith.constant 0 : index
    %c1_24 = arith.constant 1 : index
    %c0_25 = arith.constant 0 : index
    %13 = vector.load %arg2[%c0_22, %c0_23, %c1_24, %c0_25] : memref<1x18x18x4xf32, #tpu.memory_space<vmem>>, vector<1x18x16x4xf32>
    %14 = vector.shape_cast %13 : vector<1x18x16x4xf32> to vector<18x16x4xf32>
    %c0_26 = arith.constant 0 : index
    %c0_27 = arith.constant 0 : index
    %c1_28 = arith.constant 1 : index
    %c0_29 = arith.constant 0 : index
    %15 = vector.load %arg3[%c0_26, %c0_27, %c1_28, %c0_29] : memref<1x1x18x4xf32, #tpu.memory_space<vmem>>, vector<1x1x16x4xf32>
    %16 = vector.shape_cast %15 : vector<1x1x16x4xf32> to vector<1x16x4xf32>
    %c0_30 = arith.constant 0 : index
    %c0_31 = arith.constant 0 : index
    %c1_32 = arith.constant 1 : index
    %c0_33 = arith.constant 0 : index
    %17 = vector.load %arg4[%c0_30, %c0_31, %c1_32, %c0_33] : memref<1x1x18x4xf32, #tpu.memory_space<vmem>>, vector<1x1x16x4xf32>
    %18 = vector.shape_cast %17 : vector<1x1x16x4xf32> to vector<1x16x4xf32>
    %c0_34 = arith.constant 0 : index
    %c0_35 = arith.constant 0 : index
    %c4 = arith.constant 4 : index
    %19 = vector.load %arg11[%c0_34, %c0_35, %c4] : memref<18x16x72xf32, #tpu.memory_space<vmem>>, vector<1x16x4xf32>
    tpu.vector_store %arg11[%c0_34, %c0_35, %c4], %16 {strides = array<i32>} : memref<18x16x72xf32, #tpu.memory_space<vmem>>, vector<1x16x4xf32>,
    %20 = vector.extract_strided_slice %14 {offsets = [0, 0, 0], sizes = [17, 16, 4], strides = [1, 1, 1]} : vector<18x16x4xf32> to vector<17x16x4xf32>
    %c1_36 = arith.constant 1 : index
    %c0_37 = arith.constant 0 : index
    %c4_38 = arith.constant 4 : index
    %21 = vector.load %arg11[%c1_36, %c0_37, %c4_38] : memref<18x16x72xf32, #tpu.memory_space<vmem>>, vector<17x16x4xf32>
    tpu.vector_store %arg11[%c1_36, %c0_37, %c4_38], %20 {strides = array<i32>} : memref<18x16x72xf32, #tpu.memory_space<vmem>>, vector<17x16x4xf32>,
    %c0_39 = arith.constant 0 : index
    %c0_40 = arith.constant 0 : index
    %c16 = arith.constant 16 : index
    %22 = vector.load %arg11[%c0_39, %c0_40, %c16] : memref<18x16x72xf32, #tpu.memory_space<vmem>>, vector<18x16x4xf32>
    tpu.vector_store %arg11[%c0_39, %c0_40, %c16], %14 {strides = array<i32>} : memref<18x16x72xf32, #tpu.memory_space<vmem>>, vector<18x16x4xf32>,
    %23 = vector.extract_strided_slice %14 {offsets = [1, 0, 0], sizes = [17, 16, 4], strides = [1, 1, 1]} : vector<18x16x4xf32> to vector<17x16x4xf32>
    %c0_41 = arith.constant 0 : index
    %c0_42 = arith.constant 0 : index
    %c28 = arith.constant 28 : index
    %24 = vector.load %arg11[%c0_41, %c0_42, %c28] : memref<18x16x72xf32, #tpu.memory_space<vmem>>, vector<17x16x4xf32>
    tpu.vector_store %arg11[%c0_41, %c0_42, %c28], %23 {strides = array<i32>} : memref<18x16x72xf32, #tpu.memory_space<vmem>>, vector<17x16x4xf32>,
    %c17_43 = arith.constant 17 : index
    %c0_44 = arith.constant 0 : index
    %c28_45 = arith.constant 28 : index
    %25 = vector.load %arg11[%c17_43, %c0_44, %c28_45] : memref<18x16x72xf32, #tpu.memory_space<vmem>>, vector<1x16x4xf32>
    tpu.vector_store %arg11[%c17_43, %c0_44, %c28_45], %18 {strides = array<i32>} : memref<18x16x72xf32, #tpu.memory_space<vmem>>, vector<1x16x4xf32>,
    %c0_46 = arith.constant 0 : index
    %c0_47 = arith.constant 0 : index
    %c2 = arith.constant 2 : index
    %c0_48 = arith.constant 0 : index
    %26 = vector.load %arg2[%c0_46, %c0_47, %c2, %c0_48] : memref<1x18x18x4xf32, #tpu.memory_space<vmem>>, vector<1x18x16x4xf32>
    %27 = vector.shape_cast %26 : vector<1x18x16x4xf32> to vector<18x16x4xf32>
    %c0_49 = arith.constant 0 : index
    %c0_50 = arith.constant 0 : index
    %c2_51 = arith.constant 2 : index
    %c0_52 = arith.constant 0 : index
    %28 = vector.load %arg3[%c0_49, %c0_50, %c2_51, %c0_52] : memref<1x1x18x4xf32, #tpu.memory_space<vmem>>, vector<1x1x16x4xf32>
    %29 = vector.shape_cast %28 : vector<1x1x16x4xf32> to vector<1x16x4xf32>
    %c0_53 = arith.constant 0 : index
    %c0_54 = arith.constant 0 : index
    %c2_55 = arith.constant 2 : index
    %c0_56 = arith.constant 0 : index
    %30 = vector.load %arg4[%c0_53, %c0_54, %c2_55, %c0_56] : memref<1x1x18x4xf32, #tpu.memory_space<vmem>>, vector<1x1x16x4xf32>
    %31 = vector.shape_cast %30 : vector<1x1x16x4xf32> to vector<1x16x4xf32>
    %c0_57 = arith.constant 0 : index
    %c0_58 = arith.constant 0 : index
    %c8 = arith.constant 8 : index
    %32 = vector.load %arg11[%c0_57, %c0_58, %c8] : memref<18x16x72xf32, #tpu.memory_space<vmem>>, vector<1x16x4xf32>
    tpu.vector_store %arg11[%c0_57, %c0_58, %c8], %29 {strides = array<i32>} : memref<18x16x72xf32, #tpu.memory_space<vmem>>, vector<1x16x4xf32>,
    %33 = vector.extract_strided_slice %27 {offsets = [0, 0, 0], sizes = [17, 16, 4], strides = [1, 1, 1]} : vector<18x16x4xf32> to vector<17x16x4xf32>
    %c1_59 = arith.constant 1 : index
    %c0_60 = arith.constant 0 : index
    %c8_61 = arith.constant 8 : index
    %34 = vector.load %arg11[%c1_59, %c0_60, %c8_61] : memref<18x16x72xf32, #tpu.memory_space<vmem>>, vector<17x16x4xf32>
    tpu.vector_store %arg11[%c1_59, %c0_60, %c8_61], %33 {strides = array<i32>} : memref<18x16x72xf32, #tpu.memory_space<vmem>>, vector<17x16x4xf32>,
    %c0_62 = arith.constant 0 : index
    %c0_63 = arith.constant 0 : index
    %c20 = arith.constant 20 : index
    %35 = vector.load %arg11[%c0_62, %c0_63, %c20] : memref<18x16x72xf32, #tpu.memory_space<vmem>>, vector<18x16x4xf32>
    tpu.vector_store %arg11[%c0_62, %c0_63, %c20], %27 {strides = array<i32>} : memref<18x16x72xf32, #tpu.memory_space<vmem>>, vector<18x16x4xf32>,
    %36 = vector.extract_strided_slice %27 {offsets = [1, 0, 0], sizes = [17, 16, 4], strides = [1, 1, 1]} : vector<18x16x4xf32> to vector<17x16x4xf32>
    %c0_64 = arith.constant 0 : index
    %c0_65 = arith.constant 0 : index
    %c32 = arith.constant 32 : index
    %37 = vector.load %arg11[%c0_64, %c0_65, %c32] : memref<18x16x72xf32, #tpu.memory_space<vmem>>, vector<17x16x4xf32>
    tpu.vector_store %arg11[%c0_64, %c0_65, %c32], %36 {strides = array<i32>} : memref<18x16x72xf32, #tpu.memory_space<vmem>>, vector<17x16x4xf32>,
    %c17_66 = arith.constant 17 : index
    %c0_67 = arith.constant 0 : index
    %c32_68 = arith.constant 32 : index
    %38 = vector.load %arg11[%c17_66, %c0_67, %c32_68] : memref<18x16x72xf32, #tpu.memory_space<vmem>>, vector<1x16x4xf32>
    tpu.vector_store %arg11[%c17_66, %c0_67, %c32_68], %31 {strides = array<i32>} : memref<18x16x72xf32, #tpu.memory_space<vmem>>, vector<1x16x4xf32>,
    %c0_69 = arith.constant 0 : index
    %c0_70 = arith.constant 0 : index
    %c0_71 = arith.constant 0 : index
    %c0_72 = arith.constant 0 : index
    %39 = vector.load %arg5[%c0_69, %c0_70, %c0_71, %c0_72] : memref<1x18x18x4xf32, #tpu.memory_space<vmem>>, vector<1x18x16x4xf32>
    %40 = vector.shape_cast %39 : vector<1x18x16x4xf32> to vector<18x16x4xf32>
    %c0_73 = arith.constant 0 : index
    %c0_74 = arith.constant 0 : index
    %c0_75 = arith.constant 0 : index
    %c0_76 = arith.constant 0 : index
    %41 = vector.load %arg6[%c0_73, %c0_74, %c0_75, %c0_76] : memref<1x1x18x4xf32, #tpu.memory_space<vmem>>, vector<1x1x16x4xf32>
    %42 = vector.shape_cast %41 : vector<1x1x16x4xf32> to vector<1x16x4xf32>
    %c0_77 = arith.constant 0 : index
    %c0_78 = arith.constant 0 : index
    %c0_79 = arith.constant 0 : index
    %c0_80 = arith.constant 0 : index
    %43 = vector.load %arg7[%c0_77, %c0_78, %c0_79, %c0_80] : memref<1x1x18x4xf32, #tpu.memory_space<vmem>>, vector<1x1x16x4xf32>
    %44 = vector.shape_cast %43 : vector<1x1x16x4xf32> to vector<1x16x4xf32>
    %c0_81 = arith.constant 0 : index
    %c0_82 = arith.constant 0 : index
    %c36 = arith.constant 36 : index
    %45 = vector.load %arg11[%c0_81, %c0_82, %c36] : memref<18x16x72xf32, #tpu.memory_space<vmem>>, vector<1x16x4xf32>
    tpu.vector_store %arg11[%c0_81, %c0_82, %c36], %42 {strides = array<i32>} : memref<18x16x72xf32, #tpu.memory_space<vmem>>, vector<1x16x4xf32>,
    %46 = vector.extract_strided_slice %40 {offsets = [0, 0, 0], sizes = [17, 16, 4], strides = [1, 1, 1]} : vector<18x16x4xf32> to vector<17x16x4xf32>
    %c1_83 = arith.constant 1 : index
    %c0_84 = arith.constant 0 : index
    %c36_85 = arith.constant 36 : index
    %47 = vector.load %arg11[%c1_83, %c0_84, %c36_85] : memref<18x16x72xf32, #tpu.memory_space<vmem>>, vector<17x16x4xf32>
    tpu.vector_store %arg11[%c1_83, %c0_84, %c36_85], %46 {strides = array<i32>} : memref<18x16x72xf32, #tpu.memory_space<vmem>>, vector<17x16x4xf32>,
    %c0_86 = arith.constant 0 : index
    %c0_87 = arith.constant 0 : index
    %c48 = arith.constant 48 : index
    %48 = vector.load %arg11[%c0_86, %c0_87, %c48] : memref<18x16x72xf32, #tpu.memory_space<vmem>>, vector<18x16x4xf32>
    tpu.vector_store %arg11[%c0_86, %c0_87, %c48], %40 {strides = array<i32>} : memref<18x16x72xf32, #tpu.memory_space<vmem>>, vector<18x16x4xf32>,
    %49 = vector.extract_strided_slice %40 {offsets = [1, 0, 0], sizes = [17, 16, 4], strides = [1, 1, 1]} : vector<18x16x4xf32> to vector<17x16x4xf32>
    %c0_88 = arith.constant 0 : index
    %c0_89 = arith.constant 0 : index
    %c60 = arith.constant 60 : index
    %50 = vector.load %arg11[%c0_88, %c0_89, %c60] : memref<18x16x72xf32, #tpu.memory_space<vmem>>, vector<17x16x4xf32>
    tpu.vector_store %arg11[%c0_88, %c0_89, %c60], %49 {strides = array<i32>} : memref<18x16x72xf32, #tpu.memory_space<vmem>>, vector<17x16x4xf32>,
    %c17_90 = arith.constant 17 : index
    %c0_91 = arith.constant 0 : index
    %c60_92 = arith.constant 60 : index
    %51 = vector.load %arg11[%c17_90, %c0_91, %c60_92] : memref<18x16x72xf32, #tpu.memory_space<vmem>>, vector<1x16x4xf32>
    tpu.vector_store %arg11[%c17_90, %c0_91, %c60_92], %44 {strides = array<i32>} : memref<18x16x72xf32, #tpu.memory_space<vmem>>, vector<1x16x4xf32>,
    %c0_93 = arith.constant 0 : index
    %c0_94 = arith.constant 0 : index
    %c1_95 = arith.constant 1 : index
    %c0_96 = arith.constant 0 : index
    %52 = vector.load %arg5[%c0_93, %c0_94, %c1_95, %c0_96] : memref<1x18x18x4xf32, #tpu.memory_space<vmem>>, vector<1x18x16x4xf32>
    %53 = vector.shape_cast %52 : vector<1x18x16x4xf32> to vector<18x16x4xf32>
    %c0_97 = arith.constant 0 : index
    %c0_98 = arith.constant 0 : index
    %c1_99 = arith.constant 1 : index
    %c0_100 = arith.constant 0 : index
    %54 = vector.load %arg6[%c0_97, %c0_98, %c1_99, %c0_100] : memref<1x1x18x4xf32, #tpu.memory_space<vmem>>, vector<1x1x16x4xf32>
    %55 = vector.shape_cast %54 : vector<1x1x16x4xf32> to vector<1x16x4xf32>
    %c0_101 = arith.constant 0 : index
    %c0_102 = arith.constant 0 : index
    %c1_103 = arith.constant 1 : index
    %c0_104 = arith.constant 0 : index
    %56 = vector.load %arg7[%c0_101, %c0_102, %c1_103, %c0_104] : memref<1x1x18x4xf32, #tpu.memory_space<vmem>>, vector<1x1x16x4xf32>
    %57 = vector.shape_cast %56 : vector<1x1x16x4xf32> to vector<1x16x4xf32>
    %c0_105 = arith.constant 0 : index
    %c0_106 = arith.constant 0 : index
    %c40 = arith.constant 40 : index
    %58 = vector.load %arg11[%c0_105, %c0_106, %c40] : memref<18x16x72xf32, #tpu.memory_space<vmem>>, vector<1x16x4xf32>
    tpu.vector_store %arg11[%c0_105, %c0_106, %c40], %55 {strides = array<i32>} : memref<18x16x72xf32, #tpu.memory_space<vmem>>, vector<1x16x4xf32>,
    %59 = vector.extract_strided_slice %53 {offsets = [0, 0, 0], sizes = [17, 16, 4], strides = [1, 1, 1]} : vector<18x16x4xf32> to vector<17x16x4xf32>
    %c1_107 = arith.constant 1 : index
    %c0_108 = arith.constant 0 : index
    %c40_109 = arith.constant 40 : index
    %60 = vector.load %arg11[%c1_107, %c0_108, %c40_109] : memref<18x16x72xf32, #tpu.memory_space<vmem>>, vector<17x16x4xf32>
    tpu.vector_store %arg11[%c1_107, %c0_108, %c40_109], %59 {strides = array<i32>} : memref<18x16x72xf32, #tpu.memory_space<vmem>>, vector<17x16x4xf32>,
    %c0_110 = arith.constant 0 : index
    %c0_111 = arith.constant 0 : index
    %c52 = arith.constant 52 : index
    %61 = vector.load %arg11[%c0_110, %c0_111, %c52] : memref<18x16x72xf32, #tpu.memory_space<vmem>>, vector<18x16x4xf32>
    tpu.vector_store %arg11[%c0_110, %c0_111, %c52], %53 {strides = array<i32>} : memref<18x16x72xf32, #tpu.memory_space<vmem>>, vector<18x16x4xf32>,
    %62 = vector.extract_strided_slice %53 {offsets = [1, 0, 0], sizes = [17, 16, 4], strides = [1, 1, 1]} : vector<18x16x4xf32> to vector<17x16x4xf32>
    %c0_112 = arith.constant 0 : index
    %c0_113 = arith.constant 0 : index
    %c64 = arith.constant 64 : index
    %63 = vector.load %arg11[%c0_112, %c0_113, %c64] : memref<18x16x72xf32, #tpu.memory_space<vmem>>, vector<17x16x4xf32>
    tpu.vector_store %arg11[%c0_112, %c0_113, %c64], %62 {strides = array<i32>} : memref<18x16x72xf32, #tpu.memory_space<vmem>>, vector<17x16x4xf32>,
    %c17_114 = arith.constant 17 : index
    %c0_115 = arith.constant 0 : index
    %c64_116 = arith.constant 64 : index
    %64 = vector.load %arg11[%c17_114, %c0_115, %c64_116] : memref<18x16x72xf32, #tpu.memory_space<vmem>>, vector<1x16x4xf32>
    tpu.vector_store %arg11[%c17_114, %c0_115, %c64_116], %57 {strides = array<i32>} : memref<18x16x72xf32, #tpu.memory_space<vmem>>, vector<1x16x4xf32>,
    %c0_117 = arith.constant 0 : index
    %c0_118 = arith.constant 0 : index
    %c2_119 = arith.constant 2 : index
    %c0_120 = arith.constant 0 : index
    %65 = vector.load %arg5[%c0_117, %c0_118, %c2_119, %c0_120] : memref<1x18x18x4xf32, #tpu.memory_space<vmem>>, vector<1x18x16x4xf32>
    %66 = vector.shape_cast %65 : vector<1x18x16x4xf32> to vector<18x16x4xf32>
    %c0_121 = arith.constant 0 : index
    %c0_122 = arith.constant 0 : index
    %c2_123 = arith.constant 2 : index
    %c0_124 = arith.constant 0 : index
    %67 = vector.load %arg6[%c0_121, %c0_122, %c2_123, %c0_124] : memref<1x1x18x4xf32, #tpu.memory_space<vmem>>, vector<1x1x16x4xf32>
    %68 = vector.shape_cast %67 : vector<1x1x16x4xf32> to vector<1x16x4xf32>
    %c0_125 = arith.constant 0 : index
    %c0_126 = arith.constant 0 : index
    %c2_127 = arith.constant 2 : index
    %c0_128 = arith.constant 0 : index
    %69 = vector.load %arg7[%c0_125, %c0_126, %c2_127, %c0_128] : memref<1x1x18x4xf32, #tpu.memory_space<vmem>>, vector<1x1x16x4xf32>
    %70 = vector.shape_cast %69 : vector<1x1x16x4xf32> to vector<1x16x4xf32>
    %c0_129 = arith.constant 0 : index
    %c0_130 = arith.constant 0 : index
    %c44 = arith.constant 44 : index
    %71 = vector.load %arg11[%c0_129, %c0_130, %c44] : memref<18x16x72xf32, #tpu.memory_space<vmem>>, vector<1x16x4xf32>
    tpu.vector_store %arg11[%c0_129, %c0_130, %c44], %68 {strides = array<i32>} : memref<18x16x72xf32, #tpu.memory_space<vmem>>, vector<1x16x4xf32>,
    %72 = vector.extract_strided_slice %66 {offsets = [0, 0, 0], sizes = [17, 16, 4], strides = [1, 1, 1]} : vector<18x16x4xf32> to vector<17x16x4xf32>
    %c1_131 = arith.constant 1 : index
    %c0_132 = arith.constant 0 : index
    %c44_133 = arith.constant 44 : index
    %73 = vector.load %arg11[%c1_131, %c0_132, %c44_133] : memref<18x16x72xf32, #tpu.memory_space<vmem>>, vector<17x16x4xf32>
    tpu.vector_store %arg11[%c1_131, %c0_132, %c44_133], %72 {strides = array<i32>} : memref<18x16x72xf32, #tpu.memory_space<vmem>>, vector<17x16x4xf32>,
    %c0_134 = arith.constant 0 : index
    %c0_135 = arith.constant 0 : index
    %c56 = arith.constant 56 : index
    %74 = vector.load %arg11[%c0_134, %c0_135, %c56] : memref<18x16x72xf32, #tpu.memory_space<vmem>>, vector<18x16x4xf32>
    tpu.vector_store %arg11[%c0_134, %c0_135, %c56], %66 {strides = array<i32>} : memref<18x16x72xf32, #tpu.memory_space<vmem>>, vector<18x16x4xf32>,
    %75 = vector.extract_strided_slice %66 {offsets = [1, 0, 0], sizes = [17, 16, 4], strides = [1, 1, 1]} : vector<18x16x4xf32> to vector<17x16x4xf32>
    %c0_136 = arith.constant 0 : index
    %c0_137 = arith.constant 0 : index
    %c68 = arith.constant 68 : index
    %76 = vector.load %arg11[%c0_136, %c0_137, %c68] : memref<18x16x72xf32, #tpu.memory_space<vmem>>, vector<17x16x4xf32>
    tpu.vector_store %arg11[%c0_136, %c0_137, %c68], %75 {strides = array<i32>} : memref<18x16x72xf32, #tpu.memory_space<vmem>>, vector<17x16x4xf32>,
    %c17_138 = arith.constant 17 : index
    %c0_139 = arith.constant 0 : index
    %c68_140 = arith.constant 68 : index
    %77 = vector.load %arg11[%c17_138, %c0_139, %c68_140] : memref<18x16x72xf32, #tpu.memory_space<vmem>>, vector<1x16x4xf32>
    tpu.vector_store %arg11[%c17_138, %c0_139, %c68_140], %70 {strides = array<i32>} : memref<18x16x72xf32, #tpu.memory_space<vmem>>, vector<1x16x4xf32>,
    %c0_141 = arith.constant 0 : index
    %c0_142 = arith.constant 0 : index
    %c0_143 = arith.constant 0 : index
    %78 = vector.load %arg11[%c0_141, %c0_142, %c0_143] : memref<18x16x72xf32, #tpu.memory_space<vmem>>, vector<18x16x72xf32>
    %79 = vector.shape_cast %78 : vector<18x16x72xf32> to vector<288x72xf32>
    %c0_144 = arith.constant 0 : index
    %c0_145 = arith.constant 0 : index
    %80 = vector.load %arg8[%c0_144, %c0_145] : memref<72x4xf32, #tpu.memory_space<vmem>>, vector<72x4xf32>
    %cst = arith.constant dense<0.000000e+00> : vector<288x4xf32>
    %81 = tpu.matmul %79, %80, %cst {dimension_numbers = #tpu.dot_dimension_numbers<[1], [0], [0], [1], [0, 0, 1, 1], [], []>} : vector<288x72xf32>, vector<72x4xf32>, vector<288x4xf32> -> vector<288x4xf32>
    %c0_146 = arith.constant 0 : index
    %c0_147 = arith.constant 0 : index
    %82 = vector.load %arg9[%c0_146, %c0_147] : memref<1x4xf32, #tpu.memory_space<vmem>>, vector<1x4xf32>
    %83 = vector.broadcast %82 : vector<1x4xf32> to vector<288x4xf32>
    %84 = arith.addf %81, %83 : vector<288x4xf32>
    %cst_148 = arith.constant 0.000000e+00 : f32
    %85 = vector.broadcast %cst_148 : f32 to vector<288x4xf32>
    %86 = arith.maximumf %84, %85 : vector<288x4xf32>
    %87 = vector.shape_cast %86 : vector<288x4xf32> to vector<18x16x4xf32>
    %c18_i32 = arith.constant 18 : i32
    %88 = arith.muli %arg1, %c18_i32 : i32
    %89 = tpu.iota {dimensions = array<i32: 0>} : vector<18x16x4xi32>
    %90 = vector.broadcast %88 : i32 to vector<18x16x4xi32>
    %91 = arith.addi %90, %89 : vector<18x16x4xi32>
    %c1_i32 = arith.constant 1 : i32
    %92 = vector.broadcast %c1_i32 : i32 to vector<18x16x4xi32>
    %93 = arith.cmpi sge, %91, %92 : vector<18x16x4xi32>
    %c16_i32 = arith.constant 16 : i32
    %94 = vector.broadcast %c16_i32 : i32 to vector<18x16x4xi32>
    %95 = arith.cmpi sle, %91, %94 : vector<18x16x4xi32>
    %96 = arith.andi %93, %95 : vector<18x16x4xi1>
    %cst_149 = arith.constant 0.000000e+00 : f32
    %97 = vector.broadcast %cst_149 : f32 to vector<18x16x4xf32>
    %98 = arith.select %96, %87, %97 : vector<18x16x4xi1>, vector<18x16x4xf32>
    %c0_150 = arith.constant 0 : index
    %c0_151 = arith.constant 0 : index
    %c1_152 = arith.constant 1 : index
    %c0_153 = arith.constant 0 : index
    %99 = vector.load %arg10[%c0_150, %c0_151, %c1_152, %c0_153] : memref<1x18x18x4xf32, #tpu.memory_space<vmem>>, vector<1x18x16x4xf32>
    %100 = vector.shape_cast %99 : vector<1x18x16x4xf32> to vector<18x16x4xf32>
    %101 = vector.shape_cast %98 : vector<18x16x4xf32> to vector<1x18x16x4xf32>
    tpu.vector_store %arg10[%c0_150, %c0_151, %c1_152, %c0_153], %101 {strides = array<i32>} : memref<1x18x18x4xf32, #tpu.memory_space<vmem>>, vector<1x18x16x4xf32>,
    %cst_154 = arith.constant 0.000000e+00 : f32
    %102 = vector.broadcast %cst_154 : f32 to vector<18x1x4xf32>
    %c0_155 = arith.constant 0 : index
    %c0_156 = arith.constant 0 : index
    %c0_157 = arith.constant 0 : index
    %c0_158 = arith.constant 0 : index
    %103 = vector.load %arg10[%c0_155, %c0_156, %c0_157, %c0_158] : memref<1x18x18x4xf32, #tpu.memory_space<vmem>>, vector<1x18x1x4xf32>
    %104 = vector.shape_cast %103 : vector<1x18x1x4xf32> to vector<18x1x4xf32>
    %105 = vector.shape_cast %102 : vector<18x1x4xf32> to vector<1x18x1x4xf32>
    tpu.vector_store %arg10[%c0_155, %c0_156, %c0_157, %c0_158], %105 {strides = array<i32>} : memref<1x18x18x4xf32, #tpu.memory_space<vmem>>, vector<1x18x1x4xf32>,
    %c0_159 = arith.constant 0 : index
    %c0_160 = arith.constant 0 : index
    %c17_161 = arith.constant 17 : index
    %c0_162 = arith.constant 0 : index
    %106 = vector.load %arg10[%c0_159, %c0_160, %c17_161, %c0_162] : memref<1x18x18x4xf32, #tpu.memory_space<vmem>>, vector<1x18x1x4xf32>
    %107 = vector.shape_cast %106 : vector<1x18x1x4xf32> to vector<18x1x4xf32>
    %108 = vector.shape_cast %102 : vector<18x1x4xf32> to vector<1x18x1x4xf32>
    tpu.vector_store %arg10[%c0_159, %c0_160, %c17_161, %c0_162], %108 {strides = array<i32>} : memref<1x18x18x4xf32, #tpu.memory_space<vmem>>, vector<1x18x1x4xf32>,
    return
  }
  func.func @transform_0(%arg0: i32, %arg1: i32) -> (i32, i32, i32, i32) {
    %c0_i32 = arith.constant 0 : i32
    %c0_i32_0 = arith.constant 0 : i32
    %c0_i32_1 = arith.constant 0 : i32
    return %arg0, %arg1, %c0_i32, %c0_i32_0 : i32, i32, i32, i32
  }
  func.func @transform_1(%arg0: i32, %arg1: i32) -> (i32, i32, i32, i32) {
    %c18_i32 = arith.constant 18 : i32
    %0 = arith.muli %arg1, %c18_i32 : i32
    %c1_i32 = arith.constant 1 : i32
    %1 = arith.subi %0, %c1_i32 : i32
    %c0_i32 = arith.constant 0 : i32
    %2 = arith.maxsi %1, %c0_i32 : i32
    %c0_i32_0 = arith.constant 0 : i32
    %c0_i32_1 = arith.constant 0 : i32
    %c0_i32_2 = arith.constant 0 : i32
    return %arg0, %2, %c0_i32_0, %c0_i32_1 : i32, i32, i32, i32
  }
  func.func @transform_2(%arg0: i32, %arg1: i32) -> (i32, i32, i32, i32) {
    %c18_i32 = arith.constant 18 : i32
    %0 = arith.muli %arg1, %c18_i32 : i32
    %c18_i32_0 = arith.constant 18 : i32
    %1 = arith.addi %0, %c18_i32_0 : i32
    %c17_i32 = arith.constant 17 : i32
    %2 = arith.minsi %1, %c17_i32 : i32
    %c0_i32 = arith.constant 0 : i32
    %c0_i32_1 = arith.constant 0 : i32
    %c0_i32_2 = arith.constant 0 : i32
    return %arg0, %2, %c0_i32, %c0_i32_1 : i32, i32, i32, i32
  }
  func.func @transform_3(%arg0: i32, %arg1: i32) -> (i32, i32, i32, i32) {
    %c0_i32 = arith.constant 0 : i32
    %c0_i32_0 = arith.constant 0 : i32
    %c0_i32_1 = arith.constant 0 : i32
    return %arg0, %arg1, %c0_i32, %c0_i32_0 : i32, i32, i32, i32
  }
  func.func @transform_4(%arg0: i32, %arg1: i32) -> (i32, i32, i32, i32) {
    %c18_i32 = arith.constant 18 : i32
    %0 = arith.muli %arg1, %c18_i32 : i32
    %c1_i32 = arith.constant 1 : i32
    %1 = arith.subi %0, %c1_i32 : i32
    %c0_i32 = arith.constant 0 : i32
    %2 = arith.maxsi %1, %c0_i32 : i32
    %c0_i32_0 = arith.constant 0 : i32
    %c0_i32_1 = arith.constant 0 : i32
    %c0_i32_2 = arith.constant 0 : i32
    return %arg0, %2, %c0_i32_0, %c0_i32_1 : i32, i32, i32, i32
  }
  func.func @transform_5(%arg0: i32, %arg1: i32) -> (i32, i32, i32, i32) {
    %c18_i32 = arith.constant 18 : i32
    %0 = arith.muli %arg1, %c18_i32 : i32
    %c18_i32_0 = arith.constant 18 : i32
    %1 = arith.addi %0, %c18_i32_0 : i32
    %c17_i32 = arith.constant 17 : i32
    %2 = arith.minsi %1, %c17_i32 : i32
    %c0_i32 = arith.constant 0 : i32
    %c0_i32_1 = arith.constant 0 : i32
    %c0_i32_2 = arith.constant 0 : i32
    return %arg0, %2, %c0_i32, %c0_i32_1 : i32, i32, i32, i32
  }
  func.func @transform_6(%arg0: i32, %arg1: i32) -> (i32, i32) {
    %c0_i32 = arith.constant 0 : i32
    %c0_i32_0 = arith.constant 0 : i32
    %c0_i32_1 = arith.constant 0 : i32
    return %c0_i32, %c0_i32_0 : i32, i32
  }
  func.func @transform_7(%arg0: i32, %arg1: i32) -> (i32, i32) {
    %c0_i32 = arith.constant 0 : i32
    %c0_i32_0 = arith.constant 0 : i32
    %c0_i32_1 = arith.constant 0 : i32
    return %c0_i32, %c0_i32_0 : i32, i32
  }
  func.func @transform_8(%arg0: i32, %arg1: i32) -> (i32, i32, i32, i32) {
    %c0_i32 = arith.constant 0 : i32
    %c0_i32_0 = arith.constant 0 : i32
    %c0_i32_1 = arith.constant 0 : i32
    return %arg0, %arg1, %c0_i32, %c0_i32_0 : i32, i32, i32, i32
  }
}

</mosaic_0001>

<llo_original>
// kernel: fwd.5
$region0: #{fwd.5}
  #allocation0 [shape = 'u32[]', space=smem, size = 0x4, offset = 0x4, fixed_abs, tag = 'smem constant byte address 0x4 - core index']
  #allocation1 [shape = 'u32[144,128]{1,0:T(1,128)}', space=vmem, size = 0x12000, scoped, tag = 'internal scratch']
  #allocation2 [shape = 'f32[18,16,36]{2,1,0:T(8,128)}', space=vmem, size = 0x24000, scoped, tag = 'scratch operand']
  %s0 = inlined_call_operand.vmem [shape: f32[2,18,18,4], index: 0, kind: input, shape index: {}, may-alias: {0,1,2}]
  %s1 = inlined_call_operand.vmem [shape: f32[2,18,18,4], index: 1, kind: input, shape index: {}, may-alias: {0,1,2}]
  %s2 = inlined_call_operand.vmem [shape: f32[2,18,18,4], index: 2, kind: input, shape index: {}, may-alias: {0,1,2}]
  %s3 = inlined_call_operand.vmem [shape: f32[36,4], index: 3, kind: input, shape index: {}]
  %s4 = inlined_call_operand.vmem [shape: f32[1,4], index: 4, kind: input, shape index: {}]
  %s5 = inlined_call_operand.vmem [shape: f32[2,18,18,4], index: 5, kind: output, shape index: {}]
  %s6 = sld [smem:[#allocation0]]
  $region53: #{fwd.5} parent=0
    _
  %s8 = ssub.s32 1, %s6
  %s9 = scalar_select 0, %s8, %s6
  loop: start=0, step=1, limit=4
  $region2: #{fwd.5} parent=0 // loop_pre_header
    _
  $region3: #{fwd.5} parent=0 // loop_header
    %s11 = sphi 0, %s15
    %p12 = scmp.ge.s32.totalorder %s11, 4
    %s18 = sphi 0, %s30
    %s19 = sphi 0, %s26
    %s20 = sphi 0, %s18
    %s21 = sphi 0, %s19
    %s22 = sphi 0, %s20
    %s23 = sphi 0, %s21
    %s35 = sphi 0, %s37
    %s38 = sphi 0, %s35
    %s39 = sphi 0, %s38
    %s55 = sphi 0, %s39
    %s71 = sphi 0, %s73
    %s74 = sphi 0, %s71
    %s75 = sphi 0, %s74
    %s91 = sphi 0, %s75
    %s107 = sphi 0, %s109
    %s110 = sphi 0, %s107
    %s111 = sphi 0, %s110
    %s127 = sphi 0, %s111
    %s131 = sphi 0, %s131
    %s133 = sphi 0, %s131
    %s134 = sphi 0, %s133
    %s148 = sphi 0, %s134
    %s152 = sphi 0, %s152
    %s154 = sphi 0, %s152
    %s155 = sphi 0, %s154
    %s169 = sphi 0, %s155
    %s177 = sphi 0, %s179
    %s180 = sphi 0, %s177
    %s181 = sphi 0, %s180
    %s197 = sphi 0, %s181
  $region4: #{fwd.5} parent=0 // loop_header_branch
    %14 = sbr.rel (%p12) target = $region8
  $region5: #{fwd.5} parent=0 // loop_body
    %s16 = ssub.s32 %s11, 1
    %s17 = ssub.s32 %s11, 2
    %s24 = sadd.s32 1, %s19
    %p25 = scmp.ge.s32.totalorder %s24, 1
    %s26 = scalar_select %p25, 0, %s24
    %s27 = sadd.s32 1, %s18
    %s28 = scalar_select %p25, %s27, %s18
    %p29 = scmp.ge.s32.totalorder %s28, 2
    %s30 = scalar_select %p29, 0, %s28
    %s31 = ssub.s32 %s18, %s30
    %s32 = ssub.s32 %s19, %s26
    %s33 = sor.u32 %s31, %s32
    %p34 = scmp.eq.s32.totalorder %s33, 0
    %s36 = sadd.s32 %s35, 1
    %s37 = scalar_select %p34, %s35, %s36
    %p40 = pneg %p34
    %p41 = scmp.eq.s32.totalorder %s11, 1
    %p42 = por %p40, %p41
    %p43 = scmp.ne.s32.totalorder %s35, %s38
    %p44 = scmp.eq.s32.totalorder %s11, 0
    %p45 = por %p43, %p44
    %p46 = scmp.ne.s32.totalorder %s35, %s38
    %p47 = scmp.eq.s32.totalorder %s16, 1
    %p48 = por %p46, %p47
    %p49 = scmp.ne.s32.totalorder %s38, %s39
    %p50 = scmp.eq.s32.totalorder %s16, 0
    %p51 = por %p49, %p50
    %p52 = scmp.ne.s32.totalorder %s38, %s39
    %p53 = scmp.eq.s32.totalorder %s17, 1
    %p54 = por %p52, %p53
    %p56 = scmp.ne.s32.totalorder %s39, %s55
    %p57 = scmp.eq.s32.totalorder %s17, 0
    %p58 = por %p56, %p57
    %s59 = smul.u32 %s19, 18
    %s60 = ssub.s32 %s59, 1
    %p61 = scmp.gt.s32.totalorder %s60, 0
    %s62 = scalar_select %p61, %s60, 0
    %s63 = smul.u32 %s26, 18
    %s64 = ssub.s32 %s63, 1
    %p65 = scmp.gt.s32.totalorder %s64, 0
    %s66 = scalar_select %p65, %s64, 0
    %s67 = ssub.s32 %s18, %s30
    %s68 = ssub.s32 %s62, %s66
    %s69 = sor.u32 %s67, %s68
    %p70 = scmp.eq.s32.totalorder %s69, 0
    %s72 = sadd.s32 %s71, 1
    %s73 = scalar_select %p70, %s71, %s72
    %p76 = pneg %p70
    %p77 = scmp.eq.s32.totalorder %s11, 1
    %p78 = por %p76, %p77
    %p79 = scmp.ne.s32.totalorder %s71, %s74
    %p80 = scmp.eq.s32.totalorder %s11, 0
    %p81 = por %p79, %p80
    %p82 = scmp.ne.s32.totalorder %s71, %s74
    %p83 = scmp.eq.s32.totalorder %s16, 1
    %p84 = por %p82, %p83
    %p85 = scmp.ne.s32.totalorder %s74, %s75
    %p86 = scmp.eq.s32.totalorder %s16, 0
    %p87 = por %p85, %p86
    %p88 = scmp.ne.s32.totalorder %s74, %s75
    %p89 = scmp.eq.s32.totalorder %s17, 1
    %p90 = por %p88, %p89
    %p92 = scmp.ne.s32.totalorder %s75, %s91
    %p93 = scmp.eq.s32.totalorder %s17, 0
    %p94 = por %p92, %p93
    %s95 = smul.u32 %s19, 18
    %s96 = sadd.s32 %s95, 18
    %p97 = scmp.lt.s32.totalorder %s96, 17
    %s98 = scalar_select %p97, %s96, 17
    %s99 = smul.u32 %s26, 18
    %s100 = sadd.s32 %s99, 18
    %p101 = scmp.lt.s32.totalorder %s100, 17
    %s102 = scalar_select %p101, %s100, 17
    %s103 = ssub.s32 %s18, %s30
    %s104 = ssub.s32 %s98, %s102
    %s105 = sor.u32 %s103, %s104
    %p106 = scmp.eq.s32.totalorder %s105, 0
    %s108 = sadd.s32 %s107, 1
    %s109 = scalar_select %p106, %s107, %s108
    %p112 = pneg %p106
    %p113 = scmp.eq.s32.totalorder %s11, 1
    %p114 = por %p112, %p113
    %p115 = scmp.ne.s32.totalorder %s107, %s110
    %p116 = scmp.eq.s32.totalorder %s11, 0
    %p117 = por %p115, %p116
    %p118 = scmp.ne.s32.totalorder %s107, %s110
    %p119 = scmp.eq.s32.totalorder %s16, 1
    %p120 = por %p118, %p119
    %p121 = scmp.ne.s32.totalorder %s110, %s111
    %p122 = scmp.eq.s32.totalorder %s16, 0
    %p123 = por %p121, %p122
    %p124 = scmp.ne.s32.totalorder %s110, %s111
    %p125 = scmp.eq.s32.totalorder %s17, 1
    %p126 = por %p124, %p125
    %p128 = scmp.ne.s32.totalorder %s111, %s127
    %p129 = scmp.eq.s32.totalorder %s17, 0
    %p130 = por %p128, %p129
    %s132 = sadd.s32 %s131, 1
    %p135 = scmp.eq.s32.totalorder %s11, 1
    %p136 = scmp.ne.s32.totalorder %s131, %s133
    %p137 = scmp.eq.s32.totalorder %s11, 0
    %p138 = por %p136, %p137
    %p139 = scmp.ne.s32.totalorder %s131, %s133
    %p140 = scmp.eq.s32.totalorder %s16, 1
    %p141 = por %p139, %p140
    %p142 = scmp.ne.s32.totalorder %s133, %s134
    %p143 = scmp.eq.s32.totalorder %s16, 0
    %p144 = por %p142, %p143
    %p145 = scmp.ne.s32.totalorder %s133, %s134
    %p146 = scmp.eq.s32.totalorder %s17, 1
    %p147 = por %p145, %p146
    %p149 = scmp.ne.s32.totalorder %s134, %s148
    %p150 = scmp.eq.s32.totalorder %s17, 0
    %p151 = por %p149, %p150
    %s153 = sadd.s32 %s152, 1
    %p156 = scmp.eq.s32.totalorder %s11, 1
    %p157 = scmp.ne.s32.totalorder %s152, %s154
    %p158 = scmp.eq.s32.totalorder %s11, 0
    %p159 = por %p157, %p158
    %p160 = scmp.ne.s32.totalorder %s152, %s154
    %p161 = scmp.eq.s32.totalorder %s16, 1
    %p162 = por %p160, %p161
    %p163 = scmp.ne.s32.totalorder %s154, %s155
    %p164 = scmp.eq.s32.totalorder %s16, 0
    %p165 = por %p163, %p164
    %p166 = scmp.ne.s32.totalorder %s154, %s155
    %p167 = scmp.eq.s32.totalorder %s17, 1
    %p168 = por %p166, %p167
    %p170 = scmp.ne.s32.totalorder %s155, %s169
    %p171 = scmp.eq.s32.totalorder %s17, 0
    %p172 = por %p170, %p171
    %s173 = ssub.s32 %s18, %s30
    %s174 = ssub.s32 %s19, %s26
    %s175 = sor.u32 %s173, %s174
    %p176 = scmp.eq.s32.totalorder %s175, 0
    %s178 = sadd.s32 %s177, 1
    %s179 = scalar_select %p176, %s177, %s178
    %p182 = pneg %p176
    %p183 = scmp.eq.s32.totalorder %s11, 1
    %p184 = por %p182, %p183
    %p185 = scmp.ne.s32.totalorder %s177, %s180
    %p186 = scmp.eq.s32.totalorder %s11, 0
    %p187 = por %p185, %p186
    %p188 = scmp.ne.s32.totalorder %s177, %s180
    %p189 = scmp.eq.s32.totalorder %s16, 1
    %p190 = por %p188, %p189
    %p191 = scmp.ne.s32.totalorder %s180, %s181
    %p192 = scmp.eq.s32.totalorder %s16, 0
    %p193 = por %p191, %p192
    %p194 = scmp.ne.s32.totalorder %s180, %s181
    %p195 = scmp.eq.s32.totalorder %s17, 1
    %p196 = por %p194, %p195
    %p198 = scmp.ne.s32.totalorder %s181, %s197
    %p199 = scmp.eq.s32.totalorder %s17, 0
    %p200 = por %p198, %p199
    %p201 = scmp.le.s32.totalorder 1, %s11
    %p202 = scmp.lt.s32.totalorder %s11, 3
    %p203 = pnand %p201, %p202
    %p204 = pneg %p203
    // Predicated region
    $region9: #{fwd.5} parent=5 // pred_check
      _
    $region10: #{fwd.5} parent=5 // pred_check_branch
      %206 = sbr.rel (%p203) target = $region12
    $region11: #{fwd.5} parent=5 // pred_region
      %s207 = ssub.s32 %s11, 1
      // Predicated region
      $region13: #{fwd.5} parent=11 // pred_check
        %p208 = pneg %p144
      $region14: #{fwd.5} parent=11 // pred_check_branch
        %210 = sbr.rel (%p208) target = $region16
      $region15: #{fwd.5} parent=11 // pred_region
        _
      $region16: #{fwd.5} parent=11 // pred_fallthru
        _
      // Predicated region
      $region17: #{fwd.5} parent=11 // pred_check
        %p211 = pneg %p165
      $region18: #{fwd.5} parent=11 // pred_check_branch
        %213 = sbr.rel (%p211) target = $region20
      $region19: #{fwd.5} parent=11 // pred_region
        _
      $region20: #{fwd.5} parent=11 // pred_fallthru
        _
    $region12: #{fwd.5} parent=5 // pred_fallthru
      _
    %p214 = scmp.lt.s32.totalorder %s11, 2
    // Predicated region
    $region21: #{fwd.5} parent=5 // pred_check
      %p215 = pneg %p214
    $region22: #{fwd.5} parent=5 // pred_check_branch
      %217 = sbr.rel (%p215) target = $region24
    $region23: #{fwd.5} parent=5 // pred_region
      // Predicated region
      $region25: #{fwd.5} parent=23 // pred_check
        %p218 = pneg %p45
      $region26: #{fwd.5} parent=23 // pred_check_branch
        %220 = sbr.rel (%p218) target = $region28
      $region27: #{fwd.5} parent=23 // pred_region
        %s221 = smul.u32 18, %s19
        %p222 = scmp.lt.s32.totalorder %s18, 1
        %s223 = scalar_select %p222, %s18, 1
        %p224 = scmp.lt.s32.totalorder %s221, 17
        %s225 = scalar_select %p224, %s221, 17
        %s226 = smul.addr %s225, 3
        %s227 = smul.addr %s223, 54
        %s228 = sadd.s32 %s226, %s227
        %s229 = smul.addr %s228, 8
        %s230 = scalar_lea.vmem %s0, %s229
        %s231 = smul.u32 18, %s19
      $region28: #{fwd.5} parent=23 // pred_fallthru
        _
      // Predicated region
      $region29: #{fwd.5} parent=23 // pred_check
        %p232 = pneg %p81
      $region30: #{fwd.5} parent=23 // pred_check_branch
        %234 = sbr.rel (%p232) target = $region32
      $region31: #{fwd.5} parent=23 // pred_region
        %s235 = smul.u32 %s19, 18
        %s236 = ssub.s32 %s235, 1
        %p237 = scmp.gt.s32.totalorder %s236, 0
        %s238 = scalar_select %p237, %s236, 0
        %p239 = scmp.lt.s32.totalorder %s18, 1
        %s240 = scalar_select %p239, %s18, 1
        %p241 = scmp.lt.s32.totalorder %s238, 17
        %s242 = scalar_select %p241, %s238, 17
        %s243 = smul.addr %s242, 3
        %s244 = smul.addr %s240, 54
        %s245 = sadd.s32 %s243, %s244
        %s246 = smul.addr %s245, 8
        %s247 = scalar_lea.vmem %s1, %s246
        %s248 = smul.u32 %s19, 18
        %s249 = ssub.s32 %s248, 1
        %p250 = scmp.gt.s32.totalorder %s249, 0
        %s251 = scalar_select %p250, %s249, 0
      $region32: #{fwd.5} parent=23 // pred_fallthru
        _
      // Predicated region
      $region33: #{fwd.5} parent=23 // pred_check
        %p252 = pneg %p117
      $region34: #{fwd.5} parent=23 // pred_check_branch
        %254 = sbr.rel (%p252) target = $region36
      $region35: #{fwd.5} parent=23 // pred_region
        %s255 = smul.u32 %s19, 18
        %s256 = sadd.s32 %s255, 18
        %p257 = scmp.lt.s32.totalorder %s256, 17
        %s258 = scalar_select %p257, %s256, 17
        %p259 = scmp.lt.s32.totalorder %s18, 1
        %s260 = scalar_select %p259, %s18, 1
        %p261 = scmp.lt.s32.totalorder %s258, 17
        %s262 = scalar_select %p261, %s258, 17
        %s263 = smul.addr %s262, 3
        %s264 = smul.addr %s260, 54
        %s265 = sadd.s32 %s263, %s264
        %s266 = smul.addr %s265, 8
        %s267 = scalar_lea.vmem %s2, %s266
        %s268 = smul.u32 %s19, 18
        %s269 = sadd.s32 %s268, 18
        %p270 = scmp.lt.s32.totalorder %s269, 17
        %s271 = scalar_select %p270, %s269, 17
      $region36: #{fwd.5} parent=23 // pred_fallthru
        _
    $region24: #{fwd.5} parent=5 // pred_fallthru
      _
    %p272 = scmp.le.s32.totalorder 1, %s11
    %p273 = scmp.lt.s32.totalorder %s11, 3
    %p274 = pnand %p272, %p273
    %p275 = pneg %p274
    // Predicated region
    $region37: #{fwd.5} parent=5 // pred_check
      _
    $region38: #{fwd.5} parent=5 // pred_check_branch
      %277 = sbr.rel (%p274) target = $region40
    $region39: #{fwd.5} parent=5 // pred_region
      %s278 = ssub.s32 %s11, 1
      %s279 = smul.u32 18, %s21
      %p280 = scmp.lt.s32.totalorder %s20, 1
      %s281 = scalar_select %p280, %s20, 1
      %p282 = scmp.lt.s32.totalorder %s279, 17
      %s283 = scalar_select %p282, %s279, 17
      %s284 = smul.addr %s283, 3
      %s285 = smul.addr %s281, 54
      %s286 = sadd.s32 %s284, %s285
      %s287 = smul.addr %s286, 8
      %s288 = scalar_lea.vmem %s0, %s287
      %p289 = pneg %p51
      %p290 = pneg %p48
      %s291 = smul.u32 %s21, 18
      %s292 = ssub.s32 %s291, 1
      %p293 = scmp.gt.s32.totalorder %s292, 0
      %s294 = scalar_select %p293, %s292, 0
      %p295 = scmp.lt.s32.totalorder %s20, 1
      %s296 = scalar_select %p295, %s20, 1
      %p297 = scmp.lt.s32.totalorder %s294, 17
      %s298 = scalar_select %p297, %s294, 17
      %s299 = smul.addr %s298, 3
      %s300 = smul.addr %s296, 54
      %s301 = sadd.s32 %s299, %s300
      %s302 = smul.addr %s301, 8
      %s303 = scalar_lea.vmem %s1, %s302
      %p304 = pneg %p87
      %p305 = pneg %p84
      %s306 = smul.u32 %s21, 18
      %s307 = sadd.s32 %s306, 18
      %p308 = scmp.lt.s32.totalorder %s307, 17
      %s309 = scalar_select %p308, %s307, 17
      %p310 = scmp.lt.s32.totalorder %s20, 1
      %s311 = scalar_select %p310, %s20, 1
      %p312 = scmp.lt.s32.totalorder %s309, 17
      %s313 = scalar_select %p312, %s309, 17
      %s314 = smul.addr %s313, 3
      %s315 = smul.addr %s311, 54
      %s316 = sadd.s32 %s314, %s315
      %s317 = smul.addr %s316, 8
      %s318 = scalar_lea.vmem %s2, %s317
      %p319 = pneg %p123
      %p320 = pneg %p120
      %p321 = pneg %p144
      %p322 = pneg %p141
      %p323 = pneg %p165
      %p324 = pneg %p162
      %p325 = pneg %p193
      %p326 = pneg %p190
      %s327 = smul.u32 18, %s21
      %p328 = scmp.lt.s32.totalorder %s20, 1
      %s329 = scalar_select %p328, %s20, 1
      %p330 = scmp.lt.s32.totalorder %s327, 17
      %s331 = scalar_select %p330, %s327, 17
      %s332 = smul.addr %s331, 3
      %s333 = smul.addr %s329, 54
      %s334 = sadd.s32 %s332, %s333
      %s335 = smul.addr %s334, 8
      %s336 = scalar_lea.vmem %s5, %s335
      %s337 = smul.u32 18, %s21
      %p338 = scmp.lt.s32.totalorder %s20, 1
      %s339 = scalar_select %p338, %s20, 1
      %p340 = scmp.lt.s32.totalorder %s337, 17
      %s341 = scalar_select %p340, %s337, 17
      %s342 = smul.addr %s341, 3
      %s343 = smul.addr %s339, 54
      %s344 = sadd.s32 %s342, %s343
      %s345 = smul.addr %s344, 8
      %s346 = scalar_lea.vmem %s0, %s345
      %s347 = smul.u32 18, %s21
      %s348 = smul.u32 %s21, 18
      %s349 = ssub.s32 %s348, 1
      %p350 = scmp.gt.s32.totalorder %s349, 0
      %s351 = scalar_select %p350, %s349, 0
      %p352 = scmp.lt.s32.totalorder %s20, 1
      %s353 = scalar_select %p352, %s20, 1
      %p354 = scmp.lt.s32.totalorder %s351, 17
      %s355 = scalar_select %p354, %s351, 17
      %s356 = smul.addr %s355, 3
      %s357 = smul.addr %s353, 54
      %s358 = sadd.s32 %s356, %s357
      %s359 = smul.addr %s358, 8
      %s360 = scalar_lea.vmem %s1, %s359
      %s361 = smul.u32 %s21, 18
      %s362 = ssub.s32 %s361, 1
      %p363 = scmp.gt.s32.totalorder %s362, 0
      %s364 = scalar_select %p363, %s362, 0
      %s365 = smul.u32 %s21, 18
      %s366 = sadd.s32 %s365, 18
      %p367 = scmp.lt.s32.totalorder %s366, 17
      %s368 = scalar_select %p367, %s366, 17
      %p369 = scmp.lt.s32.totalorder %s20, 1
      %s370 = scalar_select %p369, %s20, 1
      %p371 = scmp.lt.s32.totalorder %s368, 17
      %s372 = scalar_select %p371, %s368, 17
      %s373 = smul.addr %s372, 3
      %s374 = smul.addr %s370, 54
      %s375 = sadd.s32 %s373, %s374
      %s376 = smul.addr %s375, 8
      %s377 = scalar_lea.vmem %s2, %s376
      %s378 = smul.u32 %s21, 18
      %s379 = sadd.s32 %s378, 18
      %p380 = scmp.lt.s32.totalorder %s379, 17
      %s381 = scalar_select %p380, %s379, 17
      %s382 = smul.u32 18, %s21
      %p383 = scmp.lt.s32.totalorder %s20, 1
      %s384 = scalar_select %p383, %s20, 1
      %p385 = scmp.lt.s32.totalorder %s382, 17
      %s386 = scalar_select %p385, %s382, 17
      %s387 = smul.addr %s386, 3
      %s388 = smul.addr %s384, 54
      %s389 = sadd.s32 %s387, %s388
      %s390 = smul.addr %s389, 8
      %s391 = scalar_lea.vmem %s5, %s390
      %s392 = smul.u32 18, %s21
      %v393 = vld [vmem:[%s346] sm:$0xff]
      %v394 = vld [vmem:[%s346 + $0x8] sm:$0xff]
      %v395 = vld [vmem:[%s346 + $0x18] sm:$0xff]
      %v396 = vld [vmem:[%s346 + $0x20] sm:$0xff]
      %v397 = vld [vmem:[%s346 + $0x30] sm:$0xff]
      %v398 = vld [vmem:[%s346 + $0x38] sm:$0xff]
      %v399 = vld [vmem:[%s346 + $0x48] sm:$0xff]
      %v400 = vld [vmem:[%s346 + $0x50] sm:$0xff]
      %v401 = vld [vmem:[%s346 + $0x60] sm:$0xff]
      %v402 = vld [vmem:[%s346 + $0x68] sm:$0xff]
      %v403 = vld [vmem:[%s346 + $0x78] sm:$0xff]
      %v404 = vld [vmem:[%s346 + $0x80] sm:$0xff]
      %v405 = vld [vmem:[%s346 + $0x90] sm:$0xff]
      %v406 = vld [vmem:[%s346 + $0x98] sm:$0xff]
      %v407 = vld [vmem:[%s346 + $0xa8] sm:$0xff]
      %v408 = vld [vmem:[%s346 + $0xb0] sm:$0xff]
      %v409 = vld [vmem:[%s346 + $0xc0] sm:$0xff]
      %v410 = vld [vmem:[%s346 + $0xc8] sm:$0xff]
      %v411 = vld [vmem:[%s346 + $0xd8] sm:$0xff]
      %v412 = vld [vmem:[%s346 + $0xe0] sm:$0xff]
      %v413 = vld [vmem:[%s346 + $0xf0] sm:$0xff]
      %v414 = vld [vmem:[%s346 + $0xf8] sm:$0xff]
      %v415 = vld [vmem:[%s346 + $0x108] sm:$0xff]
      %v416 = vld [vmem:[%s346 + $0x110] sm:$0xff]
      %v417 = vld [vmem:[%s346 + $0x120] sm:$0xff]
      %v418 = vld [vmem:[%s346 + $0x128] sm:$0xff]
      %v419 = vld [vmem:[%s346 + $0x138] sm:$0xff]
      %v420 = vld [vmem:[%s346 + $0x140] sm:$0xff]
      %v421 = vld [vmem:[%s346 + $0x150] sm:$0xff]
      %v422 = vld [vmem:[%s346 + $0x158] sm:$0xff]
      %v423 = vld [vmem:[%s346 + $0x168] sm:$0xff]
      %v424 = vld [vmem:[%s346 + $0x170] sm:$0xff]
      %v425 = vld [vmem:[%s346 + $0x180] sm:$0xff]
      %v426 = vld [vmem:[%s346 + $0x188] sm:$0xff]
      %v427 = vld [vmem:[%s346 + $0x198] sm:$0xff]
      %v428 = vld [vmem:[%s346 + $0x1a0] sm:$0xff]
      %v429 = vld [vmem:[%s360] sm:$0xff]
      %v430 = vld [vmem:[%s360 + $0x8] sm:$0xff]
      %v431 = vld [vmem:[%s377] sm:$0xff]
      %v432 = vld [vmem:[%s377 + $0x8] sm:$0xff]
      %vm433 = vcmask 31744
      %434 = vst.msk [vmem:[#allocation2] sm:$0xff] %vm433, %v429
      %435 = vst.msk [vmem:[#allocation2 + $0x8] sm:$0xff] %vm433, %v430
      %s436 = scalar_lea.vmem [#allocation2], 16
      %437 = vst.msk [vmem:[%s436] sm:$0xff] %vm433, %v393
      %438 = vst.msk [vmem:[%s436 + $0x8] sm:$0xff] %vm433, %v394
      %439 = vst.msk [vmem:[%s436 + $0x10] sm:$0xff] %vm433, %v395
      %440 = vst.msk [vmem:[%s436 + $0x18] sm:$0xff] %vm433, %v396
      %441 = vst.msk [vmem:[%s436 + $0x20] sm:$0xff] %vm433, %v397
      %442 = vst.msk [vmem:[%s436 + $0x28] sm:$0xff] %vm433, %v398
      %443 = vst.msk [vmem:[%s436 + $0x30] sm:$0xff] %vm433, %v399
      %444 = vst.msk [vmem:[%s436 + $0x38] sm:$0xff] %vm433, %v400
      %445 = vst.msk [vmem:[%s436 + $0x40] sm:$0xff] %vm433, %v401
      %446 = vst.msk [vmem:[%s436 + $0x48] sm:$0xff] %vm433, %v402
      %447 = vst.msk [vmem:[%s436 + $0x50] sm:$0xff] %vm433, %v403
      %448 = vst.msk [vmem:[%s436 + $0x58] sm:$0xff] %vm433, %v404
      %449 = vst.msk [vmem:[%s436 + $0x60] sm:$0xff] %vm433, %v405
      %450 = vst.msk [vmem:[%s436 + $0x68] sm:$0xff] %vm433, %v406
      %451 = vst.msk [vmem:[%s436 + $0x70] sm:$0xff] %vm433, %v407
      %452 = vst.msk [vmem:[%s436 + $0x78] sm:$0xff] %vm433, %v408
      %453 = vst.msk [vmem:[%s436 + $0x80] sm:$0xff] %vm433, %v409
      %454 = vst.msk [vmem:[%s436 + $0x88] sm:$0xff] %vm433, %v410
      %455 = vst.msk [vmem:[%s436 + $0x90] sm:$0xff] %vm433, %v411
      %456 = vst.msk [vmem:[%s436 + $0x98] sm:$0xff] %vm433, %v412
      %457 = vst.msk [vmem:[%s436 + $0xa0] sm:$0xff] %vm433, %v413
      %458 = vst.msk [vmem:[%s436 + $0xa8] sm:$0xff] %vm433, %v414
      %459 = vst.msk [vmem:[%s436 + $0xb0] sm:$0xff] %vm433, %v415
      %460 = vst.msk [vmem:[%s436 + $0xb8] sm:$0xff] %vm433, %v416
      %461 = vst.msk [vmem:[%s436 + $0xc0] sm:$0xff] %vm433, %v417
      %462 = vst.msk [vmem:[%s436 + $0xc8] sm:$0xff] %vm433, %v418
      %463 = vst.msk [vmem:[%s436 + $0xd0] sm:$0xff] %vm433, %v419
      %464 = vst.msk [vmem:[%s436 + $0xd8] sm:$0xff] %vm433, %v420
      %465 = vst.msk [vmem:[%s436 + $0xe0] sm:$0xff] %vm433, %v421
      %466 = vst.msk [vmem:[%s436 + $0xe8] sm:$0xff] %vm433, %v422
      %467 = vst.msk [vmem:[%s436 + $0xf0] sm:$0xff] %vm433, %v423
      %468 = vst.msk [vmem:[%s436 + $0xf8] sm:$0xff] %vm433, %v424
      %469 = vst.msk [vmem:[%s436 + $0x100] sm:$0xff] %vm433, %v425
      %470 = vst.msk [vmem:[%s436 + $0x108] sm:$0xff] %vm433, %v426
      %507 = vrot.lane.b32.xlu0 %v393, 12
      %v508 = vpop.permute.xlu0 %507
      %509 = vrot.lane.b32.xlu0 %v394, 12
      %v510 = vpop.permute.xlu0 %509
      %511 = vrot.lane.b32.xlu0 %v395, 12
      %v512 = vpop.permute.xlu0 %511
      %513 = vrot.lane.b32.xlu0 %v396, 12
      %v514 = vpop.permute.xlu0 %513
      %515 = vrot.lane.b32.xlu0 %v397, 12
      %v516 = vpop.permute.xlu0 %515
      %517 = vrot.lane.b32.xlu0 %v398, 12
      %v518 = vpop.permute.xlu0 %517
      %519 = vrot.lane.b32.xlu0 %v399, 12
      %v520 = vpop.permute.xlu0 %519
      %521 = vrot.lane.b32.xlu0 %v400, 12
      %v522 = vpop.permute.xlu0 %521
      %523 = vrot.lane.b32.xlu0 %v401, 12
      %v524 = vpop.permute.xlu0 %523
      %525 = vrot.lane.b32.xlu0 %v402, 12
      %v526 = vpop.permute.xlu0 %525
      %527 = vrot.lane.b32.xlu0 %v403, 12
      %v528 = vpop.permute.xlu0 %527
      %529 = vrot.lane.b32.xlu0 %v404, 12
      %v530 = vpop.permute.xlu0 %529
      %531 = vrot.lane.b32.xlu0 %v405, 12
      %v532 = vpop.permute.xlu0 %531
      %533 = vrot.lane.b32.xlu0 %v406, 12
      %v534 = vpop.permute.xlu0 %533
      %535 = vrot.lane.b32.xlu0 %v407, 12
      %v536 = vpop.permute.xlu0 %535
      %537 = vrot.lane.b32.xlu0 %v408, 12
      %v538 = vpop.permute.xlu0 %537
      %539 = vrot.lane.b32.xlu0 %v409, 12
      %v540 = vpop.permute.xlu0 %539
      %541 = vrot.lane.b32.xlu0 %v410, 12
      %v542 = vpop.permute.xlu0 %541
      %543 = vrot.lane.b32.xlu0 %v411, 12
      %v544 = vpop.permute.xlu0 %543
      %545 = vrot.lane.b32.xlu0 %v412, 12
      %v546 = vpop.permute.xlu0 %545
      %547 = vrot.lane.b32.xlu0 %v413, 12
      %v548 = vpop.permute.xlu0 %547
      %549 = vrot.lane.b32.xlu0 %v414, 12
      %v550 = vpop.permute.xlu0 %549
      %551 = vrot.lane.b32.xlu0 %v415, 12
      %v552 = vpop.permute.xlu0 %551
      %553 = vrot.lane.b32.xlu0 %v416, 12
      %v554 = vpop.permute.xlu0 %553
      %555 = vrot.lane.b32.xlu0 %v417, 12
      %v556 = vpop.permute.xlu0 %555
      %557 = vrot.lane.b32.xlu0 %v418, 12
      %v558 = vpop.permute.xlu0 %557
      %559 = vrot.lane.b32.xlu0 %v419, 12
      %v560 = vpop.permute.xlu0 %559
      %561 = vrot.lane.b32.xlu0 %v420, 12
      %v562 = vpop.permute.xlu0 %561
      %563 = vrot.lane.b32.xlu0 %v421, 12
      %v564 = vpop.permute.xlu0 %563
      %565 = vrot.lane.b32.xlu0 %v422, 12
      %v566 = vpop.permute.xlu0 %565
      %567 = vrot.lane.b32.xlu0 %v423, 12
      %v568 = vpop.permute.xlu0 %567
      %569 = vrot.lane.b32.xlu0 %v424, 12
      %v570 = vpop.permute.xlu0 %569
      %571 = vrot.lane.b32.xlu0 %v425, 12
      %v572 = vpop.permute.xlu0 %571
      %573 = vrot.lane.b32.xlu0 %v426, 12
      %v574 = vpop.permute.xlu0 %573
      %575 = vrot.lane.b32.xlu0 %v427, 12
      %v576 = vpop.permute.xlu0 %575
      %577 = vrot.lane.b32.xlu0 %v428, 12
      %v578 = vpop.permute.xlu0 %577
      %vm615 = vcmask 130144
      %616 = vst.msk [vmem:[#allocation2] sm:$0xff] %vm615, %v508
      %617 = vst.msk [vmem:[#allocation2 + $0x8] sm:$0xff] %vm615, %v510
      %618 = vst.msk [vmem:[#allocation2 + $0x10] sm:$0xff] %vm615, %v512
      %619 = vst.msk [vmem:[#allocation2 + $0x18] sm:$0xff] %vm615, %v514
      %620 = vst.msk [vmem:[#allocation2 + $0x20] sm:$0xff] %vm615, %v516
      %621 = vst.msk [vmem:[#allocation2 + $0x28] sm:$0xff] %vm615, %v518
      %622 = vst.msk [vmem:[#allocation2 + $0x30] sm:$0xff] %vm615, %v520
      %623 = vst.msk [vmem:[#allocation2 + $0x38] sm:$0xff] %vm615, %v522
      %624 = vst.msk [vmem:[#allocation2 + $0x40] sm:$0xff] %vm615, %v524
      %625 = vst.msk [vmem:[#allocation2 + $0x48] sm:$0xff] %vm615, %v526
      %626 = vst.msk [vmem:[#allocation2 + $0x50] sm:$0xff] %vm615, %v528
      %627 = vst.msk [vmem:[#allocation2 + $0x58] sm:$0xff] %vm615, %v530
      %628 = vst.msk [vmem:[#allocation2 + $0x60] sm:$0xff] %vm615, %v532
      %629 = vst.msk [vmem:[#allocation2 + $0x68] sm:$0xff] %vm615, %v534
      %630 = vst.msk [vmem:[#allocation2 + $0x70] sm:$0xff] %vm615, %v536
      %631 = vst.msk [vmem:[#allocation2 + $0x78] sm:$0xff] %vm615, %v538
      %632 = vst.msk [vmem:[#allocation2 + $0x80] sm:$0xff] %vm615, %v540
      %633 = vst.msk [vmem:[#allocation2 + $0x88] sm:$0xff] %vm615, %v542
      %634 = vst.msk [vmem:[#allocation2 + $0x90] sm:$0xff] %vm615, %v544
      %635 = vst.msk [vmem:[#allocation2 + $0x98] sm:$0xff] %vm615, %v546
      %636 = vst.msk [vmem:[#allocation2 + $0xa0] sm:$0xff] %vm615, %v548
      %637 = vst.msk [vmem:[#allocation2 + $0xa8] sm:$0xff] %vm615, %v550
      %638 = vst.msk [vmem:[#allocation2 + $0xb0] sm:$0xff] %vm615, %v552
      %639 = vst.msk [vmem:[#allocation2 + $0xb8] sm:$0xff] %vm615, %v554
      %640 = vst.msk [vmem:[#allocation2 + $0xc0] sm:$0xff] %vm615, %v556
      %641 = vst.msk [vmem:[#allocation2 + $0xc8] sm:$0xff] %vm615, %v558
      %642 = vst.msk [vmem:[#allocation2 + $0xd0] sm:$0xff] %vm615, %v560
      %643 = vst.msk [vmem:[#allocation2 + $0xd8] sm:$0xff] %vm615, %v562
      %644 = vst.msk [vmem:[#allocation2 + $0xe0] sm:$0xff] %vm615, %v564
      %645 = vst.msk [vmem:[#allocation2 + $0xe8] sm:$0xff] %vm615, %v566
      %646 = vst.msk [vmem:[#allocation2 + $0xf0] sm:$0xff] %vm615, %v568
      %647 = vst.msk [vmem:[#allocation2 + $0xf8] sm:$0xff] %vm615, %v570
      %648 = vst.msk [vmem:[#allocation2 + $0x100] sm:$0xff] %vm615, %v572
      %649 = vst.msk [vmem:[#allocation2 + $0x108] sm:$0xff] %vm615, %v574
      %650 = vst.msk [vmem:[#allocation2 + $0x110] sm:$0xff] %vm615, %v576
      %651 = vst.msk [vmem:[#allocation2 + $0x118] sm:$0xff] %vm615, %v578
      %652 = vrot.lane.b32.xlu0 %v395, 24
      %v653 = vpop.permute.xlu0 %652
      %654 = vrot.lane.b32.xlu0 %v396, 24
      %v655 = vpop.permute.xlu0 %654
      %656 = vrot.lane.b32.xlu0 %v397, 24
      %v657 = vpop.permute.xlu0 %656
      %658 = vrot.lane.b32.xlu0 %v398, 24
      %v659 = vpop.permute.xlu0 %658
      %660 = vrot.lane.b32.xlu0 %v399, 24
      %v661 = vpop.permute.xlu0 %660
      %662 = vrot.lane.b32.xlu0 %v400, 24
      %v663 = vpop.permute.xlu0 %662
      %664 = vrot.lane.b32.xlu0 %v401, 24
      %v665 = vpop.permute.xlu0 %664
      %666 = vrot.lane.b32.xlu0 %v402, 24
      %v667 = vpop.permute.xlu0 %666
      %668 = vrot.lane.b32.xlu0 %v403, 24
      %v669 = vpop.permute.xlu0 %668
      %670 = vrot.lane.b32.xlu0 %v404, 24
      %v671 = vpop.permute.xlu0 %670
      %672 = vrot.lane.b32.xlu0 %v405, 24
      %v673 = vpop.permute.xlu0 %672
      %674 = vrot.lane.b32.xlu0 %v406, 24
      %v675 = vpop.permute.xlu0 %674
      %676 = vrot.lane.b32.xlu0 %v407, 24
      %v677 = vpop.permute.xlu0 %676
      %678 = vrot.lane.b32.xlu0 %v408, 24
      %v679 = vpop.permute.xlu0 %678
      %680 = vrot.lane.b32.xlu0 %v409, 24
      %v681 = vpop.permute.xlu0 %680
      %682 = vrot.lane.b32.xlu0 %v410, 24
      %v683 = vpop.permute.xlu0 %682
      %684 = vrot.lane.b32.xlu0 %v411, 24
      %v685 = vpop.permute.xlu0 %684
      %686 = vrot.lane.b32.xlu0 %v412, 24
      %v687 = vpop.permute.xlu0 %686
      %688 = vrot.lane.b32.xlu0 %v413, 24
      %v689 = vpop.permute.xlu0 %688
      %690 = vrot.lane.b32.xlu0 %v414, 24
      %v691 = vpop.permute.xlu0 %690
      %692 = vrot.lane.b32.xlu0 %v415, 24
      %v693 = vpop.permute.xlu0 %692
      %694 = vrot.lane.b32.xlu0 %v416, 24
      %v695 = vpop.permute.xlu0 %694
      %696 = vrot.lane.b32.xlu0 %v417, 24
      %v697 = vpop.permute.xlu0 %696
      %698 = vrot.lane.b32.xlu0 %v418, 24
      %v699 = vpop.permute.xlu0 %698
      %700 = vrot.lane.b32.xlu0 %v419, 24
      %v701 = vpop.permute.xlu0 %700
      %702 = vrot.lane.b32.xlu0 %v420, 24
      %v703 = vpop.permute.xlu0 %702
      %704 = vrot.lane.b32.xlu0 %v421, 24
      %v705 = vpop.permute.xlu0 %704
      %706 = vrot.lane.b32.xlu0 %v422, 24
      %v707 = vpop.permute.xlu0 %706
      %708 = vrot.lane.b32.xlu0 %v423, 24
      %v709 = vpop.permute.xlu0 %708
      %710 = vrot.lane.b32.xlu0 %v424, 24
      %v711 = vpop.permute.xlu0 %710
      %712 = vrot.lane.b32.xlu0 %v425, 24
      %v713 = vpop.permute.xlu0 %712
      %714 = vrot.lane.b32.xlu0 %v426, 24
      %v715 = vpop.permute.xlu0 %714
      %716 = vrot.lane.b32.xlu0 %v427, 24
      %v717 = vpop.permute.xlu0 %716
      %718 = vrot.lane.b32.xlu0 %v428, 24
      %v719 = vpop.permute.xlu0 %718
      %vm754 = vcmask 228544
      %755 = vst.msk [vmem:[#allocation2] sm:$0xff] %vm754, %v653
      %756 = vst.msk [vmem:[#allocation2 + $0x8] sm:$0xff] %vm754, %v655
      %757 = vst.msk [vmem:[#allocation2 + $0x10] sm:$0xff] %vm754, %v657
      %758 = vst.msk [vmem:[#allocation2 + $0x18] sm:$0xff] %vm754, %v659
      %759 = vst.msk [vmem:[#allocation2 + $0x20] sm:$0xff] %vm754, %v661
      %760 = vst.msk [vmem:[#allocation2 + $0x28] sm:$0xff] %vm754, %v663
      %761 = vst.msk [vmem:[#allocation2 + $0x30] sm:$0xff] %vm754, %v665
      %762 = vst.msk [vmem:[#allocation2 + $0x38] sm:$0xff] %vm754, %v667
      %763 = vst.msk [vmem:[#allocation2 + $0x40] sm:$0xff] %vm754, %v669
      %764 = vst.msk [vmem:[#allocation2 + $0x48] sm:$0xff] %vm754, %v671
      %765 = vst.msk [vmem:[#allocation2 + $0x50] sm:$0xff] %vm754, %v673
      %766 = vst.msk [vmem:[#allocation2 + $0x58] sm:$0xff] %vm754, %v675
      %767 = vst.msk [vmem:[#allocation2 + $0x60] sm:$0xff] %vm754, %v677
      %768 = vst.msk [vmem:[#allocation2 + $0x68] sm:$0xff] %vm754, %v679
      %769 = vst.msk [vmem:[#allocation2 + $0x70] sm:$0xff] %vm754, %v681
      %770 = vst.msk [vmem:[#allocation2 + $0x78] sm:$0xff] %vm754, %v683
      %771 = vst.msk [vmem:[#allocation2 + $0x80] sm:$0xff] %vm754, %v685
      %772 = vst.msk [vmem:[#allocation2 + $0x88] sm:$0xff] %vm754, %v687
      %773 = vst.msk [vmem:[#allocation2 + $0x90] sm:$0xff] %vm754, %v689
      %774 = vst.msk [vmem:[#allocation2 + $0x98] sm:$0xff] %vm754, %v691
      %775 = vst.msk [vmem:[#allocation2 + $0xa0] sm:$0xff] %vm754, %v693
      %776 = vst.msk [vmem:[#allocation2 + $0xa8] sm:$0xff] %vm754, %v695
      %777 = vst.msk [vmem:[#allocation2 + $0xb0] sm:$0xff] %vm754, %v697
      %778 = vst.msk [vmem:[#allocation2 + $0xb8] sm:$0xff] %vm754, %v699
      %779 = vst.msk [vmem:[#allocation2 + $0xc0] sm:$0xff] %vm754, %v701
      %780 = vst.msk [vmem:[#allocation2 + $0xc8] sm:$0xff] %vm754, %v703
      %781 = vst.msk [vmem:[#allocation2 + $0xd0] sm:$0xff] %vm754, %v705
      %782 = vst.msk [vmem:[#allocation2 + $0xd8] sm:$0xff] %vm754, %v707
      %783 = vst.msk [vmem:[#allocation2 + $0xe0] sm:$0xff] %vm754, %v709
      %784 = vst.msk [vmem:[#allocation2 + $0xe8] sm:$0xff] %vm754, %v711
      %785 = vst.msk [vmem:[#allocation2 + $0xf0] sm:$0xff] %vm754, %v713
      %786 = vst.msk [vmem:[#allocation2 + $0xf8] sm:$0xff] %vm754, %v715
      %787 = vst.msk [vmem:[#allocation2 + $0x100] sm:$0xff] %vm754, %v717
      %788 = vst.msk [vmem:[#allocation2 + $0x108] sm:$0xff] %vm754, %v719
      %791 = vrot.lane.b32.xlu0 %v431, 24
      %v792 = vpop.permute.xlu0 %791
      %793 = vrot.lane.b32.xlu0 %v432, 24
      %v794 = vpop.permute.xlu0 %793
      %s797 = scalar_lea.vmem [#allocation2], 272
      %798 = vst.msk [vmem:[%s797] sm:$0xff] %vm754, %v792
      %799 = vst.msk [vmem:[%s797 + $0x8] sm:$0xff] %vm754, %v794
      %v800 = vld [vmem:[%s346 + $0x1] sm:$0xff]
      %v801 = vld [vmem:[%s346 + $0x9] sm:$0xff]
      %v802 = vld [vmem:[%s346 + $0x19] sm:$0xff]
      %v803 = vld [vmem:[%s346 + $0x21] sm:$0xff]
      %v804 = vld [vmem:[%s346 + $0x31] sm:$0xff]
      %v805 = vld [vmem:[%s346 + $0x39] sm:$0xff]
      %v806 = vld [vmem:[%s346 + $0x49] sm:$0xff]
      %v807 = vld [vmem:[%s346 + $0x51] sm:$0xff]
      %v808 = vld [vmem:[%s346 + $0x61] sm:$0xff]
      %v809 = vld [vmem:[%s346 + $0x69] sm:$0xff]
      %v810 = vld [vmem:[%s346 + $0x79] sm:$0xff]
      %v811 = vld [vmem:[%s346 + $0x81] sm:$0xff]
      %v812 = vld [vmem:[%s346 + $0x91] sm:$0xff]
      %v813 = vld [vmem:[%s346 + $0x99] sm:$0xff]
      %v814 = vld [vmem:[%s346 + $0xa9] sm:$0xff]
      %v815 = vld [vmem:[%s346 + $0xb1] sm:$0xff]
      %v816 = vld [vmem:[%s346 + $0xc1] sm:$0xff]
      %v817 = vld [vmem:[%s346 + $0xc9] sm:$0xff]
      %v818 = vld [vmem:[%s346 + $0xd9] sm:$0xff]
      %v819 = vld [vmem:[%s346 + $0xe1] sm:$0xff]
      %v820 = vld [vmem:[%s346 + $0xf1] sm:$0xff]
      %v821 = vld [vmem:[%s346 + $0xf9] sm:$0xff]
      %v822 = vld [vmem:[%s346 + $0x109] sm:$0xff]
      %v823 = vld [vmem:[%s346 + $0x111] sm:$0xff]
      %v824 = vld [vmem:[%s346 + $0x121] sm:$0xff]
      %v825 = vld [vmem:[%s346 + $0x129] sm:$0xff]
      %v826 = vld [vmem:[%s346 + $0x139] sm:$0xff]
      %v827 = vld [vmem:[%s346 + $0x141] sm:$0xff]
      %v828 = vld [vmem:[%s346 + $0x151] sm:$0xff]
      %v829 = vld [vmem:[%s346 + $0x159] sm:$0xff]
      %v830 = vld [vmem:[%s346 + $0x169] sm:$0xff]
      %v831 = vld [vmem:[%s346 + $0x171] sm:$0xff]
      %v832 = vld [vmem:[%s346 + $0x181] sm:$0xff]
      %v833 = vld [vmem:[%s346 + $0x189] sm:$0xff]
      %v834 = vld [vmem:[%s346 + $0x199] sm:$0xff]
      %v835 = vld [vmem:[%s346 + $0x1a1] sm:$0xff]
      %v836 = vld [vmem:[%s360 + $0x1] sm:$0xff]
      %v837 = vld [vmem:[%s360 + $0x9] sm:$0xff]
      %v838 = vld [vmem:[%s377 + $0x1] sm:$0xff]
      %v839 = vld [vmem:[%s377 + $0x9] sm:$0xff]
      %842 = vrot.lane.b32.xlu0 %v836, 4
      %v843 = vpop.permute.xlu0 %842
      %844 = vrot.lane.b32.xlu0 %v837, 4
      %v845 = vpop.permute.xlu0 %844
      %vm848 = vcmask 64544
      %849 = vst.msk [vmem:[#allocation2] sm:$0xff] %vm848, %v843
      %850 = vst.msk [vmem:[#allocation2 + $0x8] sm:$0xff] %vm848, %v845
      %885 = vrot.lane.b32.xlu0 %v800, 4
      %v886 = vpop.permute.xlu0 %885
      %887 = vrot.lane.b32.xlu0 %v801, 4
      %v888 = vpop.permute.xlu0 %887
      %889 = vrot.lane.b32.xlu0 %v802, 4
      %v890 = vpop.permute.xlu0 %889
      %891 = vrot.lane.b32.xlu0 %v803, 4
      %v892 = vpop.permute.xlu0 %891
      %893 = vrot.lane.b32.xlu0 %v804, 4
      %v894 = vpop.permute.xlu0 %893
      %895 = vrot.lane.b32.xlu0 %v805, 4
      %v896 = vpop.permute.xlu0 %895
      %897 = vrot.lane.b32.xlu0 %v806, 4
      %v898 = vpop.permute.xlu0 %897
      %899 = vrot.lane.b32.xlu0 %v807, 4
      %v900 = vpop.permute.xlu0 %899
      %901 = vrot.lane.b32.xlu0 %v808, 4
      %v902 = vpop.permute.xlu0 %901
      %903 = vrot.lane.b32.xlu0 %v809, 4
      %v904 = vpop.permute.xlu0 %903
      %905 = vrot.lane.b32.xlu0 %v810, 4
      %v906 = vpop.permute.xlu0 %905
      %907 = vrot.lane.b32.xlu0 %v811, 4
      %v908 = vpop.permute.xlu0 %907
      %909 = vrot.lane.b32.xlu0 %v812, 4
      %v910 = vpop.permute.xlu0 %909
      %911 = vrot.lane.b32.xlu0 %v813, 4
      %v912 = vpop.permute.xlu0 %911
      %913 = vrot.lane.b32.xlu0 %v814, 4
      %v914 = vpop.permute.xlu0 %913
      %915 = vrot.lane.b32.xlu0 %v815, 4
      %v916 = vpop.permute.xlu0 %915
      %917 = vrot.lane.b32.xlu0 %v816, 4
      %v918 = vpop.permute.xlu0 %917
      %919 = vrot.lane.b32.xlu0 %v817, 4
      %v920 = vpop.permute.xlu0 %919
      %921 = vrot.lane.b32.xlu0 %v818, 4
      %v922 = vpop.permute.xlu0 %921
      %923 = vrot.lane.b32.xlu0 %v819, 4
      %v924 = vpop.permute.xlu0 %923
      %925 = vrot.lane.b32.xlu0 %v820, 4
      %v926 = vpop.permute.xlu0 %925
      %927 = vrot.lane.b32.xlu0 %v821, 4
      %v928 = vpop.permute.xlu0 %927
      %929 = vrot.lane.b32.xlu0 %v822, 4
      %v930 = vpop.permute.xlu0 %929
      %931 = vrot.lane.b32.xlu0 %v823, 4
      %v932 = vpop.permute.xlu0 %931
      %933 = vrot.lane.b32.xlu0 %v824, 4
      %v934 = vpop.permute.xlu0 %933
      %935 = vrot.lane.b32.xlu0 %v825, 4
      %v936 = vpop.permute.xlu0 %935
      %937 = vrot.lane.b32.xlu0 %v826, 4
      %v938 = vpop.permute.xlu0 %937
      %939 = vrot.lane.b32.xlu0 %v827, 4
      %v940 = vpop.permute.xlu0 %939
      %941 = vrot.lane.b32.xlu0 %v828, 4
      %v942 = vpop.permute.xlu0 %941
      %943 = vrot.lane.b32.xlu0 %v829, 4
      %v944 = vpop.permute.xlu0 %943
      %945 = vrot.lane.b32.xlu0 %v830, 4
      %v946 = vpop.permute.xlu0 %945
      %947 = vrot.lane.b32.xlu0 %v831, 4
      %v948 = vpop.permute.xlu0 %947
      %949 = vrot.lane.b32.xlu0 %v832, 4
      %v950 = vpop.permute.xlu0 %949
      %951 = vrot.lane.b32.xlu0 %v833, 4
      %v952 = vpop.permute.xlu0 %951
      %987 = vst.msk [vmem:[%s436] sm:$0xff] %vm848, %v886
      %988 = vst.msk [vmem:[%s436 + $0x8] sm:$0xff] %vm848, %v888
      %989 = vst.msk [vmem:[%s436 + $0x10] sm:$0xff] %vm848, %v890
      %990 = vst.msk [vmem:[%s436 + $0x18] sm:$0xff] %vm848, %v892
      %991 = vst.msk [vmem:[%s436 + $0x20] sm:$0xff] %vm848, %v894
      %992 = vst.msk [vmem:[%s436 + $0x28] sm:$0xff] %vm848, %v896
      %993 = vst.msk [vmem:[%s436 + $0x30] sm:$0xff] %vm848, %v898
      %994 = vst.msk [vmem:[%s436 + $0x38] sm:$0xff] %vm848, %v900
      %995 = vst.msk [vmem:[%s436 + $0x40] sm:$0xff] %vm848, %v902
      %996 = vst.msk [vmem:[%s436 + $0x48] sm:$0xff] %vm848, %v904
      %997 = vst.msk [vmem:[%s436 + $0x50] sm:$0xff] %vm848, %v906
      %998 = vst.msk [vmem:[%s436 + $0x58] sm:$0xff] %vm848, %v908
      %999 = vst.msk [vmem:[%s436 + $0x60] sm:$0xff] %vm848, %v910
      %1000 = vst.msk [vmem:[%s436 + $0x68] sm:$0xff] %vm848, %v912
      %1001 = vst.msk [vmem:[%s436 + $0x70] sm:$0xff] %vm848, %v914
      %1002 = vst.msk [vmem:[%s436 + $0x78] sm:$0xff] %vm848, %v916
      %1003 = vst.msk [vmem:[%s436 + $0x80] sm:$0xff] %vm848, %v918
      %1004 = vst.msk [vmem:[%s436 + $0x88] sm:$0xff] %vm848, %v920
      %1005 = vst.msk [vmem:[%s436 + $0x90] sm:$0xff] %vm848, %v922
      %1006 = vst.msk [vmem:[%s436 + $0x98] sm:$0xff] %vm848, %v924
      %1007 = vst.msk [vmem:[%s436 + $0xa0] sm:$0xff] %vm848, %v926
      %1008 = vst.msk [vmem:[%s436 + $0xa8] sm:$0xff] %vm848, %v928
      %1009 = vst.msk [vmem:[%s436 + $0xb0] sm:$0xff] %vm848, %v930
      %1010 = vst.msk [vmem:[%s436 + $0xb8] sm:$0xff] %vm848, %v932
      %1011 = vst.msk [vmem:[%s436 + $0xc0] sm:$0xff] %vm848, %v934
      %1012 = vst.msk [vmem:[%s436 + $0xc8] sm:$0xff] %vm848, %v936
      %1013 = vst.msk [vmem:[%s436 + $0xd0] sm:$0xff] %vm848, %v938
      %1014 = vst.msk [vmem:[%s436 + $0xd8] sm:$0xff] %vm848, %v940
      %1015 = vst.msk [vmem:[%s436 + $0xe0] sm:$0xff] %vm848, %v942
      %1016 = vst.msk [vmem:[%s436 + $0xe8] sm:$0xff] %vm848, %v944
      %1017 = vst.msk [vmem:[%s436 + $0xf0] sm:$0xff] %vm848, %v946
      %1018 = vst.msk [vmem:[%s436 + $0xf8] sm:$0xff] %vm848, %v948
      %1019 = vst.msk [vmem:[%s436 + $0x100] sm:$0xff] %vm848, %v950
      %1020 = vst.msk [vmem:[%s436 + $0x108] sm:$0xff] %vm848, %v952
      %1023 = vrot.lane.b32.xlu0 %v800, 16
      %v1024 = vpop.permute.xlu0 %1023
      %1025 = vrot.lane.b32.xlu0 %v801, 16
      %v1026 = vpop.permute.xlu0 %1025
      %1027 = vrot.lane.b32.xlu0 %v802, 16
      %v1028 = vpop.permute.xlu0 %1027
      %1029 = vrot.lane.b32.xlu0 %v803, 16
      %v1030 = vpop.permute.xlu0 %1029
      %1031 = vrot.lane.b32.xlu0 %v804, 16
      %v1032 = vpop.permute.xlu0 %1031
      %1033 = vrot.lane.b32.xlu0 %v805, 16
      %v1034 = vpop.permute.xlu0 %1033
      %1035 = vrot.lane.b32.xlu0 %v806, 16
      %v1036 = vpop.permute.xlu0 %1035
      %1037 = vrot.lane.b32.xlu0 %v807, 16
      %v1038 = vpop.permute.xlu0 %1037
      %1039 = vrot.lane.b32.xlu0 %v808, 16
      %v1040 = vpop.permute.xlu0 %1039
      %1041 = vrot.lane.b32.xlu0 %v809, 16
      %v1042 = vpop.permute.xlu0 %1041
      %1043 = vrot.lane.b32.xlu0 %v810, 16
      %v1044 = vpop.permute.xlu0 %1043
      %1045 = vrot.lane.b32.xlu0 %v811, 16
      %v1046 = vpop.permute.xlu0 %1045
      %1047 = vrot.lane.b32.xlu0 %v812, 16
      %v1048 = vpop.permute.xlu0 %1047
      %1049 = vrot.lane.b32.xlu0 %v813, 16
      %v1050 = vpop.permute.xlu0 %1049
      %1051 = vrot.lane.b32.xlu0 %v814, 16
      %v1052 = vpop.permute.xlu0 %1051
      %1053 = vrot.lane.b32.xlu0 %v815, 16
      %v1054 = vpop.permute.xlu0 %1053
      %1055 = vrot.lane.b32.xlu0 %v816, 16
      %v1056 = vpop.permute.xlu0 %1055
      %1057 = vrot.lane.b32.xlu0 %v817, 16
      %v1058 = vpop.permute.xlu0 %1057
      %1059 = vrot.lane.b32.xlu0 %v818, 16
      %v1060 = vpop.permute.xlu0 %1059
      %1061 = vrot.lane.b32.xlu0 %v819, 16
      %v1062 = vpop.permute.xlu0 %1061
      %1063 = vrot.lane.b32.xlu0 %v820, 16
      %v1064 = vpop.permute.xlu0 %1063
      %1065 = vrot.lane.b32.xlu0 %v821, 16
      %v1066 = vpop.permute.xlu0 %1065
      %1067 = vrot.lane.b32.xlu0 %v822, 16
      %v1068 = vpop.permute.xlu0 %1067
      %1069 = vrot.lane.b32.xlu0 %v823, 16
      %v1070 = vpop.permute.xlu0 %1069
      %1071 = vrot.lane.b32.xlu0 %v824, 16
      %v1072 = vpop.permute.xlu0 %1071
      %1073 = vrot.lane.b32.xlu0 %v825, 16
      %v1074 = vpop.permute.xlu0 %1073
      %1075 = vrot.lane.b32.xlu0 %v826, 16
      %v1076 = vpop.permute.xlu0 %1075
      %1077 = vrot.lane.b32.xlu0 %v827, 16
      %v1078 = vpop.permute.xlu0 %1077
      %1079 = vrot.lane.b32.xlu0 %v828, 16
      %v1080 = vpop.permute.xlu0 %1079
      %1081 = vrot.lane.b32.xlu0 %v829, 16
      %v1082 = vpop.permute.xlu0 %1081
      %1083 = vrot.lane.b32.xlu0 %v830, 16
      %v1084 = vpop.permute.xlu0 %1083
      %1085 = vrot.lane.b32.xlu0 %v831, 16
      %v1086 = vpop.permute.xlu0 %1085
      %1087 = vrot.lane.b32.xlu0 %v832, 16
      %v1088 = vpop.permute.xlu0 %1087
      %1089 = vrot.lane.b32.xlu0 %v833, 16
      %v1090 = vpop.permute.xlu0 %1089
      %1091 = vrot.lane.b32.xlu0 %v834, 16
      %v1092 = vpop.permute.xlu0 %1091
      %1093 = vrot.lane.b32.xlu0 %v835, 16
      %v1094 = vpop.permute.xlu0 %1093
      %vm1131 = vcmask 162944
      %1132 = vst.msk [vmem:[#allocation2] sm:$0xff] %vm1131, %v1024
      %1133 = vst.msk [vmem:[#allocation2 + $0x8] sm:$0xff] %vm1131, %v1026
      %1134 = vst.msk [vmem:[#allocation2 + $0x10] sm:$0xff] %vm1131, %v1028
      %1135 = vst.msk [vmem:[#allocation2 + $0x18] sm:$0xff] %vm1131, %v1030
      %1136 = vst.msk [vmem:[#allocation2 + $0x20] sm:$0xff] %vm1131, %v1032
      %1137 = vst.msk [vmem:[#allocation2 + $0x28] sm:$0xff] %vm1131, %v1034
      %1138 = vst.msk [vmem:[#allocation2 + $0x30] sm:$0xff] %vm1131, %v1036
      %1139 = vst.msk [vmem:[#allocation2 + $0x38] sm:$0xff] %vm1131, %v1038
      %1140 = vst.msk [vmem:[#allocation2 + $0x40] sm:$0xff] %vm1131, %v1040
      %1141 = vst.msk [vmem:[#allocation2 + $0x48] sm:$0xff] %vm1131, %v1042
      %1142 = vst.msk [vmem:[#allocation2 + $0x50] sm:$0xff] %vm1131, %v1044
      %1143 = vst.msk [vmem:[#allocation2 + $0x58] sm:$0xff] %vm1131, %v1046
      %1144 = vst.msk [vmem:[#allocation2 + $0x60] sm:$0xff] %vm1131, %v1048
      %1145 = vst.msk [vmem:[#allocation2 + $0x68] sm:$0xff] %vm1131, %v1050
      %1146 = vst.msk [vmem:[#allocation2 + $0x70] sm:$0xff] %vm1131, %v1052
      %1147 = vst.msk [vmem:[#allocation2 + $0x78] sm:$0xff] %vm1131, %v1054
      %1148 = vst.msk [vmem:[#allocation2 + $0x80] sm:$0xff] %vm1131, %v1056
      %1149 = vst.msk [vmem:[#allocation2 + $0x88] sm:$0xff] %vm1131, %v1058
      %1150 = vst.msk [vmem:[#allocation2 + $0x90] sm:$0xff] %vm1131, %v1060
      %1151 = vst.msk [vmem:[#allocation2 + $0x98] sm:$0xff] %vm1131, %v1062
      %1152 = vst.msk [vmem:[#allocation2 + $0xa0] sm:$0xff] %vm1131, %v1064
      %1153 = vst.msk [vmem:[#allocation2 + $0xa8] sm:$0xff] %vm1131, %v1066
      %1154 = vst.msk [vmem:[#allocation2 + $0xb0] sm:$0xff] %vm1131, %v1068
      %1155 = vst.msk [vmem:[#allocation2 + $0xb8] sm:$0xff] %vm1131, %v1070
      %1156 = vst.msk [vmem:[#allocation2 + $0xc0] sm:$0xff] %vm1131, %v1072
      %1157 = vst.msk [vmem:[#allocation2 + $0xc8] sm:$0xff] %vm1131, %v1074
      %1158 = vst.msk [vmem:[#allocation2 + $0xd0] sm:$0xff] %vm1131, %v1076
      %1159 = vst.msk [vmem:[#allocation2 + $0xd8] sm:$0xff] %vm1131, %v1078
      %1160 = vst.msk [vmem:[#allocation2 + $0xe0] sm:$0xff] %vm1131, %v1080
      %1161 = vst.msk [vmem:[#allocation2 + $0xe8] sm:$0xff] %vm1131, %v1082
      %1162 = vst.msk [vmem:[#allocation2 + $0xf0] sm:$0xff] %vm1131, %v1084
      %1163 = vst.msk [vmem:[#allocation2 + $0xf8] sm:$0xff] %vm1131, %v1086
      %1164 = vst.msk [vmem:[#allocation2 + $0x100] sm:$0xff] %vm1131, %v1088
      %1165 = vst.msk [vmem:[#allocation2 + $0x108] sm:$0xff] %vm1131, %v1090
      %1166 = vst.msk [vmem:[#allocation2 + $0x110] sm:$0xff] %vm1131, %v1092
      %1167 = vst.msk [vmem:[#allocation2 + $0x118] sm:$0xff] %vm1131, %v1094
      %1168 = vrot.lane.b32.xlu0 %v802, 28
      %v1169 = vpop.permute.xlu0 %1168
      %1170 = vrot.lane.b32.xlu0 %v803, 28
      %v1171 = vpop.permute.xlu0 %1170
      %1172 = vrot.lane.b32.xlu0 %v804, 28
      %v1173 = vpop.permute.xlu0 %1172
      %1174 = vrot.lane.b32.xlu0 %v805, 28
      %v1175 = vpop.permute.xlu0 %1174
      %1176 = vrot.lane.b32.xlu0 %v806, 28
      %v1177 = vpop.permute.xlu0 %1176
      %1178 = vrot.lane.b32.xlu0 %v807, 28
      %v1179 = vpop.permute.xlu0 %1178
      %1180 = vrot.lane.b32.xlu0 %v808, 28
      %v1181 = vpop.permute.xlu0 %1180
      %1182 = vrot.lane.b32.xlu0 %v809, 28
      %v1183 = vpop.permute.xlu0 %1182
      %1184 = vrot.lane.b32.xlu0 %v810, 28
      %v1185 = vpop.permute.xlu0 %1184
      %1186 = vrot.lane.b32.xlu0 %v811, 28
      %v1187 = vpop.permute.xlu0 %1186
      %1188 = vrot.lane.b32.xlu0 %v812, 28
      %v1189 = vpop.permute.xlu0 %1188
      %1190 = vrot.lane.b32.xlu0 %v813, 28
      %v1191 = vpop.permute.xlu0 %1190
      %1192 = vrot.lane.b32.xlu0 %v814, 28
      %v1193 = vpop.permute.xlu0 %1192
      %1194 = vrot.lane.b32.xlu0 %v815, 28
      %v1195 = vpop.permute.xlu0 %1194
      %1196 = vrot.lane.b32.xlu0 %v816, 28
      %v1197 = vpop.permute.xlu0 %1196
      %1198 = vrot.lane.b32.xlu0 %v817, 28
      %v1199 = vpop.permute.xlu0 %1198
      %1200 = vrot.lane.b32.xlu0 %v818, 28
      %v1201 = vpop.permute.xlu0 %1200
      %1202 = vrot.lane.b32.xlu0 %v819, 28
      %v1203 = vpop.permute.xlu0 %1202
      %1204 = vrot.lane.b32.xlu0 %v820, 28
      %v1205 = vpop.permute.xlu0 %1204
      %1206 = vrot.lane.b32.xlu0 %v821, 28
      %v1207 = vpop.permute.xlu0 %1206
      %1208 = vrot.lane.b32.xlu0 %v822, 28
      %v1209 = vpop.permute.xlu0 %1208
      %1210 = vrot.lane.b32.xlu0 %v823, 28
      %v1211 = vpop.permute.xlu0 %1210
      %1212 = vrot.lane.b32.xlu0 %v824, 28
      %v1213 = vpop.permute.xlu0 %1212
      %1214 = vrot.lane.b32.xlu0 %v825, 28
      %v1215 = vpop.permute.xlu0 %1214
      %1216 = vrot.lane.b32.xlu0 %v826, 28
      %v1217 = vpop.permute.xlu0 %1216
      %1218 = vrot.lane.b32.xlu0 %v827, 28
      %v1219 = vpop.permute.xlu0 %1218
      %1220 = vrot.lane.b32.xlu0 %v828, 28
      %v1221 = vpop.permute.xlu0 %1220
      %1222 = vrot.lane.b32.xlu0 %v829, 28
      %v1223 = vpop.permute.xlu0 %1222
      %1224 = vrot.lane.b32.xlu0 %v830, 28
      %v1225 = vpop.permute.xlu0 %1224
      %1226 = vrot.lane.b32.xlu0 %v831, 28
      %v1227 = vpop.permute.xlu0 %1226
      %1228 = vrot.lane.b32.xlu0 %v832, 28
      %v1229 = vpop.permute.xlu0 %1228
      %1230 = vrot.lane.b32.xlu0 %v833, 28
      %v1231 = vpop.permute.xlu0 %1230
      %1232 = vrot.lane.b32.xlu0 %v834, 28
      %v1233 = vpop.permute.xlu0 %1232
      %1234 = vrot.lane.b32.xlu0 %v835, 28
      %v1235 = vpop.permute.xlu0 %1234
      %vm1270 = vcmask 261344
      %1271 = vst.msk [vmem:[#allocation2] sm:$0xff] %vm1270, %v1169
      %1272 = vst.msk [vmem:[#allocation2 + $0x8] sm:$0xff] %vm1270, %v1171
      %1273 = vst.msk [vmem:[#allocation2 + $0x10] sm:$0xff] %vm1270, %v1173
      %1274 = vst.msk [vmem:[#allocation2 + $0x18] sm:$0xff] %vm1270, %v1175
      %1275 = vst.msk [vmem:[#allocation2 + $0x20] sm:$0xff] %vm1270, %v1177
      %1276 = vst.msk [vmem:[#allocation2 + $0x28] sm:$0xff] %vm1270, %v1179
      %1277 = vst.msk [vmem:[#allocation2 + $0x30] sm:$0xff] %vm1270, %v1181
      %1278 = vst.msk [vmem:[#allocation2 + $0x38] sm:$0xff] %vm1270, %v1183
      %1279 = vst.msk [vmem:[#allocation2 + $0x40] sm:$0xff] %vm1270, %v1185
      %1280 = vst.msk [vmem:[#allocation2 + $0x48] sm:$0xff] %vm1270, %v1187
      %1281 = vst.msk [vmem:[#allocation2 + $0x50] sm:$0xff] %vm1270, %v1189
      %1282 = vst.msk [vmem:[#allocation2 + $0x58] sm:$0xff] %vm1270, %v1191
      %1283 = vst.msk [vmem:[#allocation2 + $0x60] sm:$0xff] %vm1270, %v1193
      %1284 = vst.msk [vmem:[#allocation2 + $0x68] sm:$0xff] %vm1270, %v1195
      %1285 = vst.msk [vmem:[#allocation2 + $0x70] sm:$0xff] %vm1270, %v1197
      %1286 = vst.msk [vmem:[#allocation2 + $0x78] sm:$0xff] %vm1270, %v1199
      %1287 = vst.msk [vmem:[#allocation2 + $0x80] sm:$0xff] %vm1270, %v1201
      %1288 = vst.msk [vmem:[#allocation2 + $0x88] sm:$0xff] %vm1270, %v1203
      %1289 = vst.msk [vmem:[#allocation2 + $0x90] sm:$0xff] %vm1270, %v1205
      %1290 = vst.msk [vmem:[#allocation2 + $0x98] sm:$0xff] %vm1270, %v1207
      %1291 = vst.msk [vmem:[#allocation2 + $0xa0] sm:$0xff] %vm1270, %v1209
      %1292 = vst.msk [vmem:[#allocation2 + $0xa8] sm:$0xff] %vm1270, %v1211
      %1293 = vst.msk [vmem:[#allocation2 + $0xb0] sm:$0xff] %vm1270, %v1213
      %1294 = vst.msk [vmem:[#allocation2 + $0xb8] sm:$0xff] %vm1270, %v1215
      %1295 = vst.msk [vmem:[#allocation2 + $0xc0] sm:$0xff] %vm1270, %v1217
      %1296 = vst.msk [vmem:[#allocation2 + $0xc8] sm:$0xff] %vm1270, %v1219
      %1297 = vst.msk [vmem:[#allocation2 + $0xd0] sm:$0xff] %vm1270, %v1221
      %1298 = vst.msk [vmem:[#allocation2 + $0xd8] sm:$0xff] %vm1270, %v1223
      %1299 = vst.msk [vmem:[#allocation2 + $0xe0] sm:$0xff] %vm1270, %v1225
      %1300 = vst.msk [vmem:[#allocation2 + $0xe8] sm:$0xff] %vm1270, %v1227
      %1301 = vst.msk [vmem:[#allocation2 + $0xf0] sm:$0xff] %vm1270, %v1229
      %1302 = vst.msk [vmem:[#allocation2 + $0xf8] sm:$0xff] %vm1270, %v1231
      %1303 = vst.msk [vmem:[#allocation2 + $0x100] sm:$0xff] %vm1270, %v1233
      %1304 = vst.msk [vmem:[#allocation2 + $0x108] sm:$0xff] %vm1270, %v1235
      %1307 = vrot.lane.b32.xlu0 %v838, 28
      %v1308 = vpop.permute.xlu0 %1307
      %1309 = vrot.lane.b32.xlu0 %v839, 28
      %v1310 = vpop.permute.xlu0 %1309
      %1313 = vst.msk [vmem:[%s797] sm:$0xff] %vm1270, %v1308
      %1314 = vst.msk [vmem:[%s797 + $0x8] sm:$0xff] %vm1270, %v1310
      %v1315 = vld [vmem:[%s346 + $0x2] sm:$0xff]
      %v1316 = vld [vmem:[%s346 + $0xa] sm:$0xff]
      %v1317 = vld [vmem:[%s346 + $0x1a] sm:$0xff]
      %v1318 = vld [vmem:[%s346 + $0x22] sm:$0xff]
      %v1319 = vld [vmem:[%s346 + $0x32] sm:$0xff]
      %v1320 = vld [vmem:[%s346 + $0x3a] sm:$0xff]
      %v1321 = vld [vmem:[%s346 + $0x4a] sm:$0xff]
      %v1322 = vld [vmem:[%s346 + $0x52] sm:$0xff]
      %v1323 = vld [vmem:[%s346 + $0x62] sm:$0xff]
      %v1324 = vld [vmem:[%s346 + $0x6a] sm:$0xff]
      %v1325 = vld [vmem:[%s346 + $0x7a] sm:$0xff]
      %v1326 = vld [vmem:[%s346 + $0x82] sm:$0xff]
      %v1327 = vld [vmem:[%s346 + $0x92] sm:$0xff]
      %v1328 = vld [vmem:[%s346 + $0x9a] sm:$0xff]
      %v1329 = vld [vmem:[%s346 + $0xaa] sm:$0xff]
      %v1330 = vld [vmem:[%s346 + $0xb2] sm:$0xff]
      %v1331 = vld [vmem:[%s346 + $0xc2] sm:$0xff]
      %v1332 = vld [vmem:[%s346 + $0xca] sm:$0xff]
      %v1333 = vld [vmem:[%s346 + $0xda] sm:$0xff]
      %v1334 = vld [vmem:[%s346 + $0xe2] sm:$0xff]
      %v1335 = vld [vmem:[%s346 + $0xf2] sm:$0xff]
      %v1336 = vld [vmem:[%s346 + $0xfa] sm:$0xff]
      %v1337 = vld [vmem:[%s346 + $0x10a] sm:$0xff]
      %v1338 = vld [vmem:[%s346 + $0x112] sm:$0xff]
      %v1339 = vld [vmem:[%s346 + $0x122] sm:$0xff]
      %v1340 = vld [vmem:[%s346 + $0x12a] sm:$0xff]
      %v1341 = vld [vmem:[%s346 + $0x13a] sm:$0xff]
      %v1342 = vld [vmem:[%s346 + $0x142] sm:$0xff]
      %v1343 = vld [vmem:[%s346 + $0x152] sm:$0xff]
      %v1344 = vld [vmem:[%s346 + $0x15a] sm:$0xff]
      %v1345 = vld [vmem:[%s346 + $0x16a] sm:$0xff]
      %v1346 = vld [vmem:[%s346 + $0x172] sm:$0xff]
      %v1347 = vld [vmem:[%s346 + $0x182] sm:$0xff]
      %v1348 = vld [vmem:[%s346 + $0x18a] sm:$0xff]
      %v1349 = vld [vmem:[%s346 + $0x19a] sm:$0xff]
      %v1350 = vld [vmem:[%s346 + $0x1a2] sm:$0xff]
      %v1351 = vld [vmem:[%s360 + $0x2] sm:$0xff]
      %v1352 = vld [vmem:[%s360 + $0xa] sm:$0xff]
      %v1353 = vld [vmem:[%s377 + $0x2] sm:$0xff]
      %v1354 = vld [vmem:[%s377 + $0xa] sm:$0xff]
      %1357 = vrot.lane.b32.xlu0 %v1351, 8
      %v1358 = vpop.permute.xlu0 %1357
      %1359 = vrot.lane.b32.xlu0 %v1352, 8
      %v1360 = vpop.permute.xlu0 %1359
      %vm1363 = vcmask 97344
      %1364 = vst.msk [vmem:[#allocation2] sm:$0xff] %vm1363, %v1358
      %1365 = vst.msk [vmem:[#allocation2 + $0x8] sm:$0xff] %vm1363, %v1360
      %1400 = vrot.lane.b32.xlu0 %v1315, 8
      %v1401 = vpop.permute.xlu0 %1400
      %1402 = vrot.lane.b32.xlu0 %v1316, 8
      %v1403 = vpop.permute.xlu0 %1402
      %1404 = vrot.lane.b32.xlu0 %v1317, 8
      %v1405 = vpop.permute.xlu0 %1404
      %1406 = vrot.lane.b32.xlu0 %v1318, 8
      %v1407 = vpop.permute.xlu0 %1406
      %1408 = vrot.lane.b32.xlu0 %v1319, 8
      %v1409 = vpop.permute.xlu0 %1408
      %1410 = vrot.lane.b32.xlu0 %v1320, 8
      %v1411 = vpop.permute.xlu0 %1410
      %1412 = vrot.lane.b32.xlu0 %v1321, 8
      %v1413 = vpop.permute.xlu0 %1412
      %1414 = vrot.lane.b32.xlu0 %v1322, 8
      %v1415 = vpop.permute.xlu0 %1414
      %1416 = vrot.lane.b32.xlu0 %v1323, 8
      %v1417 = vpop.permute.xlu0 %1416
      %1418 = vrot.lane.b32.xlu0 %v1324, 8
      %v1419 = vpop.permute.xlu0 %1418
      %1420 = vrot.lane.b32.xlu0 %v1325, 8
      %v1421 = vpop.permute.xlu0 %1420
      %1422 = vrot.lane.b32.xlu0 %v1326, 8
      %v1423 = vpop.permute.xlu0 %1422
      %1424 = vrot.lane.b32.xlu0 %v1327, 8
      %v1425 = vpop.permute.xlu0 %1424
      %1426 = vrot.lane.b32.xlu0 %v1328, 8
      %v1427 = vpop.permute.xlu0 %1426
      %1428 = vrot.lane.b32.xlu0 %v1329, 8
      %v1429 = vpop.permute.xlu0 %1428
      %1430 = vrot.lane.b32.xlu0 %v1330, 8
      %v1431 = vpop.permute.xlu0 %1430
      %1432 = vrot.lane.b32.xlu0 %v1331, 8
      %v1433 = vpop.permute.xlu0 %1432
      %1434 = vrot.lane.b32.xlu0 %v1332, 8
      %v1435 = vpop.permute.xlu0 %1434
      %1436 = vrot.lane.b32.xlu0 %v1333, 8
      %v1437 = vpop.permute.xlu0 %1436
      %1438 = vrot.lane.b32.xlu0 %v1334, 8
      %v1439 = vpop.permute.xlu0 %1438
      %1440 = vrot.lane.b32.xlu0 %v1335, 8
      %v1441 = vpop.permute.xlu0 %1440
      %1442 = vrot.lane.b32.xlu0 %v1336, 8
      %v1443 = vpop.permute.xlu0 %1442
      %1444 = vrot.lane.b32.xlu0 %v1337, 8
      %v1445 = vpop.permute.xlu0 %1444
      %1446 = vrot.lane.b32.xlu0 %v1338, 8
      %v1447 = vpop.permute.xlu0 %1446
      %1448 = vrot.lane.b32.xlu0 %v1339, 8
      %v1449 = vpop.permute.xlu0 %1448
      %1450 = vrot.lane.b32.xlu0 %v1340, 8
      %v1451 = vpop.permute.xlu0 %1450
      %1452 = vrot.lane.b32.xlu0 %v1341, 8
      %v1453 = vpop.permute.xlu0 %1452
      %1454 = vrot.lane.b32.xlu0 %v1342, 8
      %v1455 = vpop.permute.xlu0 %1454
      %1456 = vrot.lane.b32.xlu0 %v1343, 8
      %v1457 = vpop.permute.xlu0 %1456
      %1458 = vrot.lane.b32.xlu0 %v1344, 8
      %v1459 = vpop.permute.xlu0 %1458
      %1460 = vrot.lane.b32.xlu0 %v1345, 8
      %v1461 = vpop.permute.xlu0 %1460
      %1462 = vrot.lane.b32.xlu0 %v1346, 8
      %v1463 = vpop.permute.xlu0 %1462
      %1464 = vrot.lane.b32.xlu0 %v1347, 8
      %v1465 = vpop.permute.xlu0 %1464
      %1466 = vrot.lane.b32.xlu0 %v1348, 8
      %v1467 = vpop.permute.xlu0 %1466
      %1502 = vst.msk [vmem:[%s436] sm:$0xff] %vm1363, %v1401
      %1503 = vst.msk [vmem:[%s436 + $0x8] sm:$0xff] %vm1363, %v1403
      %1504 = vst.msk [vmem:[%s436 + $0x10] sm:$0xff] %vm1363, %v1405
      %1505 = vst.msk [vmem:[%s436 + $0x18] sm:$0xff] %vm1363, %v1407
      %1506 = vst.msk [vmem:[%s436 + $0x20] sm:$0xff] %vm1363, %v1409
      %1507 = vst.msk [vmem:[%s436 + $0x28] sm:$0xff] %vm1363, %v1411
      %1508 = vst.msk [vmem:[%s436 + $0x30] sm:$0xff] %vm1363, %v1413
      %1509 = vst.msk [vmem:[%s436 + $0x38] sm:$0xff] %vm1363, %v1415
      %1510 = vst.msk [vmem:[%s436 + $0x40] sm:$0xff] %vm1363, %v1417
      %1511 = vst.msk [vmem:[%s436 + $0x48] sm:$0xff] %vm1363, %v1419
      %1512 = vst.msk [vmem:[%s436 + $0x50] sm:$0xff] %vm1363, %v1421
      %1513 = vst.msk [vmem:[%s436 + $0x58] sm:$0xff] %vm1363, %v1423
      %1514 = vst.msk [vmem:[%s436 + $0x60] sm:$0xff] %vm1363, %v1425
      %1515 = vst.msk [vmem:[%s436 + $0x68] sm:$0xff] %vm1363, %v1427
      %1516 = vst.msk [vmem:[%s436 + $0x70] sm:$0xff] %vm1363, %v1429
      %1517 = vst.msk [vmem:[%s436 + $0x78] sm:$0xff] %vm1363, %v1431
      %1518 = vst.msk [vmem:[%s436 + $0x80] sm:$0xff] %vm1363, %v1433
      %1519 = vst.msk [vmem:[%s436 + $0x88] sm:$0xff] %vm1363, %v1435
      %1520 = vst.msk [vmem:[%s436 + $0x90] sm:$0xff] %vm1363, %v1437
      %1521 = vst.msk [vmem:[%s436 + $0x98] sm:$0xff] %vm1363, %v1439
      %1522 = vst.msk [vmem:[%s436 + $0xa0] sm:$0xff] %vm1363, %v1441
      %1523 = vst.msk [vmem:[%s436 + $0xa8] sm:$0xff] %vm1363, %v1443
      %1524 = vst.msk [vmem:[%s436 + $0xb0] sm:$0xff] %vm1363, %v1445
      %1525 = vst.msk [vmem:[%s436 + $0xb8] sm:$0xff] %vm1363, %v1447
      %1526 = vst.msk [vmem:[%s436 + $0xc0] sm:$0xff] %vm1363, %v1449
      %1527 = vst.msk [vmem:[%s436 + $0xc8] sm:$0xff] %vm1363, %v1451
      %1528 = vst.msk [vmem:[%s436 + $0xd0] sm:$0xff] %vm1363, %v1453
      %1529 = vst.msk [vmem:[%s436 + $0xd8] sm:$0xff] %vm1363, %v1455
      %1530 = vst.msk [vmem:[%s436 + $0xe0] sm:$0xff] %vm1363, %v1457
      %1531 = vst.msk [vmem:[%s436 + $0xe8] sm:$0xff] %vm1363, %v1459
      %1532 = vst.msk [vmem:[%s436 + $0xf0] sm:$0xff] %vm1363, %v1461
      %1533 = vst.msk [vmem:[%s436 + $0xf8] sm:$0xff] %vm1363, %v1463
      %1534 = vst.msk [vmem:[%s436 + $0x100] sm:$0xff] %vm1363, %v1465
      %1535 = vst.msk [vmem:[%s436 + $0x108] sm:$0xff] %vm1363, %v1467
      %1538 = vrot.lane.b32.xlu0 %v1315, 20
      %v1539 = vpop.permute.xlu0 %1538
      %1540 = vrot.lane.b32.xlu0 %v1316, 20
      %v1541 = vpop.permute.xlu0 %1540
      %1542 = vrot.lane.b32.xlu0 %v1317, 20
      %v1543 = vpop.permute.xlu0 %1542
      %1544 = vrot.lane.b32.xlu0 %v1318, 20
      %v1545 = vpop.permute.xlu0 %1544
      %1546 = vrot.lane.b32.xlu0 %v1319, 20
      %v1547 = vpop.permute.xlu0 %1546
      %1548 = vrot.lane.b32.xlu0 %v1320, 20
      %v1549 = vpop.permute.xlu0 %1548
      %1550 = vrot.lane.b32.xlu0 %v1321, 20
      %v1551 = vpop.permute.xlu0 %1550
      %1552 = vrot.lane.b32.xlu0 %v1322, 20
      %v1553 = vpop.permute.xlu0 %1552
      %1554 = vrot.lane.b32.xlu0 %v1323, 20
      %v1555 = vpop.permute.xlu0 %1554
      %1556 = vrot.lane.b32.xlu0 %v1324, 20
      %v1557 = vpop.permute.xlu0 %1556
      %1558 = vrot.lane.b32.xlu0 %v1325, 20
      %v1559 = vpop.permute.xlu0 %1558
      %1560 = vrot.lane.b32.xlu0 %v1326, 20
      %v1561 = vpop.permute.xlu0 %1560
      %1562 = vrot.lane.b32.xlu0 %v1327, 20
      %v1563 = vpop.permute.xlu0 %1562
      %1564 = vrot.lane.b32.xlu0 %v1328, 20
      %v1565 = vpop.permute.xlu0 %1564
      %1566 = vrot.lane.b32.xlu0 %v1329, 20
      %v1567 = vpop.permute.xlu0 %1566
      %1568 = vrot.lane.b32.xlu0 %v1330, 20
      %v1569 = vpop.permute.xlu0 %1568
      %1570 = vrot.lane.b32.xlu0 %v1331, 20
      %v1571 = vpop.permute.xlu0 %1570
      %1572 = vrot.lane.b32.xlu0 %v1332, 20
      %v1573 = vpop.permute.xlu0 %1572
      %1574 = vrot.lane.b32.xlu0 %v1333, 20
      %v1575 = vpop.permute.xlu0 %1574
      %1576 = vrot.lane.b32.xlu0 %v1334, 20
      %v1577 = vpop.permute.xlu0 %1576
      %1578 = vrot.lane.b32.xlu0 %v1335, 20
      %v1579 = vpop.permute.xlu0 %1578
      %1580 = vrot.lane.b32.xlu0 %v1336, 20
      %v1581 = vpop.permute.xlu0 %1580
      %1582 = vrot.lane.b32.xlu0 %v1337, 20
      %v1583 = vpop.permute.xlu0 %1582
      %1584 = vrot.lane.b32.xlu0 %v1338, 20
      %v1585 = vpop.permute.xlu0 %1584
      %1586 = vrot.lane.b32.xlu0 %v1339, 20
      %v1587 = vpop.permute.xlu0 %1586
      %1588 = vrot.lane.b32.xlu0 %v1340, 20
      %v1589 = vpop.permute.xlu0 %1588
      %1590 = vrot.lane.b32.xlu0 %v1341, 20
      %v1591 = vpop.permute.xlu0 %1590
      %1592 = vrot.lane.b32.xlu0 %v1342, 20
      %v1593 = vpop.permute.xlu0 %1592
      %1594 = vrot.lane.b32.xlu0 %v1343, 20
      %v1595 = vpop.permute.xlu0 %1594
      %1596 = vrot.lane.b32.xlu0 %v1344, 20
      %v1597 = vpop.permute.xlu0 %1596
      %1598 = vrot.lane.b32.xlu0 %v1345, 20
      %v1599 = vpop.permute.xlu0 %1598
      %1600 = vrot.lane.b32.xlu0 %v1346, 20
      %v1601 = vpop.permute.xlu0 %1600
      %1602 = vrot.lane.b32.xlu0 %v1347, 20
      %v1603 = vpop.permute.xlu0 %1602
      %1604 = vrot.lane.b32.xlu0 %v1348, 20
      %v1605 = vpop.permute.xlu0 %1604
      %1606 = vrot.lane.b32.xlu0 %v1349, 20
      %v1607 = vpop.permute.xlu0 %1606
      %1608 = vrot.lane.b32.xlu0 %v1350, 20
      %v1609 = vpop.permute.xlu0 %1608
      %vm1646 = vcmask 195744
      %1647 = vst.msk [vmem:[#allocation2] sm:$0xff] %vm1646, %v1539
      %1648 = vst.msk [vmem:[#allocation2 + $0x8] sm:$0xff] %vm1646, %v1541
      %1649 = vst.msk [vmem:[#allocation2 + $0x10] sm:$0xff] %vm1646, %v1543
      %1650 = vst.msk [vmem:[#allocation2 + $0x18] sm:$0xff] %vm1646, %v1545
      %1651 = vst.msk [vmem:[#allocation2 + $0x20] sm:$0xff] %vm1646, %v1547
      %1652 = vst.msk [vmem:[#allocation2 + $0x28] sm:$0xff] %vm1646, %v1549
      %1653 = vst.msk [vmem:[#allocation2 + $0x30] sm:$0xff] %vm1646, %v1551
      %1654 = vst.msk [vmem:[#allocation2 + $0x38] sm:$0xff] %vm1646, %v1553
      %1655 = vst.msk [vmem:[#allocation2 + $0x40] sm:$0xff] %vm1646, %v1555
      %1656 = vst.msk [vmem:[#allocation2 + $0x48] sm:$0xff] %vm1646, %v1557
      %1657 = vst.msk [vmem:[#allocation2 + $0x50] sm:$0xff] %vm1646, %v1559
      %1658 = vst.msk [vmem:[#allocation2 + $0x58] sm:$0xff] %vm1646, %v1561
      %1659 = vst.msk [vmem:[#allocation2 + $0x60] sm:$0xff] %vm1646, %v1563
      %1660 = vst.msk [vmem:[#allocation2 + $0x68] sm:$0xff] %vm1646, %v1565
      %1661 = vst.msk [vmem:[#allocation2 + $0x70] sm:$0xff] %vm1646, %v1567
      %1662 = vst.msk [vmem:[#allocation2 + $0x78] sm:$0xff] %vm1646, %v1569
      %1663 = vst.msk [vmem:[#allocation2 + $0x80] sm:$0xff] %vm1646, %v1571
      %1664 = vst.msk [vmem:[#allocation2 + $0x88] sm:$0xff] %vm1646, %v1573
      %1665 = vst.msk [vmem:[#allocation2 + $0x90] sm:$0xff] %vm1646, %v1575
      %1666 = vst.msk [vmem:[#allocation2 + $0x98] sm:$0xff] %vm1646, %v1577
      %1667 = vst.msk [vmem:[#allocation2 + $0xa0] sm:$0xff] %vm1646, %v1579
      %1668 = vst.msk [vmem:[#allocation2 + $0xa8] sm:$0xff] %vm1646, %v1581
      %1669 = vst.msk [vmem:[#allocation2 + $0xb0] sm:$0xff] %vm1646, %v1583
      %1670 = vst.msk [vmem:[#allocation2 + $0xb8] sm:$0xff] %vm1646, %v1585
      %1671 = vst.msk [vmem:[#allocation2 + $0xc0] sm:$0xff] %vm1646, %v1587
      %1672 = vst.msk [vmem:[#allocation2 + $0xc8] sm:$0xff] %vm1646, %v1589
      %1673 = vst.msk [vmem:[#allocation2 + $0xd0] sm:$0xff] %vm1646, %v1591
      %1674 = vst.msk [vmem:[#allocation2 + $0xd8] sm:$0xff] %vm1646, %v1593
      %1675 = vst.msk [vmem:[#allocation2 + $0xe0] sm:$0xff] %vm1646, %v1595
      %1676 = vst.msk [vmem:[#allocation2 + $0xe8] sm:$0xff] %vm1646, %v1597
      %1677 = vst.msk [vmem:[#allocation2 + $0xf0] sm:$0xff] %vm1646, %v1599
      %1678 = vst.msk [vmem:[#allocation2 + $0xf8] sm:$0xff] %vm1646, %v1601
      %1679 = vst.msk [vmem:[#allocation2 + $0x100] sm:$0xff] %vm1646, %v1603
      %1680 = vst.msk [vmem:[#allocation2 + $0x108] sm:$0xff] %vm1646, %v1605
      %1681 = vst.msk [vmem:[#allocation2 + $0x110] sm:$0xff] %vm1646, %v1607
      %1682 = vst.msk [vmem:[#allocation2 + $0x118] sm:$0xff] %vm1646, %v1609
      %1683 = vrot.lane.b32.xlu0 %v1317, 32
      %v1684 = vpop.permute.xlu0 %1683
      %1685 = vrot.lane.b32.xlu0 %v1318, 32
      %v1686 = vpop.permute.xlu0 %1685
      %1687 = vrot.lane.b32.xlu0 %v1319, 32
      %v1688 = vpop.permute.xlu0 %1687
      %1689 = vrot.lane.b32.xlu0 %v1320, 32
      %v1690 = vpop.permute.xlu0 %1689
      %1691 = vrot.lane.b32.xlu0 %v1321, 32
      %v1692 = vpop.permute.xlu0 %1691
      %1693 = vrot.lane.b32.xlu0 %v1322, 32
      %v1694 = vpop.permute.xlu0 %1693
      %1695 = vrot.lane.b32.xlu0 %v1323, 32
      %v1696 = vpop.permute.xlu0 %1695
      %1697 = vrot.lane.b32.xlu0 %v1324, 32
      %v1698 = vpop.permute.xlu0 %1697
      %1699 = vrot.lane.b32.xlu0 %v1325, 32
      %v1700 = vpop.permute.xlu0 %1699
      %1701 = vrot.lane.b32.xlu0 %v1326, 32
      %v1702 = vpop.permute.xlu0 %1701
      %1703 = vrot.lane.b32.xlu0 %v1327, 32
      %v1704 = vpop.permute.xlu0 %1703
      %1705 = vrot.lane.b32.xlu0 %v1328, 32
      %v1706 = vpop.permute.xlu0 %1705
      %1707 = vrot.lane.b32.xlu0 %v1329, 32
      %v1708 = vpop.permute.xlu0 %1707
      %1709 = vrot.lane.b32.xlu0 %v1330, 32
      %v1710 = vpop.permute.xlu0 %1709
      %1711 = vrot.lane.b32.xlu0 %v1331, 32
      %v1712 = vpop.permute.xlu0 %1711
      %1713 = vrot.lane.b32.xlu0 %v1332, 32
      %v1714 = vpop.permute.xlu0 %1713
      %1715 = vrot.lane.b32.xlu0 %v1333, 32
      %v1716 = vpop.permute.xlu0 %1715
      %1717 = vrot.lane.b32.xlu0 %v1334, 32
      %v1718 = vpop.permute.xlu0 %1717
      %1719 = vrot.lane.b32.xlu0 %v1335, 32
      %v1720 = vpop.permute.xlu0 %1719
      %1721 = vrot.lane.b32.xlu0 %v1336, 32
      %v1722 = vpop.permute.xlu0 %1721
      %1723 = vrot.lane.b32.xlu0 %v1337, 32
      %v1724 = vpop.permute.xlu0 %1723
      %1725 = vrot.lane.b32.xlu0 %v1338, 32
      %v1726 = vpop.permute.xlu0 %1725
      %1727 = vrot.lane.b32.xlu0 %v1339, 32
      %v1728 = vpop.permute.xlu0 %1727
      %1729 = vrot.lane.b32.xlu0 %v1340, 32
      %v1730 = vpop.permute.xlu0 %1729
      %1731 = vrot.lane.b32.xlu0 %v1341, 32
      %v1732 = vpop.permute.xlu0 %1731
      %1733 = vrot.lane.b32.xlu0 %v1342, 32
      %v1734 = vpop.permute.xlu0 %1733
      %1735 = vrot.lane.b32.xlu0 %v1343, 32
      %v1736 = vpop.permute.xlu0 %1735
      %1737 = vrot.lane.b32.xlu0 %v1344, 32
      %v1738 = vpop.permute.xlu0 %1737
      %1739 = vrot.lane.b32.xlu0 %v1345, 32
      %v1740 = vpop.permute.xlu0 %1739
      %1741 = vrot.lane.b32.xlu0 %v1346, 32
      %v1742 = vpop.permute.xlu0 %1741
      %1743 = vrot.lane.b32.xlu0 %v1347, 32
      %v1744 = vpop.permute.xlu0 %1743
      %1745 = vrot.lane.b32.xlu0 %v1348, 32
      %v1746 = vpop.permute.xlu0 %1745
      %1747 = vrot.lane.b32.xlu0 %v1349, 32
      %v1748 = vpop.permute.xlu0 %1747
      %1749 = vrot.lane.b32.xlu0 %v1350, 32
      %v1750 = vpop.permute.xlu0 %1749
      %vm1785 = vcmask 294144
      %1786 = vst.msk [vmem:[#allocation2] sm:$0xff] %vm1785, %v1684
      %1787 = vst.msk [vmem:[#allocation2 + $0x8] sm:$0xff] %vm1785, %v1686
      %1788 = vst.msk [vmem:[#allocation2 + $0x10] sm:$0xff] %vm1785, %v1688
      %1789 = vst.msk [vmem:[#allocation2 + $0x18] sm:$0xff] %vm1785, %v1690
      %1790 = vst.msk [vmem:[#allocation2 + $0x20] sm:$0xff] %vm1785, %v1692
      %1791 = vst.msk [vmem:[#allocation2 + $0x28] sm:$0xff] %vm1785, %v1694
      %1792 = vst.msk [vmem:[#allocation2 + $0x30] sm:$0xff] %vm1785, %v1696
      %1793 = vst.msk [vmem:[#allocation2 + $0x38] sm:$0xff] %vm1785, %v1698
      %1794 = vst.msk [vmem:[#allocation2 + $0x40] sm:$0xff] %vm1785, %v1700
      %1795 = vst.msk [vmem:[#allocation2 + $0x48] sm:$0xff] %vm1785, %v1702
      %1796 = vst.msk [vmem:[#allocation2 + $0x50] sm:$0xff] %vm1785, %v1704
      %1797 = vst.msk [vmem:[#allocation2 + $0x58] sm:$0xff] %vm1785, %v1706
      %1798 = vst.msk [vmem:[#allocation2 + $0x60] sm:$0xff] %vm1785, %v1708
      %1799 = vst.msk [vmem:[#allocation2 + $0x68] sm:$0xff] %vm1785, %v1710
      %1800 = vst.msk [vmem:[#allocation2 + $0x70] sm:$0xff] %vm1785, %v1712
      %1801 = vst.msk [vmem:[#allocation2 + $0x78] sm:$0xff] %vm1785, %v1714
      %1802 = vst.msk [vmem:[#allocation2 + $0x80] sm:$0xff] %vm1785, %v1716
      %1803 = vst.msk [vmem:[#allocation2 + $0x88] sm:$0xff] %vm1785, %v1718
      %1804 = vst.msk [vmem:[#allocation2 + $0x90] sm:$0xff] %vm1785, %v1720
      %1805 = vst.msk [vmem:[#allocation2 + $0x98] sm:$0xff] %vm1785, %v1722
      %1806 = vst.msk [vmem:[#allocation2 + $0xa0] sm:$0xff] %vm1785, %v1724
      %1807 = vst.msk [vmem:[#allocation2 + $0xa8] sm:$0xff] %vm1785, %v1726
      %1808 = vst.msk [vmem:[#allocation2 + $0xb0] sm:$0xff] %vm1785, %v1728
      %1809 = vst.msk [vmem:[#allocation2 + $0xb8] sm:$0xff] %vm1785, %v1730
      %1810 = vst.msk [vmem:[#allocation2 + $0xc0] sm:$0xff] %vm1785, %v1732
      %1811 = vst.msk [vmem:[#allocation2 + $0xc8] sm:$0xff] %vm1785, %v1734
      %1812 = vst.msk [vmem:[#allocation2 + $0xd0] sm:$0xff] %vm1785, %v1736
      %1813 = vst.msk [vmem:[#allocation2 + $0xd8] sm:$0xff] %vm1785, %v1738
      %1814 = vst.msk [vmem:[#allocation2 + $0xe0] sm:$0xff] %vm1785, %v1740
      %1815 = vst.msk [vmem:[#allocation2 + $0xe8] sm:$0xff] %vm1785, %v1742
      %1816 = vst.msk [vmem:[#allocation2 + $0xf0] sm:$0xff] %vm1785, %v1744
      %1817 = vst.msk [vmem:[#allocation2 + $0xf8] sm:$0xff] %vm1785, %v1746
      %1818 = vst.msk [vmem:[#allocation2 + $0x100] sm:$0xff] %vm1785, %v1748
      %1819 = vst.msk [vmem:[#allocation2 + $0x108] sm:$0xff] %vm1785, %v1750
      %1822 = vrot.lane.b32.xlu0 %v1353, 32
      %v1823 = vpop.permute.xlu0 %1822
      %1824 = vrot.lane.b32.xlu0 %v1354, 32
      %v1825 = vpop.permute.xlu0 %1824
      %1828 = vst.msk [vmem:[%s797] sm:$0xff] %vm1785, %v1823
      %1829 = vst.msk [vmem:[%s797 + $0x8] sm:$0xff] %vm1785, %v1825
      %v1830 = vld [vmem:[#allocation2] sm:$0xff]
      %v1831 = vld [vmem:[#allocation2 + $0x8] sm:$0xff]
      %v1832 = vld [vmem:[#allocation2 + $0x10] sm:$0xff]
      %v1833 = vld [vmem:[#allocation2 + $0x18] sm:$0xff]
      %v1834 = vld [vmem:[#allocation2 + $0x20] sm:$0xff]
      %v1835 = vld [vmem:[#allocation2 + $0x28] sm:$0xff]
      %v1836 = vld [vmem:[#allocation2 + $0x30] sm:$0xff]
      %v1837 = vld [vmem:[#allocation2 + $0x38] sm:$0xff]
      %v1838 = vld [vmem:[#allocation2 + $0x40] sm:$0xff]
      %v1839 = vld [vmem:[#allocation2 + $0x48] sm:$0xff]
      %v1840 = vld [vmem:[#allocation2 + $0x50] sm:$0xff]
      %v1841 = vld [vmem:[#allocation2 + $0x58] sm:$0xff]
      %v1842 = vld [vmem:[#allocation2 + $0x60] sm:$0xff]
      %v1843 = vld [vmem:[#allocation2 + $0x68] sm:$0xff]
      %v1844 = vld [vmem:[#allocation2 + $0x70] sm:$0xff]
      %v1845 = vld [vmem:[#allocation2 + $0x78] sm:$0xff]
      %v1846 = vld [vmem:[#allocation2 + $0x80] sm:$0xff]
      %v1847 = vld [vmem:[#allocation2 + $0x88] sm:$0xff]
      %v1848 = vld [vmem:[#allocation2 + $0x90] sm:$0xff]
      %v1849 = vld [vmem:[#allocation2 + $0x98] sm:$0xff]
      %v1850 = vld [vmem:[#allocation2 + $0xa0] sm:$0xff]
      %v1851 = vld [vmem:[#allocation2 + $0xa8] sm:$0xff]
      %v1852 = vld [vmem:[#allocation2 + $0xb0] sm:$0xff]
      %v1853 = vld [vmem:[#allocation2 + $0xb8] sm:$0xff]
      %v1854 = vld [vmem:[#allocation2 + $0xc0] sm:$0xff]
      %v1855 = vld [vmem:[#allocation2 + $0xc8] sm:$0xff]
      %v1856 = vld [vmem:[#allocation2 + $0xd0] sm:$0xff]
      %v1857 = vld [vmem:[#allocation2 + $0xd8] sm:$0xff]
      %v1858 = vld [vmem:[#allocation2 + $0xe0] sm:$0xff]
      %v1859 = vld [vmem:[#allocation2 + $0xe8] sm:$0xff]
      %v1860 = vld [vmem:[#allocation2 + $0xf0] sm:$0xff]
      %v1861 = vld [vmem:[#allocation2 + $0xf8] sm:$0xff]
      %v1862 = vld [vmem:[#allocation2 + $0x100] sm:$0xff]
      %v1863 = vld [vmem:[#allocation2 + $0x108] sm:$0xff]
      %v1864 = vld [vmem:[#allocation2 + $0x110] sm:$0xff]
      %v1865 = vld [vmem:[#allocation2 + $0x118] sm:$0xff]
      %v1866 = vld [vmem:[%s3] sm:$0xff]
      %v1867 = vld [vmem:[%s3 + $0x8] sm:$0xff]
      %v1868 = vld [vmem:[%s3 + $0x10] sm:$0xff]
      %v1869 = vld [vmem:[%s3 + $0x18] sm:$0xff]
      %v1870 = vld [vmem:[%s3 + $0x20] sm:$0xf]
      %v1871 = vld [vmem:[%s4] sm:$0x1]
      %v1873 = vlaneseq
      %v1874 = vshrl.u32 %v1873, 7
      %v1875 = vsub.s32 0, %v1874
      %v1876 = vrot.slane %v1871, %v1875
      %vm1878 = vcmask 293888
      %v1880 = vsel %vm1878, %v1830, 0
      %v1883 = vsel %vm1878, %v1831, 0
      %v1886 = vsel %vm1878, %v1832, 0
      %v1889 = vsel %vm1878, %v1833, 0
      %v1892 = vsel %vm1878, %v1834, 0
      %v1895 = vsel %vm1878, %v1835, 0
      %v1898 = vsel %vm1878, %v1836, 0
      %v1901 = vsel %vm1878, %v1837, 0
      %v1904 = vsel %vm1878, %v1838, 0
      %v1907 = vsel %vm1878, %v1839, 0
      %v1910 = vsel %vm1878, %v1840, 0
      %v1913 = vsel %vm1878, %v1841, 0
      %v1916 = vsel %vm1878, %v1842, 0
      %v1919 = vsel %vm1878, %v1843, 0
      %v1922 = vsel %vm1878, %v1844, 0
      %v1925 = vsel %vm1878, %v1845, 0
      %v1928 = vsel %vm1878, %v1846, 0
      %v1931 = vsel %vm1878, %v1847, 0
      %v1934 = vsel %vm1878, %v1848, 0
      %v1937 = vsel %vm1878, %v1849, 0
      %v1940 = vsel %vm1878, %v1850, 0
      %v1943 = vsel %vm1878, %v1851, 0
      %v1946 = vsel %vm1878, %v1852, 0
      %v1949 = vsel %vm1878, %v1853, 0
      %v1952 = vsel %vm1878, %v1854, 0
      %v1955 = vsel %vm1878, %v1855, 0
      %v1958 = vsel %vm1878, %v1856, 0
      %v1961 = vsel %vm1878, %v1857, 0
      %v1964 = vsel %vm1878, %v1858, 0
      %v1967 = vsel %vm1878, %v1859, 0
      %v1970 = vsel %vm1878, %v1860, 0
      %v1973 = vsel %vm1878, %v1861, 0
      %v1976 = vsel %vm1878, %v1862, 0
      %v1979 = vsel %vm1878, %v1863, 0
      %v1982 = vsel %vm1878, %v1864, 0
      %v1985 = vsel %vm1878, %v1865, 0
      %vm1987 = vcmask 1043456
      %v1989 = vsel %vm1987, %v1870, 0
      %1991 = vmatprep.subr.mxu0 0.0
      %1992 = vmatpush1.msra.mxu0 %v1866
      %1993 = vmatprep.subr.mxu0 0.0
      %1994 = vmatpush1.msra.mxu0 %v1867
      %1995 = vmatprep.subr.mxu0 0.0
      %1996 = vmatpush1.msra.mxu0 %v1868
      %1997 = vmatprep.subr.mxu0 0.0
      %1998 = vmatpush1.msra.mxu0 %v1869
      %1999 = vmatprep.subr.mxu0 0.0
      %2000 = vmatpush1.msra.mxu0 %v1989
      %2001 = vmatprep.subr.mxu0 0.0
      %2002 = vmatpush1.msra.mxu0 0.0
      %2003 = vmatprep.subr.mxu0 0.0
      %2004 = vmatpush1.msra.mxu0 0.0
      %2005 = vmatprep.subr.mxu0 0.0
      %2006 = vmatpush1.msra.mxu0 0.0
      %2007 = vmatprep.subr.mxu0 0.0
      %2008 = vmatpush1.msra.mxu0 0.0
      %2009 = vmatprep.subr.mxu0 0.0
      %2010 = vmatpush1.msra.mxu0 0.0
      %2011 = vmatprep.subr.mxu0 0.0
      %2012 = vmatpush1.msra.mxu0 0.0
      %2013 = vmatprep.subr.mxu0 0.0
      %2014 = vmatpush1.msra.mxu0 0.0
      %2015 = vmatprep.subr.mxu0 0.0
      %2016 = vmatpush1.msra.mxu0 0.0
      %2017 = vmatprep.subr.mxu0 0.0
      %2018 = vmatpush1.msra.mxu0 0.0
      %2019 = vmatprep.subr.mxu0 0.0
      %2020 = vmatpush1.msra.mxu0 0.0
      %2021 = vmatprep.subr.mxu0 0.0
      %2022 = vmatpush1.msra.mxu0 0.0
      %2023 = vmatprep.subr.mxu0 0.0
      %2024 = vmatpush1.msra.mxu0 0.0
      %2025 = vmatprep.subr.mxu0 0.0
      %2026 = vmatpush1.msra.mxu0 0.0
      %2027 = vmatprep.subr.mxu0 0.0
      %2028 = vmatpush1.msra.mxu0 0.0
      %2029 = vmatprep.subr.mxu0 0.0
      %2030 = vmatpush1.msra.mxu0 0.0
      %2031 = vmatprep.subr.mxu0 0.0
      %2032 = vmatpush1.msra.mxu0 0.0
      %2033 = vmatprep.subr.mxu0 0.0
      %2034 = vmatpush1.msra.mxu0 0.0
      %2035 = vmatprep.subr.mxu0 0.0
      %2036 = vmatpush1.msra.mxu0 0.0
      %2037 = vmatprep.subr.mxu0 0.0
      %2038 = vmatpush1.msra.mxu0 0.0
      %2039 = vmatprep.subr.mxu0 0.0
      %2040 = vmatpush1.msra.mxu0 0.0
      %2041 = vmatprep.subr.mxu0 0.0
      %2042 = vmatpush1.msra.mxu0 0.0
      %2043 = vmatprep.subr.mxu0 0.0
      %2044 = vmatpush1.msra.mxu0 0.0
      %2045 = vmatprep.subr.mxu0 0.0
      %2046 = vmatpush1.msra.mxu0 0.0
      %2047 = vmatprep.subr.mxu0 0.0
      %2048 = vmatpush1.msra.mxu0 0.0
      %2049 = vmatprep.subr.mxu0 0.0
      %2050 = vmatpush1.msra.mxu0 0.0
      %2051 = vmatprep.subr.mxu0 0.0
      %2052 = vmatpush1.msra.mxu0 0.0
      %2053 = vmatprep.subr.mxu0 0.0
      %2054 = vmatpush1.msra.mxu0 0.0
      %2055 = vmatprep.mubr.f32.mxu0 0.0
      %2056 = vmatmul.mubr.f32.gmra.mrb[0].mxu0 %v1880
      %v2057 = vpop.f32.mrb[0].mxu0
      %v2058 = vadd.f32 %v1876, %v2057
      %v2059 = vpop.f32.mrb[0].mxu0
      %2060 = vmatprep.mubr.f32.mxu0 0.0
      %2061 = vmatmul.mubr.f32.gmra.mrb[0].mxu0 %v1883
      %v2062 = vpop.f32.mrb[0].mxu0
      %v2063 = vadd.f32 %v1876, %v2062
      %v2064 = vpop.f32.mrb[0].mxu0
      %2065 = vmatprep.mubr.f32.mxu0 0.0
      %2066 = vmatmul.mubr.f32.gmra.mrb[0].mxu0 %v1886
      %v2067 = vpop.f32.mrb[0].mxu0
      %v2068 = vadd.f32 %v1876, %v2067
      %v2069 = vpop.f32.mrb[0].mxu0
      %2070 = vmatprep.mubr.f32.mxu0 0.0
      %2071 = vmatmul.mubr.f32.gmra.mrb[0].mxu0 %v1889
      %v2072 = vpop.f32.mrb[0].mxu0
      %v2073 = vadd.f32 %v1876, %v2072
      %v2074 = vpop.f32.mrb[0].mxu0
      %2075 = vmatprep.mubr.f32.mxu0 0.0
      %2076 = vmatmul.mubr.f32.gmra.mrb[0].mxu0 %v1892
      %v2077 = vpop.f32.mrb[0].mxu0
      %v2078 = vadd.f32 %v1876, %v2077
      %v2079 = vpop.f32.mrb[0].mxu0
      %2080 = vmatprep.mubr.f32.mxu0 0.0
      %2081 = vmatmul.mubr.f32.gmra.mrb[0].mxu0 %v1895
      %v2082 = vpop.f32.mrb[0].mxu0
      %v2083 = vadd.f32 %v1876, %v2082
      %v2084 = vpop.f32.mrb[0].mxu0
      %2085 = vmatprep.mubr.f32.mxu0 0.0
      %2086 = vmatmul.mubr.f32.gmra.mrb[0].mxu0 %v1898
      %v2087 = vpop.f32.mrb[0].mxu0
      %v2088 = vadd.f32 %v1876, %v2087
      %v2089 = vpop.f32.mrb[0].mxu0
      %2090 = vmatprep.mubr.f32.mxu0 0.0
      %2091 = vmatmul.mubr.f32.gmra.mrb[0].mxu0 %v1901
      %v2092 = vpop.f32.mrb[0].mxu0
      %v2093 = vadd.f32 %v1876, %v2092
      %v2094 = vpop.f32.mrb[0].mxu0
      %2095 = vmatprep.mubr.f32.mxu0 0.0
      %2096 = vmatmul.mubr.f32.gmra.mrb[0].mxu0 %v1904
      %v2097 = vpop.f32.mrb[0].mxu0
      %v2098 = vadd.f32 %v1876, %v2097
      %v2099 = vpop.f32.mrb[0].mxu0
      %2100 = vmatprep.mubr.f32.mxu0 0.0
      %2101 = vmatmul.mubr.f32.gmra.mrb[0].mxu0 %v1907
      %v2102 = vpop.f32.mrb[0].mxu0
      %v2103 = vadd.f32 %v1876, %v2102
      %v2104 = vpop.f32.mrb[0].mxu0
      %2105 = vmatprep.mubr.f32.mxu0 0.0
      %2106 = vmatmul.mubr.f32.gmra.mrb[0].mxu0 %v1910
      %v2107 = vpop.f32.mrb[0].mxu0
      %v2108 = vadd.f32 %v1876, %v2107
      %v2109 = vpop.f32.mrb[0].mxu0
      %2110 = vmatprep.mubr.f32.mxu0 0.0
      %2111 = vmatmul.mubr.f32.gmra.mrb[0].mxu0 %v1913
      %v2112 = vpop.f32.mrb[0].mxu0
      %v2113 = vadd.f32 %v1876, %v2112
      %v2114 = vpop.f32.mrb[0].mxu0
      %2115 = vmatprep.mubr.f32.mxu0 0.0
      %2116 = vmatmul.mubr.f32.gmra.mrb[0].mxu0 %v1916
      %v2117 = vpop.f32.mrb[0].mxu0
      %v2118 = vadd.f32 %v1876, %v2117
      %v2119 = vpop.f32.mrb[0].mxu0
      %2120 = vmatprep.mubr.f32.mxu0 0.0
      %2121 = vmatmul.mubr.f32.gmra.mrb[0].mxu0 %v1919
      %v2122 = vpop.f32.mrb[0].mxu0
      %v2123 = vadd.f32 %v1876, %v2122
      %v2124 = vpop.f32.mrb[0].mxu0
      %2125 = vmatprep.mubr.f32.mxu0 0.0
      %2126 = vmatmul.mubr.f32.gmra.mrb[0].mxu0 %v1922
      %v2127 = vpop.f32.mrb[0].mxu0
      %v2128 = vadd.f32 %v1876, %v2127
      %v2129 = vpop.f32.mrb[0].mxu0
      %2130 = vmatprep.mubr.f32.mxu0 0.0
      %2131 = vmatmul.mubr.f32.gmra.mrb[0].mxu0 %v1925
      %v2132 = vpop.f32.mrb[0].mxu0
      %v2133 = vadd.f32 %v1876, %v2132
      %v2134 = vpop.f32.mrb[0].mxu0
      %2135 = vmatprep.mubr.f32.mxu0 0.0
      %2136 = vmatmul.mubr.f32.gmra.mrb[0].mxu0 %v1928
      %v2137 = vpop.f32.mrb[0].mxu0
      %v2138 = vadd.f32 %v1876, %v2137
      %v2139 = vpop.f32.mrb[0].mxu0
      %2140 = vmatprep.mubr.f32.mxu0 0.0
      %2141 = vmatmul.mubr.f32.gmra.mrb[0].mxu0 %v1931
      %v2142 = vpop.f32.mrb[0].mxu0
      %v2143 = vadd.f32 %v1876, %v2142
      %v2144 = vpop.f32.mrb[0].mxu0
      %2145 = vmatprep.mubr.f32.mxu0 0.0
      %2146 = vmatmul.mubr.f32.gmra.mrb[0].mxu0 %v1934
      %v2147 = vpop.f32.mrb[0].mxu0
      %v2148 = vadd.f32 %v1876, %v2147
      %v2149 = vpop.f32.mrb[0].mxu0
      %2150 = vmatprep.mubr.f32.mxu0 0.0
      %2151 = vmatmul.mubr.f32.gmra.mrb[0].mxu0 %v1937
      %v2152 = vpop.f32.mrb[0].mxu0
      %v2153 = vadd.f32 %v1876, %v2152
      %v2154 = vpop.f32.mrb[0].mxu0
      %2155 = vmatprep.mubr.f32.mxu0 0.0
      %2156 = vmatmul.mubr.f32.gmra.mrb[0].mxu0 %v1940
      %v2157 = vpop.f32.mrb[0].mxu0
      %v2158 = vadd.f32 %v1876, %v2157
      %v2159 = vpop.f32.mrb[0].mxu0
      %2160 = vmatprep.mubr.f32.mxu0 0.0
      %2161 = vmatmul.mubr.f32.gmra.mrb[0].mxu0 %v1943
      %v2162 = vpop.f32.mrb[0].mxu0
      %v2163 = vadd.f32 %v1876, %v2162
      %v2164 = vpop.f32.mrb[0].mxu0
      %2165 = vmatprep.mubr.f32.mxu0 0.0
      %2166 = vmatmul.mubr.f32.gmra.mrb[0].mxu0 %v1946
      %v2167 = vpop.f32.mrb[0].mxu0
      %v2168 = vadd.f32 %v1876, %v2167
      %v2169 = vpop.f32.mrb[0].mxu0
      %2170 = vmatprep.mubr.f32.mxu0 0.0
      %2171 = vmatmul.mubr.f32.gmra.mrb[0].mxu0 %v1949
      %v2172 = vpop.f32.mrb[0].mxu0
      %v2173 = vadd.f32 %v1876, %v2172
      %v2174 = vpop.f32.mrb[0].mxu0
      %2175 = vmatprep.mubr.f32.mxu0 0.0
      %2176 = vmatmul.mubr.f32.gmra.mrb[0].mxu0 %v1952
      %v2177 = vpop.f32.mrb[0].mxu0
      %v2178 = vadd.f32 %v1876, %v2177
      %v2179 = vpop.f32.mrb[0].mxu0
      %2180 = vmatprep.mubr.f32.mxu0 0.0
      %2181 = vmatmul.mubr.f32.gmra.mrb[0].mxu0 %v1955
      %v2182 = vpop.f32.mrb[0].mxu0
      %v2183 = vadd.f32 %v1876, %v2182
      %v2184 = vpop.f32.mrb[0].mxu0
      %2185 = vmatprep.mubr.f32.mxu0 0.0
      %2186 = vmatmul.mubr.f32.gmra.mrb[0].mxu0 %v1958
      %v2187 = vpop.f32.mrb[0].mxu0
      %v2188 = vadd.f32 %v1876, %v2187
      %v2189 = vpop.f32.mrb[0].mxu0
      %2190 = vmatprep.mubr.f32.mxu0 0.0
      %2191 = vmatmul.mubr.f32.gmra.mrb[0].mxu0 %v1961
      %v2192 = vpop.f32.mrb[0].mxu0
      %v2193 = vadd.f32 %v1876, %v2192
      %v2194 = vpop.f32.mrb[0].mxu0
      %2195 = vmatprep.mubr.f32.mxu0 0.0
      %2196 = vmatmul.mubr.f32.gmra.mrb[0].mxu0 %v1964
      %v2197 = vpop.f32.mrb[0].mxu0
      %v2198 = vadd.f32 %v1876, %v2197
      %v2199 = vpop.f32.mrb[0].mxu0
      %2200 = vmatprep.mubr.f32.mxu0 0.0
      %2201 = vmatmul.mubr.f32.gmra.mrb[0].mxu0 %v1967
      %v2202 = vpop.f32.mrb[0].mxu0
      %v2203 = vadd.f32 %v1876, %v2202
      %v2204 = vpop.f32.mrb[0].mxu0
      %2205 = vmatprep.mubr.f32.mxu0 0.0
      %2206 = vmatmul.mubr.f32.gmra.mrb[0].mxu0 %v1970
      %v2207 = vpop.f32.mrb[0].mxu0
      %v2208 = vadd.f32 %v1876, %v2207
      %v2209 = vpop.f32.mrb[0].mxu0
      %2210 = vmatprep.mubr.f32.mxu0 0.0
      %2211 = vmatmul.mubr.f32.gmra.mrb[0].mxu0 %v1973
      %v2212 = vpop.f32.mrb[0].mxu0
      %v2213 = vadd.f32 %v1876, %v2212
      %v2214 = vpop.f32.mrb[0].mxu0
      %2215 = vmatprep.mubr.f32.mxu0 0.0
      %2216 = vmatmul.mubr.f32.gmra.mrb[0].mxu0 %v1976
      %v2217 = vpop.f32.mrb[0].mxu0
      %v2218 = vadd.f32 %v1876, %v2217
      %v2219 = vpop.f32.mrb[0].mxu0
      %2220 = vmatprep.mubr.f32.mxu0 0.0
      %2221 = vmatmul.mubr.f32.gmra.mrb[0].mxu0 %v1979
      %v2222 = vpop.f32.mrb[0].mxu0
      %v2223 = vadd.f32 %v1876, %v2222
      %v2224 = vpop.f32.mrb[0].mxu0
      %2225 = vmatprep.mubr.f32.mxu0 0.0
      %2226 = vmatmul.mubr.f32.gmra.mrb[0].mxu0 %v1982
      %v2227 = vpop.f32.mrb[0].mxu0
      %v2228 = vadd.f32 %v1876, %v2227
      %v2229 = vpop.f32.mrb[0].mxu0
      %2230 = vmatprep.mubr.f32.mxu0 0.0
      %2231 = vmatmul.mubr.f32.gmra.mrb[0].mxu0 %v1985
      %v2232 = vpop.f32.mrb[0].mxu0
      %v2233 = vadd.f32 %v1876, %v2232
      %v2234 = vpop.f32.mrb[0].mxu0
      %2235 = vdwg.mxu0
      %v2236 = vmax.f32 %v2058, 0.0
      %v2237 = vmax.f32 %v2063, 0.0
      %v2238 = vmax.f32 %v2068, 0.0
      %v2239 = vmax.f32 %v2073, 0.0
      %v2240 = vmax.f32 %v2078, 0.0
      %v2241 = vmax.f32 %v2083, 0.0
      %v2242 = vmax.f32 %v2088, 0.0
      %v2243 = vmax.f32 %v2093, 0.0
      %v2244 = vmax.f32 %v2098, 0.0
      %v2245 = vmax.f32 %v2103, 0.0
      %v2246 = vmax.f32 %v2108, 0.0
      %v2247 = vmax.f32 %v2113, 0.0
      %v2248 = vmax.f32 %v2118, 0.0
      %v2249 = vmax.f32 %v2123, 0.0
      %v2250 = vmax.f32 %v2128, 0.0
      %v2251 = vmax.f32 %v2133, 0.0
      %v2252 = vmax.f32 %v2138, 0.0
      %v2253 = vmax.f32 %v2143, 0.0
      %v2254 = vmax.f32 %v2148, 0.0
      %v2255 = vmax.f32 %v2153, 0.0
      %v2256 = vmax.f32 %v2158, 0.0
      %v2257 = vmax.f32 %v2163, 0.0
      %v2258 = vmax.f32 %v2168, 0.0
      %v2259 = vmax.f32 %v2173, 0.0
      %v2260 = vmax.f32 %v2178, 0.0
      %v2261 = vmax.f32 %v2183, 0.0
      %v2262 = vmax.f32 %v2188, 0.0
      %v2263 = vmax.f32 %v2193, 0.0
      %v2264 = vmax.f32 %v2198, 0.0
      %v2265 = vmax.f32 %v2203, 0.0
      %v2266 = vmax.f32 %v2208, 0.0
      %v2267 = vmax.f32 %v2213, 0.0
      %v2268 = vmax.f32 %v2218, 0.0
      %v2269 = vmax.f32 %v2223, 0.0
      %v2270 = vmax.f32 %v2228, 0.0
      %v2271 = vmax.f32 %v2233, 0.0
      %s2272 = smul.u32 %s21, 18
      %v2273 = vstv %s2272
      %v2274 = vadd.s32 %v2273, 1
      %v2275 = vadd.s32 %v2273, 2
      %v2276 = vadd.s32 %v2273, 3
      %v2277 = vadd.s32 %v2273, 4
      %v2278 = vadd.s32 %v2273, 5
      %v2279 = vadd.s32 %v2273, 6
      %v2280 = vadd.s32 %v2273, 7
      %v2281 = vadd.s32 %v2273, 8
      %v2282 = vadd.s32 %v2273, 9
      %v2283 = vadd.s32 %v2273, 10
      %v2284 = vadd.s32 %v2273, 11
      %v2285 = vadd.s32 %v2273, 12
      %v2286 = vadd.s32 %v2273, 13
      %v2287 = vadd.s32 %v2273, 14
      %v2288 = vadd.s32 %v2273, 15
      %v2289 = vadd.s32 %v2273, 16
      %v2290 = vadd.s32 %v2273, 17
      %vm2291 = vcmp.ge.s32.totalorder %v2273, 1
      %vm2292 = vcmp.ge.s32.totalorder %v2274, 1
      %vm2293 = vcmp.ge.s32.totalorder %v2275, 1
      %vm2294 = vcmp.ge.s32.totalorder %v2276, 1
      %vm2295 = vcmp.ge.s32.totalorder %v2277, 1
      %vm2296 = vcmp.ge.s32.totalorder %v2278, 1
      %vm2297 = vcmp.ge.s32.totalorder %v2279, 1
      %vm2298 = vcmp.ge.s32.totalorder %v2280, 1
      %vm2299 = vcmp.ge.s32.totalorder %v2281, 1
      %vm2300 = vcmp.ge.s32.totalorder %v2282, 1
      %vm2301 = vcmp.ge.s32.totalorder %v2283, 1
      %vm2302 = vcmp.ge.s32.totalorder %v2284, 1
      %vm2303 = vcmp.ge.s32.totalorder %v2285, 1
      %vm2304 = vcmp.ge.s32.totalorder %v2286, 1
      %vm2305 = vcmp.ge.s32.totalorder %v2287, 1
      %vm2306 = vcmp.ge.s32.totalorder %v2288, 1
      %vm2307 = vcmp.ge.s32.totalorder %v2289, 1
      %vm2308 = vcmp.ge.s32.totalorder %v2290, 1
      %vm2309 = vcmp.le.s32.totalorder %v2273, 16
      %vm2310 = vcmp.le.s32.totalorder %v2274, 16
      %vm2311 = vcmp.le.s32.totalorder %v2275, 16
      %vm2312 = vcmp.le.s32.totalorder %v2276, 16
      %vm2313 = vcmp.le.s32.totalorder %v2277, 16
      %vm2314 = vcmp.le.s32.totalorder %v2278, 16
      %vm2315 = vcmp.le.s32.totalorder %v2279, 16
      %vm2316 = vcmp.le.s32.totalorder %v2280, 16
      %vm2317 = vcmp.le.s32.totalorder %v2281, 16
      %vm2318 = vcmp.le.s32.totalorder %v2282, 16
      %vm2319 = vcmp.le.s32.totalorder %v2283, 16
      %vm2320 = vcmp.le.s32.totalorder %v2284, 16
      %vm2321 = vcmp.le.s32.totalorder %v2285, 16
      %vm2322 = vcmp.le.s32.totalorder %v2286, 16
      %vm2323 = vcmp.le.s32.totalorder %v2287, 16
      %vm2324 = vcmp.le.s32.totalorder %v2288, 16
      %vm2325 = vcmp.le.s32.totalorder %v2289, 16
      %vm2326 = vcmp.le.s32.totalorder %v2290, 16
      %vm2327 = vmand %vm2291, %vm2309
      %vm2328 = vmand %vm2292, %vm2310
      %vm2329 = vmand %vm2293, %vm2311
      %vm2330 = vmand %vm2294, %vm2312
      %vm2331 = vmand %vm2295, %vm2313
      %vm2332 = vmand %vm2296, %vm2314
      %vm2333 = vmand %vm2297, %vm2315
      %vm2334 = vmand %vm2298, %vm2316
      %vm2335 = vmand %vm2299, %vm2317
      %vm2336 = vmand %vm2300, %vm2318
      %vm2337 = vmand %vm2301, %vm2319
      %vm2338 = vmand %vm2302, %vm2320
      %vm2339 = vmand %vm2303, %vm2321
      %vm2340 = vmand %vm2304, %vm2322
      %vm2341 = vmand %vm2305, %vm2323
      %vm2342 = vmand %vm2306, %vm2324
      %vm2343 = vmand %vm2307, %vm2325
      %vm2344 = vmand %vm2308, %vm2326
      %v2345 = vsel %vm2327, %v2236, 0.0
      %v2346 = vsel %vm2327, %v2237, 0.0
      %v2347 = vsel %vm2328, %v2238, 0.0
      %v2348 = vsel %vm2328, %v2239, 0.0
      %v2349 = vsel %vm2329, %v2240, 0.0
      %v2350 = vsel %vm2329, %v2241, 0.0
      %v2351 = vsel %vm2330, %v2242, 0.0
      %v2352 = vsel %vm2330, %v2243, 0.0
      %v2353 = vsel %vm2331, %v2244, 0.0
      %v2354 = vsel %vm2331, %v2245, 0.0
      %v2355 = vsel %vm2332, %v2246, 0.0
      %v2356 = vsel %vm2332, %v2247, 0.0
      %v2357 = vsel %vm2333, %v2248, 0.0
      %v2358 = vsel %vm2333, %v2249, 0.0
      %v2359 = vsel %vm2334, %v2250, 0.0
      %v2360 = vsel %vm2334, %v2251, 0.0
      %v2361 = vsel %vm2335, %v2252, 0.0
      %v2362 = vsel %vm2335, %v2253, 0.0
      %v2363 = vsel %vm2336, %v2254, 0.0
      %v2364 = vsel %vm2336, %v2255, 0.0
      %v2365 = vsel %vm2337, %v2256, 0.0
      %v2366 = vsel %vm2337, %v2257, 0.0
      %v2367 = vsel %vm2338, %v2258, 0.0
      %v2368 = vsel %vm2338, %v2259, 0.0
      %v2369 = vsel %vm2339, %v2260, 0.0
      %v2370 = vsel %vm2339, %v2261, 0.0
      %v2371 = vsel %vm2340, %v2262, 0.0
      %v2372 = vsel %vm2340, %v2263, 0.0
      %v2373 = vsel %vm2341, %v2264, 0.0
      %v2374 = vsel %vm2341, %v2265, 0.0
      %v2375 = vsel %vm2342, %v2266, 0.0
      %v2376 = vsel %vm2342, %v2267, 0.0
      %v2377 = vsel %vm2343, %v2268, 0.0
      %v2378 = vsel %vm2343, %v2269, 0.0
      %v2379 = vsel %vm2344, %v2270, 0.0
      %v2380 = vsel %vm2344, %v2271, 0.0
      %2381 = vst.msk [vmem:[%s391 + $0x1] sm:$0xff] %vm433, %v2345
      %2382 = vst.msk [vmem:[%s391 + $0x9] sm:$0xff] %vm433, %v2346
      %2383 = vst.msk [vmem:[%s391 + $0x19] sm:$0xff] %vm433, %v2347
      %2384 = vst.msk [vmem:[%s391 + $0x21] sm:$0xff] %vm433, %v2348
      %2385 = vst.msk [vmem:[%s391 + $0x31] sm:$0xff] %vm433, %v2349
      %2386 = vst.msk [vmem:[%s391 + $0x39] sm:$0xff] %vm433, %v2350
      %2387 = vst.msk [vmem:[%s391 + $0x49] sm:$0xff] %vm433, %v2351
      %2388 = vst.msk [vmem:[%s391 + $0x51] sm:$0xff] %vm433, %v2352
      %2389 = vst.msk [vmem:[%s391 + $0x61] sm:$0xff] %vm433, %v2353
      %2390 = vst.msk [vmem:[%s391 + $0x69] sm:$0xff] %vm433, %v2354
      %2391 = vst.msk [vmem:[%s391 + $0x79] sm:$0xff] %vm433, %v2355
      %2392 = vst.msk [vmem:[%s391 + $0x81] sm:$0xff] %vm433, %v2356
      %2393 = vst.msk [vmem:[%s391 + $0x91] sm:$0xff] %vm433, %v2357
      %2394 = vst.msk [vmem:[%s391 + $0x99] sm:$0xff] %vm433, %v2358
      %2395 = vst.msk [vmem:[%s391 + $0xa9] sm:$0xff] %vm433, %v2359
      %2396 = vst.msk [vmem:[%s391 + $0xb1] sm:$0xff] %vm433, %v2360
      %2397 = vst.msk [vmem:[%s391 + $0xc1] sm:$0xff] %vm433, %v2361
      %2398 = vst.msk [vmem:[%s391 + $0xc9] sm:$0xff] %vm433, %v2362
      %2399 = vst.msk [vmem:[%s391 + $0xd9] sm:$0xff] %vm433, %v2363
      %2400 = vst.msk [vmem:[%s391 + $0xe1] sm:$0xff] %vm433, %v2364
      %2401 = vst.msk [vmem:[%s391 + $0xf1] sm:$0xff] %vm433, %v2365
      %2402 = vst.msk [vmem:[%s391 + $0xf9] sm:$0xff] %vm433, %v2366
      %2403 = vst.msk [vmem:[%s391 + $0x109] sm:$0xff] %vm433, %v2367
      %2404 = vst.msk [vmem:[%s391 + $0x111] sm:$0xff] %vm433, %v2368
      %2405 = vst.msk [vmem:[%s391 + $0x121] sm:$0xff] %vm433, %v2369
      %2406 = vst.msk [vmem:[%s391 + $0x129] sm:$0xff] %vm433, %v2370
      %2407 = vst.msk [vmem:[%s391 + $0x139] sm:$0xff] %vm433, %v2371
      %2408 = vst.msk [vmem:[%s391 + $0x141] sm:$0xff] %vm433, %v2372
      %2409 = vst.msk [vmem:[%s391 + $0x151] sm:$0xff] %vm433, %v2373
      %2410 = vst.msk [vmem:[%s391 + $0x159] sm:$0xff] %vm433, %v2374
      %2411 = vst.msk [vmem:[%s391 + $0x169] sm:$0xff] %vm433, %v2375
      %2412 = vst.msk [vmem:[%s391 + $0x171] sm:$0xff] %vm433, %v2376
      %2413 = vst.msk [vmem:[%s391 + $0x181] sm:$0xff] %vm433, %v2377
      %2414 = vst.msk [vmem:[%s391 + $0x189] sm:$0xff] %vm433, %v2378
      %2415 = vst.msk [vmem:[%s391 + $0x199] sm:$0xff] %vm433, %v2379
      %2416 = vst.msk [vmem:[%s391 + $0x1a1] sm:$0xff] %vm433, %v2380
      %vm2417 = vcmask 24576
      %2418 = vst.msk [vmem:[%s391] sm:$0x1] %vm2417, 0.0
      %2419 = vst.msk [vmem:[%s391 + $0x18] sm:$0x1] %vm2417, 0.0
      %2420 = vst.msk [vmem:[%s391 + $0x30] sm:$0x1] %vm2417, 0.0
      %2421 = vst.msk [vmem:[%s391 + $0x48] sm:$0x1] %vm2417, 0.0
      %2422 = vst.msk [vmem:[%s391 + $0x60] sm:$0x1] %vm2417, 0.0
      %2423 = vst.msk [vmem:[%s391 + $0x78] sm:$0x1] %vm2417, 0.0
      %2424 = vst.msk [vmem:[%s391 + $0x90] sm:$0x1] %vm2417, 0.0
      %2425 = vst.msk [vmem:[%s391 + $0xa8] sm:$0x1] %vm2417, 0.0
      %2426 = vst.msk [vmem:[%s391 + $0xc0] sm:$0x1] %vm2417, 0.0
      %2427 = vst.msk [vmem:[%s391 + $0xd8] sm:$0x1] %vm2417, 0.0
      %2428 = vst.msk [vmem:[%s391 + $0xf0] sm:$0x1] %vm2417, 0.0
      %2429 = vst.msk [vmem:[%s391 + $0x108] sm:$0x1] %vm2417, 0.0
      %2430 = vst.msk [vmem:[%s391 + $0x120] sm:$0x1] %vm2417, 0.0
      %2431 = vst.msk [vmem:[%s391 + $0x138] sm:$0x1] %vm2417, 0.0
      %2432 = vst.msk [vmem:[%s391 + $0x150] sm:$0x1] %vm2417, 0.0
      %2433 = vst.msk [vmem:[%s391 + $0x168] sm:$0x1] %vm2417, 0.0
      %2434 = vst.msk [vmem:[%s391 + $0x180] sm:$0x1] %vm2417, 0.0
      %2435 = vst.msk [vmem:[%s391 + $0x198] sm:$0x1] %vm2417, 0.0
      %2436 = vst.msk [vmem:[%s391 + $0x11] sm:$0x1] %vm2417, 0.0
      %2437 = vst.msk [vmem:[%s391 + $0x29] sm:$0x1] %vm2417, 0.0
      %2438 = vst.msk [vmem:[%s391 + $0x41] sm:$0x1] %vm2417, 0.0
      %2439 = vst.msk [vmem:[%s391 + $0x59] sm:$0x1] %vm2417, 0.0
      %2440 = vst.msk [vmem:[%s391 + $0x71] sm:$0x1] %vm2417, 0.0
      %2441 = vst.msk [vmem:[%s391 + $0x89] sm:$0x1] %vm2417, 0.0
      %2442 = vst.msk [vmem:[%s391 + $0xa1] sm:$0x1] %vm2417, 0.0
      %2443 = vst.msk [vmem:[%s391 + $0xb9] sm:$0x1] %vm2417, 0.0
      %2444 = vst.msk [vmem:[%s391 + $0xd1] sm:$0x1] %vm2417, 0.0
      %2445 = vst.msk [vmem:[%s391 + $0xe9] sm:$0x1] %vm2417, 0.0
      %2446 = vst.msk [vmem:[%s391 + $0x101] sm:$0x1] %vm2417, 0.0
      %2447 = vst.msk [vmem:[%s391 + $0x119] sm:$0x1] %vm2417, 0.0
      %2448 = vst.msk [vmem:[%s391 + $0x131] sm:$0x1] %vm2417, 0.0
      %2449 = vst.msk [vmem:[%s391 + $0x149] sm:$0x1] %vm2417, 0.0
      %2450 = vst.msk [vmem:[%s391 + $0x161] sm:$0x1] %vm2417, 0.0
      %2451 = vst.msk [vmem:[%s391 + $0x179] sm:$0x1] %vm2417, 0.0
      %2452 = vst.msk [vmem:[%s391 + $0x191] sm:$0x1] %vm2417, 0.0
      %2453 = vst.msk [vmem:[%s391 + $0x1a9] sm:$0x1] %vm2417, 0.0
      %s2454 = smul.u32 18, %s21
      %p2455 = scmp.lt.s32.totalorder %s20, 1
      %s2456 = scalar_select %p2455, %s20, 1
      %p2457 = scmp.lt.s32.totalorder %s2454, 17
      %s2458 = scalar_select %p2457, %s2454, 17
      %s2459 = smul.addr %s2458, 3
      %s2460 = smul.addr %s2456, 54
      %s2461 = sadd.s32 %s2459, %s2460
      %s2462 = smul.addr %s2461, 8
      %s2463 = scalar_lea.vmem %s5, %s2462
      // Predicated region
      $region41: #{fwd.5} parent=39 // pred_check
        %p2464 = pneg %p190
      $region42: #{fwd.5} parent=39 // pred_check_branch
        %2466 = sbr.rel (%p2464) target = $region44
      $region43: #{fwd.5} parent=39 // pred_region
        %s2467 = smul.u32 18, %s21
      $region44: #{fwd.5} parent=39 // pred_fallthru
        _
    $region40: #{fwd.5} parent=5 // pred_fallthru
      _
    %p2468 = scmp.le.s32.totalorder 2, %s11
    // Predicated region
    $region45: #{fwd.5} parent=5 // pred_check
      %p2469 = pneg %p2468
    $region46: #{fwd.5} parent=5 // pred_check_branch
      %2471 = sbr.rel (%p2469) target = $region48
    $region47: #{fwd.5} parent=5 // pred_region
      %s2472 = ssub.s32 %s11, 2
      // Predicated region
      $region49: #{fwd.5} parent=47 // pred_check
        %p2473 = pneg %p196
      $region50: #{fwd.5} parent=47 // pred_check_branch
        %2475 = sbr.rel (%p2473) target = $region52
      $region51: #{fwd.5} parent=47 // pred_region
        %s2476 = smul.u32 18, %s23
        %p2477 = scmp.lt.s32.totalorder %s22, 1
        %s2478 = scalar_select %p2477, %s22, 1
        %p2479 = scmp.lt.s32.totalorder %s2476, 17
        %s2480 = scalar_select %p2479, %s2476, 17
        %s2481 = smul.addr %s2480, 3
        %s2482 = smul.addr %s2478, 54
        %s2483 = sadd.s32 %s2481, %s2482
        %s2484 = smul.addr %s2483, 8
        %s2485 = scalar_lea.vmem %s5, %s2484
      $region52: #{fwd.5} parent=47 // pred_fallthru
        _
    $region48: #{fwd.5} parent=5 // pred_fallthru
      _
  $region6: #{fwd.5} parent=0 // loop_footer
    %s15 = sadd.s32 1, %s11
  $region7: #{fwd.5} parent=0 // loop_footer_branch
    %10 = sbr.rel target = $region3
  $region8: #{fwd.5} parent=0 // loop_exit
    _

// kernel: fwd.8
$region0: #{fwd.8}
  #allocation0 [shape = 'u32[]', space=smem, size = 0x4, offset = 0x4, fixed_abs, tag = 'smem constant byte address 0x4 - core index']
  #allocation1 [shape = 'u32[144,128]{1,0:T(1,128)}', space=vmem, size = 0x12000, scoped, tag = 'internal scratch']
  #allocation2 [shape = 'f32[18,16,72]{2,1,0:T(8,128)}', space=vmem, size = 0x24000, scoped, tag = 'scratch operand']
  %s0 = inlined_call_operand.vmem [shape: f32[2,18,18,4], index: 0, kind: input, shape index: {}, may-alias: {0,1,2}]
  %s1 = inlined_call_operand.vmem [shape: f32[2,18,18,4], index: 1, kind: input, shape index: {}, may-alias: {0,1,2}]
  %s2 = inlined_call_operand.vmem [shape: f32[2,18,18,4], index: 2, kind: input, shape index: {}, may-alias: {0,1,2}]
  %s3 = inlined_call_operand.vmem [shape: f32[2,18,18,4], index: 3, kind: input, shape index: {}, may-alias: {3,4,5}]
  %s4 = inlined_call_operand.vmem [shape: f32[2,18,18,4], index: 4, kind: input, shape index: {}, may-alias: {3,4,5}]
  %s5 = inlined_call_operand.vmem [shape: f32[2,18,18,4], index: 5, kind: input, shape index: {}, may-alias: {3,4,5}]
  %s6 = inlined_call_operand.vmem [shape: f32[72,4], index: 6, kind: input, shape index: {}]
  %s7 = inlined_call_operand.vmem [shape: f32[1,4], index: 7, kind: input, shape index: {}]
  %s8 = inlined_call_operand.vmem [shape: f32[2,18,18,4], index: 8, kind: output, shape index: {}]
  %s9 = sld [smem:[#allocation0]]
  $region65: #{fwd.8} parent=0
    _
  %s11 = ssub.s32 1, %s9
  %s12 = scalar_select 0, %s11, %s9
  loop: start=0, step=1, limit=4
  $region2: #{fwd.8} parent=0 // loop_pre_header
    _
  $region3: #{fwd.8} parent=0 // loop_header
    %s14 = sphi 0, %s18
    %p15 = scmp.ge.s32.totalorder %s14, 4
    %s21 = sphi 0, %s33
    %s22 = sphi 0, %s29
    %s23 = sphi 0, %s21
    %s24 = sphi 0, %s22
    %s25 = sphi 0, %s23
    %s26 = sphi 0, %s24
    %s38 = sphi 0, %s40
    %s41 = sphi 0, %s38
    %s42 = sphi 0, %s41
    %s58 = sphi 0, %s42
    %s74 = sphi 0, %s76
    %s77 = sphi 0, %s74
    %s78 = sphi 0, %s77
    %s94 = sphi 0, %s78
    %s110 = sphi 0, %s112
    %s113 = sphi 0, %s110
    %s114 = sphi 0, %s113
    %s130 = sphi 0, %s114
    %s138 = sphi 0, %s140
    %s141 = sphi 0, %s138
    %s142 = sphi 0, %s141
    %s158 = sphi 0, %s142
    %s174 = sphi 0, %s176
    %s177 = sphi 0, %s174
    %s178 = sphi 0, %s177
    %s194 = sphi 0, %s178
    %s210 = sphi 0, %s212
    %s213 = sphi 0, %s210
    %s214 = sphi 0, %s213
    %s230 = sphi 0, %s214
    %s234 = sphi 0, %s234
    %s236 = sphi 0, %s234
    %s237 = sphi 0, %s236
    %s251 = sphi 0, %s237
    %s255 = sphi 0, %s255
    %s257 = sphi 0, %s255
    %s258 = sphi 0, %s257
    %s272 = sphi 0, %s258
    %s280 = sphi 0, %s282
    %s283 = sphi 0, %s280
    %s284 = sphi 0, %s283
    %s300 = sphi 0, %s284
  $region4: #{fwd.8} parent=0 // loop_header_branch
    %17 = sbr.rel (%p15) target = $region8
  $region5: #{fwd.8} parent=0 // loop_body
    %s19 = ssub.s32 %s14, 1
    %s20 = ssub.s32 %s14, 2
    %s27 = sadd.s32 1, %s22
    %p28 = scmp.ge.s32.totalorder %s27, 1
    %s29 = scalar_select %p28, 0, %s27
    %s30 = sadd.s32 1, %s21
    %s31 = scalar_select %p28, %s30, %s21
    %p32 = scmp.ge.s32.totalorder %s31, 2
    %s33 = scalar_select %p32, 0, %s31
    %s34 = ssub.s32 %s21, %s33
    %s35 = ssub.s32 %s22, %s29
    %s36 = sor.u32 %s34, %s35
    %p37 = scmp.eq.s32.totalorder %s36, 0
    %s39 = sadd.s32 %s38, 1
    %s40 = scalar_select %p37, %s38, %s39
    %p43 = pneg %p37
    %p44 = scmp.eq.s32.totalorder %s14, 1
    %p45 = por %p43, %p44
    %p46 = scmp.ne.s32.totalorder %s38, %s41
    %p47 = scmp.eq.s32.totalorder %s14, 0
    %p48 = por %p46, %p47
    %p49 = scmp.ne.s32.totalorder %s38, %s41
    %p50 = scmp.eq.s32.totalorder %s19, 1
    %p51 = por %p49, %p50
    %p52 = scmp.ne.s32.totalorder %s41, %s42
    %p53 = scmp.eq.s32.totalorder %s19, 0
    %p54 = por %p52, %p53
    %p55 = scmp.ne.s32.totalorder %s41, %s42
    %p56 = scmp.eq.s32.totalorder %s20, 1
    %p57 = por %p55, %p56
    %p59 = scmp.ne.s32.totalorder %s42, %s58
    %p60 = scmp.eq.s32.totalorder %s20, 0
    %p61 = por %p59, %p60
    %s62 = smul.u32 %s22, 18
    %s63 = ssub.s32 %s62, 1
    %p64 = scmp.gt.s32.totalorder %s63, 0
    %s65 = scalar_select %p64, %s63, 0
    %s66 = smul.u32 %s29, 18
    %s67 = ssub.s32 %s66, 1
    %p68 = scmp.gt.s32.totalorder %s67, 0
    %s69 = scalar_select %p68, %s67, 0
    %s70 = ssub.s32 %s21, %s33
    %s71 = ssub.s32 %s65, %s69
    %s72 = sor.u32 %s70, %s71
    %p73 = scmp.eq.s32.totalorder %s72, 0
    %s75 = sadd.s32 %s74, 1
    %s76 = scalar_select %p73, %s74, %s75
    %p79 = pneg %p73
    %p80 = scmp.eq.s32.totalorder %s14, 1
    %p81 = por %p79, %p80
    %p82 = scmp.ne.s32.totalorder %s74, %s77
    %p83 = scmp.eq.s32.totalorder %s14, 0
    %p84 = por %p82, %p83
    %p85 = scmp.ne.s32.totalorder %s74, %s77
    %p86 = scmp.eq.s32.totalorder %s19, 1
    %p87 = por %p85, %p86
    %p88 = scmp.ne.s32.totalorder %s77, %s78
    %p89 = scmp.eq.s32.totalorder %s19, 0
    %p90 = por %p88, %p89
    %p91 = scmp.ne.s32.totalorder %s77, %s78
    %p92 = scmp.eq.s32.totalorder %s20, 1
    %p93 = por %p91, %p92
    %p95 = scmp.ne.s32.totalorder %s78, %s94
    %p96 = scmp.eq.s32.totalorder %s20, 0
    %p97 = por %p95, %p96
    %s98 = smul.u32 %s22, 18
    %s99 = sadd.s32 %s98, 18
    %p100 = scmp.lt.s32.totalorder %s99, 17
    %s101 = scalar_select %p100, %s99, 17
    %s102 = smul.u32 %s29, 18
    %s103 = sadd.s32 %s102, 18
    %p104 = scmp.lt.s32.totalorder %s103, 17
    %s105 = scalar_select %p104, %s103, 17
    %s106 = ssub.s32 %s21, %s33
    %s107 = ssub.s32 %s101, %s105
    %s108 = sor.u32 %s106, %s107
    %p109 = scmp.eq.s32.totalorder %s108, 0
    %s111 = sadd.s32 %s110, 1
    %s112 = scalar_select %p109, %s110, %s111
    %p115 = pneg %p109
    %p116 = scmp.eq.s32.totalorder %s14, 1
    %p117 = por %p115, %p116
    %p118 = scmp.ne.s32.totalorder %s110, %s113
    %p119 = scmp.eq.s32.totalorder %s14, 0
    %p120 = por %p118, %p119
    %p121 = scmp.ne.s32.totalorder %s110, %s113
    %p122 = scmp.eq.s32.totalorder %s19, 1
    %p123 = por %p121, %p122
    %p124 = scmp.ne.s32.totalorder %s113, %s114
    %p125 = scmp.eq.s32.totalorder %s19, 0
    %p126 = por %p124, %p125
    %p127 = scmp.ne.s32.totalorder %s113, %s114
    %p128 = scmp.eq.s32.totalorder %s20, 1
    %p129 = por %p127, %p128
    %p131 = scmp.ne.s32.totalorder %s114, %s130
    %p132 = scmp.eq.s32.totalorder %s20, 0
    %p133 = por %p131, %p132
    %s134 = ssub.s32 %s21, %s33
    %s135 = ssub.s32 %s22, %s29
    %s136 = sor.u32 %s134, %s135
    %p137 = scmp.eq.s32.totalorder %s136, 0
    %s139 = sadd.s32 %s138, 1
    %s140 = scalar_select %p137, %s138, %s139
    %p143 = pneg %p137
    %p144 = scmp.eq.s32.totalorder %s14, 1
    %p145 = por %p143, %p144
    %p146 = scmp.ne.s32.totalorder %s138, %s141
    %p147 = scmp.eq.s32.totalorder %s14, 0
    %p148 = por %p146, %p147
    %p149 = scmp.ne.s32.totalorder %s138, %s141
    %p150 = scmp.eq.s32.totalorder %s19, 1
    %p151 = por %p149, %p150
    %p152 = scmp.ne.s32.totalorder %s141, %s142
    %p153 = scmp.eq.s32.totalorder %s19, 0
    %p154 = por %p152, %p153
    %p155 = scmp.ne.s32.totalorder %s141, %s142
    %p156 = scmp.eq.s32.totalorder %s20, 1
    %p157 = por %p155, %p156
    %p159 = scmp.ne.s32.totalorder %s142, %s158
    %p160 = scmp.eq.s32.totalorder %s20, 0
    %p161 = por %p159, %p160
    %s162 = smul.u32 %s22, 18
    %s163 = ssub.s32 %s162, 1
    %p164 = scmp.gt.s32.totalorder %s163, 0
    %s165 = scalar_select %p164, %s163, 0
    %s166 = smul.u32 %s29, 18
    %s167 = ssub.s32 %s166, 1
    %p168 = scmp.gt.s32.totalorder %s167, 0
    %s169 = scalar_select %p168, %s167, 0
    %s170 = ssub.s32 %s21, %s33
    %s171 = ssub.s32 %s165, %s169
    %s172 = sor.u32 %s170, %s171
    %p173 = scmp.eq.s32.totalorder %s172, 0
    %s175 = sadd.s32 %s174, 1
    %s176 = scalar_select %p173, %s174, %s175
    %p179 = pneg %p173
    %p180 = scmp.eq.s32.totalorder %s14, 1
    %p181 = por %p179, %p180
    %p182 = scmp.ne.s32.totalorder %s174, %s177
    %p183 = scmp.eq.s32.totalorder %s14, 0
    %p184 = por %p182, %p183
    %p185 = scmp.ne.s32.totalorder %s174, %s177
    %p186 = scmp.eq.s32.totalorder %s19, 1
    %p187 = por %p185, %p186
    %p188 = scmp.ne.s32.totalorder %s177, %s178
    %p189 = scmp.eq.s32.totalorder %s19, 0
    %p190 = por %p188, %p189
    %p191 = scmp.ne.s32.totalorder %s177, %s178
    %p192 = scmp.eq.s32.totalorder %s20, 1
    %p193 = por %p191, %p192
    %p195 = scmp.ne.s32.totalorder %s178, %s194
    %p196 = scmp.eq.s32.totalorder %s20, 0
    %p197 = por %p195, %p196
    %s198 = smul.u32 %s22, 18
    %s199 = sadd.s32 %s198, 18
    %p200 = scmp.lt.s32.totalorder %s199, 17
    %s201 = scalar_select %p200, %s199, 17
    %s202 = smul.u32 %s29, 18
    %s203 = sadd.s32 %s202, 18
    %p204 = scmp.lt.s32.totalorder %s203, 17
    %s205 = scalar_select %p204, %s203, 17
    %s206 = ssub.s32 %s21, %s33
    %s207 = ssub.s32 %s201, %s205
    %s208 = sor.u32 %s206, %s207
    %p209 = scmp.eq.s32.totalorder %s208, 0
    %s211 = sadd.s32 %s210, 1
    %s212 = scalar_select %p209, %s210, %s211
    %p215 = pneg %p209
    %p216 = scmp.eq.s32.totalorder %s14, 1
    %p217 = por %p215, %p216
    %p218 = scmp.ne.s32.totalorder %s210, %s213
    %p219 = scmp.eq.s32.totalorder %s14, 0
    %p220 = por %p218, %p219
    %p221 = scmp.ne.s32.totalorder %s210, %s213
    %p222 = scmp.eq.s32.totalorder %s19, 1
    %p223 = por %p221, %p222
    %p224 = scmp.ne.s32.totalorder %s213, %s214
    %p225 = scmp.eq.s32.totalorder %s19, 0
    %p226 = por %p224, %p225
    %p227 = scmp.ne.s32.totalorder %s213, %s214
    %p228 = scmp.eq.s32.totalorder %s20, 1
    %p229 = por %p227, %p228
    %p231 = scmp.ne.s32.totalorder %s214, %s230
    %p232 = scmp.eq.s32.totalorder %s20, 0
    %p233 = por %p231, %p232
    %s235 = sadd.s32 %s234, 1
    %p238 = scmp.eq.s32.totalorder %s14, 1
    %p239 = scmp.ne.s32.totalorder %s234, %s236
    %p240 = scmp.eq.s32.totalorder %s14, 0
    %p241 = por %p239, %p240
    %p242 = scmp.ne.s32.totalorder %s234, %s236
    %p243 = scmp.eq.s32.totalorder %s19, 1
    %p244 = por %p242, %p243
    %p245 = scmp.ne.s32.totalorder %s236, %s237
    %p246 = scmp.eq.s32.totalorder %s19, 0
    %p247 = por %p245, %p246
    %p248 = scmp.ne.s32.totalorder %s236, %s237
    %p249 = scmp.eq.s32.totalorder %s20, 1
    %p250 = por %p248, %p249
    %p252 = scmp.ne.s32.totalorder %s237, %s251
    %p253 = scmp.eq.s32.totalorder %s20, 0
    %p254 = por %p252, %p253
    %s256 = sadd.s32 %s255, 1
    %p259 = scmp.eq.s32.totalorder %s14, 1
    %p260 = scmp.ne.s32.totalorder %s255, %s257
    %p261 = scmp.eq.s32.totalorder %s14, 0
    %p262 = por %p260, %p261
    %p263 = scmp.ne.s32.totalorder %s255, %s257
    %p264 = scmp.eq.s32.totalorder %s19, 1
    %p265 = por %p263, %p264
    %p266 = scmp.ne.s32.totalorder %s257, %s258
    %p267 = scmp.eq.s32.totalorder %s19, 0
    %p268 = por %p266, %p267
    %p269 = scmp.ne.s32.totalorder %s257, %s258
    %p270 = scmp.eq.s32.totalorder %s20, 1
    %p271 = por %p269, %p270
    %p273 = scmp.ne.s32.totalorder %s258, %s272
    %p274 = scmp.eq.s32.totalorder %s20, 0
    %p275 = por %p273, %p274
    %s276 = ssub.s32 %s21, %s33
    %s277 = ssub.s32 %s22, %s29
    %s278 = sor.u32 %s276, %s277
    %p279 = scmp.eq.s32.totalorder %s278, 0
    %s281 = sadd.s32 %s280, 1
    %s282 = scalar_select %p279, %s280, %s281
    %p285 = pneg %p279
    %p286 = scmp.eq.s32.totalorder %s14, 1
    %p287 = por %p285, %p286
    %p288 = scmp.ne.s32.totalorder %s280, %s283
    %p289 = scmp.eq.s32.totalorder %s14, 0
    %p290 = por %p288, %p289
    %p291 = scmp.ne.s32.totalorder %s280, %s283
    %p292 = scmp.eq.s32.totalorder %s19, 1
    %p293 = por %p291, %p292
    %p294 = scmp.ne.s32.totalorder %s283, %s284
    %p295 = scmp.eq.s32.totalorder %s19, 0
    %p296 = por %p294, %p295
    %p297 = scmp.ne.s32.totalorder %s283, %s284
    %p298 = scmp.eq.s32.totalorder %s20, 1
    %p299 = por %p297, %p298
    %p301 = scmp.ne.s32.totalorder %s284, %s300
    %p302 = scmp.eq.s32.totalorder %s20, 0
    %p303 = por %p301, %p302
    %p304 = scmp.le.s32.totalorder 1, %s14
    %p305 = scmp.lt.s32.totalorder %s14, 3
    %p306 = pnand %p304, %p305
    %p307 = pneg %p306
    // Predicated region
    $region9: #{fwd.8} parent=5 // pred_check
      _
    $region10: #{fwd.8} parent=5 // pred_check_branch
      %309 = sbr.rel (%p306) target = $region12
    $region11: #{fwd.8} parent=5 // pred_region
      %s310 = ssub.s32 %s14, 1
      // Predicated region
      $region13: #{fwd.8} parent=11 // pred_check
        %p311 = pneg %p247
      $region14: #{fwd.8} parent=11 // pred_check_branch
        %313 = sbr.rel (%p311) target = $region16
      $region15: #{fwd.8} parent=11 // pred_region
        _
      $region16: #{fwd.8} parent=11 // pred_fallthru
        _
      // Predicated region
      $region17: #{fwd.8} parent=11 // pred_check
        %p314 = pneg %p268
      $region18: #{fwd.8} parent=11 // pred_check_branch
        %316 = sbr.rel (%p314) target = $region20
      $region19: #{fwd.8} parent=11 // pred_region
        _
      $region20: #{fwd.8} parent=11 // pred_fallthru
        _
    $region12: #{fwd.8} parent=5 // pred_fallthru
      _
    %p317 = scmp.lt.s32.totalorder %s14, 2
    // Predicated region
    $region21: #{fwd.8} parent=5 // pred_check
      %p318 = pneg %p317
    $region22: #{fwd.8} parent=5 // pred_check_branch
      %320 = sbr.rel (%p318) target = $region24
    $region23: #{fwd.8} parent=5 // pred_region
      // Predicated region
      $region25: #{fwd.8} parent=23 // pred_check
        %p321 = pneg %p48
      $region26: #{fwd.8} parent=23 // pred_check_branch
        %323 = sbr.rel (%p321) target = $region28
      $region27: #{fwd.8} parent=23 // pred_region
        %s324 = smul.u32 18, %s22
        %p325 = scmp.lt.s32.totalorder %s21, 1
        %s326 = scalar_select %p325, %s21, 1
        %p327 = scmp.lt.s32.totalorder %s324, 17
        %s328 = scalar_select %p327, %s324, 17
        %s329 = smul.addr %s328, 3
        %s330 = smul.addr %s326, 54
        %s331 = sadd.s32 %s329, %s330
        %s332 = smul.addr %s331, 8
        %s333 = scalar_lea.vmem %s0, %s332
        %s334 = smul.u32 18, %s22
      $region28: #{fwd.8} parent=23 // pred_fallthru
        _
      // Predicated region
      $region29: #{fwd.8} parent=23 // pred_check
        %p335 = pneg %p84
      $region30: #{fwd.8} parent=23 // pred_check_branch
        %337 = sbr.rel (%p335) target = $region32
      $region31: #{fwd.8} parent=23 // pred_region
        %s338 = smul.u32 %s22, 18
        %s339 = ssub.s32 %s338, 1
        %p340 = scmp.gt.s32.totalorder %s339, 0
        %s341 = scalar_select %p340, %s339, 0
        %p342 = scmp.lt.s32.totalorder %s21, 1
        %s343 = scalar_select %p342, %s21, 1
        %p344 = scmp.lt.s32.totalorder %s341, 17
        %s345 = scalar_select %p344, %s341, 17
        %s346 = smul.addr %s345, 3
        %s347 = smul.addr %s343, 54
        %s348 = sadd.s32 %s346, %s347
        %s349 = smul.addr %s348, 8
        %s350 = scalar_lea.vmem %s1, %s349
        %s351 = smul.u32 %s22, 18
        %s352 = ssub.s32 %s351, 1
        %p353 = scmp.gt.s32.totalorder %s352, 0
        %s354 = scalar_select %p353, %s352, 0
      $region32: #{fwd.8} parent=23 // pred_fallthru
        _
      // Predicated region
      $region33: #{fwd.8} parent=23 // pred_check
        %p355 = pneg %p120
      $region34: #{fwd.8} parent=23 // pred_check_branch
        %357 = sbr.rel (%p355) target = $region36
      $region35: #{fwd.8} parent=23 // pred_region
        %s358 = smul.u32 %s22, 18
        %s359 = sadd.s32 %s358, 18
        %p360 = scmp.lt.s32.totalorder %s359, 17
        %s361 = scalar_select %p360, %s359, 17
        %p362 = scmp.lt.s32.totalorder %s21, 1
        %s363 = scalar_select %p362, %s21, 1
        %p364 = scmp.lt.s32.totalorder %s361, 17
        %s365 = scalar_select %p364, %s361, 17
        %s366 = smul.addr %s365, 3
        %s367 = smul.addr %s363, 54
        %s368 = sadd.s32 %s366, %s367
        %s369 = smul.addr %s368, 8
        %s370 = scalar_lea.vmem %s2, %s369
        %s371 = smul.u32 %s22, 18
        %s372 = sadd.s32 %s371, 18
        %p373 = scmp.lt.s32.totalorder %s372, 17
        %s374 = scalar_select %p373, %s372, 17
      $region36: #{fwd.8} parent=23 // pred_fallthru
        _
      // Predicated region
      $region37: #{fwd.8} parent=23 // pred_check
        %p375 = pneg %p148
      $region38: #{fwd.8} parent=23 // pred_check_branch
        %377 = sbr.rel (%p375) target = $region40
      $region39: #{fwd.8} parent=23 // pred_region
        %s378 = smul.u32 18, %s22
        %p379 = scmp.lt.s32.totalorder %s21, 1
        %s380 = scalar_select %p379, %s21, 1
        %p381 = scmp.lt.s32.totalorder %s378, 17
        %s382 = scalar_select %p381, %s378, 17
        %s383 = smul.addr %s382, 3
        %s384 = smul.addr %s380, 54
        %s385 = sadd.s32 %s383, %s384
        %s386 = smul.addr %s385, 8
        %s387 = scalar_lea.vmem %s3, %s386
        %s388 = smul.u32 18, %s22
      $region40: #{fwd.8} parent=23 // pred_fallthru
        _
      // Predicated region
      $region41: #{fwd.8} parent=23 // pred_check
        %p389 = pneg %p184
      $region42: #{fwd.8} parent=23 // pred_check_branch
        %391 = sbr.rel (%p389) target = $region44
      $region43: #{fwd.8} parent=23 // pred_region
        %s392 = smul.u32 %s22, 18
        %s393 = ssub.s32 %s392, 1
        %p394 = scmp.gt.s32.totalorder %s393, 0
        %s395 = scalar_select %p394, %s393, 0
        %p396 = scmp.lt.s32.totalorder %s21, 1
        %s397 = scalar_select %p396, %s21, 1
        %p398 = scmp.lt.s32.totalorder %s395, 17
        %s399 = scalar_select %p398, %s395, 17
        %s400 = smul.addr %s399, 3
        %s401 = smul.addr %s397, 54
        %s402 = sadd.s32 %s400, %s401
        %s403 = smul.addr %s402, 8
        %s404 = scalar_lea.vmem %s4, %s403
        %s405 = smul.u32 %s22, 18
        %s406 = ssub.s32 %s405, 1
        %p407 = scmp.gt.s32.totalorder %s406, 0
        %s408 = scalar_select %p407, %s406, 0
      $region44: #{fwd.8} parent=23 // pred_fallthru
        _
      // Predicated region
      $region45: #{fwd.8} parent=23 // pred_check
        %p409 = pneg %p220
      $region46: #{fwd.8} parent=23 // pred_check_branch
        %411 = sbr.rel (%p409) target = $region48
      $region47: #{fwd.8} parent=23 // pred_region
        %s412 = smul.u32 %s22, 18
        %s413 = sadd.s32 %s412, 18
        %p414 = scmp.lt.s32.totalorder %s413, 17
        %s415 = scalar_select %p414, %s413, 17
        %p416 = scmp.lt.s32.totalorder %s21, 1
        %s417 = scalar_select %p416, %s21, 1
        %p418 = scmp.lt.s32.totalorder %s415, 17
        %s419 = scalar_select %p418, %s415, 17
        %s420 = smul.addr %s419, 3
        %s421 = smul.addr %s417, 54
        %s422 = sadd.s32 %s420, %s421
        %s423 = smul.addr %s422, 8
        %s424 = scalar_lea.vmem %s5, %s423
        %s425 = smul.u32 %s22, 18
        %s426 = sadd.s32 %s425, 18
        %p427 = scmp.lt.s32.totalorder %s426, 17
        %s428 = scalar_select %p427, %s426, 17
      $region48: #{fwd.8} parent=23 // pred_fallthru
        _
    $region24: #{fwd.8} parent=5 // pred_fallthru
      _
    %p429 = scmp.le.s32.totalorder 1, %s14
    %p430 = scmp.lt.s32.totalorder %s14, 3
    %p431 = pnand %p429, %p430
    %p432 = pneg %p431
    // Predicated region
    $region49: #{fwd.8} parent=5 // pred_check
      _
    $region50: #{fwd.8} parent=5 // pred_check_branch
      %434 = sbr.rel (%p431) target = $region52
    $region51: #{fwd.8} parent=5 // pred_region
      %s435 = ssub.s32 %s14, 1
      %s436 = smul.u32 18, %s24
      %p437 = scmp.lt.s32.totalorder %s23, 1
      %s438 = scalar_select %p437, %s23, 1
      %p439 = scmp.lt.s32.totalorder %s436, 17
      %s440 = scalar_select %p439, %s436, 17
      %s441 = smul.addr %s440, 3
      %s442 = smul.addr %s438, 54
      %s443 = sadd.s32 %s441, %s442
      %s444 = smul.addr %s443, 8
      %s445 = scalar_lea.vmem %s0, %s444
      %p446 = pneg %p54
      %p447 = pneg %p51
      %s448 = smul.u32 %s24, 18
      %s449 = ssub.s32 %s448, 1
      %p450 = scmp.gt.s32.totalorder %s449, 0
      %s451 = scalar_select %p450, %s449, 0
      %p452 = scmp.lt.s32.totalorder %s23, 1
      %s453 = scalar_select %p452, %s23, 1
      %p454 = scmp.lt.s32.totalorder %s451, 17
      %s455 = scalar_select %p454, %s451, 17
      %s456 = smul.addr %s455, 3
      %s457 = smul.addr %s453, 54
      %s458 = sadd.s32 %s456, %s457
      %s459 = smul.addr %s458, 8
      %s460 = scalar_lea.vmem %s1, %s459
      %p461 = pneg %p90
      %p462 = pneg %p87
      %s463 = smul.u32 %s24, 18
      %s464 = sadd.s32 %s463, 18
      %p465 = scmp.lt.s32.totalorder %s464, 17
      %s466 = scalar_select %p465, %s464, 17
      %p467 = scmp.lt.s32.totalorder %s23, 1
      %s468 = scalar_select %p467, %s23, 1
      %p469 = scmp.lt.s32.totalorder %s466, 17
      %s470 = scalar_select %p469, %s466, 17
      %s471 = smul.addr %s470, 3
      %s472 = smul.addr %s468, 54
      %s473 = sadd.s32 %s471, %s472
      %s474 = smul.addr %s473, 8
      %s475 = scalar_lea.vmem %s2, %s474
      %p476 = pneg %p126
      %p477 = pneg %p123
      %s478 = smul.u32 18, %s24
      %p479 = scmp.lt.s32.totalorder %s23, 1
      %s480 = scalar_select %p479, %s23, 1
      %p481 = scmp.lt.s32.totalorder %s478, 17
      %s482 = scalar_select %p481, %s478, 17
      %s483 = smul.addr %s482, 3
      %s484 = smul.addr %s480, 54
      %s485 = sadd.s32 %s483, %s484
      %s486 = smul.addr %s485, 8
      %s487 = scalar_lea.vmem %s3, %s486
      %p488 = pneg %p154
      %p489 = pneg %p151
      %s490 = smul.u32 %s24, 18
      %s491 = ssub.s32 %s490, 1
      %p492 = scmp.gt.s32.totalorder %s491, 0
      %s493 = scalar_select %p492, %s491, 0
      %p494 = scmp.lt.s32.totalorder %s23, 1
      %s495 = scalar_select %p494, %s23, 1
      %p496 = scmp.lt.s32.totalorder %s493, 17
      %s497 = scalar_select %p496, %s493, 17
      %s498 = smul.addr %s497, 3
      %s499 = smul.addr %s495, 54
      %s500 = sadd.s32 %s498, %s499
      %s501 = smul.addr %s500, 8
      %s502 = scalar_lea.vmem %s4, %s501
      %p503 = pneg %p190
      %p504 = pneg %p187
      %s505 = smul.u32 %s24, 18
      %s506 = sadd.s32 %s505, 18
      %p507 = scmp.lt.s32.totalorder %s506, 17
      %s508 = scalar_select %p507, %s506, 17
      %p509 = scmp.lt.s32.totalorder %s23, 1
      %s510 = scalar_select %p509, %s23, 1
      %p511 = scmp.lt.s32.totalorder %s508, 17
      %s512 = scalar_select %p511, %s508, 17
      %s513 = smul.addr %s512, 3
      %s514 = smul.addr %s510, 54
      %s515 = sadd.s32 %s513, %s514
      %s516 = smul.addr %s515, 8
      %s517 = scalar_lea.vmem %s5, %s516
      %p518 = pneg %p226
      %p519 = pneg %p223
      %p520 = pneg %p247
      %p521 = pneg %p244
      %p522 = pneg %p268
      %p523 = pneg %p265
      %p524 = pneg %p296
      %p525 = pneg %p293
      %s526 = smul.u32 18, %s24
      %p527 = scmp.lt.s32.totalorder %s23, 1
      %s528 = scalar_select %p527, %s23, 1
      %p529 = scmp.lt.s32.totalorder %s526, 17
      %s530 = scalar_select %p529, %s526, 17
      %s531 = smul.addr %s530, 3
      %s532 = smul.addr %s528, 54
      %s533 = sadd.s32 %s531, %s532
      %s534 = smul.addr %s533, 8
      %s535 = scalar_lea.vmem %s8, %s534
      %s536 = smul.u32 18, %s24
      %p537 = scmp.lt.s32.totalorder %s23, 1
      %s538 = scalar_select %p537, %s23, 1
      %p539 = scmp.lt.s32.totalorder %s536, 17
      %s540 = scalar_select %p539, %s536, 17
      %s541 = smul.addr %s540, 3
      %s542 = smul.addr %s538, 54
      %s543 = sadd.s32 %s541, %s542
      %s544 = smul.addr %s543, 8
      %s545 = scalar_lea.vmem %s0, %s544
      %s546 = smul.u32 18, %s24
      %s547 = smul.u32 %s24, 18
      %s548 = ssub.s32 %s547, 1
      %p549 = scmp.gt.s32.totalorder %s548, 0
      %s550 = scalar_select %p549, %s548, 0
      %p551 = scmp.lt.s32.totalorder %s23, 1
      %s552 = scalar_select %p551, %s23, 1
      %p553 = scmp.lt.s32.totalorder %s550, 17
      %s554 = scalar_select %p553, %s550, 17
      %s555 = smul.addr %s554, 3
      %s556 = smul.addr %s552, 54
      %s557 = sadd.s32 %s555, %s556
      %s558 = smul.addr %s557, 8
      %s559 = scalar_lea.vmem %s1, %s558
      %s560 = smul.u32 %s24, 18
      %s561 = ssub.s32 %s560, 1
      %p562 = scmp.gt.s32.totalorder %s561, 0
      %s563 = scalar_select %p562, %s561, 0
      %s564 = smul.u32 %s24, 18
      %s565 = sadd.s32 %s564, 18
      %p566 = scmp.lt.s32.totalorder %s565, 17
      %s567 = scalar_select %p566, %s565, 17
      %p568 = scmp.lt.s32.totalorder %s23, 1
      %s569 = scalar_select %p568, %s23, 1
      %p570 = scmp.lt.s32.totalorder %s567, 17
      %s571 = scalar_select %p570, %s567, 17
      %s572 = smul.addr %s571, 3
      %s573 = smul.addr %s569, 54
      %s574 = sadd.s32 %s572, %s573
      %s575 = smul.addr %s574, 8
      %s576 = scalar_lea.vmem %s2, %s575
      %s577 = smul.u32 %s24, 18
      %s578 = sadd.s32 %s577, 18
      %p579 = scmp.lt.s32.totalorder %s578, 17
      %s580 = scalar_select %p579, %s578, 17
      %s581 = smul.u32 18, %s24
      %p582 = scmp.lt.s32.totalorder %s23, 1
      %s583 = scalar_select %p582, %s23, 1
      %p584 = scmp.lt.s32.totalorder %s581, 17
      %s585 = scalar_select %p584, %s581, 17
      %s586 = smul.addr %s585, 3
      %s587 = smul.addr %s583, 54
      %s588 = sadd.s32 %s586, %s587
      %s589 = smul.addr %s588, 8
      %s590 = scalar_lea.vmem %s3, %s589
      %s591 = smul.u32 18, %s24
      %s592 = smul.u32 %s24, 18
      %s593 = ssub.s32 %s592, 1
      %p594 = scmp.gt.s32.totalorder %s593, 0
      %s595 = scalar_select %p594, %s593, 0
      %p596 = scmp.lt.s32.totalorder %s23, 1
      %s597 = scalar_select %p596, %s23, 1
      %p598 = scmp.lt.s32.totalorder %s595, 17
      %s599 = scalar_select %p598, %s595, 17
      %s600 = smul.addr %s599, 3
      %s601 = smul.addr %s597, 54
      %s602 = sadd.s32 %s600, %s601
      %s603 = smul.addr %s602, 8
      %s604 = scalar_lea.vmem %s4, %s603
      %s605 = smul.u32 %s24, 18
      %s606 = ssub.s32 %s605, 1
      %p607 = scmp.gt.s32.totalorder %s606, 0
      %s608 = scalar_select %p607, %s606, 0
      %s609 = smul.u32 %s24, 18
      %s610 = sadd.s32 %s609, 18
      %p611 = scmp.lt.s32.totalorder %s610, 17
      %s612 = scalar_select %p611, %s610, 17
      %p613 = scmp.lt.s32.totalorder %s23, 1
      %s614 = scalar_select %p613, %s23, 1
      %p615 = scmp.lt.s32.totalorder %s612, 17
      %s616 = scalar_select %p615, %s612, 17
      %s617 = smul.addr %s616, 3
      %s618 = smul.addr %s614, 54
      %s619 = sadd.s32 %s617, %s618
      %s620 = smul.addr %s619, 8
      %s621 = scalar_lea.vmem %s5, %s620
      %s622 = smul.u32 %s24, 18
      %s623 = sadd.s32 %s622, 18
      %p624 = scmp.lt.s32.totalorder %s623, 17
      %s625 = scalar_select %p624, %s623, 17
      %s626 = smul.u32 18, %s24
      %p627 = scmp.lt.s32.totalorder %s23, 1
      %s628 = scalar_select %p627, %s23, 1
      %p629 = scmp.lt.s32.totalorder %s626, 17
      %s630 = scalar_select %p629, %s626, 17
      %s631 = smul.addr %s630, 3
      %s632 = smul.addr %s628, 54
      %s633 = sadd.s32 %s631, %s632
      %s634 = smul.addr %s633, 8
      %s635 = scalar_lea.vmem %s8, %s634
      %s636 = smul.u32 18, %s24
      %v637 = vld [vmem:[%s545] sm:$0xff]
      %v638 = vld [vmem:[%s545 + $0x8] sm:$0xff]
      %v639 = vld [vmem:[%s545 + $0x18] sm:$0xff]
      %v640 = vld [vmem:[%s545 + $0x20] sm:$0xff]
      %v641 = vld [vmem:[%s545 + $0x30] sm:$0xff]
      %v642 = vld [vmem:[%s545 + $0x38] sm:$0xff]
      %v643 = vld [vmem:[%s545 + $0x48] sm:$0xff]
      %v644 = vld [vmem:[%s545 + $0x50] sm:$0xff]
      %v645 = vld [vmem:[%s545 + $0x60] sm:$0xff]
      %v646 = vld [vmem:[%s545 + $0x68] sm:$0xff]
      %v647 = vld [vmem:[%s545 + $0x78] sm:$0xff]
      %v648 = vld [vmem:[%s545 + $0x80] sm:$0xff]
      %v649 = vld [vmem:[%s545 + $0x90] sm:$0xff]
      %v650 = vld [vmem:[%s545 + $0x98] sm:$0xff]
      %v651 = vld [vmem:[%s545 + $0xa8] sm:$0xff]
      %v652 = vld [vmem:[%s545 + $0xb0] sm:$0xff]
      %v653 = vld [vmem:[%s545 + $0xc0] sm:$0xff]
      %v654 = vld [vmem:[%s545 + $0xc8] sm:$0xff]
      %v655 = vld [vmem:[%s545 + $0xd8] sm:$0xff]
      %v656 = vld [vmem:[%s545 + $0xe0] sm:$0xff]
      %v657 = vld [vmem:[%s545 + $0xf0] sm:$0xff]
      %v658 = vld [vmem:[%s545 + $0xf8] sm:$0xff]
      %v659 = vld [vmem:[%s545 + $0x108] sm:$0xff]
      %v660 = vld [vmem:[%s545 + $0x110] sm:$0xff]
      %v661 = vld [vmem:[%s545 + $0x120] sm:$0xff]
      %v662 = vld [vmem:[%s545 + $0x128] sm:$0xff]
      %v663 = vld [vmem:[%s545 + $0x138] sm:$0xff]
      %v664 = vld [vmem:[%s545 + $0x140] sm:$0xff]
      %v665 = vld [vmem:[%s545 + $0x150] sm:$0xff]
      %v666 = vld [vmem:[%s545 + $0x158] sm:$0xff]
      %v667 = vld [vmem:[%s545 + $0x168] sm:$0xff]
      %v668 = vld [vmem:[%s545 + $0x170] sm:$0xff]
      %v669 = vld [vmem:[%s545 + $0x180] sm:$0xff]
      %v670 = vld [vmem:[%s545 + $0x188] sm:$0xff]
      %v671 = vld [vmem:[%s545 + $0x198] sm:$0xff]
      %v672 = vld [vmem:[%s545 + $0x1a0] sm:$0xff]
      %v673 = vld [vmem:[%s559] sm:$0xff]
      %v674 = vld [vmem:[%s559 + $0x8] sm:$0xff]
      %v675 = vld [vmem:[%s576] sm:$0xff]
      %v676 = vld [vmem:[%s576 + $0x8] sm:$0xff]
      %vm677 = vcmask 31744
      %678 = vst.msk [vmem:[#allocation2] sm:$0xff] %vm677, %v673
      %679 = vst.msk [vmem:[#allocation2 + $0x8] sm:$0xff] %vm677, %v674
      %s680 = scalar_lea.vmem [#allocation2], 16
      %681 = vst.msk [vmem:[%s680] sm:$0xff] %vm677, %v637
      %682 = vst.msk [vmem:[%s680 + $0x8] sm:$0xff] %vm677, %v638
      %683 = vst.msk [vmem:[%s680 + $0x10] sm:$0xff] %vm677, %v639
      %684 = vst.msk [vmem:[%s680 + $0x18] sm:$0xff] %vm677, %v640
      %685 = vst.msk [vmem:[%s680 + $0x20] sm:$0xff] %vm677, %v641
      %686 = vst.msk [vmem:[%s680 + $0x28] sm:$0xff] %vm677, %v642
      %687 = vst.msk [vmem:[%s680 + $0x30] sm:$0xff] %vm677, %v643
      %688 = vst.msk [vmem:[%s680 + $0x38] sm:$0xff] %vm677, %v644
      %689 = vst.msk [vmem:[%s680 + $0x40] sm:$0xff] %vm677, %v645
      %690 = vst.msk [vmem:[%s680 + $0x48] sm:$0xff] %vm677, %v646
      %691 = vst.msk [vmem:[%s680 + $0x50] sm:$0xff] %vm677, %v647
      %692 = vst.msk [vmem:[%s680 + $0x58] sm:$0xff] %vm677, %v648
      %693 = vst.msk [vmem:[%s680 + $0x60] sm:$0xff] %vm677, %v649
      %694 = vst.msk [vmem:[%s680 + $0x68] sm:$0xff] %vm677, %v650
      %695 = vst.msk [vmem:[%s680 + $0x70] sm:$0xff] %vm677, %v651
      %696 = vst.msk [vmem:[%s680 + $0x78] sm:$0xff] %vm677, %v652
      %697 = vst.msk [vmem:[%s680 + $0x80] sm:$0xff] %vm677, %v653
      %698 = vst.msk [vmem:[%s680 + $0x88] sm:$0xff] %vm677, %v654
      %699 = vst.msk [vmem:[%s680 + $0x90] sm:$0xff] %vm677, %v655
      %700 = vst.msk [vmem:[%s680 + $0x98] sm:$0xff] %vm677, %v656
      %701 = vst.msk [vmem:[%s680 + $0xa0] sm:$0xff] %vm677, %v657
      %702 = vst.msk [vmem:[%s680 + $0xa8] sm:$0xff] %vm677, %v658
      %703 = vst.msk [vmem:[%s680 + $0xb0] sm:$0xff] %vm677, %v659
      %704 = vst.msk [vmem:[%s680 + $0xb8] sm:$0xff] %vm677, %v660
      %705 = vst.msk [vmem:[%s680 + $0xc0] sm:$0xff] %vm677, %v661
      %706 = vst.msk [vmem:[%s680 + $0xc8] sm:$0xff] %vm677, %v662
      %707 = vst.msk [vmem:[%s680 + $0xd0] sm:$0xff] %vm677, %v663
      %708 = vst.msk [vmem:[%s680 + $0xd8] sm:$0xff] %vm677, %v664
      %709 = vst.msk [vmem:[%s680 + $0xe0] sm:$0xff] %vm677, %v665
      %710 = vst.msk [vmem:[%s680 + $0xe8] sm:$0xff] %vm677, %v666
      %711 = vst.msk [vmem:[%s680 + $0xf0] sm:$0xff] %vm677, %v667
      %712 = vst.msk [vmem:[%s680 + $0xf8] sm:$0xff] %vm677, %v668
      %713 = vst.msk [vmem:[%s680 + $0x100] sm:$0xff] %vm677, %v669
      %714 = vst.msk [vmem:[%s680 + $0x108] sm:$0xff] %vm677, %v670
      %751 = vrot.lane.b32.xlu0 %v637, 12
      %v752 = vpop.permute.xlu0 %751
      %753 = vrot.lane.b32.xlu0 %v638, 12
      %v754 = vpop.permute.xlu0 %753
      %755 = vrot.lane.b32.xlu0 %v639, 12
      %v756 = vpop.permute.xlu0 %755
      %757 = vrot.lane.b32.xlu0 %v640, 12
      %v758 = vpop.permute.xlu0 %757
      %759 = vrot.lane.b32.xlu0 %v641, 12
      %v760 = vpop.permute.xlu0 %759
      %761 = vrot.lane.b32.xlu0 %v642, 12
      %v762 = vpop.permute.xlu0 %761
      %763 = vrot.lane.b32.xlu0 %v643, 12
      %v764 = vpop.permute.xlu0 %763
      %765 = vrot.lane.b32.xlu0 %v644, 12
      %v766 = vpop.permute.xlu0 %765
      %767 = vrot.lane.b32.xlu0 %v645, 12
      %v768 = vpop.permute.xlu0 %767
      %769 = vrot.lane.b32.xlu0 %v646, 12
      %v770 = vpop.permute.xlu0 %769
      %771 = vrot.lane.b32.xlu0 %v647, 12
      %v772 = vpop.permute.xlu0 %771
      %773 = vrot.lane.b32.xlu0 %v648, 12
      %v774 = vpop.permute.xlu0 %773
      %775 = vrot.lane.b32.xlu0 %v649, 12
      %v776 = vpop.permute.xlu0 %775
      %777 = vrot.lane.b32.xlu0 %v650, 12
      %v778 = vpop.permute.xlu0 %777
      %779 = vrot.lane.b32.xlu0 %v651, 12
      %v780 = vpop.permute.xlu0 %779
      %781 = vrot.lane.b32.xlu0 %v652, 12
      %v782 = vpop.permute.xlu0 %781
      %783 = vrot.lane.b32.xlu0 %v653, 12
      %v784 = vpop.permute.xlu0 %783
      %785 = vrot.lane.b32.xlu0 %v654, 12
      %v786 = vpop.permute.xlu0 %785
      %787 = vrot.lane.b32.xlu0 %v655, 12
      %v788 = vpop.permute.xlu0 %787
      %789 = vrot.lane.b32.xlu0 %v656, 12
      %v790 = vpop.permute.xlu0 %789
      %791 = vrot.lane.b32.xlu0 %v657, 12
      %v792 = vpop.permute.xlu0 %791
      %793 = vrot.lane.b32.xlu0 %v658, 12
      %v794 = vpop.permute.xlu0 %793
      %795 = vrot.lane.b32.xlu0 %v659, 12
      %v796 = vpop.permute.xlu0 %795
      %797 = vrot.lane.b32.xlu0 %v660, 12
      %v798 = vpop.permute.xlu0 %797
      %799 = vrot.lane.b32.xlu0 %v661, 12
      %v800 = vpop.permute.xlu0 %799
      %801 = vrot.lane.b32.xlu0 %v662, 12
      %v802 = vpop.permute.xlu0 %801
      %803 = vrot.lane.b32.xlu0 %v663, 12
      %v804 = vpop.permute.xlu0 %803
      %805 = vrot.lane.b32.xlu0 %v664, 12
      %v806 = vpop.permute.xlu0 %805
      %807 = vrot.lane.b32.xlu0 %v665, 12
      %v808 = vpop.permute.xlu0 %807
      %809 = vrot.lane.b32.xlu0 %v666, 12
      %v810 = vpop.permute.xlu0 %809
      %811 = vrot.lane.b32.xlu0 %v667, 12
      %v812 = vpop.permute.xlu0 %811
      %813 = vrot.lane.b32.xlu0 %v668, 12
      %v814 = vpop.permute.xlu0 %813
      %815 = vrot.lane.b32.xlu0 %v669, 12
      %v816 = vpop.permute.xlu0 %815
      %817 = vrot.lane.b32.xlu0 %v670, 12
      %v818 = vpop.permute.xlu0 %817
      %819 = vrot.lane.b32.xlu0 %v671, 12
      %v820 = vpop.permute.xlu0 %819
      %821 = vrot.lane.b32.xlu0 %v672, 12
      %v822 = vpop.permute.xlu0 %821
      %vm859 = vcmask 130144
      %860 = vst.msk [vmem:[#allocation2] sm:$0xff] %vm859, %v752
      %861 = vst.msk [vmem:[#allocation2 + $0x8] sm:$0xff] %vm859, %v754
      %862 = vst.msk [vmem:[#allocation2 + $0x10] sm:$0xff] %vm859, %v756
      %863 = vst.msk [vmem:[#allocation2 + $0x18] sm:$0xff] %vm859, %v758
      %864 = vst.msk [vmem:[#allocation2 + $0x20] sm:$0xff] %vm859, %v760
      %865 = vst.msk [vmem:[#allocation2 + $0x28] sm:$0xff] %vm859, %v762
      %866 = vst.msk [vmem:[#allocation2 + $0x30] sm:$0xff] %vm859, %v764
      %867 = vst.msk [vmem:[#allocation2 + $0x38] sm:$0xff] %vm859, %v766
      %868 = vst.msk [vmem:[#allocation2 + $0x40] sm:$0xff] %vm859, %v768
      %869 = vst.msk [vmem:[#allocation2 + $0x48] sm:$0xff] %vm859, %v770
      %870 = vst.msk [vmem:[#allocation2 + $0x50] sm:$0xff] %vm859, %v772
      %871 = vst.msk [vmem:[#allocation2 + $0x58] sm:$0xff] %vm859, %v774
      %872 = vst.msk [vmem:[#allocation2 + $0x60] sm:$0xff] %vm859, %v776
      %873 = vst.msk [vmem:[#allocation2 + $0x68] sm:$0xff] %vm859, %v778
      %874 = vst.msk [vmem:[#allocation2 + $0x70] sm:$0xff] %vm859, %v780
      %875 = vst.msk [vmem:[#allocation2 + $0x78] sm:$0xff] %vm859, %v782
      %876 = vst.msk [vmem:[#allocation2 + $0x80] sm:$0xff] %vm859, %v784
      %877 = vst.msk [vmem:[#allocation2 + $0x88] sm:$0xff] %vm859, %v786
      %878 = vst.msk [vmem:[#allocation2 + $0x90] sm:$0xff] %vm859, %v788
      %879 = vst.msk [vmem:[#allocation2 + $0x98] sm:$0xff] %vm859, %v790
      %880 = vst.msk [vmem:[#allocation2 + $0xa0] sm:$0xff] %vm859, %v792
      %881 = vst.msk [vmem:[#allocation2 + $0xa8] sm:$0xff] %vm859, %v794
      %882 = vst.msk [vmem:[#allocation2 + $0xb0] sm:$0xff] %vm859, %v796
      %883 = vst.msk [vmem:[#allocation2 + $0xb8] sm:$0xff] %vm859, %v798
      %884 = vst.msk [vmem:[#allocation2 + $0xc0] sm:$0xff] %vm859, %v800
      %885 = vst.msk [vmem:[#allocation2 + $0xc8] sm:$0xff] %vm859, %v802
      %886 = vst.msk [vmem:[#allocation2 + $0xd0] sm:$0xff] %vm859, %v804
      %887 = vst.msk [vmem:[#allocation2 + $0xd8] sm:$0xff] %vm859, %v806
      %888 = vst.msk [vmem:[#allocation2 + $0xe0] sm:$0xff] %vm859, %v808
      %889 = vst.msk [vmem:[#allocation2 + $0xe8] sm:$0xff] %vm859, %v810
      %890 = vst.msk [vmem:[#allocation2 + $0xf0] sm:$0xff] %vm859, %v812
      %891 = vst.msk [vmem:[#allocation2 + $0xf8] sm:$0xff] %vm859, %v814
      %892 = vst.msk [vmem:[#allocation2 + $0x100] sm:$0xff] %vm859, %v816
      %893 = vst.msk [vmem:[#allocation2 + $0x108] sm:$0xff] %vm859, %v818
      %894 = vst.msk [vmem:[#allocation2 + $0x110] sm:$0xff] %vm859, %v820
      %895 = vst.msk [vmem:[#allocation2 + $0x118] sm:$0xff] %vm859, %v822
      %896 = vrot.lane.b32.xlu0 %v639, 24
      %v897 = vpop.permute.xlu0 %896
      %898 = vrot.lane.b32.xlu0 %v640, 24
      %v899 = vpop.permute.xlu0 %898
      %900 = vrot.lane.b32.xlu0 %v641, 24
      %v901 = vpop.permute.xlu0 %900
      %902 = vrot.lane.b32.xlu0 %v642, 24
      %v903 = vpop.permute.xlu0 %902
      %904 = vrot.lane.b32.xlu0 %v643, 24
      %v905 = vpop.permute.xlu0 %904
      %906 = vrot.lane.b32.xlu0 %v644, 24
      %v907 = vpop.permute.xlu0 %906
      %908 = vrot.lane.b32.xlu0 %v645, 24
      %v909 = vpop.permute.xlu0 %908
      %910 = vrot.lane.b32.xlu0 %v646, 24
      %v911 = vpop.permute.xlu0 %910
      %912 = vrot.lane.b32.xlu0 %v647, 24
      %v913 = vpop.permute.xlu0 %912
      %914 = vrot.lane.b32.xlu0 %v648, 24
      %v915 = vpop.permute.xlu0 %914
      %916 = vrot.lane.b32.xlu0 %v649, 24
      %v917 = vpop.permute.xlu0 %916
      %918 = vrot.lane.b32.xlu0 %v650, 24
      %v919 = vpop.permute.xlu0 %918
      %920 = vrot.lane.b32.xlu0 %v651, 24
      %v921 = vpop.permute.xlu0 %920
      %922 = vrot.lane.b32.xlu0 %v652, 24
      %v923 = vpop.permute.xlu0 %922
      %924 = vrot.lane.b32.xlu0 %v653, 24
      %v925 = vpop.permute.xlu0 %924
      %926 = vrot.lane.b32.xlu0 %v654, 24
      %v927 = vpop.permute.xlu0 %926
      %928 = vrot.lane.b32.xlu0 %v655, 24
      %v929 = vpop.permute.xlu0 %928
      %930 = vrot.lane.b32.xlu0 %v656, 24
      %v931 = vpop.permute.xlu0 %930
      %932 = vrot.lane.b32.xlu0 %v657, 24
      %v933 = vpop.permute.xlu0 %932
      %934 = vrot.lane.b32.xlu0 %v658, 24
      %v935 = vpop.permute.xlu0 %934
      %936 = vrot.lane.b32.xlu0 %v659, 24
      %v937 = vpop.permute.xlu0 %936
      %938 = vrot.lane.b32.xlu0 %v660, 24
      %v939 = vpop.permute.xlu0 %938
      %940 = vrot.lane.b32.xlu0 %v661, 24
      %v941 = vpop.permute.xlu0 %940
      %942 = vrot.lane.b32.xlu0 %v662, 24
      %v943 = vpop.permute.xlu0 %942
      %944 = vrot.lane.b32.xlu0 %v663, 24
      %v945 = vpop.permute.xlu0 %944
      %946 = vrot.lane.b32.xlu0 %v664, 24
      %v947 = vpop.permute.xlu0 %946
      %948 = vrot.lane.b32.xlu0 %v665, 24
      %v949 = vpop.permute.xlu0 %948
      %950 = vrot.lane.b32.xlu0 %v666, 24
      %v951 = vpop.permute.xlu0 %950
      %952 = vrot.lane.b32.xlu0 %v667, 24
      %v953 = vpop.permute.xlu0 %952
      %954 = vrot.lane.b32.xlu0 %v668, 24
      %v955 = vpop.permute.xlu0 %954
      %956 = vrot.lane.b32.xlu0 %v669, 24
      %v957 = vpop.permute.xlu0 %956
      %958 = vrot.lane.b32.xlu0 %v670, 24
      %v959 = vpop.permute.xlu0 %958
      %960 = vrot.lane.b32.xlu0 %v671, 24
      %v961 = vpop.permute.xlu0 %960
      %962 = vrot.lane.b32.xlu0 %v672, 24
      %v963 = vpop.permute.xlu0 %962
      %vm998 = vcmask 228544
      %999 = vst.msk [vmem:[#allocation2] sm:$0xff] %vm998, %v897
      %1000 = vst.msk [vmem:[#allocation2 + $0x8] sm:$0xff] %vm998, %v899
      %1001 = vst.msk [vmem:[#allocation2 + $0x10] sm:$0xff] %vm998, %v901
      %1002 = vst.msk [vmem:[#allocation2 + $0x18] sm:$0xff] %vm998, %v903
      %1003 = vst.msk [vmem:[#allocation2 + $0x20] sm:$0xff] %vm998, %v905
      %1004 = vst.msk [vmem:[#allocation2 + $0x28] sm:$0xff] %vm998, %v907
      %1005 = vst.msk [vmem:[#allocation2 + $0x30] sm:$0xff] %vm998, %v909
      %1006 = vst.msk [vmem:[#allocation2 + $0x38] sm:$0xff] %vm998, %v911
      %1007 = vst.msk [vmem:[#allocation2 + $0x40] sm:$0xff] %vm998, %v913
      %1008 = vst.msk [vmem:[#allocation2 + $0x48] sm:$0xff] %vm998, %v915
      %1009 = vst.msk [vmem:[#allocation2 + $0x50] sm:$0xff] %vm998, %v917
      %1010 = vst.msk [vmem:[#allocation2 + $0x58] sm:$0xff] %vm998, %v919
      %1011 = vst.msk [vmem:[#allocation2 + $0x60] sm:$0xff] %vm998, %v921
      %1012 = vst.msk [vmem:[#allocation2 + $0x68] sm:$0xff] %vm998, %v923
      %1013 = vst.msk [vmem:[#allocation2 + $0x70] sm:$0xff] %vm998, %v925
      %1014 = vst.msk [vmem:[#allocation2 + $0x78] sm:$0xff] %vm998, %v927
      %1015 = vst.msk [vmem:[#allocation2 + $0x80] sm:$0xff] %vm998, %v929
      %1016 = vst.msk [vmem:[#allocation2 + $0x88] sm:$0xff] %vm998, %v931
      %1017 = vst.msk [vmem:[#allocation2 + $0x90] sm:$0xff] %vm998, %v933
      %1018 = vst.msk [vmem:[#allocation2 + $0x98] sm:$0xff] %vm998, %v935
      %1019 = vst.msk [vmem:[#allocation2 + $0xa0] sm:$0xff] %vm998, %v937
      %1020 = vst.msk [vmem:[#allocation2 + $0xa8] sm:$0xff] %vm998, %v939
      %1021 = vst.msk [vmem:[#allocation2 + $0xb0] sm:$0xff] %vm998, %v941
      %1022 = vst.msk [vmem:[#allocation2 + $0xb8] sm:$0xff] %vm998, %v943
      %1023 = vst.msk [vmem:[#allocation2 + $0xc0] sm:$0xff] %vm998, %v945
      %1024 = vst.msk [vmem:[#allocation2 + $0xc8] sm:$0xff] %vm998, %v947
      %1025 = vst.msk [vmem:[#allocation2 + $0xd0] sm:$0xff] %vm998, %v949
      %1026 = vst.msk [vmem:[#allocation2 + $0xd8] sm:$0xff] %vm998, %v951
      %1027 = vst.msk [vmem:[#allocation2 + $0xe0] sm:$0xff] %vm998, %v953
      %1028 = vst.msk [vmem:[#allocation2 + $0xe8] sm:$0xff] %vm998, %v955
      %1029 = vst.msk [vmem:[#allocation2 + $0xf0] sm:$0xff] %vm998, %v957
      %1030 = vst.msk [vmem:[#allocation2 + $0xf8] sm:$0xff] %vm998, %v959
      %1031 = vst.msk [vmem:[#allocation2 + $0x100] sm:$0xff] %vm998, %v961
      %1032 = vst.msk [vmem:[#allocation2 + $0x108] sm:$0xff] %vm998, %v963
      %1035 = vrot.lane.b32.xlu0 %v675, 24
      %v1036 = vpop.permute.xlu0 %1035
      %1037 = vrot.lane.b32.xlu0 %v676, 24
      %v1038 = vpop.permute.xlu0 %1037
      %s1041 = scalar_lea.vmem [#allocation2], 272
      %1042 = vst.msk [vmem:[%s1041] sm:$0xff] %vm998, %v1036
      %1043 = vst.msk [vmem:[%s1041 + $0x8] sm:$0xff] %vm998, %v1038
      %v1044 = vld [vmem:[%s545 + $0x1] sm:$0xff]
      %v1045 = vld [vmem:[%s545 + $0x9] sm:$0xff]
      %v1046 = vld [vmem:[%s545 + $0x19] sm:$0xff]
      %v1047 = vld [vmem:[%s545 + $0x21] sm:$0xff]
      %v1048 = vld [vmem:[%s545 + $0x31] sm:$0xff]
      %v1049 = vld [vmem:[%s545 + $0x39] sm:$0xff]
      %v1050 = vld [vmem:[%s545 + $0x49] sm:$0xff]
      %v1051 = vld [vmem:[%s545 + $0x51] sm:$0xff]
      %v1052 = vld [vmem:[%s545 + $0x61] sm:$0xff]
      %v1053 = vld [vmem:[%s545 + $0x69] sm:$0xff]
      %v1054 = vld [vmem:[%s545 + $0x79] sm:$0xff]
      %v1055 = vld [vmem:[%s545 + $0x81] sm:$0xff]
      %v1056 = vld [vmem:[%s545 + $0x91] sm:$0xff]
      %v1057 = vld [vmem:[%s545 + $0x99] sm:$0xff]
      %v1058 = vld [vmem:[%s545 + $0xa9] sm:$0xff]
      %v1059 = vld [vmem:[%s545 + $0xb1] sm:$0xff]
      %v1060 = vld [vmem:[%s545 + $0xc1] sm:$0xff]
      %v1061 = vld [vmem:[%s545 + $0xc9] sm:$0xff]
      %v1062 = vld [vmem:[%s545 + $0xd9] sm:$0xff]
      %v1063 = vld [vmem:[%s545 + $0xe1] sm:$0xff]
      %v1064 = vld [vmem:[%s545 + $0xf1] sm:$0xff]
      %v1065 = vld [vmem:[%s545 + $0xf9] sm:$0xff]
      %v1066 = vld [vmem:[%s545 + $0x109] sm:$0xff]
      %v1067 = vld [vmem:[%s545 + $0x111] sm:$0xff]
      %v1068 = vld [vmem:[%s545 + $0x121] sm:$0xff]
      %v1069 = vld [vmem:[%s545 + $0x129] sm:$0xff]
      %v1070 = vld [vmem:[%s545 + $0x139] sm:$0xff]
      %v1071 = vld [vmem:[%s545 + $0x141] sm:$0xff]
      %v1072 = vld [vmem:[%s545 + $0x151] sm:$0xff]
      %v1073 = vld [vmem:[%s545 + $0x159] sm:$0xff]
      %v1074 = vld [vmem:[%s545 + $0x169] sm:$0xff]
      %v1075 = vld [vmem:[%s545 + $0x171] sm:$0xff]
      %v1076 = vld [vmem:[%s545 + $0x181] sm:$0xff]
      %v1077 = vld [vmem:[%s545 + $0x189] sm:$0xff]
      %v1078 = vld [vmem:[%s545 + $0x199] sm:$0xff]
      %v1079 = vld [vmem:[%s545 + $0x1a1] sm:$0xff]
      %v1080 = vld [vmem:[%s559 + $0x1] sm:$0xff]
      %v1081 = vld [vmem:[%s559 + $0x9] sm:$0xff]
      %v1082 = vld [vmem:[%s576 + $0x1] sm:$0xff]
      %v1083 = vld [vmem:[%s576 + $0x9] sm:$0xff]
      %1086 = vrot.lane.b32.xlu0 %v1080, 4
      %v1087 = vpop.permute.xlu0 %1086
      %1088 = vrot.lane.b32.xlu0 %v1081, 4
      %v1089 = vpop.permute.xlu0 %1088
      %vm1092 = vcmask 64544
      %1093 = vst.msk [vmem:[#allocation2] sm:$0xff] %vm1092, %v1087
      %1094 = vst.msk [vmem:[#allocation2 + $0x8] sm:$0xff] %vm1092, %v1089
      %1129 = vrot.lane.b32.xlu0 %v1044, 4
      %v1130 = vpop.permute.xlu0 %1129
      %1131 = vrot.lane.b32.xlu0 %v1045, 4
      %v1132 = vpop.permute.xlu0 %1131
      %1133 = vrot.lane.b32.xlu0 %v1046, 4
      %v1134 = vpop.permute.xlu0 %1133
      %1135 = vrot.lane.b32.xlu0 %v1047, 4
      %v1136 = vpop.permute.xlu0 %1135
      %1137 = vrot.lane.b32.xlu0 %v1048, 4
      %v1138 = vpop.permute.xlu0 %1137
      %1139 = vrot.lane.b32.xlu0 %v1049, 4
      %v1140 = vpop.permute.xlu0 %1139
      %1141 = vrot.lane.b32.xlu0 %v1050, 4
      %v1142 = vpop.permute.xlu0 %1141
      %1143 = vrot.lane.b32.xlu0 %v1051, 4
      %v1144 = vpop.permute.xlu0 %1143
      %1145 = vrot.lane.b32.xlu0 %v1052, 4
      %v1146 = vpop.permute.xlu0 %1145
      %1147 = vrot.lane.b32.xlu0 %v1053, 4
      %v1148 = vpop.permute.xlu0 %1147
      %1149 = vrot.lane.b32.xlu0 %v1054, 4
      %v1150 = vpop.permute.xlu0 %1149
      %1151 = vrot.lane.b32.xlu0 %v1055, 4
      %v1152 = vpop.permute.xlu0 %1151
      %1153 = vrot.lane.b32.xlu0 %v1056, 4
      %v1154 = vpop.permute.xlu0 %1153
      %1155 = vrot.lane.b32.xlu0 %v1057, 4
      %v1156 = vpop.permute.xlu0 %1155
      %1157 = vrot.lane.b32.xlu0 %v1058, 4
      %v1158 = vpop.permute.xlu0 %1157
      %1159 = vrot.lane.b32.xlu0 %v1059, 4
      %v1160 = vpop.permute.xlu0 %1159
      %1161 = vrot.lane.b32.xlu0 %v1060, 4
      %v1162 = vpop.permute.xlu0 %1161
      %1163 = vrot.lane.b32.xlu0 %v1061, 4
      %v1164 = vpop.permute.xlu0 %1163
      %1165 = vrot.lane.b32.xlu0 %v1062, 4
      %v1166 = vpop.permute.xlu0 %1165
      %1167 = vrot.lane.b32.xlu0 %v1063, 4
      %v1168 = vpop.permute.xlu0 %1167
      %1169 = vrot.lane.b32.xlu0 %v1064, 4
      %v1170 = vpop.permute.xlu0 %1169
      %1171 = vrot.lane.b32.xlu0 %v1065, 4
      %v1172 = vpop.permute.xlu0 %1171
      %1173 = vrot.lane.b32.xlu0 %v1066, 4
      %v1174 = vpop.permute.xlu0 %1173
      %1175 = vrot.lane.b32.xlu0 %v1067, 4
      %v1176 = vpop.permute.xlu0 %1175
      %1177 = vrot.lane.b32.xlu0 %v1068, 4
      %v1178 = vpop.permute.xlu0 %1177
      %1179 = vrot.lane.b32.xlu0 %v1069, 4
      %v1180 = vpop.permute.xlu0 %1179
      %1181 = vrot.lane.b32.xlu0 %v1070, 4
      %v1182 = vpop.permute.xlu0 %1181
      %1183 = vrot.lane.b32.xlu0 %v1071, 4
      %v1184 = vpop.permute.xlu0 %1183
      %1185 = vrot.lane.b32.xlu0 %v1072, 4
      %v1186 = vpop.permute.xlu0 %1185
      %1187 = vrot.lane.b32.xlu0 %v1073, 4
      %v1188 = vpop.permute.xlu0 %1187
      %1189 = vrot.lane.b32.xlu0 %v1074, 4
      %v1190 = vpop.permute.xlu0 %1189
      %1191 = vrot.lane.b32.xlu0 %v1075, 4
      %v1192 = vpop.permute.xlu0 %1191
      %1193 = vrot.lane.b32.xlu0 %v1076, 4
      %v1194 = vpop.permute.xlu0 %1193
      %1195 = vrot.lane.b32.xlu0 %v1077, 4
      %v1196 = vpop.permute.xlu0 %1195
      %1231 = vst.msk [vmem:[%s680] sm:$0xff] %vm1092, %v1130
      %1232 = vst.msk [vmem:[%s680 + $0x8] sm:$0xff] %vm1092, %v1132
      %1233 = vst.msk [vmem:[%s680 + $0x10] sm:$0xff] %vm1092, %v1134
      %1234 = vst.msk [vmem:[%s680 + $0x18] sm:$0xff] %vm1092, %v1136
      %1235 = vst.msk [vmem:[%s680 + $0x20] sm:$0xff] %vm1092, %v1138
      %1236 = vst.msk [vmem:[%s680 + $0x28] sm:$0xff] %vm1092, %v1140
      %1237 = vst.msk [vmem:[%s680 + $0x30] sm:$0xff] %vm1092, %v1142
      %1238 = vst.msk [vmem:[%s680 + $0x38] sm:$0xff] %vm1092, %v1144
      %1239 = vst.msk [vmem:[%s680 + $0x40] sm:$0xff] %vm1092, %v1146
      %1240 = vst.msk [vmem:[%s680 + $0x48] sm:$0xff] %vm1092, %v1148
      %1241 = vst.msk [vmem:[%s680 + $0x50] sm:$0xff] %vm1092, %v1150
      %1242 = vst.msk [vmem:[%s680 + $0x58] sm:$0xff] %vm1092, %v1152
      %1243 = vst.msk [vmem:[%s680 + $0x60] sm:$0xff] %vm1092, %v1154
      %1244 = vst.msk [vmem:[%s680 + $0x68] sm:$0xff] %vm1092, %v1156
      %1245 = vst.msk [vmem:[%s680 + $0x70] sm:$0xff] %vm1092, %v1158
      %1246 = vst.msk [vmem:[%s680 + $0x78] sm:$0xff] %vm1092, %v1160
      %1247 = vst.msk [vmem:[%s680 + $0x80] sm:$0xff] %vm1092, %v1162
      %1248 = vst.msk [vmem:[%s680 + $0x88] sm:$0xff] %vm1092, %v1164
      %1249 = vst.msk [vmem:[%s680 + $0x90] sm:$0xff] %vm1092, %v1166
      %1250 = vst.msk [vmem:[%s680 + $0x98] sm:$0xff] %vm1092, %v1168
      %1251 = vst.msk [vmem:[%s680 + $0xa0] sm:$0xff] %vm1092, %v1170
      %1252 = vst.msk [vmem:[%s680 + $0xa8] sm:$0xff] %vm1092, %v1172
      %1253 = vst.msk [vmem:[%s680 + $0xb0] sm:$0xff] %vm1092, %v1174
      %1254 = vst.msk [vmem:[%s680 + $0xb8] sm:$0xff] %vm1092, %v1176
      %1255 = vst.msk [vmem:[%s680 + $0xc0] sm:$0xff] %vm1092, %v1178
      %1256 = vst.msk [vmem:[%s680 + $0xc8] sm:$0xff] %vm1092, %v1180
      %1257 = vst.msk [vmem:[%s680 + $0xd0] sm:$0xff] %vm1092, %v1182
      %1258 = vst.msk [vmem:[%s680 + $0xd8] sm:$0xff] %vm1092, %v1184
      %1259 = vst.msk [vmem:[%s680 + $0xe0] sm:$0xff] %vm1092, %v1186
      %1260 = vst.msk [vmem:[%s680 + $0xe8] sm:$0xff] %vm1092, %v1188
      %1261 = vst.msk [vmem:[%s680 + $0xf0] sm:$0xff] %vm1092, %v1190
      %1262 = vst.msk [vmem:[%s680 + $0xf8] sm:$0xff] %vm1092, %v1192
      %1263 = vst.msk [vmem:[%s680 + $0x100] sm:$0xff] %vm1092, %v1194
      %1264 = vst.msk [vmem:[%s680 + $0x108] sm:$0xff] %vm1092, %v1196
      %1267 = vrot.lane.b32.xlu0 %v1044, 16
      %v1268 = vpop.permute.xlu0 %1267
      %1269 = vrot.lane.b32.xlu0 %v1045, 16
      %v1270 = vpop.permute.xlu0 %1269
      %1271 = vrot.lane.b32.xlu0 %v1046, 16
      %v1272 = vpop.permute.xlu0 %1271
      %1273 = vrot.lane.b32.xlu0 %v1047, 16
      %v1274 = vpop.permute.xlu0 %1273
      %1275 = vrot.lane.b32.xlu0 %v1048, 16
      %v1276 = vpop.permute.xlu0 %1275
      %1277 = vrot.lane.b32.xlu0 %v1049, 16
      %v1278 = vpop.permute.xlu0 %1277
      %1279 = vrot.lane.b32.xlu0 %v1050, 16
      %v1280 = vpop.permute.xlu0 %1279
      %1281 = vrot.lane.b32.xlu0 %v1051, 16
      %v1282 = vpop.permute.xlu0 %1281
      %1283 = vrot.lane.b32.xlu0 %v1052, 16
      %v1284 = vpop.permute.xlu0 %1283
      %1285 = vrot.lane.b32.xlu0 %v1053, 16
      %v1286 = vpop.permute.xlu0 %1285
      %1287 = vrot.lane.b32.xlu0 %v1054, 16
      %v1288 = vpop.permute.xlu0 %1287
      %1289 = vrot.lane.b32.xlu0 %v1055, 16
      %v1290 = vpop.permute.xlu0 %1289
      %1291 = vrot.lane.b32.xlu0 %v1056, 16
      %v1292 = vpop.permute.xlu0 %1291
      %1293 = vrot.lane.b32.xlu0 %v1057, 16
      %v1294 = vpop.permute.xlu0 %1293
      %1295 = vrot.lane.b32.xlu0 %v1058, 16
      %v1296 = vpop.permute.xlu0 %1295
      %1297 = vrot.lane.b32.xlu0 %v1059, 16
      %v1298 = vpop.permute.xlu0 %1297
      %1299 = vrot.lane.b32.xlu0 %v1060, 16
      %v1300 = vpop.permute.xlu0 %1299
      %1301 = vrot.lane.b32.xlu0 %v1061, 16
      %v1302 = vpop.permute.xlu0 %1301
      %1303 = vrot.lane.b32.xlu0 %v1062, 16
      %v1304 = vpop.permute.xlu0 %1303
      %1305 = vrot.lane.b32.xlu0 %v1063, 16
      %v1306 = vpop.permute.xlu0 %1305
      %1307 = vrot.lane.b32.xlu0 %v1064, 16
      %v1308 = vpop.permute.xlu0 %1307
      %1309 = vrot.lane.b32.xlu0 %v1065, 16
      %v1310 = vpop.permute.xlu0 %1309
      %1311 = vrot.lane.b32.xlu0 %v1066, 16
      %v1312 = vpop.permute.xlu0 %1311
      %1313 = vrot.lane.b32.xlu0 %v1067, 16
      %v1314 = vpop.permute.xlu0 %1313
      %1315 = vrot.lane.b32.xlu0 %v1068, 16
      %v1316 = vpop.permute.xlu0 %1315
      %1317 = vrot.lane.b32.xlu0 %v1069, 16
      %v1318 = vpop.permute.xlu0 %1317
      %1319 = vrot.lane.b32.xlu0 %v1070, 16
      %v1320 = vpop.permute.xlu0 %1319
      %1321 = vrot.lane.b32.xlu0 %v1071, 16
      %v1322 = vpop.permute.xlu0 %1321
      %1323 = vrot.lane.b32.xlu0 %v1072, 16
      %v1324 = vpop.permute.xlu0 %1323
      %1325 = vrot.lane.b32.xlu0 %v1073, 16
      %v1326 = vpop.permute.xlu0 %1325
      %1327 = vrot.lane.b32.xlu0 %v1074, 16
      %v1328 = vpop.permute.xlu0 %1327
      %1329 = vrot.lane.b32.xlu0 %v1075, 16
      %v1330 = vpop.permute.xlu0 %1329
      %1331 = vrot.lane.b32.xlu0 %v1076, 16
      %v1332 = vpop.permute.xlu0 %1331
      %1333 = vrot.lane.b32.xlu0 %v1077, 16
      %v1334 = vpop.permute.xlu0 %1333
      %1335 = vrot.lane.b32.xlu0 %v1078, 16
      %v1336 = vpop.permute.xlu0 %1335
      %1337 = vrot.lane.b32.xlu0 %v1079, 16
      %v1338 = vpop.permute.xlu0 %1337
      %vm1375 = vcmask 162944
      %1376 = vst.msk [vmem:[#allocation2] sm:$0xff] %vm1375, %v1268
      %1377 = vst.msk [vmem:[#allocation2 + $0x8] sm:$0xff] %vm1375, %v1270
      %1378 = vst.msk [vmem:[#allocation2 + $0x10] sm:$0xff] %vm1375, %v1272
      %1379 = vst.msk [vmem:[#allocation2 + $0x18] sm:$0xff] %vm1375, %v1274
      %1380 = vst.msk [vmem:[#allocation2 + $0x20] sm:$0xff] %vm1375, %v1276
      %1381 = vst.msk [vmem:[#allocation2 + $0x28] sm:$0xff] %vm1375, %v1278
      %1382 = vst.msk [vmem:[#allocation2 + $0x30] sm:$0xff] %vm1375, %v1280
      %1383 = vst.msk [vmem:[#allocation2 + $0x38] sm:$0xff] %vm1375, %v1282
      %1384 = vst.msk [vmem:[#allocation2 + $0x40] sm:$0xff] %vm1375, %v1284
      %1385 = vst.msk [vmem:[#allocation2 + $0x48] sm:$0xff] %vm1375, %v1286
      %1386 = vst.msk [vmem:[#allocation2 + $0x50] sm:$0xff] %vm1375, %v1288
      %1387 = vst.msk [vmem:[#allocation2 + $0x58] sm:$0xff] %vm1375, %v1290
      %1388 = vst.msk [vmem:[#allocation2 + $0x60] sm:$0xff] %vm1375, %v1292
      %1389 = vst.msk [vmem:[#allocation2 + $0x68] sm:$0xff] %vm1375, %v1294
      %1390 = vst.msk [vmem:[#allocation2 + $0x70] sm:$0xff] %vm1375, %v1296
      %1391 = vst.msk [vmem:[#allocation2 + $0x78] sm:$0xff] %vm1375, %v1298
      %1392 = vst.msk [vmem:[#allocation2 + $0x80] sm:$0xff] %vm1375, %v1300
      %1393 = vst.msk [vmem:[#allocation2 + $0x88] sm:$0xff] %vm1375, %v1302
      %1394 = vst.msk [vmem:[#allocation2 + $0x90] sm:$0xff] %vm1375, %v1304
      %1395 = vst.msk [vmem:[#allocation2 + $0x98] sm:$0xff] %vm1375, %v1306
      %1396 = vst.msk [vmem:[#allocation2 + $0xa0] sm:$0xff] %vm1375, %v1308
      %1397 = vst.msk [vmem:[#allocation2 + $0xa8] sm:$0xff] %vm1375, %v1310
      %1398 = vst.msk [vmem:[#allocation2 + $0xb0] sm:$0xff] %vm1375, %v1312
      %1399 = vst.msk [vmem:[#allocation2 + $0xb8] sm:$0xff] %vm1375, %v1314
      %1400 = vst.msk [vmem:[#allocation2 + $0xc0] sm:$0xff] %vm1375, %v1316
      %1401 = vst.msk [vmem:[#allocation2 + $0xc8] sm:$0xff] %vm1375, %v1318
      %1402 = vst.msk [vmem:[#allocation2 + $0xd0] sm:$0xff] %vm1375, %v1320
      %1403 = vst.msk [vmem:[#allocation2 + $0xd8] sm:$0xff] %vm1375, %v1322
      %1404 = vst.msk [vmem:[#allocation2 + $0xe0] sm:$0xff] %vm1375, %v1324
      %1405 = vst.msk [vmem:[#allocation2 + $0xe8] sm:$0xff] %vm1375, %v1326
      %1406 = vst.msk [vmem:[#allocation2 + $0xf0] sm:$0xff] %vm1375, %v1328
      %1407 = vst.msk [vmem:[#allocation2 + $0xf8] sm:$0xff] %vm1375, %v1330
      %1408 = vst.msk [vmem:[#allocation2 + $0x100] sm:$0xff] %vm1375, %v1332
      %1409 = vst.msk [vmem:[#allocation2 + $0x108] sm:$0xff] %vm1375, %v1334
      %1410 = vst.msk [vmem:[#allocation2 + $0x110] sm:$0xff] %vm1375, %v1336
      %1411 = vst.msk [vmem:[#allocation2 + $0x118] sm:$0xff] %vm1375, %v1338
      %1412 = vrot.lane.b32.xlu0 %v1046, 28
      %v1413 = vpop.permute.xlu0 %1412
      %1414 = vrot.lane.b32.xlu0 %v1047, 28
      %v1415 = vpop.permute.xlu0 %1414
      %1416 = vrot.lane.b32.xlu0 %v1048, 28
      %v1417 = vpop.permute.xlu0 %1416
      %1418 = vrot.lane.b32.xlu0 %v1049, 28
      %v1419 = vpop.permute.xlu0 %1418
      %1420 = vrot.lane.b32.xlu0 %v1050, 28
      %v1421 = vpop.permute.xlu0 %1420
      %1422 = vrot.lane.b32.xlu0 %v1051, 28
      %v1423 = vpop.permute.xlu0 %1422
      %1424 = vrot.lane.b32.xlu0 %v1052, 28
      %v1425 = vpop.permute.xlu0 %1424
      %1426 = vrot.lane.b32.xlu0 %v1053, 28
      %v1427 = vpop.permute.xlu0 %1426
      %1428 = vrot.lane.b32.xlu0 %v1054, 28
      %v1429 = vpop.permute.xlu0 %1428
      %1430 = vrot.lane.b32.xlu0 %v1055, 28
      %v1431 = vpop.permute.xlu0 %1430
      %1432 = vrot.lane.b32.xlu0 %v1056, 28
      %v1433 = vpop.permute.xlu0 %1432
      %1434 = vrot.lane.b32.xlu0 %v1057, 28
      %v1435 = vpop.permute.xlu0 %1434
      %1436 = vrot.lane.b32.xlu0 %v1058, 28
      %v1437 = vpop.permute.xlu0 %1436
      %1438 = vrot.lane.b32.xlu0 %v1059, 28
      %v1439 = vpop.permute.xlu0 %1438
      %1440 = vrot.lane.b32.xlu0 %v1060, 28
      %v1441 = vpop.permute.xlu0 %1440
      %1442 = vrot.lane.b32.xlu0 %v1061, 28
      %v1443 = vpop.permute.xlu0 %1442
      %1444 = vrot.lane.b32.xlu0 %v1062, 28
      %v1445 = vpop.permute.xlu0 %1444
      %1446 = vrot.lane.b32.xlu0 %v1063, 28
      %v1447 = vpop.permute.xlu0 %1446
      %1448 = vrot.lane.b32.xlu0 %v1064, 28
      %v1449 = vpop.permute.xlu0 %1448
      %1450 = vrot.lane.b32.xlu0 %v1065, 28
      %v1451 = vpop.permute.xlu0 %1450
      %1452 = vrot.lane.b32.xlu0 %v1066, 28
      %v1453 = vpop.permute.xlu0 %1452
      %1454 = vrot.lane.b32.xlu0 %v1067, 28
      %v1455 = vpop.permute.xlu0 %1454
      %1456 = vrot.lane.b32.xlu0 %v1068, 28
      %v1457 = vpop.permute.xlu0 %1456
      %1458 = vrot.lane.b32.xlu0 %v1069, 28
      %v1459 = vpop.permute.xlu0 %1458
      %1460 = vrot.lane.b32.xlu0 %v1070, 28
      %v1461 = vpop.permute.xlu0 %1460
      %1462 = vrot.lane.b32.xlu0 %v1071, 28
      %v1463 = vpop.permute.xlu0 %1462
      %1464 = vrot.lane.b32.xlu0 %v1072, 28
      %v1465 = vpop.permute.xlu0 %1464
      %1466 = vrot.lane.b32.xlu0 %v1073, 28
      %v1467 = vpop.permute.xlu0 %1466
      %1468 = vrot.lane.b32.xlu0 %v1074, 28
      %v1469 = vpop.permute.xlu0 %1468
      %1470 = vrot.lane.b32.xlu0 %v1075, 28
      %v1471 = vpop.permute.xlu0 %1470
      %1472 = vrot.lane.b32.xlu0 %v1076, 28
      %v1473 = vpop.permute.xlu0 %1472
      %1474 = vrot.lane.b32.xlu0 %v1077, 28
      %v1475 = vpop.permute.xlu0 %1474
      %1476 = vrot.lane.b32.xlu0 %v1078, 28
      %v1477 = vpop.permute.xlu0 %1476
      %1478 = vrot.lane.b32.xlu0 %v1079, 28
      %v1479 = vpop.permute.xlu0 %1478
      %vm1514 = vcmask 261344
      %1515 = vst.msk [vmem:[#allocation2] sm:$0xff] %vm1514, %v1413
      %1516 = vst.msk [vmem:[#allocation2 + $0x8] sm:$0xff] %vm1514, %v1415
      %1517 = vst.msk [vmem:[#allocation2 + $0x10] sm:$0xff] %vm1514, %v1417
      %1518 = vst.msk [vmem:[#allocation2 + $0x18] sm:$0xff] %vm1514, %v1419
      %1519 = vst.msk [vmem:[#allocation2 + $0x20] sm:$0xff] %vm1514, %v1421
      %1520 = vst.msk [vmem:[#allocation2 + $0x28] sm:$0xff] %vm1514, %v1423
      %1521 = vst.msk [vmem:[#allocation2 + $0x30] sm:$0xff] %vm1514, %v1425
      %1522 = vst.msk [vmem:[#allocation2 + $0x38] sm:$0xff] %vm1514, %v1427
      %1523 = vst.msk [vmem:[#allocation2 + $0x40] sm:$0xff] %vm1514, %v1429
      %1524 = vst.msk [vmem:[#allocation2 + $0x48] sm:$0xff] %vm1514, %v1431
      %1525 = vst.msk [vmem:[#allocation2 + $0x50] sm:$0xff] %vm1514, %v1433
      %1526 = vst.msk [vmem:[#allocation2 + $0x58] sm:$0xff] %vm1514, %v1435
      %1527 = vst.msk [vmem:[#allocation2 + $0x60] sm:$0xff] %vm1514, %v1437
      %1528 = vst.msk [vmem:[#allocation2 + $0x68] sm:$0xff] %vm1514, %v1439
      %1529 = vst.msk [vmem:[#allocation2 + $0x70] sm:$0xff] %vm1514, %v1441
      %1530 = vst.msk [vmem:[#allocation2 + $0x78] sm:$0xff] %vm1514, %v1443
      %1531 = vst.msk [vmem:[#allocation2 + $0x80] sm:$0xff] %vm1514, %v1445
      %1532 = vst.msk [vmem:[#allocation2 + $0x88] sm:$0xff] %vm1514, %v1447
      %1533 = vst.msk [vmem:[#allocation2 + $0x90] sm:$0xff] %vm1514, %v1449
      %1534 = vst.msk [vmem:[#allocation2 + $0x98] sm:$0xff] %vm1514, %v1451
      %1535 = vst.msk [vmem:[#allocation2 + $0xa0] sm:$0xff] %vm1514, %v1453
      %1536 = vst.msk [vmem:[#allocation2 + $0xa8] sm:$0xff] %vm1514, %v1455
      %1537 = vst.msk [vmem:[#allocation2 + $0xb0] sm:$0xff] %vm1514, %v1457
      %1538 = vst.msk [vmem:[#allocation2 + $0xb8] sm:$0xff] %vm1514, %v1459
      %1539 = vst.msk [vmem:[#allocation2 + $0xc0] sm:$0xff] %vm1514, %v1461
      %1540 = vst.msk [vmem:[#allocation2 + $0xc8] sm:$0xff] %vm1514, %v1463
      %1541 = vst.msk [vmem:[#allocation2 + $0xd0] sm:$0xff] %vm1514, %v1465
      %1542 = vst.msk [vmem:[#allocation2 + $0xd8] sm:$0xff] %vm1514, %v1467
      %1543 = vst.msk [vmem:[#allocation2 + $0xe0] sm:$0xff] %vm1514, %v1469
      %1544 = vst.msk [vmem:[#allocation2 + $0xe8] sm:$0xff] %vm1514, %v1471
      %1545 = vst.msk [vmem:[#allocation2 + $0xf0] sm:$0xff] %vm1514, %v1473
      %1546 = vst.msk [vmem:[#allocation2 + $0xf8] sm:$0xff] %vm1514, %v1475
      %1547 = vst.msk [vmem:[#allocation2 + $0x100] sm:$0xff] %vm1514, %v1477
      %1548 = vst.msk [vmem:[#allocation2 + $0x108] sm:$0xff] %vm1514, %v1479
      %1551 = vrot.lane.b32.xlu0 %v1082, 28
      %v1552 = vpop.permute.xlu0 %1551
      %1553 = vrot.lane.b32.xlu0 %v1083, 28
      %v1554 = vpop.permute.xlu0 %1553
      %1557 = vst.msk [vmem:[%s1041] sm:$0xff] %vm1514, %v1552
      %1558 = vst.msk [vmem:[%s1041 + $0x8] sm:$0xff] %vm1514, %v1554
      %v1559 = vld [vmem:[%s545 + $0x2] sm:$0xff]
      %v1560 = vld [vmem:[%s545 + $0xa] sm:$0xff]
      %v1561 = vld [vmem:[%s545 + $0x1a] sm:$0xff]
      %v1562 = vld [vmem:[%s545 + $0x22] sm:$0xff]
      %v1563 = vld [vmem:[%s545 + $0x32] sm:$0xff]
      %v1564 = vld [vmem:[%s545 + $0x3a] sm:$0xff]
      %v1565 = vld [vmem:[%s545 + $0x4a] sm:$0xff]
      %v1566 = vld [vmem:[%s545 + $0x52] sm:$0xff]
      %v1567 = vld [vmem:[%s545 + $0x62] sm:$0xff]
      %v1568 = vld [vmem:[%s545 + $0x6a] sm:$0xff]
      %v1569 = vld [vmem:[%s545 + $0x7a] sm:$0xff]
      %v1570 = vld [vmem:[%s545 + $0x82] sm:$0xff]
      %v1571 = vld [vmem:[%s545 + $0x92] sm:$0xff]
      %v1572 = vld [vmem:[%s545 + $0x9a] sm:$0xff]
      %v1573 = vld [vmem:[%s545 + $0xaa] sm:$0xff]
      %v1574 = vld [vmem:[%s545 + $0xb2] sm:$0xff]
      %v1575 = vld [vmem:[%s545 + $0xc2] sm:$0xff]
      %v1576 = vld [vmem:[%s545 + $0xca] sm:$0xff]
      %v1577 = vld [vmem:[%s545 + $0xda] sm:$0xff]
      %v1578 = vld [vmem:[%s545 + $0xe2] sm:$0xff]
      %v1579 = vld [vmem:[%s545 + $0xf2] sm:$0xff]
      %v1580 = vld [vmem:[%s545 + $0xfa] sm:$0xff]
      %v1581 = vld [vmem:[%s545 + $0x10a] sm:$0xff]
      %v1582 = vld [vmem:[%s545 + $0x112] sm:$0xff]
      %v1583 = vld [vmem:[%s545 + $0x122] sm:$0xff]
      %v1584 = vld [vmem:[%s545 + $0x12a] sm:$0xff]
      %v1585 = vld [vmem:[%s545 + $0x13a] sm:$0xff]
      %v1586 = vld [vmem:[%s545 + $0x142] sm:$0xff]
      %v1587 = vld [vmem:[%s545 + $0x152] sm:$0xff]
      %v1588 = vld [vmem:[%s545 + $0x15a] sm:$0xff]
      %v1589 = vld [vmem:[%s545 + $0x16a] sm:$0xff]
      %v1590 = vld [vmem:[%s545 + $0x172] sm:$0xff]
      %v1591 = vld [vmem:[%s545 + $0x182] sm:$0xff]
      %v1592 = vld [vmem:[%s545 + $0x18a] sm:$0xff]
      %v1593 = vld [vmem:[%s545 + $0x19a] sm:$0xff]
      %v1594 = vld [vmem:[%s545 + $0x1a2] sm:$0xff]
      %v1595 = vld [vmem:[%s559 + $0x2] sm:$0xff]
      %v1596 = vld [vmem:[%s559 + $0xa] sm:$0xff]
      %v1597 = vld [vmem:[%s576 + $0x2] sm:$0xff]
      %v1598 = vld [vmem:[%s576 + $0xa] sm:$0xff]
      %1601 = vrot.lane.b32.xlu0 %v1595, 8
      %v1602 = vpop.permute.xlu0 %1601
      %1603 = vrot.lane.b32.xlu0 %v1596, 8
      %v1604 = vpop.permute.xlu0 %1603
      %vm1607 = vcmask 97344
      %1608 = vst.msk [vmem:[#allocation2] sm:$0xff] %vm1607, %v1602
      %1609 = vst.msk [vmem:[#allocation2 + $0x8] sm:$0xff] %vm1607, %v1604
      %1644 = vrot.lane.b32.xlu0 %v1559, 8
      %v1645 = vpop.permute.xlu0 %1644
      %1646 = vrot.lane.b32.xlu0 %v1560, 8
      %v1647 = vpop.permute.xlu0 %1646
      %1648 = vrot.lane.b32.xlu0 %v1561, 8
      %v1649 = vpop.permute.xlu0 %1648
      %1650 = vrot.lane.b32.xlu0 %v1562, 8
      %v1651 = vpop.permute.xlu0 %1650
      %1652 = vrot.lane.b32.xlu0 %v1563, 8
      %v1653 = vpop.permute.xlu0 %1652
      %1654 = vrot.lane.b32.xlu0 %v1564, 8
      %v1655 = vpop.permute.xlu0 %1654
      %1656 = vrot.lane.b32.xlu0 %v1565, 8
      %v1657 = vpop.permute.xlu0 %1656
      %1658 = vrot.lane.b32.xlu0 %v1566, 8
      %v1659 = vpop.permute.xlu0 %1658
      %1660 = vrot.lane.b32.xlu0 %v1567, 8
      %v1661 = vpop.permute.xlu0 %1660
      %1662 = vrot.lane.b32.xlu0 %v1568, 8
      %v1663 = vpop.permute.xlu0 %1662
      %1664 = vrot.lane.b32.xlu0 %v1569, 8
      %v1665 = vpop.permute.xlu0 %1664
      %1666 = vrot.lane.b32.xlu0 %v1570, 8
      %v1667 = vpop.permute.xlu0 %1666
      %1668 = vrot.lane.b32.xlu0 %v1571, 8
      %v1669 = vpop.permute.xlu0 %1668
      %1670 = vrot.lane.b32.xlu0 %v1572, 8
      %v1671 = vpop.permute.xlu0 %1670
      %1672 = vrot.lane.b32.xlu0 %v1573, 8
      %v1673 = vpop.permute.xlu0 %1672
      %1674 = vrot.lane.b32.xlu0 %v1574, 8
      %v1675 = vpop.permute.xlu0 %1674
      %1676 = vrot.lane.b32.xlu0 %v1575, 8
      %v1677 = vpop.permute.xlu0 %1676
      %1678 = vrot.lane.b32.xlu0 %v1576, 8
      %v1679 = vpop.permute.xlu0 %1678
      %1680 = vrot.lane.b32.xlu0 %v1577, 8
      %v1681 = vpop.permute.xlu0 %1680
      %1682 = vrot.lane.b32.xlu0 %v1578, 8
      %v1683 = vpop.permute.xlu0 %1682
      %1684 = vrot.lane.b32.xlu0 %v1579, 8
      %v1685 = vpop.permute.xlu0 %1684
      %1686 = vrot.lane.b32.xlu0 %v1580, 8
      %v1687 = vpop.permute.xlu0 %1686
      %1688 = vrot.lane.b32.xlu0 %v1581, 8
      %v1689 = vpop.permute.xlu0 %1688
      %1690 = vrot.lane.b32.xlu0 %v1582, 8
      %v1691 = vpop.permute.xlu0 %1690
      %1692 = vrot.lane.b32.xlu0 %v1583, 8
      %v1693 = vpop.permute.xlu0 %1692
      %1694 = vrot.lane.b32.xlu0 %v1584, 8
      %v1695 = vpop.permute.xlu0 %1694
      %1696 = vrot.lane.b32.xlu0 %v1585, 8
      %v1697 = vpop.permute.xlu0 %1696
      %1698 = vrot.lane.b32.xlu0 %v1586, 8
      %v1699 = vpop.permute.xlu0 %1698
      %1700 = vrot.lane.b32.xlu0 %v1587, 8
      %v1701 = vpop.permute.xlu0 %1700
      %1702 = vrot.lane.b32.xlu0 %v1588, 8
      %v1703 = vpop.permute.xlu0 %1702
      %1704 = vrot.lane.b32.xlu0 %v1589, 8
      %v1705 = vpop.permute.xlu0 %1704
      %1706 = vrot.lane.b32.xlu0 %v1590, 8
      %v1707 = vpop.permute.xlu0 %1706
      %1708 = vrot.lane.b32.xlu0 %v1591, 8
      %v1709 = vpop.permute.xlu0 %1708
      %1710 = vrot.lane.b32.xlu0 %v1592, 8
      %v1711 = vpop.permute.xlu0 %1710
      %1746 = vst.msk [vmem:[%s680] sm:$0xff] %vm1607, %v1645
      %1747 = vst.msk [vmem:[%s680 + $0x8] sm:$0xff] %vm1607, %v1647
      %1748 = vst.msk [vmem:[%s680 + $0x10] sm:$0xff] %vm1607, %v1649
      %1749 = vst.msk [vmem:[%s680 + $0x18] sm:$0xff] %vm1607, %v1651
      %1750 = vst.msk [vmem:[%s680 + $0x20] sm:$0xff] %vm1607, %v1653
      %1751 = vst.msk [vmem:[%s680 + $0x28] sm:$0xff] %vm1607, %v1655
      %1752 = vst.msk [vmem:[%s680 + $0x30] sm:$0xff] %vm1607, %v1657
      %1753 = vst.msk [vmem:[%s680 + $0x38] sm:$0xff] %vm1607, %v1659
      %1754 = vst.msk [vmem:[%s680 + $0x40] sm:$0xff] %vm1607, %v1661
      %1755 = vst.msk [vmem:[%s680 + $0x48] sm:$0xff] %vm1607, %v1663
      %1756 = vst.msk [vmem:[%s680 + $0x50] sm:$0xff] %vm1607, %v1665
      %1757 = vst.msk [vmem:[%s680 + $0x58] sm:$0xff] %vm1607, %v1667
      %1758 = vst.msk [vmem:[%s680 + $0x60] sm:$0xff] %vm1607, %v1669
      %1759 = vst.msk [vmem:[%s680 + $0x68] sm:$0xff] %vm1607, %v1671
      %1760 = vst.msk [vmem:[%s680 + $0x70] sm:$0xff] %vm1607, %v1673
      %1761 = vst.msk [vmem:[%s680 + $0x78] sm:$0xff] %vm1607, %v1675
      %1762 = vst.msk [vmem:[%s680 + $0x80] sm:$0xff] %vm1607, %v1677
      %1763 = vst.msk [vmem:[%s680 + $0x88] sm:$0xff] %vm1607, %v1679
      %1764 = vst.msk [vmem:[%s680 + $0x90] sm:$0xff] %vm1607, %v1681
      %1765 = vst.msk [vmem:[%s680 + $0x98] sm:$0xff] %vm1607, %v1683
      %1766 = vst.msk [vmem:[%s680 + $0xa0] sm:$0xff] %vm1607, %v1685
      %1767 = vst.msk [vmem:[%s680 + $0xa8] sm:$0xff] %vm1607, %v1687
      %1768 = vst.msk [vmem:[%s680 + $0xb0] sm:$0xff] %vm1607, %v1689
      %1769 = vst.msk [vmem:[%s680 + $0xb8] sm:$0xff] %vm1607, %v1691
      %1770 = vst.msk [vmem:[%s680 + $0xc0] sm:$0xff] %vm1607, %v1693
      %1771 = vst.msk [vmem:[%s680 + $0xc8] sm:$0xff] %vm1607, %v1695
      %1772 = vst.msk [vmem:[%s680 + $0xd0] sm:$0xff] %vm1607, %v1697
      %1773 = vst.msk [vmem:[%s680 + $0xd8] sm:$0xff] %vm1607, %v1699
      %1774 = vst.msk [vmem:[%s680 + $0xe0] sm:$0xff] %vm1607, %v1701
      %1775 = vst.msk [vmem:[%s680 + $0xe8] sm:$0xff] %vm1607, %v1703
      %1776 = vst.msk [vmem:[%s680 + $0xf0] sm:$0xff] %vm1607, %v1705
      %1777 = vst.msk [vmem:[%s680 + $0xf8] sm:$0xff] %vm1607, %v1707
      %1778 = vst.msk [vmem:[%s680 + $0x100] sm:$0xff] %vm1607, %v1709
      %1779 = vst.msk [vmem:[%s680 + $0x108] sm:$0xff] %vm1607, %v1711
      %1782 = vrot.lane.b32.xlu0 %v1559, 20
      %v1783 = vpop.permute.xlu0 %1782
      %1784 = vrot.lane.b32.xlu0 %v1560, 20
      %v1785 = vpop.permute.xlu0 %1784
      %1786 = vrot.lane.b32.xlu0 %v1561, 20
      %v1787 = vpop.permute.xlu0 %1786
      %1788 = vrot.lane.b32.xlu0 %v1562, 20
      %v1789 = vpop.permute.xlu0 %1788
      %1790 = vrot.lane.b32.xlu0 %v1563, 20
      %v1791 = vpop.permute.xlu0 %1790
      %1792 = vrot.lane.b32.xlu0 %v1564, 20
      %v1793 = vpop.permute.xlu0 %1792
      %1794 = vrot.lane.b32.xlu0 %v1565, 20
      %v1795 = vpop.permute.xlu0 %1794
      %1796 = vrot.lane.b32.xlu0 %v1566, 20
      %v1797 = vpop.permute.xlu0 %1796
      %1798 = vrot.lane.b32.xlu0 %v1567, 20
      %v1799 = vpop.permute.xlu0 %1798
      %1800 = vrot.lane.b32.xlu0 %v1568, 20
      %v1801 = vpop.permute.xlu0 %1800
      %1802 = vrot.lane.b32.xlu0 %v1569, 20
      %v1803 = vpop.permute.xlu0 %1802
      %1804 = vrot.lane.b32.xlu0 %v1570, 20
      %v1805 = vpop.permute.xlu0 %1804
      %1806 = vrot.lane.b32.xlu0 %v1571, 20
      %v1807 = vpop.permute.xlu0 %1806
      %1808 = vrot.lane.b32.xlu0 %v1572, 20
      %v1809 = vpop.permute.xlu0 %1808
      %1810 = vrot.lane.b32.xlu0 %v1573, 20
      %v1811 = vpop.permute.xlu0 %1810
      %1812 = vrot.lane.b32.xlu0 %v1574, 20
      %v1813 = vpop.permute.xlu0 %1812
      %1814 = vrot.lane.b32.xlu0 %v1575, 20
      %v1815 = vpop.permute.xlu0 %1814
      %1816 = vrot.lane.b32.xlu0 %v1576, 20
      %v1817 = vpop.permute.xlu0 %1816
      %1818 = vrot.lane.b32.xlu0 %v1577, 20
      %v1819 = vpop.permute.xlu0 %1818
      %1820 = vrot.lane.b32.xlu0 %v1578, 20
      %v1821 = vpop.permute.xlu0 %1820
      %1822 = vrot.lane.b32.xlu0 %v1579, 20
      %v1823 = vpop.permute.xlu0 %1822
      %1824 = vrot.lane.b32.xlu0 %v1580, 20
      %v1825 = vpop.permute.xlu0 %1824
      %1826 = vrot.lane.b32.xlu0 %v1581, 20
      %v1827 = vpop.permute.xlu0 %1826
      %1828 = vrot.lane.b32.xlu0 %v1582, 20
      %v1829 = vpop.permute.xlu0 %1828
      %1830 = vrot.lane.b32.xlu0 %v1583, 20
      %v1831 = vpop.permute.xlu0 %1830
      %1832 = vrot.lane.b32.xlu0 %v1584, 20
      %v1833 = vpop.permute.xlu0 %1832
      %1834 = vrot.lane.b32.xlu0 %v1585, 20
      %v1835 = vpop.permute.xlu0 %1834
      %1836 = vrot.lane.b32.xlu0 %v1586, 20
      %v1837 = vpop.permute.xlu0 %1836
      %1838 = vrot.lane.b32.xlu0 %v1587, 20
      %v1839 = vpop.permute.xlu0 %1838
      %1840 = vrot.lane.b32.xlu0 %v1588, 20
      %v1841 = vpop.permute.xlu0 %1840
      %1842 = vrot.lane.b32.xlu0 %v1589, 20
      %v1843 = vpop.permute.xlu0 %1842
      %1844 = vrot.lane.b32.xlu0 %v1590, 20
      %v1845 = vpop.permute.xlu0 %1844
      %1846 = vrot.lane.b32.xlu0 %v1591, 20
      %v1847 = vpop.permute.xlu0 %1846
      %1848 = vrot.lane.b32.xlu0 %v1592, 20
      %v1849 = vpop.permute.xlu0 %1848
      %1850 = vrot.lane.b32.xlu0 %v1593, 20
      %v1851 = vpop.permute.xlu0 %1850
      %1852 = vrot.lane.b32.xlu0 %v1594, 20
      %v1853 = vpop.permute.xlu0 %1852
      %vm1890 = vcmask 195744
      %1891 = vst.msk [vmem:[#allocation2] sm:$0xff] %vm1890, %v1783
      %1892 = vst.msk [vmem:[#allocation2 + $0x8] sm:$0xff] %vm1890, %v1785
      %1893 = vst.msk [vmem:[#allocation2 + $0x10] sm:$0xff] %vm1890, %v1787
      %1894 = vst.msk [vmem:[#allocation2 + $0x18] sm:$0xff] %vm1890, %v1789
      %1895 = vst.msk [vmem:[#allocation2 + $0x20] sm:$0xff] %vm1890, %v1791
      %1896 = vst.msk [vmem:[#allocation2 + $0x28] sm:$0xff] %vm1890, %v1793
      %1897 = vst.msk [vmem:[#allocation2 + $0x30] sm:$0xff] %vm1890, %v1795
      %1898 = vst.msk [vmem:[#allocation2 + $0x38] sm:$0xff] %vm1890, %v1797
      %1899 = vst.msk [vmem:[#allocation2 + $0x40] sm:$0xff] %vm1890, %v1799
      %1900 = vst.msk [vmem:[#allocation2 + $0x48] sm:$0xff] %vm1890, %v1801
      %1901 = vst.msk [vmem:[#allocation2 + $0x50] sm:$0xff] %vm1890, %v1803
      %1902 = vst.msk [vmem:[#allocation2 + $0x58] sm:$0xff] %vm1890, %v1805
      %1903 = vst.msk [vmem:[#allocation2 + $0x60] sm:$0xff] %vm1890, %v1807
      %1904 = vst.msk [vmem:[#allocation2 + $0x68] sm:$0xff] %vm1890, %v1809
      %1905 = vst.msk [vmem:[#allocation2 + $0x70] sm:$0xff] %vm1890, %v1811
      %1906 = vst.msk [vmem:[#allocation2 + $0x78] sm:$0xff] %vm1890, %v1813
      %1907 = vst.msk [vmem:[#allocation2 + $0x80] sm:$0xff] %vm1890, %v1815
      %1908 = vst.msk [vmem:[#allocation2 + $0x88] sm:$0xff] %vm1890, %v1817
      %1909 = vst.msk [vmem:[#allocation2 + $0x90] sm:$0xff] %vm1890, %v1819
      %1910 = vst.msk [vmem:[#allocation2 + $0x98] sm:$0xff] %vm1890, %v1821
      %1911 = vst.msk [vmem:[#allocation2 + $0xa0] sm:$0xff] %vm1890, %v1823
      %1912 = vst.msk [vmem:[#allocation2 + $0xa8] sm:$0xff] %vm1890, %v1825
      %1913 = vst.msk [vmem:[#allocation2 + $0xb0] sm:$0xff] %vm1890, %v1827
      %1914 = vst.msk [vmem:[#allocation2 + $0xb8] sm:$0xff] %vm1890, %v1829
      %1915 = vst.msk [vmem:[#allocation2 + $0xc0] sm:$0xff] %vm1890, %v1831
      %1916 = vst.msk [vmem:[#allocation2 + $0xc8] sm:$0xff] %vm1890, %v1833
      %1917 = vst.msk [vmem:[#allocation2 + $0xd0] sm:$0xff] %vm1890, %v1835
      %1918 = vst.msk [vmem:[#allocation2 + $0xd8] sm:$0xff] %vm1890, %v1837
      %1919 = vst.msk [vmem:[#allocation2 + $0xe0] sm:$0xff] %vm1890, %v1839
      %1920 = vst.msk [vmem:[#allocation2 + $0xe8] sm:$0xff] %vm1890, %v1841
      %1921 = vst.msk [vmem:[#allocation2 + $0xf0] sm:$0xff] %vm1890, %v1843
      %1922 = vst.msk [vmem:[#allocation2 + $0xf8] sm:$0xff] %vm1890, %v1845
      %1923 = vst.msk [vmem:[#allocation2 + $0x100] sm:$0xff] %vm1890, %v1847
      %1924 = vst.msk [vmem:[#allocation2 + $0x108] sm:$0xff] %vm1890, %v1849
      %1925 = vst.msk [vmem:[#allocation2 + $0x110] sm:$0xff] %vm1890, %v1851
      %1926 = vst.msk [vmem:[#allocation2 + $0x118] sm:$0xff] %vm1890, %v1853
      %1927 = vrot.lane.b32.xlu0 %v1561, 32
      %v1928 = vpop.permute.xlu0 %1927
      %1929 = vrot.lane.b32.xlu0 %v1562, 32
      %v1930 = vpop.permute.xlu0 %1929
      %1931 = vrot.lane.b32.xlu0 %v1563, 32
      %v1932 = vpop.permute.xlu0 %1931
      %1933 = vrot.lane.b32.xlu0 %v1564, 32
      %v1934 = vpop.permute.xlu0 %1933
      %1935 = vrot.lane.b32.xlu0 %v1565, 32
      %v1936 = vpop.permute.xlu0 %1935
      %1937 = vrot.lane.b32.xlu0 %v1566, 32
      %v1938 = vpop.permute.xlu0 %1937
      %1939 = vrot.lane.b32.xlu0 %v1567, 32
      %v1940 = vpop.permute.xlu0 %1939
      %1941 = vrot.lane.b32.xlu0 %v1568, 32
      %v1942 = vpop.permute.xlu0 %1941
      %1943 = vrot.lane.b32.xlu0 %v1569, 32
      %v1944 = vpop.permute.xlu0 %1943
      %1945 = vrot.lane.b32.xlu0 %v1570, 32
      %v1946 = vpop.permute.xlu0 %1945
      %1947 = vrot.lane.b32.xlu0 %v1571, 32
      %v1948 = vpop.permute.xlu0 %1947
      %1949 = vrot.lane.b32.xlu0 %v1572, 32
      %v1950 = vpop.permute.xlu0 %1949
      %1951 = vrot.lane.b32.xlu0 %v1573, 32
      %v1952 = vpop.permute.xlu0 %1951
      %1953 = vrot.lane.b32.xlu0 %v1574, 32
      %v1954 = vpop.permute.xlu0 %1953
      %1955 = vrot.lane.b32.xlu0 %v1575, 32
      %v1956 = vpop.permute.xlu0 %1955
      %1957 = vrot.lane.b32.xlu0 %v1576, 32
      %v1958 = vpop.permute.xlu0 %1957
      %1959 = vrot.lane.b32.xlu0 %v1577, 32
      %v1960 = vpop.permute.xlu0 %1959
      %1961 = vrot.lane.b32.xlu0 %v1578, 32
      %v1962 = vpop.permute.xlu0 %1961
      %1963 = vrot.lane.b32.xlu0 %v1579, 32
      %v1964 = vpop.permute.xlu0 %1963
      %1965 = vrot.lane.b32.xlu0 %v1580, 32
      %v1966 = vpop.permute.xlu0 %1965
      %1967 = vrot.lane.b32.xlu0 %v1581, 32
      %v1968 = vpop.permute.xlu0 %1967
      %1969 = vrot.lane.b32.xlu0 %v1582, 32
      %v1970 = vpop.permute.xlu0 %1969
      %1971 = vrot.lane.b32.xlu0 %v1583, 32
      %v1972 = vpop.permute.xlu0 %1971
      %1973 = vrot.lane.b32.xlu0 %v1584, 32
      %v1974 = vpop.permute.xlu0 %1973
      %1975 = vrot.lane.b32.xlu0 %v1585, 32
      %v1976 = vpop.permute.xlu0 %1975
      %1977 = vrot.lane.b32.xlu0 %v1586, 32
      %v1978 = vpop.permute.xlu0 %1977
      %1979 = vrot.lane.b32.xlu0 %v1587, 32
      %v1980 = vpop.permute.xlu0 %1979
      %1981 = vrot.lane.b32.xlu0 %v1588, 32
      %v1982 = vpop.permute.xlu0 %1981
      %1983 = vrot.lane.b32.xlu0 %v1589, 32
      %v1984 = vpop.permute.xlu0 %1983
      %1985 = vrot.lane.b32.xlu0 %v1590, 32
      %v1986 = vpop.permute.xlu0 %1985
      %1987 = vrot.lane.b32.xlu0 %v1591, 32
      %v1988 = vpop.permute.xlu0 %1987
      %1989 = vrot.lane.b32.xlu0 %v1592, 32
      %v1990 = vpop.permute.xlu0 %1989
      %1991 = vrot.lane.b32.xlu0 %v1593, 32
      %v1992 = vpop.permute.xlu0 %1991
      %1993 = vrot.lane.b32.xlu0 %v1594, 32
      %v1994 = vpop.permute.xlu0 %1993
      %vm2029 = vcmask 294144
      %2030 = vst.msk [vmem:[#allocation2] sm:$0xff] %vm2029, %v1928
      %2031 = vst.msk [vmem:[#allocation2 + $0x8] sm:$0xff] %vm2029, %v1930
      %2032 = vst.msk [vmem:[#allocation2 + $0x10] sm:$0xff] %vm2029, %v1932
      %2033 = vst.msk [vmem:[#allocation2 + $0x18] sm:$0xff] %vm2029, %v1934
      %2034 = vst.msk [vmem:[#allocation2 + $0x20] sm:$0xff] %vm2029, %v1936
      %2035 = vst.msk [vmem:[#allocation2 + $0x28] sm:$0xff] %vm2029, %v1938
      %2036 = vst.msk [vmem:[#allocation2 + $0x30] sm:$0xff] %vm2029, %v1940
      %2037 = vst.msk [vmem:[#allocation2 + $0x38] sm:$0xff] %vm2029, %v1942
      %2038 = vst.msk [vmem:[#allocation2 + $0x40] sm:$0xff] %vm2029, %v1944
      %2039 = vst.msk [vmem:[#allocation2 + $0x48] sm:$0xff] %vm2029, %v1946
      %2040 = vst.msk [vmem:[#allocation2 + $0x50] sm:$0xff] %vm2029, %v1948
      %2041 = vst.msk [vmem:[#allocation2 + $0x58] sm:$0xff] %vm2029, %v1950
      %2042 = vst.msk [vmem:[#allocation2 + $0x60] sm:$0xff] %vm2029, %v1952
      %2043 = vst.msk [vmem:[#allocation2 + $0x68] sm:$0xff] %vm2029, %v1954
      %2044 = vst.msk [vmem:[#allocation2 + $0x70] sm:$0xff] %vm2029, %v1956
      %2045 = vst.msk [vmem:[#allocation2 + $0x78] sm:$0xff] %vm2029, %v1958
      %2046 = vst.msk [vmem:[#allocation2 + $0x80] sm:$0xff] %vm2029, %v1960
      %2047 = vst.msk [vmem:[#allocation2 + $0x88] sm:$0xff] %vm2029, %v1962
      %2048 = vst.msk [vmem:[#allocation2 + $0x90] sm:$0xff] %vm2029, %v1964
      %2049 = vst.msk [vmem:[#allocation2 + $0x98] sm:$0xff] %vm2029, %v1966
      %2050 = vst.msk [vmem:[#allocation2 + $0xa0] sm:$0xff] %vm2029, %v1968
      %2051 = vst.msk [vmem:[#allocation2 + $0xa8] sm:$0xff] %vm2029, %v1970
      %2052 = vst.msk [vmem:[#allocation2 + $0xb0] sm:$0xff] %vm2029, %v1972
      %2053 = vst.msk [vmem:[#allocation2 + $0xb8] sm:$0xff] %vm2029, %v1974
      %2054 = vst.msk [vmem:[#allocation2 + $0xc0] sm:$0xff] %vm2029, %v1976
      %2055 = vst.msk [vmem:[#allocation2 + $0xc8] sm:$0xff] %vm2029, %v1978
      %2056 = vst.msk [vmem:[#allocation2 + $0xd0] sm:$0xff] %vm2029, %v1980
      %2057 = vst.msk [vmem:[#allocation2 + $0xd8] sm:$0xff] %vm2029, %v1982
      %2058 = vst.msk [vmem:[#allocation2 + $0xe0] sm:$0xff] %vm2029, %v1984
      %2059 = vst.msk [vmem:[#allocation2 + $0xe8] sm:$0xff] %vm2029, %v1986
      %2060 = vst.msk [vmem:[#allocation2 + $0xf0] sm:$0xff] %vm2029, %v1988
      %2061 = vst.msk [vmem:[#allocation2 + $0xf8] sm:$0xff] %vm2029, %v1990
      %2062 = vst.msk [vmem:[#allocation2 + $0x100] sm:$0xff] %vm2029, %v1992
      %2063 = vst.msk [vmem:[#allocation2 + $0x108] sm:$0xff] %vm2029, %v1994
      %2066 = vrot.lane.b32.xlu0 %v1597, 32
      %v2067 = vpop.permute.xlu0 %2066
      %2068 = vrot.lane.b32.xlu0 %v1598, 32
      %v2069 = vpop.permute.xlu0 %2068
      %2072 = vst.msk [vmem:[%s1041] sm:$0xff] %vm2029, %v2067
      %2073 = vst.msk [vmem:[%s1041 + $0x8] sm:$0xff] %vm2029, %v2069
      %v2074 = vld [vmem:[%s590] sm:$0xff]
      %v2075 = vld [vmem:[%s590 + $0x8] sm:$0xff]
      %v2076 = vld [vmem:[%s590 + $0x18] sm:$0xff]
      %v2077 = vld [vmem:[%s590 + $0x20] sm:$0xff]
      %v2078 = vld [vmem:[%s590 + $0x30] sm:$0xff]
      %v2079 = vld [vmem:[%s590 + $0x38] sm:$0xff]
      %v2080 = vld [vmem:[%s590 + $0x48] sm:$0xff]
      %v2081 = vld [vmem:[%s590 + $0x50] sm:$0xff]
      %v2082 = vld [vmem:[%s590 + $0x60] sm:$0xff]
      %v2083 = vld [vmem:[%s590 + $0x68] sm:$0xff]
      %v2084 = vld [vmem:[%s590 + $0x78] sm:$0xff]
      %v2085 = vld [vmem:[%s590 + $0x80] sm:$0xff]
      %v2086 = vld [vmem:[%s590 + $0x90] sm:$0xff]
      %v2087 = vld [vmem:[%s590 + $0x98] sm:$0xff]
      %v2088 = vld [vmem:[%s590 + $0xa8] sm:$0xff]
      %v2089 = vld [vmem:[%s590 + $0xb0] sm:$0xff]
      %v2090 = vld [vmem:[%s590 + $0xc0] sm:$0xff]
      %v2091 = vld [vmem:[%s590 + $0xc8] sm:$0xff]
      %v2092 = vld [vmem:[%s590 + $0xd8] sm:$0xff]
      %v2093 = vld [vmem:[%s590 + $0xe0] sm:$0xff]
      %v2094 = vld [vmem:[%s590 + $0xf0] sm:$0xff]
      %v2095 = vld [vmem:[%s590 + $0xf8] sm:$0xff]
      %v2096 = vld [vmem:[%s590 + $0x108] sm:$0xff]
      %v2097 = vld [vmem:[%s590 + $0x110] sm:$0xff]
      %v2098 = vld [vmem:[%s590 + $0x120] sm:$0xff]
      %v2099 = vld [vmem:[%s590 + $0x128] sm:$0xff]
      %v2100 = vld [vmem:[%s590 + $0x138] sm:$0xff]
      %v2101 = vld [vmem:[%s590 + $0x140] sm:$0xff]
      %v2102 = vld [vmem:[%s590 + $0x150] sm:$0xff]
      %v2103 = vld [vmem:[%s590 + $0x158] sm:$0xff]
      %v2104 = vld [vmem:[%s590 + $0x168] sm:$0xff]
      %v2105 = vld [vmem:[%s590 + $0x170] sm:$0xff]
      %v2106 = vld [vmem:[%s590 + $0x180] sm:$0xff]
      %v2107 = vld [vmem:[%s590 + $0x188] sm:$0xff]
      %v2108 = vld [vmem:[%s590 + $0x198] sm:$0xff]
      %v2109 = vld [vmem:[%s590 + $0x1a0] sm:$0xff]
      %v2110 = vld [vmem:[%s604] sm:$0xff]
      %v2111 = vld [vmem:[%s604 + $0x8] sm:$0xff]
      %v2112 = vld [vmem:[%s621] sm:$0xff]
      %v2113 = vld [vmem:[%s621 + $0x8] sm:$0xff]
      %2116 = vrot.lane.b32.xlu0 %v2110, 36
      %v2117 = vpop.permute.xlu0 %2116
      %2118 = vrot.lane.b32.xlu0 %v2111, 36
      %v2119 = vpop.permute.xlu0 %2118
      %vm2122 = vcmask 326944
      %2123 = vst.msk [vmem:[#allocation2] sm:$0xff] %vm2122, %v2117
      %2124 = vst.msk [vmem:[#allocation2 + $0x8] sm:$0xff] %vm2122, %v2119
      %2159 = vrot.lane.b32.xlu0 %v2074, 36
      %v2160 = vpop.permute.xlu0 %2159
      %2161 = vrot.lane.b32.xlu0 %v2075, 36
      %v2162 = vpop.permute.xlu0 %2161
      %2163 = vrot.lane.b32.xlu0 %v2076, 36
      %v2164 = vpop.permute.xlu0 %2163
      %2165 = vrot.lane.b32.xlu0 %v2077, 36
      %v2166 = vpop.permute.xlu0 %2165
      %2167 = vrot.lane.b32.xlu0 %v2078, 36
      %v2168 = vpop.permute.xlu0 %2167
      %2169 = vrot.lane.b32.xlu0 %v2079, 36
      %v2170 = vpop.permute.xlu0 %2169
      %2171 = vrot.lane.b32.xlu0 %v2080, 36
      %v2172 = vpop.permute.xlu0 %2171
      %2173 = vrot.lane.b32.xlu0 %v2081, 36
      %v2174 = vpop.permute.xlu0 %2173
      %2175 = vrot.lane.b32.xlu0 %v2082, 36
      %v2176 = vpop.permute.xlu0 %2175
      %2177 = vrot.lane.b32.xlu0 %v2083, 36
      %v2178 = vpop.permute.xlu0 %2177
      %2179 = vrot.lane.b32.xlu0 %v2084, 36
      %v2180 = vpop.permute.xlu0 %2179
      %2181 = vrot.lane.b32.xlu0 %v2085, 36
      %v2182 = vpop.permute.xlu0 %2181
      %2183 = vrot.lane.b32.xlu0 %v2086, 36
      %v2184 = vpop.permute.xlu0 %2183
      %2185 = vrot.lane.b32.xlu0 %v2087, 36
      %v2186 = vpop.permute.xlu0 %2185
      %2187 = vrot.lane.b32.xlu0 %v2088, 36
      %v2188 = vpop.permute.xlu0 %2187
      %2189 = vrot.lane.b32.xlu0 %v2089, 36
      %v2190 = vpop.permute.xlu0 %2189
      %2191 = vrot.lane.b32.xlu0 %v2090, 36
      %v2192 = vpop.permute.xlu0 %2191
      %2193 = vrot.lane.b32.xlu0 %v2091, 36
      %v2194 = vpop.permute.xlu0 %2193
      %2195 = vrot.lane.b32.xlu0 %v2092, 36
      %v2196 = vpop.permute.xlu0 %2195
      %2197 = vrot.lane.b32.xlu0 %v2093, 36
      %v2198 = vpop.permute.xlu0 %2197
      %2199 = vrot.lane.b32.xlu0 %v2094, 36
      %v2200 = vpop.permute.xlu0 %2199
      %2201 = vrot.lane.b32.xlu0 %v2095, 36
      %v2202 = vpop.permute.xlu0 %2201
      %2203 = vrot.lane.b32.xlu0 %v2096, 36
      %v2204 = vpop.permute.xlu0 %2203
      %2205 = vrot.lane.b32.xlu0 %v2097, 36
      %v2206 = vpop.permute.xlu0 %2205
      %2207 = vrot.lane.b32.xlu0 %v2098, 36
      %v2208 = vpop.permute.xlu0 %2207
      %2209 = vrot.lane.b32.xlu0 %v2099, 36
      %v2210 = vpop.permute.xlu0 %2209
      %2211 = vrot.lane.b32.xlu0 %v2100, 36
      %v2212 = vpop.permute.xlu0 %2211
      %2213 = vrot.lane.b32.xlu0 %v2101, 36
      %v2214 = vpop.permute.xlu0 %2213
      %2215 = vrot.lane.b32.xlu0 %v2102, 36
      %v2216 = vpop.permute.xlu0 %2215
      %2217 = vrot.lane.b32.xlu0 %v2103, 36
      %v2218 = vpop.permute.xlu0 %2217
      %2219 = vrot.lane.b32.xlu0 %v2104, 36
      %v2220 = vpop.permute.xlu0 %2219
      %2221 = vrot.lane.b32.xlu0 %v2105, 36
      %v2222 = vpop.permute.xlu0 %2221
      %2223 = vrot.lane.b32.xlu0 %v2106, 36
      %v2224 = vpop.permute.xlu0 %2223
      %2225 = vrot.lane.b32.xlu0 %v2107, 36
      %v2226 = vpop.permute.xlu0 %2225
      %2261 = vst.msk [vmem:[%s680] sm:$0xff] %vm2122, %v2160
      %2262 = vst.msk [vmem:[%s680 + $0x8] sm:$0xff] %vm2122, %v2162
      %2263 = vst.msk [vmem:[%s680 + $0x10] sm:$0xff] %vm2122, %v2164
      %2264 = vst.msk [vmem:[%s680 + $0x18] sm:$0xff] %vm2122, %v2166
      %2265 = vst.msk [vmem:[%s680 + $0x20] sm:$0xff] %vm2122, %v2168
      %2266 = vst.msk [vmem:[%s680 + $0x28] sm:$0xff] %vm2122, %v2170
      %2267 = vst.msk [vmem:[%s680 + $0x30] sm:$0xff] %vm2122, %v2172
      %2268 = vst.msk [vmem:[%s680 + $0x38] sm:$0xff] %vm2122, %v2174
      %2269 = vst.msk [vmem:[%s680 + $0x40] sm:$0xff] %vm2122, %v2176
      %2270 = vst.msk [vmem:[%s680 + $0x48] sm:$0xff] %vm2122, %v2178
      %2271 = vst.msk [vmem:[%s680 + $0x50] sm:$0xff] %vm2122, %v2180
      %2272 = vst.msk [vmem:[%s680 + $0x58] sm:$0xff] %vm2122, %v2182
      %2273 = vst.msk [vmem:[%s680 + $0x60] sm:$0xff] %vm2122, %v2184
      %2274 = vst.msk [vmem:[%s680 + $0x68] sm:$0xff] %vm2122, %v2186
      %2275 = vst.msk [vmem:[%s680 + $0x70] sm:$0xff] %vm2122, %v2188
      %2276 = vst.msk [vmem:[%s680 + $0x78] sm:$0xff] %vm2122, %v2190
      %2277 = vst.msk [vmem:[%s680 + $0x80] sm:$0xff] %vm2122, %v2192
      %2278 = vst.msk [vmem:[%s680 + $0x88] sm:$0xff] %vm2122, %v2194
      %2279 = vst.msk [vmem:[%s680 + $0x90] sm:$0xff] %vm2122, %v2196
      %2280 = vst.msk [vmem:[%s680 + $0x98] sm:$0xff] %vm2122, %v2198
      %2281 = vst.msk [vmem:[%s680 + $0xa0] sm:$0xff] %vm2122, %v2200
      %2282 = vst.msk [vmem:[%s680 + $0xa8] sm:$0xff] %vm2122, %v2202
      %2283 = vst.msk [vmem:[%s680 + $0xb0] sm:$0xff] %vm2122, %v2204
      %2284 = vst.msk [vmem:[%s680 + $0xb8] sm:$0xff] %vm2122, %v2206
      %2285 = vst.msk [vmem:[%s680 + $0xc0] sm:$0xff] %vm2122, %v2208
      %2286 = vst.msk [vmem:[%s680 + $0xc8] sm:$0xff] %vm2122, %v2210
      %2287 = vst.msk [vmem:[%s680 + $0xd0] sm:$0xff] %vm2122, %v2212
      %2288 = vst.msk [vmem:[%s680 + $0xd8] sm:$0xff] %vm2122, %v2214
      %2289 = vst.msk [vmem:[%s680 + $0xe0] sm:$0xff] %vm2122, %v2216
      %2290 = vst.msk [vmem:[%s680 + $0xe8] sm:$0xff] %vm2122, %v2218
      %2291 = vst.msk [vmem:[%s680 + $0xf0] sm:$0xff] %vm2122, %v2220
      %2292 = vst.msk [vmem:[%s680 + $0xf8] sm:$0xff] %vm2122, %v2222
      %2293 = vst.msk [vmem:[%s680 + $0x100] sm:$0xff] %vm2122, %v2224
      %2294 = vst.msk [vmem:[%s680 + $0x108] sm:$0xff] %vm2122, %v2226
      %2297 = vrot.lane.b32.xlu0 %v2074, 48
      %v2298 = vpop.permute.xlu0 %2297
      %2299 = vrot.lane.b32.xlu0 %v2075, 48
      %v2300 = vpop.permute.xlu0 %2299
      %2301 = vrot.lane.b32.xlu0 %v2076, 48
      %v2302 = vpop.permute.xlu0 %2301
      %2303 = vrot.lane.b32.xlu0 %v2077, 48
      %v2304 = vpop.permute.xlu0 %2303
      %2305 = vrot.lane.b32.xlu0 %v2078, 48
      %v2306 = vpop.permute.xlu0 %2305
      %2307 = vrot.lane.b32.xlu0 %v2079, 48
      %v2308 = vpop.permute.xlu0 %2307
      %2309 = vrot.lane.b32.xlu0 %v2080, 48
      %v2310 = vpop.permute.xlu0 %2309
      %2311 = vrot.lane.b32.xlu0 %v2081, 48
      %v2312 = vpop.permute.xlu0 %2311
      %2313 = vrot.lane.b32.xlu0 %v2082, 48
      %v2314 = vpop.permute.xlu0 %2313
      %2315 = vrot.lane.b32.xlu0 %v2083, 48
      %v2316 = vpop.permute.xlu0 %2315
      %2317 = vrot.lane.b32.xlu0 %v2084, 48
      %v2318 = vpop.permute.xlu0 %2317
      %2319 = vrot.lane.b32.xlu0 %v2085, 48
      %v2320 = vpop.permute.xlu0 %2319
      %2321 = vrot.lane.b32.xlu0 %v2086, 48
      %v2322 = vpop.permute.xlu0 %2321
      %2323 = vrot.lane.b32.xlu0 %v2087, 48
      %v2324 = vpop.permute.xlu0 %2323
      %2325 = vrot.lane.b32.xlu0 %v2088, 48
      %v2326 = vpop.permute.xlu0 %2325
      %2327 = vrot.lane.b32.xlu0 %v2089, 48
      %v2328 = vpop.permute.xlu0 %2327
      %2329 = vrot.lane.b32.xlu0 %v2090, 48
      %v2330 = vpop.permute.xlu0 %2329
      %2331 = vrot.lane.b32.xlu0 %v2091, 48
      %v2332 = vpop.permute.xlu0 %2331
      %2333 = vrot.lane.b32.xlu0 %v2092, 48
      %v2334 = vpop.permute.xlu0 %2333
      %2335 = vrot.lane.b32.xlu0 %v2093, 48
      %v2336 = vpop.permute.xlu0 %2335
      %2337 = vrot.lane.b32.xlu0 %v2094, 48
      %v2338 = vpop.permute.xlu0 %2337
      %2339 = vrot.lane.b32.xlu0 %v2095, 48
      %v2340 = vpop.permute.xlu0 %2339
      %2341 = vrot.lane.b32.xlu0 %v2096, 48
      %v2342 = vpop.permute.xlu0 %2341
      %2343 = vrot.lane.b32.xlu0 %v2097, 48
      %v2344 = vpop.permute.xlu0 %2343
      %2345 = vrot.lane.b32.xlu0 %v2098, 48
      %v2346 = vpop.permute.xlu0 %2345
      %2347 = vrot.lane.b32.xlu0 %v2099, 48
      %v2348 = vpop.permute.xlu0 %2347
      %2349 = vrot.lane.b32.xlu0 %v2100, 48
      %v2350 = vpop.permute.xlu0 %2349
      %2351 = vrot.lane.b32.xlu0 %v2101, 48
      %v2352 = vpop.permute.xlu0 %2351
      %2353 = vrot.lane.b32.xlu0 %v2102, 48
      %v2354 = vpop.permute.xlu0 %2353
      %2355 = vrot.lane.b32.xlu0 %v2103, 48
      %v2356 = vpop.permute.xlu0 %2355
      %2357 = vrot.lane.b32.xlu0 %v2104, 48
      %v2358 = vpop.permute.xlu0 %2357
      %2359 = vrot.lane.b32.xlu0 %v2105, 48
      %v2360 = vpop.permute.xlu0 %2359
      %2361 = vrot.lane.b32.xlu0 %v2106, 48
      %v2362 = vpop.permute.xlu0 %2361
      %2363 = vrot.lane.b32.xlu0 %v2107, 48
      %v2364 = vpop.permute.xlu0 %2363
      %2365 = vrot.lane.b32.xlu0 %v2108, 48
      %v2366 = vpop.permute.xlu0 %2365
      %2367 = vrot.lane.b32.xlu0 %v2109, 48
      %v2368 = vpop.permute.xlu0 %2367
      %vm2405 = vcmask 425344
      %2406 = vst.msk [vmem:[#allocation2] sm:$0xff] %vm2405, %v2298
      %2407 = vst.msk [vmem:[#allocation2 + $0x8] sm:$0xff] %vm2405, %v2300
      %2408 = vst.msk [vmem:[#allocation2 + $0x10] sm:$0xff] %vm2405, %v2302
      %2409 = vst.msk [vmem:[#allocation2 + $0x18] sm:$0xff] %vm2405, %v2304
      %2410 = vst.msk [vmem:[#allocation2 + $0x20] sm:$0xff] %vm2405, %v2306
      %2411 = vst.msk [vmem:[#allocation2 + $0x28] sm:$0xff] %vm2405, %v2308
      %2412 = vst.msk [vmem:[#allocation2 + $0x30] sm:$0xff] %vm2405, %v2310
      %2413 = vst.msk [vmem:[#allocation2 + $0x38] sm:$0xff] %vm2405, %v2312
      %2414 = vst.msk [vmem:[#allocation2 + $0x40] sm:$0xff] %vm2405, %v2314
      %2415 = vst.msk [vmem:[#allocation2 + $0x48] sm:$0xff] %vm2405, %v2316
      %2416 = vst.msk [vmem:[#allocation2 + $0x50] sm:$0xff] %vm2405, %v2318
      %2417 = vst.msk [vmem:[#allocation2 + $0x58] sm:$0xff] %vm2405, %v2320
      %2418 = vst.msk [vmem:[#allocation2 + $0x60] sm:$0xff] %vm2405, %v2322
      %2419 = vst.msk [vmem:[#allocation2 + $0x68] sm:$0xff] %vm2405, %v2324
      %2420 = vst.msk [vmem:[#allocation2 + $0x70] sm:$0xff] %vm2405, %v2326
      %2421 = vst.msk [vmem:[#allocation2 + $0x78] sm:$0xff] %vm2405, %v2328
      %2422 = vst.msk [vmem:[#allocation2 + $0x80] sm:$0xff] %vm2405, %v2330
      %2423 = vst.msk [vmem:[#allocation2 + $0x88] sm:$0xff] %vm2405, %v2332
      %2424 = vst.msk [vmem:[#allocation2 + $0x90] sm:$0xff] %vm2405, %v2334
      %2425 = vst.msk [vmem:[#allocation2 + $0x98] sm:$0xff] %vm2405, %v2336
      %2426 = vst.msk [vmem:[#allocation2 + $0xa0] sm:$0xff] %vm2405, %v2338
      %2427 = vst.msk [vmem:[#allocation2 + $0xa8] sm:$0xff] %vm2405, %v2340
      %2428 = vst.msk [vmem:[#allocation2 + $0xb0] sm:$0xff] %vm2405, %v2342
      %2429 = vst.msk [vmem:[#allocation2 + $0xb8] sm:$0xff] %vm2405, %v2344
      %2430 = vst.msk [vmem:[#allocation2 + $0xc0] sm:$0xff] %vm2405, %v2346
      %2431 = vst.msk [vmem:[#allocation2 + $0xc8] sm:$0xff] %vm2405, %v2348
      %2432 = vst.msk [vmem:[#allocation2 + $0xd0] sm:$0xff] %vm2405, %v2350
      %2433 = vst.msk [vmem:[#allocation2 + $0xd8] sm:$0xff] %vm2405, %v2352
      %2434 = vst.msk [vmem:[#allocation2 + $0xe0] sm:$0xff] %vm2405, %v2354
      %2435 = vst.msk [vmem:[#allocation2 + $0xe8] sm:$0xff] %vm2405, %v2356
      %2436 = vst.msk [vmem:[#allocation2 + $0xf0] sm:$0xff] %vm2405, %v2358
      %2437 = vst.msk [vmem:[#allocation2 + $0xf8] sm:$0xff] %vm2405, %v2360
      %2438 = vst.msk [vmem:[#allocation2 + $0x100] sm:$0xff] %vm2405, %v2362
      %2439 = vst.msk [vmem:[#allocation2 + $0x108] sm:$0xff] %vm2405, %v2364
      %2440 = vst.msk [vmem:[#allocation2 + $0x110] sm:$0xff] %vm2405, %v2366
      %2441 = vst.msk [vmem:[#allocation2 + $0x118] sm:$0xff] %vm2405, %v2368
      %2442 = vrot.lane.b32.xlu0 %v2076, 60
      %v2443 = vpop.permute.xlu0 %2442
      %2444 = vrot.lane.b32.xlu0 %v2077, 60
      %v2445 = vpop.permute.xlu0 %2444
      %2446 = vrot.lane.b32.xlu0 %v2078, 60
      %v2447 = vpop.permute.xlu0 %2446
      %2448 = vrot.lane.b32.xlu0 %v2079, 60
      %v2449 = vpop.permute.xlu0 %2448
      %2450 = vrot.lane.b32.xlu0 %v2080, 60
      %v2451 = vpop.permute.xlu0 %2450
      %2452 = vrot.lane.b32.xlu0 %v2081, 60
      %v2453 = vpop.permute.xlu0 %2452
      %2454 = vrot.lane.b32.xlu0 %v2082, 60
      %v2455 = vpop.permute.xlu0 %2454
      %2456 = vrot.lane.b32.xlu0 %v2083, 60
      %v2457 = vpop.permute.xlu0 %2456
      %2458 = vrot.lane.b32.xlu0 %v2084, 60
      %v2459 = vpop.permute.xlu0 %2458
      %2460 = vrot.lane.b32.xlu0 %v2085, 60
      %v2461 = vpop.permute.xlu0 %2460
      %2462 = vrot.lane.b32.xlu0 %v2086, 60
      %v2463 = vpop.permute.xlu0 %2462
      %2464 = vrot.lane.b32.xlu0 %v2087, 60
      %v2465 = vpop.permute.xlu0 %2464
      %2466 = vrot.lane.b32.xlu0 %v2088, 60
      %v2467 = vpop.permute.xlu0 %2466
      %2468 = vrot.lane.b32.xlu0 %v2089, 60
      %v2469 = vpop.permute.xlu0 %2468
      %2470 = vrot.lane.b32.xlu0 %v2090, 60
      %v2471 = vpop.permute.xlu0 %2470
      %2472 = vrot.lane.b32.xlu0 %v2091, 60
      %v2473 = vpop.permute.xlu0 %2472
      %2474 = vrot.lane.b32.xlu0 %v2092, 60
      %v2475 = vpop.permute.xlu0 %2474
      %2476 = vrot.lane.b32.xlu0 %v2093, 60
      %v2477 = vpop.permute.xlu0 %2476
      %2478 = vrot.lane.b32.xlu0 %v2094, 60
      %v2479 = vpop.permute.xlu0 %2478
      %2480 = vrot.lane.b32.xlu0 %v2095, 60
      %v2481 = vpop.permute.xlu0 %2480
      %2482 = vrot.lane.b32.xlu0 %v2096, 60
      %v2483 = vpop.permute.xlu0 %2482
      %2484 = vrot.lane.b32.xlu0 %v2097, 60
      %v2485 = vpop.permute.xlu0 %2484
      %2486 = vrot.lane.b32.xlu0 %v2098, 60
      %v2487 = vpop.permute.xlu0 %2486
      %2488 = vrot.lane.b32.xlu0 %v2099, 60
      %v2489 = vpop.permute.xlu0 %2488
      %2490 = vrot.lane.b32.xlu0 %v2100, 60
      %v2491 = vpop.permute.xlu0 %2490
      %2492 = vrot.lane.b32.xlu0 %v2101, 60
      %v2493 = vpop.permute.xlu0 %2492
      %2494 = vrot.lane.b32.xlu0 %v2102, 60
      %v2495 = vpop.permute.xlu0 %2494
      %2496 = vrot.lane.b32.xlu0 %v2103, 60
      %v2497 = vpop.permute.xlu0 %2496
      %2498 = vrot.lane.b32.xlu0 %v2104, 60
      %v2499 = vpop.permute.xlu0 %2498
      %2500 = vrot.lane.b32.xlu0 %v2105, 60
      %v2501 = vpop.permute.xlu0 %2500
      %2502 = vrot.lane.b32.xlu0 %v2106, 60
      %v2503 = vpop.permute.xlu0 %2502
      %2504 = vrot.lane.b32.xlu0 %v2107, 60
      %v2505 = vpop.permute.xlu0 %2504
      %2506 = vrot.lane.b32.xlu0 %v2108, 60
      %v2507 = vpop.permute.xlu0 %2506
      %2508 = vrot.lane.b32.xlu0 %v2109, 60
      %v2509 = vpop.permute.xlu0 %2508
      %vm2544 = vcmask 523744
      %2545 = vst.msk [vmem:[#allocation2] sm:$0xff] %vm2544, %v2443
      %2546 = vst.msk [vmem:[#allocation2 + $0x8] sm:$0xff] %vm2544, %v2445
      %2547 = vst.msk [vmem:[#allocation2 + $0x10] sm:$0xff] %vm2544, %v2447
      %2548 = vst.msk [vmem:[#allocation2 + $0x18] sm:$0xff] %vm2544, %v2449
      %2549 = vst.msk [vmem:[#allocation2 + $0x20] sm:$0xff] %vm2544, %v2451
      %2550 = vst.msk [vmem:[#allocation2 + $0x28] sm:$0xff] %vm2544, %v2453
      %2551 = vst.msk [vmem:[#allocation2 + $0x30] sm:$0xff] %vm2544, %v2455
      %2552 = vst.msk [vmem:[#allocation2 + $0x38] sm:$0xff] %vm2544, %v2457
      %2553 = vst.msk [vmem:[#allocation2 + $0x40] sm:$0xff] %vm2544, %v2459
      %2554 = vst.msk [vmem:[#allocation2 + $0x48] sm:$0xff] %vm2544, %v2461
      %2555 = vst.msk [vmem:[#allocation2 + $0x50] sm:$0xff] %vm2544, %v2463
      %2556 = vst.msk [vmem:[#allocation2 + $0x58] sm:$0xff] %vm2544, %v2465
      %2557 = vst.msk [vmem:[#allocation2 + $0x60] sm:$0xff] %vm2544, %v2467
      %2558 = vst.msk [vmem:[#allocation2 + $0x68] sm:$0xff] %vm2544, %v2469
      %2559 = vst.msk [vmem:[#allocation2 + $0x70] sm:$0xff] %vm2544, %v2471
      %2560 = vst.msk [vmem:[#allocation2 + $0x78] sm:$0xff] %vm2544, %v2473
      %2561 = vst.msk [vmem:[#allocation2 + $0x80] sm:$0xff] %vm2544, %v2475
      %2562 = vst.msk [vmem:[#allocation2 + $0x88] sm:$0xff] %vm2544, %v2477
      %2563 = vst.msk [vmem:[#allocation2 + $0x90] sm:$0xff] %vm2544, %v2479
      %2564 = vst.msk [vmem:[#allocation2 + $0x98] sm:$0xff] %vm2544, %v2481
      %2565 = vst.msk [vmem:[#allocation2 + $0xa0] sm:$0xff] %vm2544, %v2483
      %2566 = vst.msk [vmem:[#allocation2 + $0xa8] sm:$0xff] %vm2544, %v2485
      %2567 = vst.msk [vmem:[#allocation2 + $0xb0] sm:$0xff] %vm2544, %v2487
      %2568 = vst.msk [vmem:[#allocation2 + $0xb8] sm:$0xff] %vm2544, %v2489
      %2569 = vst.msk [vmem:[#allocation2 + $0xc0] sm:$0xff] %vm2544, %v2491
      %2570 = vst.msk [vmem:[#allocation2 + $0xc8] sm:$0xff] %vm2544, %v2493
      %2571 = vst.msk [vmem:[#allocation2 + $0xd0] sm:$0xff] %vm2544, %v2495
      %2572 = vst.msk [vmem:[#allocation2 + $0xd8] sm:$0xff] %vm2544, %v2497
      %2573 = vst.msk [vmem:[#allocation2 + $0xe0] sm:$0xff] %vm2544, %v2499
      %2574 = vst.msk [vmem:[#allocation2 + $0xe8] sm:$0xff] %vm2544, %v2501
      %2575 = vst.msk [vmem:[#allocation2 + $0xf0] sm:$0xff] %vm2544, %v2503
      %2576 = vst.msk [vmem:[#allocation2 + $0xf8] sm:$0xff] %vm2544, %v2505
      %2577 = vst.msk [vmem:[#allocation2 + $0x100] sm:$0xff] %vm2544, %v2507
      %2578 = vst.msk [vmem:[#allocation2 + $0x108] sm:$0xff] %vm2544, %v2509
      %2581 = vrot.lane.b32.xlu0 %v2112, 60
      %v2582 = vpop.permute.xlu0 %2581
      %2583 = vrot.lane.b32.xlu0 %v2113, 60
      %v2584 = vpop.permute.xlu0 %2583
      %2587 = vst.msk [vmem:[%s1041] sm:$0xff] %vm2544, %v2582
      %2588 = vst.msk [vmem:[%s1041 + $0x8] sm:$0xff] %vm2544, %v2584
      %v2589 = vld [vmem:[%s590 + $0x1] sm:$0xff]
      %v2590 = vld [vmem:[%s590 + $0x9] sm:$0xff]
      %v2591 = vld [vmem:[%s590 + $0x19] sm:$0xff]
      %v2592 = vld [vmem:[%s590 + $0x21] sm:$0xff]
      %v2593 = vld [vmem:[%s590 + $0x31] sm:$0xff]
      %v2594 = vld [vmem:[%s590 + $0x39] sm:$0xff]
      %v2595 = vld [vmem:[%s590 + $0x49] sm:$0xff]
      %v2596 = vld [vmem:[%s590 + $0x51] sm:$0xff]
      %v2597 = vld [vmem:[%s590 + $0x61] sm:$0xff]
      %v2598 = vld [vmem:[%s590 + $0x69] sm:$0xff]
      %v2599 = vld [vmem:[%s590 + $0x79] sm:$0xff]
      %v2600 = vld [vmem:[%s590 + $0x81] sm:$0xff]
      %v2601 = vld [vmem:[%s590 + $0x91] sm:$0xff]
      %v2602 = vld [vmem:[%s590 + $0x99] sm:$0xff]
      %v2603 = vld [vmem:[%s590 + $0xa9] sm:$0xff]
      %v2604 = vld [vmem:[%s590 + $0xb1] sm:$0xff]
      %v2605 = vld [vmem:[%s590 + $0xc1] sm:$0xff]
      %v2606 = vld [vmem:[%s590 + $0xc9] sm:$0xff]
      %v2607 = vld [vmem:[%s590 + $0xd9] sm:$0xff]
      %v2608 = vld [vmem:[%s590 + $0xe1] sm:$0xff]
      %v2609 = vld [vmem:[%s590 + $0xf1] sm:$0xff]
      %v2610 = vld [vmem:[%s590 + $0xf9] sm:$0xff]
      %v2611 = vld [vmem:[%s590 + $0x109] sm:$0xff]
      %v2612 = vld [vmem:[%s590 + $0x111] sm:$0xff]
      %v2613 = vld [vmem:[%s590 + $0x121] sm:$0xff]
      %v2614 = vld [vmem:[%s590 + $0x129] sm:$0xff]
      %v2615 = vld [vmem:[%s590 + $0x139] sm:$0xff]
      %v2616 = vld [vmem:[%s590 + $0x141] sm:$0xff]
      %v2617 = vld [vmem:[%s590 + $0x151] sm:$0xff]
      %v2618 = vld [vmem:[%s590 + $0x159] sm:$0xff]
      %v2619 = vld [vmem:[%s590 + $0x169] sm:$0xff]
      %v2620 = vld [vmem:[%s590 + $0x171] sm:$0xff]
      %v2621 = vld [vmem:[%s590 + $0x181] sm:$0xff]
      %v2622 = vld [vmem:[%s590 + $0x189] sm:$0xff]
      %v2623 = vld [vmem:[%s590 + $0x199] sm:$0xff]
      %v2624 = vld [vmem:[%s590 + $0x1a1] sm:$0xff]
      %v2625 = vld [vmem:[%s604 + $0x1] sm:$0xff]
      %v2626 = vld [vmem:[%s604 + $0x9] sm:$0xff]
      %v2627 = vld [vmem:[%s621 + $0x1] sm:$0xff]
      %v2628 = vld [vmem:[%s621 + $0x9] sm:$0xff]
      %2631 = vrot.lane.b32.xlu0 %v2625, 40
      %v2632 = vpop.permute.xlu0 %2631
      %2633 = vrot.lane.b32.xlu0 %v2626, 40
      %v2634 = vpop.permute.xlu0 %2633
      %vm2637 = vcmask 359744
      %2638 = vst.msk [vmem:[#allocation2] sm:$0xff] %vm2637, %v2632
      %2639 = vst.msk [vmem:[#allocation2 + $0x8] sm:$0xff] %vm2637, %v2634
      %2674 = vrot.lane.b32.xlu0 %v2589, 40
      %v2675 = vpop.permute.xlu0 %2674
      %2676 = vrot.lane.b32.xlu0 %v2590, 40
      %v2677 = vpop.permute.xlu0 %2676
      %2678 = vrot.lane.b32.xlu0 %v2591, 40
      %v2679 = vpop.permute.xlu0 %2678
      %2680 = vrot.lane.b32.xlu0 %v2592, 40
      %v2681 = vpop.permute.xlu0 %2680
      %2682 = vrot.lane.b32.xlu0 %v2593, 40
      %v2683 = vpop.permute.xlu0 %2682
      %2684 = vrot.lane.b32.xlu0 %v2594, 40
      %v2685 = vpop.permute.xlu0 %2684
      %2686 = vrot.lane.b32.xlu0 %v2595, 40
      %v2687 = vpop.permute.xlu0 %2686
      %2688 = vrot.lane.b32.xlu0 %v2596, 40
      %v2689 = vpop.permute.xlu0 %2688
      %2690 = vrot.lane.b32.xlu0 %v2597, 40
      %v2691 = vpop.permute.xlu0 %2690
      %2692 = vrot.lane.b32.xlu0 %v2598, 40
      %v2693 = vpop.permute.xlu0 %2692
      %2694 = vrot.lane.b32.xlu0 %v2599, 40
      %v2695 = vpop.permute.xlu0 %2694
      %2696 = vrot.lane.b32.xlu0 %v2600, 40
      %v2697 = vpop.permute.xlu0 %2696
      %2698 = vrot.lane.b32.xlu0 %v2601, 40
      %v2699 = vpop.permute.xlu0 %2698
      %2700 = vrot.lane.b32.xlu0 %v2602, 40
      %v2701 = vpop.permute.xlu0 %2700
      %2702 = vrot.lane.b32.xlu0 %v2603, 40
      %v2703 = vpop.permute.xlu0 %2702
      %2704 = vrot.lane.b32.xlu0 %v2604, 40
      %v2705 = vpop.permute.xlu0 %2704
      %2706 = vrot.lane.b32.xlu0 %v2605, 40
      %v2707 = vpop.permute.xlu0 %2706
      %2708 = vrot.lane.b32.xlu0 %v2606, 40
      %v2709 = vpop.permute.xlu0 %2708
      %2710 = vrot.lane.b32.xlu0 %v2607, 40
      %v2711 = vpop.permute.xlu0 %2710
      %2712 = vrot.lane.b32.xlu0 %v2608, 40
      %v2713 = vpop.permute.xlu0 %2712
      %2714 = vrot.lane.b32.xlu0 %v2609, 40
      %v2715 = vpop.permute.xlu0 %2714
      %2716 = vrot.lane.b32.xlu0 %v2610, 40
      %v2717 = vpop.permute.xlu0 %2716
      %2718 = vrot.lane.b32.xlu0 %v2611, 40
      %v2719 = vpop.permute.xlu0 %2718
      %2720 = vrot.lane.b32.xlu0 %v2612, 40
      %v2721 = vpop.permute.xlu0 %2720
      %2722 = vrot.lane.b32.xlu0 %v2613, 40
      %v2723 = vpop.permute.xlu0 %2722
      %2724 = vrot.lane.b32.xlu0 %v2614, 40
      %v2725 = vpop.permute.xlu0 %2724
      %2726 = vrot.lane.b32.xlu0 %v2615, 40
      %v2727 = vpop.permute.xlu0 %2726
      %2728 = vrot.lane.b32.xlu0 %v2616, 40
      %v2729 = vpop.permute.xlu0 %2728
      %2730 = vrot.lane.b32.xlu0 %v2617, 40
      %v2731 = vpop.permute.xlu0 %2730
      %2732 = vrot.lane.b32.xlu0 %v2618, 40
      %v2733 = vpop.permute.xlu0 %2732
      %2734 = vrot.lane.b32.xlu0 %v2619, 40
      %v2735 = vpop.permute.xlu0 %2734
      %2736 = vrot.lane.b32.xlu0 %v2620, 40
      %v2737 = vpop.permute.xlu0 %2736
      %2738 = vrot.lane.b32.xlu0 %v2621, 40
      %v2739 = vpop.permute.xlu0 %2738
      %2740 = vrot.lane.b32.xlu0 %v2622, 40
      %v2741 = vpop.permute.xlu0 %2740
      %2776 = vst.msk [vmem:[%s680] sm:$0xff] %vm2637, %v2675
      %2777 = vst.msk [vmem:[%s680 + $0x8] sm:$0xff] %vm2637, %v2677
      %2778 = vst.msk [vmem:[%s680 + $0x10] sm:$0xff] %vm2637, %v2679
      %2779 = vst.msk [vmem:[%s680 + $0x18] sm:$0xff] %vm2637, %v2681
      %2780 = vst.msk [vmem:[%s680 + $0x20] sm:$0xff] %vm2637, %v2683
      %2781 = vst.msk [vmem:[%s680 + $0x28] sm:$0xff] %vm2637, %v2685
      %2782 = vst.msk [vmem:[%s680 + $0x30] sm:$0xff] %vm2637, %v2687
      %2783 = vst.msk [vmem:[%s680 + $0x38] sm:$0xff] %vm2637, %v2689
      %2784 = vst.msk [vmem:[%s680 + $0x40] sm:$0xff] %vm2637, %v2691
      %2785 = vst.msk [vmem:[%s680 + $0x48] sm:$0xff] %vm2637, %v2693
      %2786 = vst.msk [vmem:[%s680 + $0x50] sm:$0xff] %vm2637, %v2695
      %2787 = vst.msk [vmem:[%s680 + $0x58] sm:$0xff] %vm2637, %v2697
      %2788 = vst.msk [vmem:[%s680 + $0x60] sm:$0xff] %vm2637, %v2699
      %2789 = vst.msk [vmem:[%s680 + $0x68] sm:$0xff] %vm2637, %v2701
      %2790 = vst.msk [vmem:[%s680 + $0x70] sm:$0xff] %vm2637, %v2703
      %2791 = vst.msk [vmem:[%s680 + $0x78] sm:$0xff] %vm2637, %v2705
      %2792 = vst.msk [vmem:[%s680 + $0x80] sm:$0xff] %vm2637, %v2707
      %2793 = vst.msk [vmem:[%s680 + $0x88] sm:$0xff] %vm2637, %v2709
      %2794 = vst.msk [vmem:[%s680 + $0x90] sm:$0xff] %vm2637, %v2711
      %2795 = vst.msk [vmem:[%s680 + $0x98] sm:$0xff] %vm2637, %v2713
      %2796 = vst.msk [vmem:[%s680 + $0xa0] sm:$0xff] %vm2637, %v2715
      %2797 = vst.msk [vmem:[%s680 + $0xa8] sm:$0xff] %vm2637, %v2717
      %2798 = vst.msk [vmem:[%s680 + $0xb0] sm:$0xff] %vm2637, %v2719
      %2799 = vst.msk [vmem:[%s680 + $0xb8] sm:$0xff] %vm2637, %v2721
      %2800 = vst.msk [vmem:[%s680 + $0xc0] sm:$0xff] %vm2637, %v2723
      %2801 = vst.msk [vmem:[%s680 + $0xc8] sm:$0xff] %vm2637, %v2725
      %2802 = vst.msk [vmem:[%s680 + $0xd0] sm:$0xff] %vm2637, %v2727
      %2803 = vst.msk [vmem:[%s680 + $0xd8] sm:$0xff] %vm2637, %v2729
      %2804 = vst.msk [vmem:[%s680 + $0xe0] sm:$0xff] %vm2637, %v2731
      %2805 = vst.msk [vmem:[%s680 + $0xe8] sm:$0xff] %vm2637, %v2733
      %2806 = vst.msk [vmem:[%s680 + $0xf0] sm:$0xff] %vm2637, %v2735
      %2807 = vst.msk [vmem:[%s680 + $0xf8] sm:$0xff] %vm2637, %v2737
      %2808 = vst.msk [vmem:[%s680 + $0x100] sm:$0xff] %vm2637, %v2739
      %2809 = vst.msk [vmem:[%s680 + $0x108] sm:$0xff] %vm2637, %v2741
      %2812 = vrot.lane.b32.xlu0 %v2589, 52
      %v2813 = vpop.permute.xlu0 %2812
      %2814 = vrot.lane.b32.xlu0 %v2590, 52
      %v2815 = vpop.permute.xlu0 %2814
      %2816 = vrot.lane.b32.xlu0 %v2591, 52
      %v2817 = vpop.permute.xlu0 %2816
      %2818 = vrot.lane.b32.xlu0 %v2592, 52
      %v2819 = vpop.permute.xlu0 %2818
      %2820 = vrot.lane.b32.xlu0 %v2593, 52
      %v2821 = vpop.permute.xlu0 %2820
      %2822 = vrot.lane.b32.xlu0 %v2594, 52
      %v2823 = vpop.permute.xlu0 %2822
      %2824 = vrot.lane.b32.xlu0 %v2595, 52
      %v2825 = vpop.permute.xlu0 %2824
      %2826 = vrot.lane.b32.xlu0 %v2596, 52
      %v2827 = vpop.permute.xlu0 %2826
      %2828 = vrot.lane.b32.xlu0 %v2597, 52
      %v2829 = vpop.permute.xlu0 %2828
      %2830 = vrot.lane.b32.xlu0 %v2598, 52
      %v2831 = vpop.permute.xlu0 %2830
      %2832 = vrot.lane.b32.xlu0 %v2599, 52
      %v2833 = vpop.permute.xlu0 %2832
      %2834 = vrot.lane.b32.xlu0 %v2600, 52
      %v2835 = vpop.permute.xlu0 %2834
      %2836 = vrot.lane.b32.xlu0 %v2601, 52
      %v2837 = vpop.permute.xlu0 %2836
      %2838 = vrot.lane.b32.xlu0 %v2602, 52
      %v2839 = vpop.permute.xlu0 %2838
      %2840 = vrot.lane.b32.xlu0 %v2603, 52
      %v2841 = vpop.permute.xlu0 %2840
      %2842 = vrot.lane.b32.xlu0 %v2604, 52
      %v2843 = vpop.permute.xlu0 %2842
      %2844 = vrot.lane.b32.xlu0 %v2605, 52
      %v2845 = vpop.permute.xlu0 %2844
      %2846 = vrot.lane.b32.xlu0 %v2606, 52
      %v2847 = vpop.permute.xlu0 %2846
      %2848 = vrot.lane.b32.xlu0 %v2607, 52
      %v2849 = vpop.permute.xlu0 %2848
      %2850 = vrot.lane.b32.xlu0 %v2608, 52
      %v2851 = vpop.permute.xlu0 %2850
      %2852 = vrot.lane.b32.xlu0 %v2609, 52
      %v2853 = vpop.permute.xlu0 %2852
      %2854 = vrot.lane.b32.xlu0 %v2610, 52
      %v2855 = vpop.permute.xlu0 %2854
      %2856 = vrot.lane.b32.xlu0 %v2611, 52
      %v2857 = vpop.permute.xlu0 %2856
      %2858 = vrot.lane.b32.xlu0 %v2612, 52
      %v2859 = vpop.permute.xlu0 %2858
      %2860 = vrot.lane.b32.xlu0 %v2613, 52
      %v2861 = vpop.permute.xlu0 %2860
      %2862 = vrot.lane.b32.xlu0 %v2614, 52
      %v2863 = vpop.permute.xlu0 %2862
      %2864 = vrot.lane.b32.xlu0 %v2615, 52
      %v2865 = vpop.permute.xlu0 %2864
      %2866 = vrot.lane.b32.xlu0 %v2616, 52
      %v2867 = vpop.permute.xlu0 %2866
      %2868 = vrot.lane.b32.xlu0 %v2617, 52
      %v2869 = vpop.permute.xlu0 %2868
      %2870 = vrot.lane.b32.xlu0 %v2618, 52
      %v2871 = vpop.permute.xlu0 %2870
      %2872 = vrot.lane.b32.xlu0 %v2619, 52
      %v2873 = vpop.permute.xlu0 %2872
      %2874 = vrot.lane.b32.xlu0 %v2620, 52
      %v2875 = vpop.permute.xlu0 %2874
      %2876 = vrot.lane.b32.xlu0 %v2621, 52
      %v2877 = vpop.permute.xlu0 %2876
      %2878 = vrot.lane.b32.xlu0 %v2622, 52
      %v2879 = vpop.permute.xlu0 %2878
      %2880 = vrot.lane.b32.xlu0 %v2623, 52
      %v2881 = vpop.permute.xlu0 %2880
      %2882 = vrot.lane.b32.xlu0 %v2624, 52
      %v2883 = vpop.permute.xlu0 %2882
      %vm2920 = vcmask 458144
      %2921 = vst.msk [vmem:[#allocation2] sm:$0xff] %vm2920, %v2813
      %2922 = vst.msk [vmem:[#allocation2 + $0x8] sm:$0xff] %vm2920, %v2815
      %2923 = vst.msk [vmem:[#allocation2 + $0x10] sm:$0xff] %vm2920, %v2817
      %2924 = vst.msk [vmem:[#allocation2 + $0x18] sm:$0xff] %vm2920, %v2819
      %2925 = vst.msk [vmem:[#allocation2 + $0x20] sm:$0xff] %vm2920, %v2821
      %2926 = vst.msk [vmem:[#allocation2 + $0x28] sm:$0xff] %vm2920, %v2823
      %2927 = vst.msk [vmem:[#allocation2 + $0x30] sm:$0xff] %vm2920, %v2825
      %2928 = vst.msk [vmem:[#allocation2 + $0x38] sm:$0xff] %vm2920, %v2827
      %2929 = vst.msk [vmem:[#allocation2 + $0x40] sm:$0xff] %vm2920, %v2829
      %2930 = vst.msk [vmem:[#allocation2 + $0x48] sm:$0xff] %vm2920, %v2831
      %2931 = vst.msk [vmem:[#allocation2 + $0x50] sm:$0xff] %vm2920, %v2833
      %2932 = vst.msk [vmem:[#allocation2 + $0x58] sm:$0xff] %vm2920, %v2835
      %2933 = vst.msk [vmem:[#allocation2 + $0x60] sm:$0xff] %vm2920, %v2837
      %2934 = vst.msk [vmem:[#allocation2 + $0x68] sm:$0xff] %vm2920, %v2839
      %2935 = vst.msk [vmem:[#allocation2 + $0x70] sm:$0xff] %vm2920, %v2841
      %2936 = vst.msk [vmem:[#allocation2 + $0x78] sm:$0xff] %vm2920, %v2843
      %2937 = vst.msk [vmem:[#allocation2 + $0x80] sm:$0xff] %vm2920, %v2845
      %2938 = vst.msk [vmem:[#allocation2 + $0x88] sm:$0xff] %vm2920, %v2847
      %2939 = vst.msk [vmem:[#allocation2 + $0x90] sm:$0xff] %vm2920, %v2849
      %2940 = vst.msk [vmem:[#allocation2 + $0x98] sm:$0xff] %vm2920, %v2851
      %2941 = vst.msk [vmem:[#allocation2 + $0xa0] sm:$0xff] %vm2920, %v2853
      %2942 = vst.msk [vmem:[#allocation2 + $0xa8] sm:$0xff] %vm2920, %v2855
      %2943 = vst.msk [vmem:[#allocation2 + $0xb0] sm:$0xff] %vm2920, %v2857
      %2944 = vst.msk [vmem:[#allocation2 + $0xb8] sm:$0xff] %vm2920, %v2859
      %2945 = vst.msk [vmem:[#allocation2 + $0xc0] sm:$0xff] %vm2920, %v2861
      %2946 = vst.msk [vmem:[#allocation2 + $0xc8] sm:$0xff] %vm2920, %v2863
      %2947 = vst.msk [vmem:[#allocation2 + $0xd0] sm:$0xff] %vm2920, %v2865
      %2948 = vst.msk [vmem:[#allocation2 + $0xd8] sm:$0xff] %vm2920, %v2867
      %2949 = vst.msk [vmem:[#allocation2 + $0xe0] sm:$0xff] %vm2920, %v2869
      %2950 = vst.msk [vmem:[#allocation2 + $0xe8] sm:$0xff] %vm2920, %v2871
      %2951 = vst.msk [vmem:[#allocation2 + $0xf0] sm:$0xff] %vm2920, %v2873
      %2952 = vst.msk [vmem:[#allocation2 + $0xf8] sm:$0xff] %vm2920, %v2875
      %2953 = vst.msk [vmem:[#allocation2 + $0x100] sm:$0xff] %vm2920, %v2877
      %2954 = vst.msk [vmem:[#allocation2 + $0x108] sm:$0xff] %vm2920, %v2879
      %2955 = vst.msk [vmem:[#allocation2 + $0x110] sm:$0xff] %vm2920, %v2881
      %2956 = vst.msk [vmem:[#allocation2 + $0x118] sm:$0xff] %vm2920, %v2883
      %2957 = vrot.lane.b32.xlu0 %v2591, 64
      %v2958 = vpop.permute.xlu0 %2957
      %2959 = vrot.lane.b32.xlu0 %v2592, 64
      %v2960 = vpop.permute.xlu0 %2959
      %2961 = vrot.lane.b32.xlu0 %v2593, 64
      %v2962 = vpop.permute.xlu0 %2961
      %2963 = vrot.lane.b32.xlu0 %v2594, 64
      %v2964 = vpop.permute.xlu0 %2963
      %2965 = vrot.lane.b32.xlu0 %v2595, 64
      %v2966 = vpop.permute.xlu0 %2965
      %2967 = vrot.lane.b32.xlu0 %v2596, 64
      %v2968 = vpop.permute.xlu0 %2967
      %2969 = vrot.lane.b32.xlu0 %v2597, 64
      %v2970 = vpop.permute.xlu0 %2969
      %2971 = vrot.lane.b32.xlu0 %v2598, 64
      %v2972 = vpop.permute.xlu0 %2971
      %2973 = vrot.lane.b32.xlu0 %v2599, 64
      %v2974 = vpop.permute.xlu0 %2973
      %2975 = vrot.lane.b32.xlu0 %v2600, 64
      %v2976 = vpop.permute.xlu0 %2975
      %2977 = vrot.lane.b32.xlu0 %v2601, 64
      %v2978 = vpop.permute.xlu0 %2977
      %2979 = vrot.lane.b32.xlu0 %v2602, 64
      %v2980 = vpop.permute.xlu0 %2979
      %2981 = vrot.lane.b32.xlu0 %v2603, 64
      %v2982 = vpop.permute.xlu0 %2981
      %2983 = vrot.lane.b32.xlu0 %v2604, 64
      %v2984 = vpop.permute.xlu0 %2983
      %2985 = vrot.lane.b32.xlu0 %v2605, 64
      %v2986 = vpop.permute.xlu0 %2985
      %2987 = vrot.lane.b32.xlu0 %v2606, 64
      %v2988 = vpop.permute.xlu0 %2987
      %2989 = vrot.lane.b32.xlu0 %v2607, 64
      %v2990 = vpop.permute.xlu0 %2989
      %2991 = vrot.lane.b32.xlu0 %v2608, 64
      %v2992 = vpop.permute.xlu0 %2991
      %2993 = vrot.lane.b32.xlu0 %v2609, 64
      %v2994 = vpop.permute.xlu0 %2993
      %2995 = vrot.lane.b32.xlu0 %v2610, 64
      %v2996 = vpop.permute.xlu0 %2995
      %2997 = vrot.lane.b32.xlu0 %v2611, 64
      %v2998 = vpop.permute.xlu0 %2997
      %2999 = vrot.lane.b32.xlu0 %v2612, 64
      %v3000 = vpop.permute.xlu0 %2999
      %3001 = vrot.lane.b32.xlu0 %v2613, 64
      %v3002 = vpop.permute.xlu0 %3001
      %3003 = vrot.lane.b32.xlu0 %v2614, 64
      %v3004 = vpop.permute.xlu0 %3003
      %3005 = vrot.lane.b32.xlu0 %v2615, 64
      %v3006 = vpop.permute.xlu0 %3005
      %3007 = vrot.lane.b32.xlu0 %v2616, 64
      %v3008 = vpop.permute.xlu0 %3007
      %3009 = vrot.lane.b32.xlu0 %v2617, 64
      %v3010 = vpop.permute.xlu0 %3009
      %3011 = vrot.lane.b32.xlu0 %v2618, 64
      %v3012 = vpop.permute.xlu0 %3011
      %3013 = vrot.lane.b32.xlu0 %v2619, 64
      %v3014 = vpop.permute.xlu0 %3013
      %3015 = vrot.lane.b32.xlu0 %v2620, 64
      %v3016 = vpop.permute.xlu0 %3015
      %3017 = vrot.lane.b32.xlu0 %v2621, 64
      %v3018 = vpop.permute.xlu0 %3017
      %3019 = vrot.lane.b32.xlu0 %v2622, 64
      %v3020 = vpop.permute.xlu0 %3019
      %3021 = vrot.lane.b32.xlu0 %v2623, 64
      %v3022 = vpop.permute.xlu0 %3021
      %3023 = vrot.lane.b32.xlu0 %v2624, 64
      %v3024 = vpop.permute.xlu0 %3023
      %vm3059 = vcmask 556544
      %3060 = vst.msk [vmem:[#allocation2] sm:$0xff] %vm3059, %v2958
      %3061 = vst.msk [vmem:[#allocation2 + $0x8] sm:$0xff] %vm3059, %v2960
      %3062 = vst.msk [vmem:[#allocation2 + $0x10] sm:$0xff] %vm3059, %v2962
      %3063 = vst.msk [vmem:[#allocation2 + $0x18] sm:$0xff] %vm3059, %v2964
      %3064 = vst.msk [vmem:[#allocation2 + $0x20] sm:$0xff] %vm3059, %v2966
      %3065 = vst.msk [vmem:[#allocation2 + $0x28] sm:$0xff] %vm3059, %v2968
      %3066 = vst.msk [vmem:[#allocation2 + $0x30] sm:$0xff] %vm3059, %v2970
      %3067 = vst.msk [vmem:[#allocation2 + $0x38] sm:$0xff] %vm3059, %v2972
      %3068 = vst.msk [vmem:[#allocation2 + $0x40] sm:$0xff] %vm3059, %v2974
      %3069 = vst.msk [vmem:[#allocation2 + $0x48] sm:$0xff] %vm3059, %v2976
      %3070 = vst.msk [vmem:[#allocation2 + $0x50] sm:$0xff] %vm3059, %v2978
      %3071 = vst.msk [vmem:[#allocation2 + $0x58] sm:$0xff] %vm3059, %v2980
      %3072 = vst.msk [vmem:[#allocation2 + $0x60] sm:$0xff] %vm3059, %v2982
      %3073 = vst.msk [vmem:[#allocation2 + $0x68] sm:$0xff] %vm3059, %v2984
      %3074 = vst.msk [vmem:[#allocation2 + $0x70] sm:$0xff] %vm3059, %v2986
      %3075 = vst.msk [vmem:[#allocation2 + $0x78] sm:$0xff] %vm3059, %v2988
      %3076 = vst.msk [vmem:[#allocation2 + $0x80] sm:$0xff] %vm3059, %v2990
      %3077 = vst.msk [vmem:[#allocation2 + $0x88] sm:$0xff] %vm3059, %v2992
      %3078 = vst.msk [vmem:[#allocation2 + $0x90] sm:$0xff] %vm3059, %v2994
      %3079 = vst.msk [vmem:[#allocation2 + $0x98] sm:$0xff] %vm3059, %v2996
      %3080 = vst.msk [vmem:[#allocation2 + $0xa0] sm:$0xff] %vm3059, %v2998
      %3081 = vst.msk [vmem:[#allocation2 + $0xa8] sm:$0xff] %vm3059, %v3000
      %3082 = vst.msk [vmem:[#allocation2 + $0xb0] sm:$0xff] %vm3059, %v3002
      %3083 = vst.msk [vmem:[#allocation2 + $0xb8] sm:$0xff] %vm3059, %v3004
      %3084 = vst.msk [vmem:[#allocation2 + $0xc0] sm:$0xff] %vm3059, %v3006
      %3085 = vst.msk [vmem:[#allocation2 + $0xc8] sm:$0xff] %vm3059, %v3008
      %3086 = vst.msk [vmem:[#allocation2 + $0xd0] sm:$0xff] %vm3059, %v3010
      %3087 = vst.msk [vmem:[#allocation2 + $0xd8] sm:$0xff] %vm3059, %v3012
      %3088 = vst.msk [vmem:[#allocation2 + $0xe0] sm:$0xff] %vm3059, %v3014
      %3089 = vst.msk [vmem:[#allocation2 + $0xe8] sm:$0xff] %vm3059, %v3016
      %3090 = vst.msk [vmem:[#allocation2 + $0xf0] sm:$0xff] %vm3059, %v3018
      %3091 = vst.msk [vmem:[#allocation2 + $0xf8] sm:$0xff] %vm3059, %v3020
      %3092 = vst.msk [vmem:[#allocation2 + $0x100] sm:$0xff] %vm3059, %v3022
      %3093 = vst.msk [vmem:[#allocation2 + $0x108] sm:$0xff] %vm3059, %v3024
      %3096 = vrot.lane.b32.xlu0 %v2627, 64
      %v3097 = vpop.permute.xlu0 %3096
      %3098 = vrot.lane.b32.xlu0 %v2628, 64
      %v3099 = vpop.permute.xlu0 %3098
      %3102 = vst.msk [vmem:[%s1041] sm:$0xff] %vm3059, %v3097
      %3103 = vst.msk [vmem:[%s1041 + $0x8] sm:$0xff] %vm3059, %v3099
      %v3104 = vld [vmem:[%s590 + $0x2] sm:$0xff]
      %v3105 = vld [vmem:[%s590 + $0xa] sm:$0xff]
      %v3106 = vld [vmem:[%s590 + $0x1a] sm:$0xff]
      %v3107 = vld [vmem:[%s590 + $0x22] sm:$0xff]
      %v3108 = vld [vmem:[%s590 + $0x32] sm:$0xff]
      %v3109 = vld [vmem:[%s590 + $0x3a] sm:$0xff]
      %v3110 = vld [vmem:[%s590 + $0x4a] sm:$0xff]
      %v3111 = vld [vmem:[%s590 + $0x52] sm:$0xff]
      %v3112 = vld [vmem:[%s590 + $0x62] sm:$0xff]
      %v3113 = vld [vmem:[%s590 + $0x6a] sm:$0xff]
      %v3114 = vld [vmem:[%s590 + $0x7a] sm:$0xff]
      %v3115 = vld [vmem:[%s590 + $0x82] sm:$0xff]
      %v3116 = vld [vmem:[%s590 + $0x92] sm:$0xff]
      %v3117 = vld [vmem:[%s590 + $0x9a] sm:$0xff]
      %v3118 = vld [vmem:[%s590 + $0xaa] sm:$0xff]
      %v3119 = vld [vmem:[%s590 + $0xb2] sm:$0xff]
      %v3120 = vld [vmem:[%s590 + $0xc2] sm:$0xff]
      %v3121 = vld [vmem:[%s590 + $0xca] sm:$0xff]
      %v3122 = vld [vmem:[%s590 + $0xda] sm:$0xff]
      %v3123 = vld [vmem:[%s590 + $0xe2] sm:$0xff]
      %v3124 = vld [vmem:[%s590 + $0xf2] sm:$0xff]
      %v3125 = vld [vmem:[%s590 + $0xfa] sm:$0xff]
      %v3126 = vld [vmem:[%s590 + $0x10a] sm:$0xff]
      %v3127 = vld [vmem:[%s590 + $0x112] sm:$0xff]
      %v3128 = vld [vmem:[%s590 + $0x122] sm:$0xff]
      %v3129 = vld [vmem:[%s590 + $0x12a] sm:$0xff]
      %v3130 = vld [vmem:[%s590 + $0x13a] sm:$0xff]
      %v3131 = vld [vmem:[%s590 + $0x142] sm:$0xff]
      %v3132 = vld [vmem:[%s590 + $0x152] sm:$0xff]
      %v3133 = vld [vmem:[%s590 + $0x15a] sm:$0xff]
      %v3134 = vld [vmem:[%s590 + $0x16a] sm:$0xff]
      %v3135 = vld [vmem:[%s590 + $0x172] sm:$0xff]
      %v3136 = vld [vmem:[%s590 + $0x182] sm:$0xff]
      %v3137 = vld [vmem:[%s590 + $0x18a] sm:$0xff]
      %v3138 = vld [vmem:[%s590 + $0x19a] sm:$0xff]
      %v3139 = vld [vmem:[%s590 + $0x1a2] sm:$0xff]
      %v3140 = vld [vmem:[%s604 + $0x2] sm:$0xff]
      %v3141 = vld [vmem:[%s604 + $0xa] sm:$0xff]
      %v3142 = vld [vmem:[%s621 + $0x2] sm:$0xff]
      %v3143 = vld [vmem:[%s621 + $0xa] sm:$0xff]
      %3146 = vrot.lane.b32.xlu0 %v3140, 44
      %v3147 = vpop.permute.xlu0 %3146
      %3148 = vrot.lane.b32.xlu0 %v3141, 44
      %v3149 = vpop.permute.xlu0 %3148
      %vm3152 = vcmask 392544
      %3153 = vst.msk [vmem:[#allocation2] sm:$0xff] %vm3152, %v3147
      %3154 = vst.msk [vmem:[#allocation2 + $0x8] sm:$0xff] %vm3152, %v3149
      %3189 = vrot.lane.b32.xlu0 %v3104, 44
      %v3190 = vpop.permute.xlu0 %3189
      %3191 = vrot.lane.b32.xlu0 %v3105, 44
      %v3192 = vpop.permute.xlu0 %3191
      %3193 = vrot.lane.b32.xlu0 %v3106, 44
      %v3194 = vpop.permute.xlu0 %3193
      %3195 = vrot.lane.b32.xlu0 %v3107, 44
      %v3196 = vpop.permute.xlu0 %3195
      %3197 = vrot.lane.b32.xlu0 %v3108, 44
      %v3198 = vpop.permute.xlu0 %3197
      %3199 = vrot.lane.b32.xlu0 %v3109, 44
      %v3200 = vpop.permute.xlu0 %3199
      %3201 = vrot.lane.b32.xlu0 %v3110, 44
      %v3202 = vpop.permute.xlu0 %3201
      %3203 = vrot.lane.b32.xlu0 %v3111, 44
      %v3204 = vpop.permute.xlu0 %3203
      %3205 = vrot.lane.b32.xlu0 %v3112, 44
      %v3206 = vpop.permute.xlu0 %3205
      %3207 = vrot.lane.b32.xlu0 %v3113, 44
      %v3208 = vpop.permute.xlu0 %3207
      %3209 = vrot.lane.b32.xlu0 %v3114, 44
      %v3210 = vpop.permute.xlu0 %3209
      %3211 = vrot.lane.b32.xlu0 %v3115, 44
      %v3212 = vpop.permute.xlu0 %3211
      %3213 = vrot.lane.b32.xlu0 %v3116, 44
      %v3214 = vpop.permute.xlu0 %3213
      %3215 = vrot.lane.b32.xlu0 %v3117, 44
      %v3216 = vpop.permute.xlu0 %3215
      %3217 = vrot.lane.b32.xlu0 %v3118, 44
      %v3218 = vpop.permute.xlu0 %3217
      %3219 = vrot.lane.b32.xlu0 %v3119, 44
      %v3220 = vpop.permute.xlu0 %3219
      %3221 = vrot.lane.b32.xlu0 %v3120, 44
      %v3222 = vpop.permute.xlu0 %3221
      %3223 = vrot.lane.b32.xlu0 %v3121, 44
      %v3224 = vpop.permute.xlu0 %3223
      %3225 = vrot.lane.b32.xlu0 %v3122, 44
      %v3226 = vpop.permute.xlu0 %3225
      %3227 = vrot.lane.b32.xlu0 %v3123, 44
      %v3228 = vpop.permute.xlu0 %3227
      %3229 = vrot.lane.b32.xlu0 %v3124, 44
      %v3230 = vpop.permute.xlu0 %3229
      %3231 = vrot.lane.b32.xlu0 %v3125, 44
      %v3232 = vpop.permute.xlu0 %3231
      %3233 = vrot.lane.b32.xlu0 %v3126, 44
      %v3234 = vpop.permute.xlu0 %3233
      %3235 = vrot.lane.b32.xlu0 %v3127, 44
      %v3236 = vpop.permute.xlu0 %3235
      %3237 = vrot.lane.b32.xlu0 %v3128, 44
      %v3238 = vpop.permute.xlu0 %3237
      %3239 = vrot.lane.b32.xlu0 %v3129, 44
      %v3240 = vpop.permute.xlu0 %3239
      %3241 = vrot.lane.b32.xlu0 %v3130, 44
      %v3242 = vpop.permute.xlu0 %3241
      %3243 = vrot.lane.b32.xlu0 %v3131, 44
      %v3244 = vpop.permute.xlu0 %3243
      %3245 = vrot.lane.b32.xlu0 %v3132, 44
      %v3246 = vpop.permute.xlu0 %3245
      %3247 = vrot.lane.b32.xlu0 %v3133, 44
      %v3248 = vpop.permute.xlu0 %3247
      %3249 = vrot.lane.b32.xlu0 %v3134, 44
      %v3250 = vpop.permute.xlu0 %3249
      %3251 = vrot.lane.b32.xlu0 %v3135, 44
      %v3252 = vpop.permute.xlu0 %3251
      %3253 = vrot.lane.b32.xlu0 %v3136, 44
      %v3254 = vpop.permute.xlu0 %3253
      %3255 = vrot.lane.b32.xlu0 %v3137, 44
      %v3256 = vpop.permute.xlu0 %3255
      %3291 = vst.msk [vmem:[%s680] sm:$0xff] %vm3152, %v3190
      %3292 = vst.msk [vmem:[%s680 + $0x8] sm:$0xff] %vm3152, %v3192
      %3293 = vst.msk [vmem:[%s680 + $0x10] sm:$0xff] %vm3152, %v3194
      %3294 = vst.msk [vmem:[%s680 + $0x18] sm:$0xff] %vm3152, %v3196
      %3295 = vst.msk [vmem:[%s680 + $0x20] sm:$0xff] %vm3152, %v3198
      %3296 = vst.msk [vmem:[%s680 + $0x28] sm:$0xff] %vm3152, %v3200
      %3297 = vst.msk [vmem:[%s680 + $0x30] sm:$0xff] %vm3152, %v3202
      %3298 = vst.msk [vmem:[%s680 + $0x38] sm:$0xff] %vm3152, %v3204
      %3299 = vst.msk [vmem:[%s680 + $0x40] sm:$0xff] %vm3152, %v3206
      %3300 = vst.msk [vmem:[%s680 + $0x48] sm:$0xff] %vm3152, %v3208
      %3301 = vst.msk [vmem:[%s680 + $0x50] sm:$0xff] %vm3152, %v3210
      %3302 = vst.msk [vmem:[%s680 + $0x58] sm:$0xff] %vm3152, %v3212
      %3303 = vst.msk [vmem:[%s680 + $0x60] sm:$0xff] %vm3152, %v3214
      %3304 = vst.msk [vmem:[%s680 + $0x68] sm:$0xff] %vm3152, %v3216
      %3305 = vst.msk [vmem:[%s680 + $0x70] sm:$0xff] %vm3152, %v3218
      %3306 = vst.msk [vmem:[%s680 + $0x78] sm:$0xff] %vm3152, %v3220
      %3307 = vst.msk [vmem:[%s680 + $0x80] sm:$0xff] %vm3152, %v3222
      %3308 = vst.msk [vmem:[%s680 + $0x88] sm:$0xff] %vm3152, %v3224
      %3309 = vst.msk [vmem:[%s680 + $0x90] sm:$0xff] %vm3152, %v3226
      %3310 = vst.msk [vmem:[%s680 + $0x98] sm:$0xff] %vm3152, %v3228
      %3311 = vst.msk [vmem:[%s680 + $0xa0] sm:$0xff] %vm3152, %v3230
      %3312 = vst.msk [vmem:[%s680 + $0xa8] sm:$0xff] %vm3152, %v3232
      %3313 = vst.msk [vmem:[%s680 + $0xb0] sm:$0xff] %vm3152, %v3234
      %3314 = vst.msk [vmem:[%s680 + $0xb8] sm:$0xff] %vm3152, %v3236
      %3315 = vst.msk [vmem:[%s680 + $0xc0] sm:$0xff] %vm3152, %v3238
      %3316 = vst.msk [vmem:[%s680 + $0xc8] sm:$0xff] %vm3152, %v3240
      %3317 = vst.msk [vmem:[%s680 + $0xd0] sm:$0xff] %vm3152, %v3242
      %3318 = vst.msk [vmem:[%s680 + $0xd8] sm:$0xff] %vm3152, %v3244
      %3319 = vst.msk [vmem:[%s680 + $0xe0] sm:$0xff] %vm3152, %v3246
      %3320 = vst.msk [vmem:[%s680 + $0xe8] sm:$0xff] %vm3152, %v3248
      %3321 = vst.msk [vmem:[%s680 + $0xf0] sm:$0xff] %vm3152, %v3250
      %3322 = vst.msk [vmem:[%s680 + $0xf8] sm:$0xff] %vm3152, %v3252
      %3323 = vst.msk [vmem:[%s680 + $0x100] sm:$0xff] %vm3152, %v3254
      %3324 = vst.msk [vmem:[%s680 + $0x108] sm:$0xff] %vm3152, %v3256
      %3327 = vrot.lane.b32.xlu0 %v3104, 56
      %v3328 = vpop.permute.xlu0 %3327
      %3329 = vrot.lane.b32.xlu0 %v3105, 56
      %v3330 = vpop.permute.xlu0 %3329
      %3331 = vrot.lane.b32.xlu0 %v3106, 56
      %v3332 = vpop.permute.xlu0 %3331
      %3333 = vrot.lane.b32.xlu0 %v3107, 56
      %v3334 = vpop.permute.xlu0 %3333
      %3335 = vrot.lane.b32.xlu0 %v3108, 56
      %v3336 = vpop.permute.xlu0 %3335
      %3337 = vrot.lane.b32.xlu0 %v3109, 56
      %v3338 = vpop.permute.xlu0 %3337
      %3339 = vrot.lane.b32.xlu0 %v3110, 56
      %v3340 = vpop.permute.xlu0 %3339
      %3341 = vrot.lane.b32.xlu0 %v3111, 56
      %v3342 = vpop.permute.xlu0 %3341
      %3343 = vrot.lane.b32.xlu0 %v3112, 56
      %v3344 = vpop.permute.xlu0 %3343
      %3345 = vrot.lane.b32.xlu0 %v3113, 56
      %v3346 = vpop.permute.xlu0 %3345
      %3347 = vrot.lane.b32.xlu0 %v3114, 56
      %v3348 = vpop.permute.xlu0 %3347
      %3349 = vrot.lane.b32.xlu0 %v3115, 56
      %v3350 = vpop.permute.xlu0 %3349
      %3351 = vrot.lane.b32.xlu0 %v3116, 56
      %v3352 = vpop.permute.xlu0 %3351
      %3353 = vrot.lane.b32.xlu0 %v3117, 56
      %v3354 = vpop.permute.xlu0 %3353
      %3355 = vrot.lane.b32.xlu0 %v3118, 56
      %v3356 = vpop.permute.xlu0 %3355
      %3357 = vrot.lane.b32.xlu0 %v3119, 56
      %v3358 = vpop.permute.xlu0 %3357
      %3359 = vrot.lane.b32.xlu0 %v3120, 56
      %v3360 = vpop.permute.xlu0 %3359
      %3361 = vrot.lane.b32.xlu0 %v3121, 56
      %v3362 = vpop.permute.xlu0 %3361
      %3363 = vrot.lane.b32.xlu0 %v3122, 56
      %v3364 = vpop.permute.xlu0 %3363
      %3365 = vrot.lane.b32.xlu0 %v3123, 56
      %v3366 = vpop.permute.xlu0 %3365
      %3367 = vrot.lane.b32.xlu0 %v3124, 56
      %v3368 = vpop.permute.xlu0 %3367
      %3369 = vrot.lane.b32.xlu0 %v3125, 56
      %v3370 = vpop.permute.xlu0 %3369
      %3371 = vrot.lane.b32.xlu0 %v3126, 56
      %v3372 = vpop.permute.xlu0 %3371
      %3373 = vrot.lane.b32.xlu0 %v3127, 56
      %v3374 = vpop.permute.xlu0 %3373
      %3375 = vrot.lane.b32.xlu0 %v3128, 56
      %v3376 = vpop.permute.xlu0 %3375
      %3377 = vrot.lane.b32.xlu0 %v3129, 56
      %v3378 = vpop.permute.xlu0 %3377
      %3379 = vrot.lane.b32.xlu0 %v3130, 56
      %v3380 = vpop.permute.xlu0 %3379
      %3381 = vrot.lane.b32.xlu0 %v3131, 56
      %v3382 = vpop.permute.xlu0 %3381
      %3383 = vrot.lane.b32.xlu0 %v3132, 56
      %v3384 = vpop.permute.xlu0 %3383
      %3385 = vrot.lane.b32.xlu0 %v3133, 56
      %v3386 = vpop.permute.xlu0 %3385
      %3387 = vrot.lane.b32.xlu0 %v3134, 56
      %v3388 = vpop.permute.xlu0 %3387
      %3389 = vrot.lane.b32.xlu0 %v3135, 56
      %v3390 = vpop.permute.xlu0 %3389
      %3391 = vrot.lane.b32.xlu0 %v3136, 56
      %v3392 = vpop.permute.xlu0 %3391
      %3393 = vrot.lane.b32.xlu0 %v3137, 56
      %v3394 = vpop.permute.xlu0 %3393
      %3395 = vrot.lane.b32.xlu0 %v3138, 56
      %v3396 = vpop.permute.xlu0 %3395
      %3397 = vrot.lane.b32.xlu0 %v3139, 56
      %v3398 = vpop.permute.xlu0 %3397
      %vm3435 = vcmask 490944
      %3436 = vst.msk [vmem:[#allocation2] sm:$0xff] %vm3435, %v3328
      %3437 = vst.msk [vmem:[#allocation2 + $0x8] sm:$0xff] %vm3435, %v3330
      %3438 = vst.msk [vmem:[#allocation2 + $0x10] sm:$0xff] %vm3435, %v3332
      %3439 = vst.msk [vmem:[#allocation2 + $0x18] sm:$0xff] %vm3435, %v3334
      %3440 = vst.msk [vmem:[#allocation2 + $0x20] sm:$0xff] %vm3435, %v3336
      %3441 = vst.msk [vmem:[#allocation2 + $0x28] sm:$0xff] %vm3435, %v3338
      %3442 = vst.msk [vmem:[#allocation2 + $0x30] sm:$0xff] %vm3435, %v3340
      %3443 = vst.msk [vmem:[#allocation2 + $0x38] sm:$0xff] %vm3435, %v3342
      %3444 = vst.msk [vmem:[#allocation2 + $0x40] sm:$0xff] %vm3435, %v3344
      %3445 = vst.msk [vmem:[#allocation2 + $0x48] sm:$0xff] %vm3435, %v3346
      %3446 = vst.msk [vmem:[#allocation2 + $0x50] sm:$0xff] %vm3435, %v3348
      %3447 = vst.msk [vmem:[#allocation2 + $0x58] sm:$0xff] %vm3435, %v3350
      %3448 = vst.msk [vmem:[#allocation2 + $0x60] sm:$0xff] %vm3435, %v3352
      %3449 = vst.msk [vmem:[#allocation2 + $0x68] sm:$0xff] %vm3435, %v3354
      %3450 = vst.msk [vmem:[#allocation2 + $0x70] sm:$0xff] %vm3435, %v3356
      %3451 = vst.msk [vmem:[#allocation2 + $0x78] sm:$0xff] %vm3435, %v3358
      %3452 = vst.msk [vmem:[#allocation2 + $0x80] sm:$0xff] %vm3435, %v3360
      %3453 = vst.msk [vmem:[#allocation2 + $0x88] sm:$0xff] %vm3435, %v3362
      %3454 = vst.msk [vmem:[#allocation2 + $0x90] sm:$0xff] %vm3435, %v3364
      %3455 = vst.msk [vmem:[#allocation2 + $0x98] sm:$0xff] %vm3435, %v3366
      %3456 = vst.msk [vmem:[#allocation2 + $0xa0] sm:$0xff] %vm3435, %v3368
      %3457 = vst.msk [vmem:[#allocation2 + $0xa8] sm:$0xff] %vm3435, %v3370
      %3458 = vst.msk [vmem:[#allocation2 + $0xb0] sm:$0xff] %vm3435, %v3372
      %3459 = vst.msk [vmem:[#allocation2 + $0xb8] sm:$0xff] %vm3435, %v3374
      %3460 = vst.msk [vmem:[#allocation2 + $0xc0] sm:$0xff] %vm3435, %v3376
      %3461 = vst.msk [vmem:[#allocation2 + $0xc8] sm:$0xff] %vm3435, %v3378
      %3462 = vst.msk [vmem:[#allocation2 + $0xd0] sm:$0xff] %vm3435, %v3380
      %3463 = vst.msk [vmem:[#allocation2 + $0xd8] sm:$0xff] %vm3435, %v3382
      %3464 = vst.msk [vmem:[#allocation2 + $0xe0] sm:$0xff] %vm3435, %v3384
      %3465 = vst.msk [vmem:[#allocation2 + $0xe8] sm:$0xff] %vm3435, %v3386
      %3466 = vst.msk [vmem:[#allocation2 + $0xf0] sm:$0xff] %vm3435, %v3388
      %3467 = vst.msk [vmem:[#allocation2 + $0xf8] sm:$0xff] %vm3435, %v3390
      %3468 = vst.msk [vmem:[#allocation2 + $0x100] sm:$0xff] %vm3435, %v3392
      %3469 = vst.msk [vmem:[#allocation2 + $0x108] sm:$0xff] %vm3435, %v3394
      %3470 = vst.msk [vmem:[#allocation2 + $0x110] sm:$0xff] %vm3435, %v3396
      %3471 = vst.msk [vmem:[#allocation2 + $0x118] sm:$0xff] %vm3435, %v3398
      %3472 = vrot.lane.b32.xlu0 %v3106, 68
      %v3473 = vpop.permute.xlu0 %3472
      %3474 = vrot.lane.b32.xlu0 %v3107, 68
      %v3475 = vpop.permute.xlu0 %3474
      %3476 = vrot.lane.b32.xlu0 %v3108, 68
      %v3477 = vpop.permute.xlu0 %3476
      %3478 = vrot.lane.b32.xlu0 %v3109, 68
      %v3479 = vpop.permute.xlu0 %3478
      %3480 = vrot.lane.b32.xlu0 %v3110, 68
      %v3481 = vpop.permute.xlu0 %3480
      %3482 = vrot.lane.b32.xlu0 %v3111, 68
      %v3483 = vpop.permute.xlu0 %3482
      %3484 = vrot.lane.b32.xlu0 %v3112, 68
      %v3485 = vpop.permute.xlu0 %3484
      %3486 = vrot.lane.b32.xlu0 %v3113, 68
      %v3487 = vpop.permute.xlu0 %3486
      %3488 = vrot.lane.b32.xlu0 %v3114, 68
      %v3489 = vpop.permute.xlu0 %3488
      %3490 = vrot.lane.b32.xlu0 %v3115, 68
      %v3491 = vpop.permute.xlu0 %3490
      %3492 = vrot.lane.b32.xlu0 %v3116, 68
      %v3493 = vpop.permute.xlu0 %3492
      %3494 = vrot.lane.b32.xlu0 %v3117, 68
      %v3495 = vpop.permute.xlu0 %3494
      %3496 = vrot.lane.b32.xlu0 %v3118, 68
      %v3497 = vpop.permute.xlu0 %3496
      %3498 = vrot.lane.b32.xlu0 %v3119, 68
      %v3499 = vpop.permute.xlu0 %3498
      %3500 = vrot.lane.b32.xlu0 %v3120, 68
      %v3501 = vpop.permute.xlu0 %3500
      %3502 = vrot.lane.b32.xlu0 %v3121, 68
      %v3503 = vpop.permute.xlu0 %3502
      %3504 = vrot.lane.b32.xlu0 %v3122, 68
      %v3505 = vpop.permute.xlu0 %3504
      %3506 = vrot.lane.b32.xlu0 %v3123, 68
      %v3507 = vpop.permute.xlu0 %3506
      %3508 = vrot.lane.b32.xlu0 %v3124, 68
      %v3509 = vpop.permute.xlu0 %3508
      %3510 = vrot.lane.b32.xlu0 %v3125, 68
      %v3511 = vpop.permute.xlu0 %3510
      %3512 = vrot.lane.b32.xlu0 %v3126, 68
      %v3513 = vpop.permute.xlu0 %3512
      %3514 = vrot.lane.b32.xlu0 %v3127, 68
      %v3515 = vpop.permute.xlu0 %3514
      %3516 = vrot.lane.b32.xlu0 %v3128, 68
      %v3517 = vpop.permute.xlu0 %3516
      %3518 = vrot.lane.b32.xlu0 %v3129, 68
      %v3519 = vpop.permute.xlu0 %3518
      %3520 = vrot.lane.b32.xlu0 %v3130, 68
      %v3521 = vpop.permute.xlu0 %3520
      %3522 = vrot.lane.b32.xlu0 %v3131, 68
      %v3523 = vpop.permute.xlu0 %3522
      %3524 = vrot.lane.b32.xlu0 %v3132, 68
      %v3525 = vpop.permute.xlu0 %3524
      %3526 = vrot.lane.b32.xlu0 %v3133, 68
      %v3527 = vpop.permute.xlu0 %3526
      %3528 = vrot.lane.b32.xlu0 %v3134, 68
      %v3529 = vpop.permute.xlu0 %3528
      %3530 = vrot.lane.b32.xlu0 %v3135, 68
      %v3531 = vpop.permute.xlu0 %3530
      %3532 = vrot.lane.b32.xlu0 %v3136, 68
      %v3533 = vpop.permute.xlu0 %3532
      %3534 = vrot.lane.b32.xlu0 %v3137, 68
      %v3535 = vpop.permute.xlu0 %3534
      %3536 = vrot.lane.b32.xlu0 %v3138, 68
      %v3537 = vpop.permute.xlu0 %3536
      %3538 = vrot.lane.b32.xlu0 %v3139, 68
      %v3539 = vpop.permute.xlu0 %3538
      %vm3574 = vcmask 589344
      %3575 = vst.msk [vmem:[#allocation2] sm:$0xff] %vm3574, %v3473
      %3576 = vst.msk [vmem:[#allocation2 + $0x8] sm:$0xff] %vm3574, %v3475
      %3577 = vst.msk [vmem:[#allocation2 + $0x10] sm:$0xff] %vm3574, %v3477
      %3578 = vst.msk [vmem:[#allocation2 + $0x18] sm:$0xff] %vm3574, %v3479
      %3579 = vst.msk [vmem:[#allocation2 + $0x20] sm:$0xff] %vm3574, %v3481
      %3580 = vst.msk [vmem:[#allocation2 + $0x28] sm:$0xff] %vm3574, %v3483
      %3581 = vst.msk [vmem:[#allocation2 + $0x30] sm:$0xff] %vm3574, %v3485
      %3582 = vst.msk [vmem:[#allocation2 + $0x38] sm:$0xff] %vm3574, %v3487
      %3583 = vst.msk [vmem:[#allocation2 + $0x40] sm:$0xff] %vm3574, %v3489
      %3584 = vst.msk [vmem:[#allocation2 + $0x48] sm:$0xff] %vm3574, %v3491
      %3585 = vst.msk [vmem:[#allocation2 + $0x50] sm:$0xff] %vm3574, %v3493
      %3586 = vst.msk [vmem:[#allocation2 + $0x58] sm:$0xff] %vm3574, %v3495
      %3587 = vst.msk [vmem:[#allocation2 + $0x60] sm:$0xff] %vm3574, %v3497
      %3588 = vst.msk [vmem:[#allocation2 + $0x68] sm:$0xff] %vm3574, %v3499
      %3589 = vst.msk [vmem:[#allocation2 + $0x70] sm:$0xff] %vm3574, %v3501
      %3590 = vst.msk [vmem:[#allocation2 + $0x78] sm:$0xff] %vm3574, %v3503
      %3591 = vst.msk [vmem:[#allocation2 + $0x80] sm:$0xff] %vm3574, %v3505
      %3592 = vst.msk [vmem:[#allocation2 + $0x88] sm:$0xff] %vm3574, %v3507
      %3593 = vst.msk [vmem:[#allocation2 + $0x90] sm:$0xff] %vm3574, %v3509
      %3594 = vst.msk [vmem:[#allocation2 + $0x98] sm:$0xff] %vm3574, %v3511
      %3595 = vst.msk [vmem:[#allocation2 + $0xa0] sm:$0xff] %vm3574, %v3513
      %3596 = vst.msk [vmem:[#allocation2 + $0xa8] sm:$0xff] %vm3574, %v3515
      %3597 = vst.msk [vmem:[#allocation2 + $0xb0] sm:$0xff] %vm3574, %v3517
      %3598 = vst.msk [vmem:[#allocation2 + $0xb8] sm:$0xff] %vm3574, %v3519
      %3599 = vst.msk [vmem:[#allocation2 + $0xc0] sm:$0xff] %vm3574, %v3521
      %3600 = vst.msk [vmem:[#allocation2 + $0xc8] sm:$0xff] %vm3574, %v3523
      %3601 = vst.msk [vmem:[#allocation2 + $0xd0] sm:$0xff] %vm3574, %v3525
      %3602 = vst.msk [vmem:[#allocation2 + $0xd8] sm:$0xff] %vm3574, %v3527
      %3603 = vst.msk [vmem:[#allocation2 + $0xe0] sm:$0xff] %vm3574, %v3529
      %3604 = vst.msk [vmem:[#allocation2 + $0xe8] sm:$0xff] %vm3574, %v3531
      %3605 = vst.msk [vmem:[#allocation2 + $0xf0] sm:$0xff] %vm3574, %v3533
      %3606 = vst.msk [vmem:[#allocation2 + $0xf8] sm:$0xff] %vm3574, %v3535
      %3607 = vst.msk [vmem:[#allocation2 + $0x100] sm:$0xff] %vm3574, %v3537
      %3608 = vst.msk [vmem:[#allocation2 + $0x108] sm:$0xff] %vm3574, %v3539
      %3611 = vrot.lane.b32.xlu0 %v3142, 68
      %v3612 = vpop.permute.xlu0 %3611
      %3613 = vrot.lane.b32.xlu0 %v3143, 68
      %v3614 = vpop.permute.xlu0 %3613
      %3617 = vst.msk [vmem:[%s1041] sm:$0xff] %vm3574, %v3612
      %3618 = vst.msk [vmem:[%s1041 + $0x8] sm:$0xff] %vm3574, %v3614
      %v3619 = vld [vmem:[#allocation2] sm:$0xff]
      %v3620 = vld [vmem:[#allocation2 + $0x8] sm:$0xff]
      %v3621 = vld [vmem:[#allocation2 + $0x10] sm:$0xff]
      %v3622 = vld [vmem:[#allocation2 + $0x18] sm:$0xff]
      %v3623 = vld [vmem:[#allocation2 + $0x20] sm:$0xff]
      %v3624 = vld [vmem:[#allocation2 + $0x28] sm:$0xff]
      %v3625 = vld [vmem:[#allocation2 + $0x30] sm:$0xff]
      %v3626 = vld [vmem:[#allocation2 + $0x38] sm:$0xff]
      %v3627 = vld [vmem:[#allocation2 + $0x40] sm:$0xff]
      %v3628 = vld [vmem:[#allocation2 + $0x48] sm:$0xff]
      %v3629 = vld [vmem:[#allocation2 + $0x50] sm:$0xff]
      %v3630 = vld [vmem:[#allocation2 + $0x58] sm:$0xff]
      %v3631 = vld [vmem:[#allocation2 + $0x60] sm:$0xff]
      %v3632 = vld [vmem:[#allocation2 + $0x68] sm:$0xff]
      %v3633 = vld [vmem:[#allocation2 + $0x70] sm:$0xff]
      %v3634 = vld [vmem:[#allocation2 + $0x78] sm:$0xff]
      %v3635 = vld [vmem:[#allocation2 + $0x80] sm:$0xff]
      %v3636 = vld [vmem:[#allocation2 + $0x88] sm:$0xff]
      %v3637 = vld [vmem:[#allocation2 + $0x90] sm:$0xff]
      %v3638 = vld [vmem:[#allocation2 + $0x98] sm:$0xff]
      %v3639 = vld [vmem:[#allocation2 + $0xa0] sm:$0xff]
      %v3640 = vld [vmem:[#allocation2 + $0xa8] sm:$0xff]
      %v3641 = vld [vmem:[#allocation2 + $0xb0] sm:$0xff]
      %v3642 = vld [vmem:[#allocation2 + $0xb8] sm:$0xff]
      %v3643 = vld [vmem:[#allocation2 + $0xc0] sm:$0xff]
      %v3644 = vld [vmem:[#allocation2 + $0xc8] sm:$0xff]
      %v3645 = vld [vmem:[#allocation2 + $0xd0] sm:$0xff]
      %v3646 = vld [vmem:[#allocation2 + $0xd8] sm:$0xff]
      %v3647 = vld [vmem:[#allocation2 + $0xe0] sm:$0xff]
      %v3648 = vld [vmem:[#allocation2 + $0xe8] sm:$0xff]
      %v3649 = vld [vmem:[#allocation2 + $0xf0] sm:$0xff]
      %v3650 = vld [vmem:[#allocation2 + $0xf8] sm:$0xff]
      %v3651 = vld [vmem:[#allocation2 + $0x100] sm:$0xff]
      %v3652 = vld [vmem:[#allocation2 + $0x108] sm:$0xff]
      %v3653 = vld [vmem:[#allocation2 + $0x110] sm:$0xff]
      %v3654 = vld [vmem:[#allocation2 + $0x118] sm:$0xff]
      %v3655 = vld [vmem:[%s6] sm:$0xff]
      %v3656 = vld [vmem:[%s6 + $0x8] sm:$0xff]
      %v3657 = vld [vmem:[%s6 + $0x10] sm:$0xff]
      %v3658 = vld [vmem:[%s6 + $0x18] sm:$0xff]
      %v3659 = vld [vmem:[%s6 + $0x20] sm:$0xff]
      %v3660 = vld [vmem:[%s6 + $0x28] sm:$0xff]
      %v3661 = vld [vmem:[%s6 + $0x30] sm:$0xff]
      %v3662 = vld [vmem:[%s6 + $0x38] sm:$0xff]
      %v3663 = vld [vmem:[%s6 + $0x40] sm:$0xff]
      %v3664 = vld [vmem:[%s7] sm:$0x1]
      %v3666 = vlaneseq
      %v3667 = vshrl.u32 %v3666, 7
      %v3668 = vsub.s32 0, %v3667
      %v3669 = vrot.slane %v3664, %v3668
      %vm3671 = vcmask 588800
      %v3673 = vsel %vm3671, %v3619, 0
      %v3676 = vsel %vm3671, %v3620, 0
      %v3679 = vsel %vm3671, %v3621, 0
      %v3682 = vsel %vm3671, %v3622, 0
      %v3685 = vsel %vm3671, %v3623, 0
      %v3688 = vsel %vm3671, %v3624, 0
      %v3691 = vsel %vm3671, %v3625, 0
      %v3694 = vsel %vm3671, %v3626, 0
      %v3697 = vsel %vm3671, %v3627, 0
      %v3700 = vsel %vm3671, %v3628, 0
      %v3703 = vsel %vm3671, %v3629, 0
      %v3706 = vsel %vm3671, %v3630, 0
      %v3709 = vsel %vm3671, %v3631, 0
      %v3712 = vsel %vm3671, %v3632, 0
      %v3715 = vsel %vm3671, %v3633, 0
      %v3718 = vsel %vm3671, %v3634, 0
      %v3721 = vsel %vm3671, %v3635, 0
      %v3724 = vsel %vm3671, %v3636, 0
      %v3727 = vsel %vm3671, %v3637, 0
      %v3730 = vsel %vm3671, %v3638, 0
      %v3733 = vsel %vm3671, %v3639, 0
      %v3736 = vsel %vm3671, %v3640, 0
      %v3739 = vsel %vm3671, %v3641, 0
      %v3742 = vsel %vm3671, %v3642, 0
      %v3745 = vsel %vm3671, %v3643, 0
      %v3748 = vsel %vm3671, %v3644, 0
      %v3751 = vsel %vm3671, %v3645, 0
      %v3754 = vsel %vm3671, %v3646, 0
      %v3757 = vsel %vm3671, %v3647, 0
      %v3760 = vsel %vm3671, %v3648, 0
      %v3763 = vsel %vm3671, %v3649, 0
      %v3766 = vsel %vm3671, %v3650, 0
      %v3769 = vsel %vm3671, %v3651, 0
      %v3772 = vsel %vm3671, %v3652, 0
      %v3775 = vsel %vm3671, %v3653, 0
      %v3778 = vsel %vm3671, %v3654, 0
      %3780 = vmatprep.subr.mxu0 0.0
      %3781 = vmatpush1.msra.mxu0 %v3655
      %3782 = vmatprep.subr.mxu0 0.0
      %3783 = vmatpush1.msra.mxu0 %v3656
      %3784 = vmatprep.subr.mxu0 0.0
      %3785 = vmatpush1.msra.mxu0 %v3657
      %3786 = vmatprep.subr.mxu0 0.0
      %3787 = vmatpush1.msra.mxu0 %v3658
      %3788 = vmatprep.subr.mxu0 0.0
      %3789 = vmatpush1.msra.mxu0 %v3659
      %3790 = vmatprep.subr.mxu0 0.0
      %3791 = vmatpush1.msra.mxu0 %v3660
      %3792 = vmatprep.subr.mxu0 0.0
      %3793 = vmatpush1.msra.mxu0 %v3661
      %3794 = vmatprep.subr.mxu0 0.0
      %3795 = vmatpush1.msra.mxu0 %v3662
      %3796 = vmatprep.subr.mxu0 0.0
      %3797 = vmatpush1.msra.mxu0 %v3663
      %3798 = vmatprep.subr.mxu0 0.0
      %3799 = vmatpush1.msra.mxu0 0.0
      %3800 = vmatprep.subr.mxu0 0.0
      %3801 = vmatpush1.msra.mxu0 0.0
      %3802 = vmatprep.subr.mxu0 0.0
      %3803 = vmatpush1.msra.mxu0 0.0
      %3804 = vmatprep.subr.mxu0 0.0
      %3805 = vmatpush1.msra.mxu0 0.0
      %3806 = vmatprep.subr.mxu0 0.0
      %3807 = vmatpush1.msra.mxu0 0.0
      %3808 = vmatprep.subr.mxu0 0.0
      %3809 = vmatpush1.msra.mxu0 0.0
      %3810 = vmatprep.subr.mxu0 0.0
      %3811 = vmatpush1.msra.mxu0 0.0
      %3812 = vmatprep.subr.mxu0 0.0
      %3813 = vmatpush1.msra.mxu0 0.0
      %3814 = vmatprep.subr.mxu0 0.0
      %3815 = vmatpush1.msra.mxu0 0.0
      %3816 = vmatprep.subr.mxu0 0.0
      %3817 = vmatpush1.msra.mxu0 0.0
      %3818 = vmatprep.subr.mxu0 0.0
      %3819 = vmatpush1.msra.mxu0 0.0
      %3820 = vmatprep.subr.mxu0 0.0
      %3821 = vmatpush1.msra.mxu0 0.0
      %3822 = vmatprep.subr.mxu0 0.0
      %3823 = vmatpush1.msra.mxu0 0.0
      %3824 = vmatprep.subr.mxu0 0.0
      %3825 = vmatpush1.msra.mxu0 0.0
      %3826 = vmatprep.subr.mxu0 0.0
      %3827 = vmatpush1.msra.mxu0 0.0
      %3828 = vmatprep.subr.mxu0 0.0
      %3829 = vmatpush1.msra.mxu0 0.0
      %3830 = vmatprep.subr.mxu0 0.0
      %3831 = vmatpush1.msra.mxu0 0.0
      %3832 = vmatprep.subr.mxu0 0.0
      %3833 = vmatpush1.msra.mxu0 0.0
      %3834 = vmatprep.subr.mxu0 0.0
      %3835 = vmatpush1.msra.mxu0 0.0
      %3836 = vmatprep.subr.mxu0 0.0
      %3837 = vmatpush1.msra.mxu0 0.0
      %3838 = vmatprep.subr.mxu0 0.0
      %3839 = vmatpush1.msra.mxu0 0.0
      %3840 = vmatprep.subr.mxu0 0.0
      %3841 = vmatpush1.msra.mxu0 0.0
      %3842 = vmatprep.subr.mxu0 0.0
      %3843 = vmatpush1.msra.mxu0 0.0
      %3844 = vmatprep.mubr.f32.mxu0 0.0
      %3845 = vmatmul.mubr.f32.gmra.mrb[0].mxu0 %v3673
      %v3846 = vpop.f32.mrb[0].mxu0
      %v3847 = vadd.f32 %v3669, %v3846
      %v3848 = vpop.f32.mrb[0].mxu0
      %3849 = vmatprep.mubr.f32.mxu0 0.0
      %3850 = vmatmul.mubr.f32.gmra.mrb[0].mxu0 %v3676
      %v3851 = vpop.f32.mrb[0].mxu0
      %v3852 = vadd.f32 %v3669, %v3851
      %v3853 = vpop.f32.mrb[0].mxu0
      %3854 = vmatprep.mubr.f32.mxu0 0.0
      %3855 = vmatmul.mubr.f32.gmra.mrb[0].mxu0 %v3679
      %v3856 = vpop.f32.mrb[0].mxu0
      %v3857 = vadd.f32 %v3669, %v3856
      %v3858 = vpop.f32.mrb[0].mxu0
      %3859 = vmatprep.mubr.f32.mxu0 0.0
      %3860 = vmatmul.mubr.f32.gmra.mrb[0].mxu0 %v3682
      %v3861 = vpop.f32.mrb[0].mxu0
      %v3862 = vadd.f32 %v3669, %v3861
      %v3863 = vpop.f32.mrb[0].mxu0
      %3864 = vmatprep.mubr.f32.mxu0 0.0
      %3865 = vmatmul.mubr.f32.gmra.mrb[0].mxu0 %v3685
      %v3866 = vpop.f32.mrb[0].mxu0
      %v3867 = vadd.f32 %v3669, %v3866
      %v3868 = vpop.f32.mrb[0].mxu0
      %3869 = vmatprep.mubr.f32.mxu0 0.0
      %3870 = vmatmul.mubr.f32.gmra.mrb[0].mxu0 %v3688
      %v3871 = vpop.f32.mrb[0].mxu0
      %v3872 = vadd.f32 %v3669, %v3871
      %v3873 = vpop.f32.mrb[0].mxu0
      %3874 = vmatprep.mubr.f32.mxu0 0.0
      %3875 = vmatmul.mubr.f32.gmra.mrb[0].mxu0 %v3691
      %v3876 = vpop.f32.mrb[0].mxu0
      %v3877 = vadd.f32 %v3669, %v3876
      %v3878 = vpop.f32.mrb[0].mxu0
      %3879 = vmatprep.mubr.f32.mxu0 0.0
      %3880 = vmatmul.mubr.f32.gmra.mrb[0].mxu0 %v3694
      %v3881 = vpop.f32.mrb[0].mxu0
      %v3882 = vadd.f32 %v3669, %v3881
      %v3883 = vpop.f32.mrb[0].mxu0
      %3884 = vmatprep.mubr.f32.mxu0 0.0
      %3885 = vmatmul.mubr.f32.gmra.mrb[0].mxu0 %v3697
      %v3886 = vpop.f32.mrb[0].mxu0
      %v3887 = vadd.f32 %v3669, %v3886
      %v3888 = vpop.f32.mrb[0].mxu0
      %3889 = vmatprep.mubr.f32.mxu0 0.0
      %3890 = vmatmul.mubr.f32.gmra.mrb[0].mxu0 %v3700
      %v3891 = vpop.f32.mrb[0].mxu0
      %v3892 = vadd.f32 %v3669, %v3891
      %v3893 = vpop.f32.mrb[0].mxu0
      %3894 = vmatprep.mubr.f32.mxu0 0.0
      %3895 = vmatmul.mubr.f32.gmra.mrb[0].mxu0 %v3703
      %v3896 = vpop.f32.mrb[0].mxu0
      %v3897 = vadd.f32 %v3669, %v3896
      %v3898 = vpop.f32.mrb[0].mxu0
      %3899 = vmatprep.mubr.f32.mxu0 0.0
      %3900 = vmatmul.mubr.f32.gmra.mrb[0].mxu0 %v3706
      %v3901 = vpop.f32.mrb[0].mxu0
      %v3902 = vadd.f32 %v3669, %v3901
      %v3903 = vpop.f32.mrb[0].mxu0
      %3904 = vmatprep.mubr.f32.mxu0 0.0
      %3905 = vmatmul.mubr.f32.gmra.mrb[0].mxu0 %v3709
      %v3906 = vpop.f32.mrb[0].mxu0
      %v3907 = vadd.f32 %v3669, %v3906
      %v3908 = vpop.f32.mrb[0].mxu0
      %3909 = vmatprep.mubr.f32.mxu0 0.0
      %3910 = vmatmul.mubr.f32.gmra.mrb[0].mxu0 %v3712
      %v3911 = vpop.f32.mrb[0].mxu0
      %v3912 = vadd.f32 %v3669, %v3911
      %v3913 = vpop.f32.mrb[0].mxu0
      %3914 = vmatprep.mubr.f32.mxu0 0.0
      %3915 = vmatmul.mubr.f32.gmra.mrb[0].mxu0 %v3715
      %v3916 = vpop.f32.mrb[0].mxu0
      %v3917 = vadd.f32 %v3669, %v3916
      %v3918 = vpop.f32.mrb[0].mxu0
      %3919 = vmatprep.mubr.f32.mxu0 0.0
      %3920 = vmatmul.mubr.f32.gmra.mrb[0].mxu0 %v3718
      %v3921 = vpop.f32.mrb[0].mxu0
      %v3922 = vadd.f32 %v3669, %v3921
      %v3923 = vpop.f32.mrb[0].mxu0
      %3924 = vmatprep.mubr.f32.mxu0 0.0
      %3925 = vmatmul.mubr.f32.gmra.mrb[0].mxu0 %v3721
      %v3926 = vpop.f32.mrb[0].mxu0
      %v3927 = vadd.f32 %v3669, %v3926
      %v3928 = vpop.f32.mrb[0].mxu0
      %3929 = vmatprep.mubr.f32.mxu0 0.0
      %3930 = vmatmul.mubr.f32.gmra.mrb[0].mxu0 %v3724
      %v3931 = vpop.f32.mrb[0].mxu0
      %v3932 = vadd.f32 %v3669, %v3931
      %v3933 = vpop.f32.mrb[0].mxu0
      %3934 = vmatprep.mubr.f32.mxu0 0.0
      %3935 = vmatmul.mubr.f32.gmra.mrb[0].mxu0 %v3727
      %v3936 = vpop.f32.mrb[0].mxu0
      %v3937 = vadd.f32 %v3669, %v3936
      %v3938 = vpop.f32.mrb[0].mxu0
      %3939 = vmatprep.mubr.f32.mxu0 0.0
      %3940 = vmatmul.mubr.f32.gmra.mrb[0].mxu0 %v3730
      %v3941 = vpop.f32.mrb[0].mxu0
      %v3942 = vadd.f32 %v3669, %v3941
      %v3943 = vpop.f32.mrb[0].mxu0
      %3944 = vmatprep.mubr.f32.mxu0 0.0
      %3945 = vmatmul.mubr.f32.gmra.mrb[0].mxu0 %v3733
      %v3946 = vpop.f32.mrb[0].mxu0
      %v3947 = vadd.f32 %v3669, %v3946
      %v3948 = vpop.f32.mrb[0].mxu0
      %3949 = vmatprep.mubr.f32.mxu0 0.0
      %3950 = vmatmul.mubr.f32.gmra.mrb[0].mxu0 %v3736
      %v3951 = vpop.f32.mrb[0].mxu0
      %v3952 = vadd.f32 %v3669, %v3951
      %v3953 = vpop.f32.mrb[0].mxu0
      %3954 = vmatprep.mubr.f32.mxu0 0.0
      %3955 = vmatmul.mubr.f32.gmra.mrb[0].mxu0 %v3739
      %v3956 = vpop.f32.mrb[0].mxu0
      %v3957 = vadd.f32 %v3669, %v3956
      %v3958 = vpop.f32.mrb[0].mxu0
      %3959 = vmatprep.mubr.f32.mxu0 0.0
      %3960 = vmatmul.mubr.f32.gmra.mrb[0].mxu0 %v3742
      %v3961 = vpop.f32.mrb[0].mxu0
      %v3962 = vadd.f32 %v3669, %v3961
      %v3963 = vpop.f32.mrb[0].mxu0
      %3964 = vmatprep.mubr.f32.mxu0 0.0
      %3965 = vmatmul.mubr.f32.gmra.mrb[0].mxu0 %v3745
      %v3966 = vpop.f32.mrb[0].mxu0
      %v3967 = vadd.f32 %v3669, %v3966
      %v3968 = vpop.f32.mrb[0].mxu0
      %3969 = vmatprep.mubr.f32.mxu0 0.0
      %3970 = vmatmul.mubr.f32.gmra.mrb[0].mxu0 %v3748
      %v3971 = vpop.f32.mrb[0].mxu0
      %v3972 = vadd.f32 %v3669, %v3971
      %v3973 = vpop.f32.mrb[0].mxu0
      %3974 = vmatprep.mubr.f32.mxu0 0.0
      %3975 = vmatmul.mubr.f32.gmra.mrb[0].mxu0 %v3751
      %v3976 = vpop.f32.mrb[0].mxu0
      %v3977 = vadd.f32 %v3669, %v3976
      %v3978 = vpop.f32.mrb[0].mxu0
      %3979 = vmatprep.mubr.f32.mxu0 0.0
      %3980 = vmatmul.mubr.f32.gmra.mrb[0].mxu0 %v3754
      %v3981 = vpop.f32.mrb[0].mxu0
      %v3982 = vadd.f32 %v3669, %v3981
      %v3983 = vpop.f32.mrb[0].mxu0
      %3984 = vmatprep.mubr.f32.mxu0 0.0
      %3985 = vmatmul.mubr.f32.gmra.mrb[0].mxu0 %v3757
      %v3986 = vpop.f32.mrb[0].mxu0
      %v3987 = vadd.f32 %v3669, %v3986
      %v3988 = vpop.f32.mrb[0].mxu0
      %3989 = vmatprep.mubr.f32.mxu0 0.0
      %3990 = vmatmul.mubr.f32.gmra.mrb[0].mxu0 %v3760
      %v3991 = vpop.f32.mrb[0].mxu0
      %v3992 = vadd.f32 %v3669, %v3991
      %v3993 = vpop.f32.mrb[0].mxu0
      %3994 = vmatprep.mubr.f32.mxu0 0.0
      %3995 = vmatmul.mubr.f32.gmra.mrb[0].mxu0 %v3763
      %v3996 = vpop.f32.mrb[0].mxu0
      %v3997 = vadd.f32 %v3669, %v3996
      %v3998 = vpop.f32.mrb[0].mxu0
      %3999 = vmatprep.mubr.f32.mxu0 0.0
      %4000 = vmatmul.mubr.f32.gmra.mrb[0].mxu0 %v3766
      %v4001 = vpop.f32.mrb[0].mxu0
      %v4002 = vadd.f32 %v3669, %v4001
      %v4003 = vpop.f32.mrb[0].mxu0
      %4004 = vmatprep.mubr.f32.mxu0 0.0
      %4005 = vmatmul.mubr.f32.gmra.mrb[0].mxu0 %v3769
      %v4006 = vpop.f32.mrb[0].mxu0
      %v4007 = vadd.f32 %v3669, %v4006
      %v4008 = vpop.f32.mrb[0].mxu0
      %4009 = vmatprep.mubr.f32.mxu0 0.0
      %4010 = vmatmul.mubr.f32.gmra.mrb[0].mxu0 %v3772
      %v4011 = vpop.f32.mrb[0].mxu0
      %v4012 = vadd.f32 %v3669, %v4011
      %v4013 = vpop.f32.mrb[0].mxu0
      %4014 = vmatprep.mubr.f32.mxu0 0.0
      %4015 = vmatmul.mubr.f32.gmra.mrb[0].mxu0 %v3775
      %v4016 = vpop.f32.mrb[0].mxu0
      %v4017 = vadd.f32 %v3669, %v4016
      %v4018 = vpop.f32.mrb[0].mxu0
      %4019 = vmatprep.mubr.f32.mxu0 0.0
      %4020 = vmatmul.mubr.f32.gmra.mrb[0].mxu0 %v3778
      %v4021 = vpop.f32.mrb[0].mxu0
      %v4022 = vadd.f32 %v3669, %v4021
      %v4023 = vpop.f32.mrb[0].mxu0
      %4024 = vdwg.mxu0
      %v4025 = vmax.f32 %v3847, 0.0
      %v4026 = vmax.f32 %v3852, 0.0
      %v4027 = vmax.f32 %v3857, 0.0
      %v4028 = vmax.f32 %v3862, 0.0
      %v4029 = vmax.f32 %v3867, 0.0
      %v4030 = vmax.f32 %v3872, 0.0
      %v4031 = vmax.f32 %v3877, 0.0
      %v4032 = vmax.f32 %v3882, 0.0
      %v4033 = vmax.f32 %v3887, 0.0
      %v4034 = vmax.f32 %v3892, 0.0
      %v4035 = vmax.f32 %v3897, 0.0
      %v4036 = vmax.f32 %v3902, 0.0
      %v4037 = vmax.f32 %v3907, 0.0
      %v4038 = vmax.f32 %v3912, 0.0
      %v4039 = vmax.f32 %v3917, 0.0
      %v4040 = vmax.f32 %v3922, 0.0
      %v4041 = vmax.f32 %v3927, 0.0
      %v4042 = vmax.f32 %v3932, 0.0
      %v4043 = vmax.f32 %v3937, 0.0
      %v4044 = vmax.f32 %v3942, 0.0
      %v4045 = vmax.f32 %v3947, 0.0
      %v4046 = vmax.f32 %v3952, 0.0
      %v4047 = vmax.f32 %v3957, 0.0
      %v4048 = vmax.f32 %v3962, 0.0
      %v4049 = vmax.f32 %v3967, 0.0
      %v4050 = vmax.f32 %v3972, 0.0
      %v4051 = vmax.f32 %v3977, 0.0
      %v4052 = vmax.f32 %v3982, 0.0
      %v4053 = vmax.f32 %v3987, 0.0
      %v4054 = vmax.f32 %v3992, 0.0
      %v4055 = vmax.f32 %v3997, 0.0
      %v4056 = vmax.f32 %v4002, 0.0
      %v4057 = vmax.f32 %v4007, 0.0
      %v4058 = vmax.f32 %v4012, 0.0
      %v4059 = vmax.f32 %v4017, 0.0
      %v4060 = vmax.f32 %v4022, 0.0
      %s4061 = smul.u32 %s24, 18
      %v4062 = vstv %s4061
      %v4063 = vadd.s32 %v4062, 1
      %v4064 = vadd.s32 %v4062, 2
      %v4065 = vadd.s32 %v4062, 3
      %v4066 = vadd.s32 %v4062, 4
      %v4067 = vadd.s32 %v4062, 5
      %v4068 = vadd.s32 %v4062, 6
      %v4069 = vadd.s32 %v4062, 7
      %v4070 = vadd.s32 %v4062, 8
      %v4071 = vadd.s32 %v4062, 9
      %v4072 = vadd.s32 %v4062, 10
      %v4073 = vadd.s32 %v4062, 11
      %v4074 = vadd.s32 %v4062, 12
      %v4075 = vadd.s32 %v4062, 13
      %v4076 = vadd.s32 %v4062, 14
      %v4077 = vadd.s32 %v4062, 15
      %v4078 = vadd.s32 %v4062, 16
      %v4079 = vadd.s32 %v4062, 17
      %vm4080 = vcmp.ge.s32.totalorder %v4062, 1
      %vm4081 = vcmp.ge.s32.totalorder %v4063, 1
      %vm4082 = vcmp.ge.s32.totalorder %v4064, 1
      %vm4083 = vcmp.ge.s32.totalorder %v4065, 1
      %vm4084 = vcmp.ge.s32.totalorder %v4066, 1
      %vm4085 = vcmp.ge.s32.totalorder %v4067, 1
      %vm4086 = vcmp.ge.s32.totalorder %v4068, 1
      %vm4087 = vcmp.ge.s32.totalorder %v4069, 1
      %vm4088 = vcmp.ge.s32.totalorder %v4070, 1
      %vm4089 = vcmp.ge.s32.totalorder %v4071, 1
      %vm4090 = vcmp.ge.s32.totalorder %v4072, 1
      %vm4091 = vcmp.ge.s32.totalorder %v4073, 1
      %vm4092 = vcmp.ge.s32.totalorder %v4074, 1
      %vm4093 = vcmp.ge.s32.totalorder %v4075, 1
      %vm4094 = vcmp.ge.s32.totalorder %v4076, 1
      %vm4095 = vcmp.ge.s32.totalorder %v4077, 1
      %vm4096 = vcmp.ge.s32.totalorder %v4078, 1
      %vm4097 = vcmp.ge.s32.totalorder %v4079, 1
      %vm4098 = vcmp.le.s32.totalorder %v4062, 16
      %vm4099 = vcmp.le.s32.totalorder %v4063, 16
      %vm4100 = vcmp.le.s32.totalorder %v4064, 16
      %vm4101 = vcmp.le.s32.totalorder %v4065, 16
      %vm4102 = vcmp.le.s32.totalorder %v4066, 16
      %vm4103 = vcmp.le.s32.totalorder %v4067, 16
      %vm4104 = vcmp.le.s32.totalorder %v4068, 16
      %vm4105 = vcmp.le.s32.totalorder %v4069, 16
      %vm4106 = vcmp.le.s32.totalorder %v4070, 16
      %vm4107 = vcmp.le.s32.totalorder %v4071, 16
      %vm4108 = vcmp.le.s32.totalorder %v4072, 16
      %vm4109 = vcmp.le.s32.totalorder %v4073, 16
      %vm4110 = vcmp.le.s32.totalorder %v4074, 16
      %vm4111 = vcmp.le.s32.totalorder %v4075, 16
      %vm4112 = vcmp.le.s32.totalorder %v4076, 16
      %vm4113 = vcmp.le.s32.totalorder %v4077, 16
      %vm4114 = vcmp.le.s32.totalorder %v4078, 16
      %vm4115 = vcmp.le.s32.totalorder %v4079, 16
      %vm4116 = vmand %vm4080, %vm4098
      %vm4117 = vmand %vm4081, %vm4099
      %vm4118 = vmand %vm4082, %vm4100
      %vm4119 = vmand %vm4083, %vm4101
      %vm4120 = vmand %vm4084, %vm4102
      %vm4121 = vmand %vm4085, %vm4103
      %vm4122 = vmand %vm4086, %vm4104
      %vm4123 = vmand %vm4087, %vm4105
      %vm4124 = vmand %vm4088, %vm4106
      %vm4125 = vmand %vm4089, %vm4107
      %vm4126 = vmand %vm4090, %vm4108
      %vm4127 = vmand %vm4091, %vm4109
      %vm4128 = vmand %vm4092, %vm4110
      %vm4129 = vmand %vm4093, %vm4111
      %vm4130 = vmand %vm4094, %vm4112
      %vm4131 = vmand %vm4095, %vm4113
      %vm4132 = vmand %vm4096, %vm4114
      %vm4133 = vmand %vm4097, %vm4115
      %v4134 = vsel %vm4116, %v4025, 0.0
      %v4135 = vsel %vm4116, %v4026, 0.0
      %v4136 = vsel %vm4117, %v4027, 0.0
      %v4137 = vsel %vm4117, %v4028, 0.0
      %v4138 = vsel %vm4118, %v4029, 0.0
      %v4139 = vsel %vm4118, %v4030, 0.0
      %v4140 = vsel %vm4119, %v4031, 0.0
      %v4141 = vsel %vm4119, %v4032, 0.0
      %v4142 = vsel %vm4120, %v4033, 0.0
      %v4143 = vsel %vm4120, %v4034, 0.0
      %v4144 = vsel %vm4121, %v4035, 0.0
      %v4145 = vsel %vm4121, %v4036, 0.0
      %v4146 = vsel %vm4122, %v4037, 0.0
      %v4147 = vsel %vm4122, %v4038, 0.0
      %v4148 = vsel %vm4123, %v4039, 0.0
      %v4149 = vsel %vm4123, %v4040, 0.0
      %v4150 = vsel %vm4124, %v4041, 0.0
      %v4151 = vsel %vm4124, %v4042, 0.0
      %v4152 = vsel %vm4125, %v4043, 0.0
      %v4153 = vsel %vm4125, %v4044, 0.0
      %v4154 = vsel %vm4126, %v4045, 0.0
      %v4155 = vsel %vm4126, %v4046, 0.0
      %v4156 = vsel %vm4127, %v4047, 0.0
      %v4157 = vsel %vm4127, %v4048, 0.0
      %v4158 = vsel %vm4128, %v4049, 0.0
      %v4159 = vsel %vm4128, %v4050, 0.0
      %v4160 = vsel %vm4129, %v4051, 0.0
      %v4161 = vsel %vm4129, %v4052, 0.0
      %v4162 = vsel %vm4130, %v4053, 0.0
      %v4163 = vsel %vm4130, %v4054, 0.0
      %v4164 = vsel %vm4131, %v4055, 0.0
      %v4165 = vsel %vm4131, %v4056, 0.0
      %v4166 = vsel %vm4132, %v4057, 0.0
      %v4167 = vsel %vm4132, %v4058, 0.0
      %v4168 = vsel %vm4133, %v4059, 0.0
      %v4169 = vsel %vm4133, %v4060, 0.0
      %4170 = vst.msk [vmem:[%s635 + $0x1] sm:$0xff] %vm677, %v4134
      %4171 = vst.msk [vmem:[%s635 + $0x9] sm:$0xff] %vm677, %v4135
      %4172 = vst.msk [vmem:[%s635 + $0x19] sm:$0xff] %vm677, %v4136
      %4173 = vst.msk [vmem:[%s635 + $0x21] sm:$0xff] %vm677, %v4137
      %4174 = vst.msk [vmem:[%s635 + $0x31] sm:$0xff] %vm677, %v4138
      %4175 = vst.msk [vmem:[%s635 + $0x39] sm:$0xff] %vm677, %v4139
      %4176 = vst.msk [vmem:[%s635 + $0x49] sm:$0xff] %vm677, %v4140
      %4177 = vst.msk [vmem:[%s635 + $0x51] sm:$0xff] %vm677, %v4141
      %4178 = vst.msk [vmem:[%s635 + $0x61] sm:$0xff] %vm677, %v4142
      %4179 = vst.msk [vmem:[%s635 + $0x69] sm:$0xff] %vm677, %v4143
      %4180 = vst.msk [vmem:[%s635 + $0x79] sm:$0xff] %vm677, %v4144
      %4181 = vst.msk [vmem:[%s635 + $0x81] sm:$0xff] %vm677, %v4145
      %4182 = vst.msk [vmem:[%s635 + $0x91] sm:$0xff] %vm677, %v4146
      %4183 = vst.msk [vmem:[%s635 + $0x99] sm:$0xff] %vm677, %v4147
      %4184 = vst.msk [vmem:[%s635 + $0xa9] sm:$0xff] %vm677, %v4148
      %4185 = vst.msk [vmem:[%s635 + $0xb1] sm:$0xff] %vm677, %v4149
      %4186 = vst.msk [vmem:[%s635 + $0xc1] sm:$0xff] %vm677, %v4150
      %4187 = vst.msk [vmem:[%s635 + $0xc9] sm:$0xff] %vm677, %v4151
      %4188 = vst.msk [vmem:[%s635 + $0xd9] sm:$0xff] %vm677, %v4152
      %4189 = vst.msk [vmem:[%s635 + $0xe1] sm:$0xff] %vm677, %v4153
      %4190 = vst.msk [vmem:[%s635 + $0xf1] sm:$0xff] %vm677, %v4154
      %4191 = vst.msk [vmem:[%s635 + $0xf9] sm:$0xff] %vm677, %v4155
      %4192 = vst.msk [vmem:[%s635 + $0x109] sm:$0xff] %vm677, %v4156
      %4193 = vst.msk [vmem:[%s635 + $0x111] sm:$0xff] %vm677, %v4157
      %4194 = vst.msk [vmem:[%s635 + $0x121] sm:$0xff] %vm677, %v4158
      %4195 = vst.msk [vmem:[%s635 + $0x129] sm:$0xff] %vm677, %v4159
      %4196 = vst.msk [vmem:[%s635 + $0x139] sm:$0xff] %vm677, %v4160
      %4197 = vst.msk [vmem:[%s635 + $0x141] sm:$0xff] %vm677, %v4161
      %4198 = vst.msk [vmem:[%s635 + $0x151] sm:$0xff] %vm677, %v4162
      %4199 = vst.msk [vmem:[%s635 + $0x159] sm:$0xff] %vm677, %v4163
      %4200 = vst.msk [vmem:[%s635 + $0x169] sm:$0xff] %vm677, %v4164
      %4201 = vst.msk [vmem:[%s635 + $0x171] sm:$0xff] %vm677, %v4165
      %4202 = vst.msk [vmem:[%s635 + $0x181] sm:$0xff] %vm677, %v4166
      %4203 = vst.msk [vmem:[%s635 + $0x189] sm:$0xff] %vm677, %v4167
      %4204 = vst.msk [vmem:[%s635 + $0x199] sm:$0xff] %vm677, %v4168
      %4205 = vst.msk [vmem:[%s635 + $0x1a1] sm:$0xff] %vm677, %v4169
      %vm4206 = vcmask 24576
      %4207 = vst.msk [vmem:[%s635] sm:$0x1] %vm4206, 0.0
      %4208 = vst.msk [vmem:[%s635 + $0x18] sm:$0x1] %vm4206, 0.0
      %4209 = vst.msk [vmem:[%s635 + $0x30] sm:$0x1] %vm4206, 0.0
      %4210 = vst.msk [vmem:[%s635 + $0x48] sm:$0x1] %vm4206, 0.0
      %4211 = vst.msk [vmem:[%s635 + $0x60] sm:$0x1] %vm4206, 0.0
      %4212 = vst.msk [vmem:[%s635 + $0x78] sm:$0x1] %vm4206, 0.0
      %4213 = vst.msk [vmem:[%s635 + $0x90] sm:$0x1] %vm4206, 0.0
      %4214 = vst.msk [vmem:[%s635 + $0xa8] sm:$0x1] %vm4206, 0.0
      %4215 = vst.msk [vmem:[%s635 + $0xc0] sm:$0x1] %vm4206, 0.0
      %4216 = vst.msk [vmem:[%s635 + $0xd8] sm:$0x1] %vm4206, 0.0
      %4217 = vst.msk [vmem:[%s635 + $0xf0] sm:$0x1] %vm4206, 0.0
      %4218 = vst.msk [vmem:[%s635 + $0x108] sm:$0x1] %vm4206, 0.0
      %4219 = vst.msk [vmem:[%s635 + $0x120] sm:$0x1] %vm4206, 0.0
      %4220 = vst.msk [vmem:[%s635 + $0x138] sm:$0x1] %vm4206, 0.0
      %4221 = vst.msk [vmem:[%s635 + $0x150] sm:$0x1] %vm4206, 0.0
      %4222 = vst.msk [vmem:[%s635 + $0x168] sm:$0x1] %vm4206, 0.0
      %4223 = vst.msk [vmem:[%s635 + $0x180] sm:$0x1] %vm4206, 0.0
      %4224 = vst.msk [vmem:[%s635 + $0x198] sm:$0x1] %vm4206, 0.0
      %4225 = vst.msk [vmem:[%s635 + $0x11] sm:$0x1] %vm4206, 0.0
      %4226 = vst.msk [vmem:[%s635 + $0x29] sm:$0x1] %vm4206, 0.0
      %4227 = vst.msk [vmem:[%s635 + $0x41] sm:$0x1] %vm4206, 0.0
      %4228 = vst.msk [vmem:[%s635 + $0x59] sm:$0x1] %vm4206, 0.0
      %4229 = vst.msk [vmem:[%s635 + $0x71] sm:$0x1] %vm4206, 0.0
      %4230 = vst.msk [vmem:[%s635 + $0x89] sm:$0x1] %vm4206, 0.0
      %4231 = vst.msk [vmem:[%s635 + $0xa1] sm:$0x1] %vm4206, 0.0
      %4232 = vst.msk [vmem:[%s635 + $0xb9] sm:$0x1] %vm4206, 0.0
      %4233 = vst.msk [vmem:[%s635 + $0xd1] sm:$0x1] %vm4206, 0.0
      %4234 = vst.msk [vmem:[%s635 + $0xe9] sm:$0x1] %vm4206, 0.0
      %4235 = vst.msk [vmem:[%s635 + $0x101] sm:$0x1] %vm4206, 0.0
      %4236 = vst.msk [vmem:[%s635 + $0x119] sm:$0x1] %vm4206, 0.0
      %4237 = vst.msk [vmem:[%s635 + $0x131] sm:$0x1] %vm4206, 0.0
      %4238 = vst.msk [vmem:[%s635 + $0x149] sm:$0x1] %vm4206, 0.0
      %4239 = vst.msk [vmem:[%s635 + $0x161] sm:$0x1] %vm4206, 0.0
      %4240 = vst.msk [vmem:[%s635 + $0x179] sm:$0x1] %vm4206, 0.0
      %4241 = vst.msk [vmem:[%s635 + $0x191] sm:$0x1] %vm4206, 0.0
      %4242 = vst.msk [vmem:[%s635 + $0x1a9] sm:$0x1] %vm4206, 0.0
      %s4243 = smul.u32 18, %s24
      %p4244 = scmp.lt.s32.totalorder %s23, 1
      %s4245 = scalar_select %p4244, %s23, 1
      %p4246 = scmp.lt.s32.totalorder %s4243, 17
      %s4247 = scalar_select %p4246, %s4243, 17
      %s4248 = smul.addr %s4247, 3
      %s4249 = smul.addr %s4245, 54
      %s4250 = sadd.s32 %s4248, %s4249
      %s4251 = smul.addr %s4250, 8
      %s4252 = scalar_lea.vmem %s8, %s4251
      // Predicated region
      $region53: #{fwd.8} parent=51 // pred_check
        %p4253 = pneg %p293
      $region54: #{fwd.8} parent=51 // pred_check_branch
        %4255 = sbr.rel (%p4253) target = $region56
      $region55: #{fwd.8} parent=51 // pred_region
        %s4256 = smul.u32 18, %s24
      $region56: #{fwd.8} parent=51 // pred_fallthru
        _
    $region52: #{fwd.8} parent=5 // pred_fallthru
      _
    %p4257 = scmp.le.s32.totalorder 2, %s14
    // Predicated region
    $region57: #{fwd.8} parent=5 // pred_check
      %p4258 = pneg %p4257
    $region58: #{fwd.8} parent=5 // pred_check_branch
      %4260 = sbr.rel (%p4258) target = $region60
    $region59: #{fwd.8} parent=5 // pred_region
      %s4261 = ssub.s32 %s14, 2
      // Predicated region
      $region61: #{fwd.8} parent=59 // pred_check
        %p4262 = pneg %p299
      $region62: #{fwd.8} parent=59 // pred_check_branch
        %4264 = sbr.rel (%p4262) target = $region64
      $region63: #{fwd.8} parent=59 // pred_region
        %s4265 = smul.u32 18, %s26
        %p4266 = scmp.lt.s32.totalorder %s25, 1
        %s4267 = scalar_select %p4266, %s25, 1
        %p4268 = scmp.lt.s32.totalorder %s4265, 17
        %s4269 = scalar_select %p4268, %s4265, 17
        %s4270 = smul.addr %s4269, 3
        %s4271 = smul.addr %s4267, 54
        %s4272 = sadd.s32 %s4270, %s4271
        %s4273 = smul.addr %s4272, 8
        %s4274 = scalar_lea.vmem %s8, %s4273
      $region64: #{fwd.8} parent=59 // pred_fallthru
        _
    $region60: #{fwd.8} parent=5 // pred_fallthru
      _
  $region6: #{fwd.8} parent=0 // loop_footer
    %s18 = sadd.s32 1, %s14
  $region7: #{fwd.8} parent=0 // loop_footer_branch
    %13 = sbr.rel target = $region3
  $region8: #{fwd.8} parent=0 // loop_exit
    _

</llo_original>
